<compile_context>
chip_gen: v7x
topology: tpu7x:2x2x1
jax: 0.10.0
libtpu: 0.0.40
codegen_flags: <defaults>
</compile_context>

<pallas_src>
import functools
import math

import numpy as np
import jax
import jax.numpy as jnp
from jax.experimental import pallas as pl
from jax.experimental.pallas import tpu as pltpu

d_model = 1024
d_ff = d_model * 4

_INV_SQRT2 = 1.0 / math.sqrt(2.0)


def _round_up(x, m):
    return ((x + m - 1) // m) * m


def _ffn_kernel(x_ref, w1_ref, b1_ref, w2_ref, b2_ref, o_ref, *, tf):
    """Grid = (i over M tiles [parallel], j over d_ff tiles [reduction]).

    h_j     = gelu(x_i @ W1[:, j*tf:(j+1)*tf] + b1[j*tf:(j+1)*tf])   (tm, tf)
    out_i  += h_j @ W2[j*tf:(j+1)*tf, :]                              (tm, d_model)
    out_i  += b2                                                      (last j step)

    W1 / W2 / b1 / b2 are full-array VMEM-resident blocks (constant block
    index), so they are DMAed from HBM exactly once per kernel call.
    """
    j = pl.program_id(1)

    @pl.when(j == 0)
    def _():
        o_ref[...] = jnp.zeros_like(o_ref)

    col = pl.multiple_of(j * tf, tf)
    w1_j = w1_ref[:, pl.ds(col, tf)]      # (d_model, tf)   bf16
    b1_j = b1_ref[:, pl.ds(col, tf)]      # (1, tf)         f32
    w2_j = w2_ref[pl.ds(col, tf), :]      # (tf, d_model)   bf16

    # fc1 tile: bf16 operands on the MXU, f32 accumulation.
    h = jnp.dot(x_ref[...], w1_j, preferred_element_type=jnp.float32)
    h = h + b1_j                          # b1 broadcasts over rows
    # Exact-erf GELU (module semantics), computed in f32 on the VPU.
    h = h * 0.5 * (1.0 + jax.lax.erf(h * _INV_SQRT2))

    # fc2 partial contraction over this d_ff tile: bf16 MXU, accumulated into
    # the VMEM-resident f32 output block (block index constant over j).
    o_ref[...] += jnp.dot(h.astype(jnp.bfloat16), w2_j,
                          preferred_element_type=jnp.float32)

    @pl.when(j == pl.num_programs(1) - 1)
    def _():
        o_ref[...] = o_ref[...] + b2_ref[...]


def poswise_ffn(x, w1, b1, w2, b2, *, tm=256, tf=1024):
    """x: (B, S, d_model) f32.  w1: (d_model, d_ff), b1: (d_ff,),
    w2: (d_ff, d_model), b2: (d_model,).  Returns (B, S, d_model) f32."""
    B, S, D = x.shape
    assert D == d_model
    assert d_ff % tf == 0

    M = B * S
    # bf16 activations / weights in HBM (halves the streamed bytes); f32
    # accumulation inside the kernel preserves precision.
    x2d = x.reshape(M, D).astype(jnp.bfloat16)
    w1_bf = w1.astype(jnp.bfloat16)
    w2_bf = w2.astype(jnp.bfloat16)

    # Effective row tile: multiple of 8 (sublane), no larger than needed.
    tm_eff = min(tm, _round_up(M, 8))
    M_pad = _round_up(M, tm_eff)
    if M_pad != M:
        x2d = jnp.pad(x2d, ((0, M_pad - M), (0, 0)))

    b1_2d = b1.reshape(1, d_ff).astype(jnp.float32)
    b2_2d = b2.reshape(1, d_model).astype(jnp.float32)

    grid = (M_pad // tm_eff, d_ff // tf)

    # Single weight pass (resident), bf16 x in, f32 out, f32 biases.
    flops = 4 * M_pad * d_model * d_ff
    bytes_accessed = (M_pad * d_model * 2          # x (bf16)
                      + M_pad * d_model * 4        # out (f32)
                      + 2 * d_model * d_ff * 2     # W1 + W2 (bf16, one pass)
                      + (d_ff + d_model) * 4)      # b1, b2
    cost = pl.CostEstimate(flops=flops,
                           transcendentals=M_pad * d_ff,   # erf per hidden elem
                           bytes_accessed=bytes_accessed)

    kernel = functools.partial(_ffn_kernel, tf=tf)

    out2d = pl.pallas_call(
        kernel,
        out_shape=jax.ShapeDtypeStruct((M_pad, d_model), jnp.float32),
        grid_spec=pltpu.PrefetchScalarGridSpec(
            num_scalar_prefetch=0,
            grid=grid,
            in_specs=[
                # x row tile: streams per i.
                pl.BlockSpec((tm_eff, d_model), lambda i, j: (i, 0)),
                # W1 / b1 / W2 / b2: full-array, constant index -> fetched once,
                # VMEM-resident for the whole kernel.
                pl.BlockSpec((d_model, d_ff), lambda i, j: (0, 0)),
                pl.BlockSpec((1, d_ff), lambda i, j: (0, 0)),
                pl.BlockSpec((d_ff, d_model), lambda i, j: (0, 0)),
                pl.BlockSpec((1, d_model), lambda i, j: (0, 0)),
            ],
            out_specs=pl.BlockSpec((tm_eff, d_model), lambda i, j: (i, 0)),
        ),
        compiler_params=pltpu.CompilerParams(
            dimension_semantics=("parallel", "arbitrary"),
            vmem_limit_bytes=56 * 1024 * 1024,
        ),
        cost_estimate=cost,
    )(x2d, w1_bf, b1_2d, w2_bf, b2_2d)

    if M_pad != M:
        out2d = out2d[:M]
    return out2d.reshape(B, S, d_model)


def _gelu_exact(h):
    return h * 0.5 * (1.0 + jax.lax.erf(h * _INV_SQRT2))


def _reference_f32(x, w1, b1, w2, b2):
    h = _gelu_exact(jnp.dot(x, w1) + b1)
    return jnp.dot(h, w2) + b2


def _reference_bf16_matmul(x, w1, b1, w2, b2):
    """Same math as the kernel: bf16 MXU operands, f32 accumulation/GELU."""
    xb = x.astype(jnp.bfloat16)
    h = jnp.dot(xb, w1.astype(jnp.bfloat16),
                preferred_element_type=jnp.float32) + b1
    h = _gelu_exact(h)
    return jnp.dot(h.astype(jnp.bfloat16), w2.astype(jnp.bfloat16),
                   preferred_element_type=jnp.float32) + b2


if __name__ == "__main__":
    key = jax.random.PRNGKey(0)
    kx, k1, k2, k3, k4 = jax.random.split(key, 5)

    B, S = 2, 8
    x = jax.random.normal(kx, (B, S, d_model), dtype=jnp.float32)

    # Deterministic parameter init (nn.Linear-style uniform bounds).
    bound1 = 1.0 / math.sqrt(d_model)
    bound2 = 1.0 / math.sqrt(d_ff)
    w1 = jax.random.uniform(k1, (d_model, d_ff), jnp.float32, -bound1, bound1)
    b1 = jax.random.uniform(k2, (d_ff,), jnp.float32, -bound1, bound1)
    w2 = jax.random.uniform(k3, (d_ff, d_model), jnp.float32, -bound2, bound2)
    b2 = jax.random.uniform(k4, (d_model,), jnp.float32, -bound2, bound2)

    out = poswise_ffn(x, w1, b1, w2, b2)
    out = jax.block_until_ready(out)
    out_np = np.asarray(out)

    # Tight check against a reference with identical bf16-matmul / f32-acc math.
    ref_bf16 = np.asarray(_reference_bf16_matmul(x, w1, b1, w2, b2))
    np.testing.assert_allclose(out_np, ref_bf16, rtol=2e-3, atol=2e-3)

    # Loose sanity check against the exact f32 module semantics.
    ref_f32 = np.asarray(_reference_f32(x, w1, b1, w2, b2))
    np.testing.assert_allclose(out_np, ref_f32, rtol=5e-2, atol=5e-2)

    print("KERNEL_OK")
</pallas_src>

<mosaic_0001>
module attributes {stable_mosaic.version = 11 : i64} {
  func.func @_ffn_kernel(%arg0: i32, %arg1: i32, %arg2: memref<16x1024xbf16, #tpu.memory_space<vmem>>, %arg3: memref<1024x4096xbf16, #tpu.memory_space<vmem>>, %arg4: memref<1x4096xf32, #tpu.memory_space<vmem>>, %arg5: memref<4096x1024xbf16, #tpu.memory_space<vmem>>, %arg6: memref<1x1024xf32, #tpu.memory_space<vmem>>, %arg7: memref<16x1024xf32, #tpu.memory_space<vmem>>) attributes {dimension_semantics = [#tpu.dimension_semantics<parallel>, #tpu.dimension_semantics<arbitrary>], iteration_bounds = array<i64: 1, 4>, scalar_prefetch = 0 : i64, scratch_operands = 0 : i64, tpu.core_type = #tpu.core_type<tc>, window_params = [{transform_indices = @transform_0, window_bounds = array<i64: 16, 1024>}, {pipeline_mode = #tpu.pipeline_mode<synchronous>, transform_indices = @transform_1, window_bounds = array<i64: 1024, 4096>}, {pipeline_mode = #tpu.pipeline_mode<synchronous>, transform_indices = @transform_2, window_bounds = array<i64: 1, 4096>}, {pipeline_mode = #tpu.pipeline_mode<synchronous>, transform_indices = @transform_3, window_bounds = array<i64: 4096, 1024>}, {pipeline_mode = #tpu.pipeline_mode<synchronous>, transform_indices = @transform_4, window_bounds = array<i64: 1, 1024>}, {transform_indices = @transform_5, window_bounds = array<i64: 16, 1024>}]} {
    %c0_i32 = arith.constant 0 : i32
    %0 = arith.cmpi eq, %arg1, %c0_i32 : i32
    %1 = arith.extui %0 : i1 to i32
    %c0_i32_0 = arith.constant 0 : i32
    %2 = arith.cmpi ne, %1, %c0_i32_0 : i32
    scf.if %2 {
      %cst_14 = arith.constant 0.000000e+00 : f32
      %31 = vector.broadcast %cst_14 : f32 to vector<16x1024xf32>
      %c0_15 = arith.constant 0 : index
      %c0_16 = arith.constant 0 : index
      %32 = vector.load %arg7[%c0_15, %c0_16] : memref<16x1024xf32, #tpu.memory_space<vmem>>, vector<16x1024xf32>
      tpu.vector_store %arg7[%c0_15, %c0_16], %31 {strides = array<i32>} : memref<16x1024xf32, #tpu.memory_space<vmem>>, vector<16x1024xf32>,
    } else {
    }
    %c1024_i32 = arith.constant 1024 : i32
    %3 = arith.muli %arg1, %c1024_i32 : i32
    %4 = tpu.assume_multiple %3, 1024 : i32
    %c0 = arith.constant 0 : index
    %5 = arith.index_cast %4 : i32 to index
    %6 = vector.load %arg3[%c0, %5] : memref<1024x4096xbf16, #tpu.memory_space<vmem>>, vector<1024x1024xbf16>
    %c0_1 = arith.constant 0 : index
    %7 = arith.index_cast %4 : i32 to index
    %8 = vector.load %arg4[%c0_1, %7] : memref<1x4096xf32, #tpu.memory_space<vmem>>, vector<1x1024xf32>
    %9 = arith.index_cast %4 : i32 to index
    %c0_2 = arith.constant 0 : index
    %10 = vector.load %arg5[%9, %c0_2] : memref<4096x1024xbf16, #tpu.memory_space<vmem>>, vector<1024x1024xbf16>
    %c0_3 = arith.constant 0 : index
    %c0_4 = arith.constant 0 : index
    %11 = vector.load %arg2[%c0_3, %c0_4] : memref<16x1024xbf16, #tpu.memory_space<vmem>>, vector<16x1024xbf16>
    %cst = arith.constant dense<0.000000e+00> : vector<16x1024xf32>
    %12 = tpu.matmul %11, %6, %cst {dimension_numbers = #tpu.dot_dimension_numbers<[1], [0], [0], [1], [0, 0, 1, 1], [], []>} : vector<16x1024xbf16>, vector<1024x1024xbf16>, vector<16x1024xf32> -> vector<16x1024xf32>
    %13 = vector.broadcast %8 : vector<1x1024xf32> to vector<16x1024xf32>
    %14 = arith.addf %12, %13 : vector<16x1024xf32>
    %cst_5 = arith.constant 5.000000e-01 : f32
    %15 = vector.broadcast %cst_5 : f32 to vector<16x1024xf32>
    %16 = arith.mulf %14, %15 : vector<16x1024xf32>
    %cst_6 = arith.constant 0.707106769 : f32
    %17 = vector.broadcast %cst_6 : f32 to vector<16x1024xf32>
    %18 = arith.mulf %14, %17 : vector<16x1024xf32>
    %19 = math.erf %18 : vector<16x1024xf32>
    %cst_7 = arith.constant 1.000000e+00 : f32
    %20 = vector.broadcast %cst_7 : f32 to vector<16x1024xf32>
    %21 = arith.addf %20, %19 : vector<16x1024xf32>
    %22 = arith.mulf %16, %21 : vector<16x1024xf32>
    %c0_8 = arith.constant 0 : index
    %c0_9 = arith.constant 0 : index
    %23 = vector.load %arg7[%c0_8, %c0_9] : memref<16x1024xf32, #tpu.memory_space<vmem>>, vector<16x1024xf32>
    %24 = arith.truncf %22 : vector<16x1024xf32> to vector<16x1024xbf16>
    %cst_10 = arith.constant dense<0.000000e+00> : vector<16x1024xf32>
    %25 = tpu.matmul %24, %10, %cst_10 {dimension_numbers = #tpu.dot_dimension_numbers<[1], [0], [0], [1], [0, 0, 1, 1], [], []>} : vector<16x1024xbf16>, vector<1024x1024xbf16>, vector<16x1024xf32> -> vector<16x1024xf32>
    %26 = arith.addf %23, %25 : vector<16x1024xf32>
    %c0_11 = arith.constant 0 : index
    %c0_12 = arith.constant 0 : index
    %27 = vector.load %arg7[%c0_11, %c0_12] : memref<16x1024xf32, #tpu.memory_space<vmem>>, vector<16x1024xf32>
    tpu.vector_store %arg7[%c0_11, %c0_12], %26 {strides = array<i32>} : memref<16x1024xf32, #tpu.memory_space<vmem>>, vector<16x1024xf32>,
    %c3_i32 = arith.constant 3 : i32
    %28 = arith.cmpi eq, %arg1, %c3_i32 : i32
    %29 = arith.extui %28 : i1 to i32
    %c0_i32_13 = arith.constant 0 : i32
    %30 = arith.cmpi ne, %29, %c0_i32_13 : i32
    scf.if %30 {
      %c0_14 = arith.constant 0 : index
      %c0_15 = arith.constant 0 : index
      %31 = vector.load %arg7[%c0_14, %c0_15] : memref<16x1024xf32, #tpu.memory_space<vmem>>, vector<16x1024xf32>
      %c0_16 = arith.constant 0 : index
      %c0_17 = arith.constant 0 : index
      %32 = vector.load %arg6[%c0_16, %c0_17] : memref<1x1024xf32, #tpu.memory_space<vmem>>, vector<1x1024xf32>
      %33 = vector.broadcast %32 : vector<1x1024xf32> to vector<16x1024xf32>
      %34 = arith.addf %31, %33 : vector<16x1024xf32>
      %c0_18 = arith.constant 0 : index
      %c0_19 = arith.constant 0 : index
      %35 = vector.load %arg7[%c0_18, %c0_19] : memref<16x1024xf32, #tpu.memory_space<vmem>>, vector<16x1024xf32>
      tpu.vector_store %arg7[%c0_18, %c0_19], %34 {strides = array<i32>} : memref<16x1024xf32, #tpu.memory_space<vmem>>, vector<16x1024xf32>,
    } else {
    }
    return
  }
  func.func @transform_0(%arg0: i32, %arg1: i32) -> (i32, i32) {
    %c0_i32 = arith.constant 0 : i32
    %c0_i32_0 = arith.constant 0 : i32
    return %arg0, %c0_i32 : i32, i32
  }
  func.func @transform_1(%arg0: i32, %arg1: i32) -> (i32, i32) {
    %c0_i32 = arith.constant 0 : i32
    %c0_i32_0 = arith.constant 0 : i32
    %c0_i32_1 = arith.constant 0 : i32
    return %c0_i32, %c0_i32_0 : i32, i32
  }
  func.func @transform_2(%arg0: i32, %arg1: i32) -> (i32, i32) {
    %c0_i32 = arith.constant 0 : i32
    %c0_i32_0 = arith.constant 0 : i32
    %c0_i32_1 = arith.constant 0 : i32
    return %c0_i32, %c0_i32_0 : i32, i32
  }
  func.func @transform_3(%arg0: i32, %arg1: i32) -> (i32, i32) {
    %c0_i32 = arith.constant 0 : i32
    %c0_i32_0 = arith.constant 0 : i32
    %c0_i32_1 = arith.constant 0 : i32
    return %c0_i32, %c0_i32_0 : i32, i32
  }
  func.func @transform_4(%arg0: i32, %arg1: i32) -> (i32, i32) {
    %c0_i32 = arith.constant 0 : i32
    %c0_i32_0 = arith.constant 0 : i32
    %c0_i32_1 = arith.constant 0 : i32
    return %c0_i32, %c0_i32_0 : i32, i32
  }
  func.func @transform_5(%arg0: i32, %arg1: i32) -> (i32, i32) {
    %c0_i32 = arith.constant 0 : i32
    %c0_i32_0 = arith.constant 0 : i32
    return %arg0, %c0_i32 : i32, i32
  }
}

</mosaic_0001>

<llo_original>
// kernel: tpu_custom_call.1
$region0: #{tpu_custom_call.1}
  #allocation0 [shape = 'u32[]', space=smem, size = 0x4, offset = 0x4, fixed_abs, tag = 'smem constant byte address 0x4 - core index']
  #allocation1 [shape = 'u32[144,128]{1,0:T(1,128)}', space=vmem, size = 0x12000, scoped, tag = 'internal scratch']
  %s0 = inlined_call_operand.hbm [shape: bf16[16,1024], index: 0, kind: input, shape index: {}]
  %s1 = inlined_call_operand.hbm [shape: bf16[1024,4096], index: 1, kind: input, shape index: {}]
  %s2 = inlined_call_operand.hbm [shape: f32[1,4096], index: 2, kind: input, shape index: {}]
  %s3 = inlined_call_operand.hbm [shape: bf16[4096,1024], index: 3, kind: input, shape index: {}]
  %s4 = inlined_call_operand.hbm [shape: f32[1,1024], index: 4, kind: input, shape index: {}]
  %s5 = inlined_call_operand.hbm [shape: f32[16,1024], index: 5, kind: output, shape index: {}]
  %s6 = sld [smem:[#allocation0]]
  $region81: #{tpu_custom_call.1} parent=0
    _
  %s8 = ssub.s32 1, %s6
  %s9 = scalar_select 0, %s8, %s6
  $region1: #{tpu_custom_call.1} parent=0
    #allocation2 [shape = 'u8[32768]{0}', space=vmem, size = 0x8000, scoped, tag = 'input window, operand 0, single buffered']
    #allocation3 [shape = 's32[2]{0}', space=sflag, size = 0x8, scoped, tag = 'scoped memory for tpu_custom_call.1']
    #allocation4 [shape = 's32[2]{0}', space=sflag, size = 0x8, scoped, tag = 'scoped memory for tpu_custom_call.1']
    #allocation5 [shape = 'u8[8388608]{0}', space=vmem, size = 0x800000, scoped, tag = 'input window, operand 1, single buffered']
    #allocation6 [shape = 's32[1]{0}', space=sflag, size = 0x4, scoped, tag = 'scoped memory for tpu_custom_call.1']
    #allocation7 [shape = 'u8[16384]{0}', space=vmem, size = 0x4000, scoped, tag = 'input window, operand 2, single buffered']
    #allocation8 [shape = 'u8[8388608]{0}', space=vmem, size = 0x800000, scoped, tag = 'input window, operand 3, single buffered']
    #allocation9 [shape = 's32[1]{0}', space=sflag, size = 0x4, scoped, tag = 'scoped memory for tpu_custom_call.1']
    #allocation10 [shape = 'u8[4096]{0}', space=vmem, size = 0x1000, scoped, tag = 'input window, operand 4, single buffered']
    #allocation11 [shape = 'u8[65536]{0}', space=vmem, size = 0x10000, scoped, tag = 'output window, operand 0, single buffered']
    %10 = vsyncpa [#allocation3], 0
    %11 = vsyncpa [#allocation6], 0
    %12 = vsyncpa [#allocation9], 0
    %13 = vsyncpa [#allocation4], 0
    loop: start=0, step=1, limit=6
    $region2: #{tpu_custom_call.1} parent=1 // loop_pre_header
      _
    $region3: #{tpu_custom_call.1} parent=1 // loop_header
      %s15 = sphi 0, %s19
      %p16 = scmp.ge.s32.totalorder %s15, 6
      %s22 = sphi 0, %s34
      %s23 = sphi 0, %s30
      %s24 = sphi 0, %s22
      %s25 = sphi 0, %s23
      %s26 = sphi 0, %s24
      %s27 = sphi 0, %s25
      %s37 = sphi 0, %s39
      %s40 = sphi 0, %s37
      %s41 = sphi 0, %s40
      %s57 = sphi 0, %s41
      %s61 = sphi 0, %s61
      %s63 = sphi 0, %s61
      %s64 = sphi 0, %s63
      %s78 = sphi 0, %s64
      %s82 = sphi 0, %s82
      %s84 = sphi 0, %s82
      %s85 = sphi 0, %s84
      %s99 = sphi 0, %s85
      %s103 = sphi 0, %s103
      %s105 = sphi 0, %s103
      %s106 = sphi 0, %s105
      %s120 = sphi 0, %s106
      %s124 = sphi 0, %s124
      %s126 = sphi 0, %s124
      %s127 = sphi 0, %s126
      %s141 = sphi 0, %s127
      %s147 = sphi 0, %s149
      %s150 = sphi 0, %s147
      %s151 = sphi 0, %s150
      %s167 = sphi 0, %s151
    $region4: #{tpu_custom_call.1} parent=1 // loop_header_branch
      %18 = sbr.rel (%p16) target = $region8
    $region5: #{tpu_custom_call.1} parent=1 // loop_body
      %s20 = ssub.s32 %s15, 1
      %s21 = ssub.s32 %s15, 2
      %s28 = sadd.s32 1, %s23
      %p29 = scmp.ge.s32.totalorder %s28, 4
      %s30 = scalar_select %p29, 0, %s28
      %s31 = sadd.s32 1, %s22
      %s32 = scalar_select %p29, %s31, %s22
      %p33 = scmp.ge.s32.totalorder %s32, 1
      %s34 = scalar_select %p33, 0, %s32
      %s35 = ssub.s32 %s22, %s34
      %p36 = scmp.eq.s32.totalorder %s35, 0
      %s38 = sadd.s32 %s37, 1
      %s39 = scalar_select %p36, %s37, %s38
      %p42 = pneg %p36
      %p43 = scmp.eq.s32.totalorder %s15, 3
      %p44 = por %p42, %p43
      %p45 = scmp.ne.s32.totalorder %s37, %s40
      %p46 = scmp.eq.s32.totalorder %s15, 0
      %p47 = por %p45, %p46
      %p48 = scmp.ne.s32.totalorder %s37, %s40
      %p49 = scmp.eq.s32.totalorder %s20, 3
      %p50 = por %p48, %p49
      %p51 = scmp.ne.s32.totalorder %s40, %s41
      %p52 = scmp.eq.s32.totalorder %s20, 0
      %p53 = por %p51, %p52
      %p54 = scmp.ne.s32.totalorder %s40, %s41
      %p55 = scmp.eq.s32.totalorder %s21, 3
      %p56 = por %p54, %p55
      %p58 = scmp.ne.s32.totalorder %s41, %s57
      %p59 = scmp.eq.s32.totalorder %s21, 0
      %p60 = por %p58, %p59
      %s62 = sadd.s32 %s61, 1
      %p65 = scmp.eq.s32.totalorder %s15, 3
      %p66 = scmp.ne.s32.totalorder %s61, %s63
      %p67 = scmp.eq.s32.totalorder %s15, 0
      %p68 = por %p66, %p67
      %p69 = scmp.ne.s32.totalorder %s61, %s63
      %p70 = scmp.eq.s32.totalorder %s20, 3
      %p71 = por %p69, %p70
      %p72 = scmp.ne.s32.totalorder %s63, %s64
      %p73 = scmp.eq.s32.totalorder %s20, 0
      %p74 = por %p72, %p73
      %p75 = scmp.ne.s32.totalorder %s63, %s64
      %p76 = scmp.eq.s32.totalorder %s21, 3
      %p77 = por %p75, %p76
      %p79 = scmp.ne.s32.totalorder %s64, %s78
      %p80 = scmp.eq.s32.totalorder %s21, 0
      %p81 = por %p79, %p80
      %s83 = sadd.s32 %s82, 1
      %p86 = scmp.eq.s32.totalorder %s15, 3
      %p87 = scmp.ne.s32.totalorder %s82, %s84
      %p88 = scmp.eq.s32.totalorder %s15, 0
      %p89 = por %p87, %p88
      %p90 = scmp.ne.s32.totalorder %s82, %s84
      %p91 = scmp.eq.s32.totalorder %s20, 3
      %p92 = por %p90, %p91
      %p93 = scmp.ne.s32.totalorder %s84, %s85
      %p94 = scmp.eq.s32.totalorder %s20, 0
      %p95 = por %p93, %p94
      %p96 = scmp.ne.s32.totalorder %s84, %s85
      %p97 = scmp.eq.s32.totalorder %s21, 3
      %p98 = por %p96, %p97
      %p100 = scmp.ne.s32.totalorder %s85, %s99
      %p101 = scmp.eq.s32.totalorder %s21, 0
      %p102 = por %p100, %p101
      %s104 = sadd.s32 %s103, 1
      %p107 = scmp.eq.s32.totalorder %s15, 3
      %p108 = scmp.ne.s32.totalorder %s103, %s105
      %p109 = scmp.eq.s32.totalorder %s15, 0
      %p110 = por %p108, %p109
      %p111 = scmp.ne.s32.totalorder %s103, %s105
      %p112 = scmp.eq.s32.totalorder %s20, 3
      %p113 = por %p111, %p112
      %p114 = scmp.ne.s32.totalorder %s105, %s106
      %p115 = scmp.eq.s32.totalorder %s20, 0
      %p116 = por %p114, %p115
      %p117 = scmp.ne.s32.totalorder %s105, %s106
      %p118 = scmp.eq.s32.totalorder %s21, 3
      %p119 = por %p117, %p118
      %p121 = scmp.ne.s32.totalorder %s106, %s120
      %p122 = scmp.eq.s32.totalorder %s21, 0
      %p123 = por %p121, %p122
      %s125 = sadd.s32 %s124, 1
      %p128 = scmp.eq.s32.totalorder %s15, 3
      %p129 = scmp.ne.s32.totalorder %s124, %s126
      %p130 = scmp.eq.s32.totalorder %s15, 0
      %p131 = por %p129, %p130
      %p132 = scmp.ne.s32.totalorder %s124, %s126
      %p133 = scmp.eq.s32.totalorder %s20, 3
      %p134 = por %p132, %p133
      %p135 = scmp.ne.s32.totalorder %s126, %s127
      %p136 = scmp.eq.s32.totalorder %s20, 0
      %p137 = por %p135, %p136
      %p138 = scmp.ne.s32.totalorder %s126, %s127
      %p139 = scmp.eq.s32.totalorder %s21, 3
      %p140 = por %p138, %p139
      %p142 = scmp.ne.s32.totalorder %s127, %s141
      %p143 = scmp.eq.s32.totalorder %s21, 0
      %p144 = por %p142, %p143
      %s145 = ssub.s32 %s22, %s34
      %p146 = scmp.eq.s32.totalorder %s145, 0
      %s148 = sadd.s32 %s147, 1
      %s149 = scalar_select %p146, %s147, %s148
      %p152 = pneg %p146
      %p153 = scmp.eq.s32.totalorder %s15, 3
      %p154 = por %p152, %p153
      %p155 = scmp.ne.s32.totalorder %s147, %s150
      %p156 = scmp.eq.s32.totalorder %s15, 0
      %p157 = por %p155, %p156
      %p158 = scmp.ne.s32.totalorder %s147, %s150
      %p159 = scmp.eq.s32.totalorder %s20, 3
      %p160 = por %p158, %p159
      %p161 = scmp.ne.s32.totalorder %s150, %s151
      %p162 = scmp.eq.s32.totalorder %s20, 0
      %p163 = por %p161, %p162
      %p164 = scmp.ne.s32.totalorder %s150, %s151
      %p165 = scmp.eq.s32.totalorder %s21, 3
      %p166 = por %p164, %p165
      %p168 = scmp.ne.s32.totalorder %s151, %s167
      %p169 = scmp.eq.s32.totalorder %s21, 0
      %p170 = por %p168, %p169
      %p171 = scmp.le.s32.totalorder 1, %s15
      %p172 = scmp.lt.s32.totalorder %s15, 5
      %p173 = pnand %p171, %p172
      %p174 = pneg %p173
      // Predicated region
      $region9: #{tpu_custom_call.1} parent=5 // pred_check
        _
      $region10: #{tpu_custom_call.1} parent=5 // pred_check_branch
        %176 = sbr.rel (%p173) target = $region12
      $region11: #{tpu_custom_call.1} parent=5 // pred_region
        %s177 = ssub.s32 %s15, 1
        // Predicated region
        $region13: #{tpu_custom_call.1} parent=11 // pred_check
          %p178 = pneg %p53
        $region14: #{tpu_custom_call.1} parent=11 // pred_check_branch
          %180 = sbr.rel (%p178) target = $region16
        $region15: #{tpu_custom_call.1} parent=11 // pred_region
          %s181 = smul.u32 2, %s24
          %s183 = ssub.s32 1024, 1024
          %184 = vsyncadd [#allocation3], %s183
          %s185 = smul.addr %s181, 8
          %s186 = smul.addr %s185, 64
          %s187 = scalar_lea.hbm %s0, %s186
          %s188 = sshll.u32 [#allocation2], 4
          %s189 = int_to_ptr.vmem [resolvable:$true] %s188
          %194 = dma.hbm_to_vmem [thread:$0]  %s187, 1024, %s189, [#allocation3], 512, 512, 32
        $region16: #{tpu_custom_call.1} parent=11 // pred_fallthru
          _
        // Predicated region
        $region17: #{tpu_custom_call.1} parent=11 // pred_check
          %p195 = pneg %p74
        $region18: #{tpu_custom_call.1} parent=11 // pred_check_branch
          %197 = sbr.rel (%p195) target = $region20
        $region19: #{tpu_custom_call.1} parent=11 // pred_region
          %s199 = ssub.s32 262144, 262144
          %200 = vsyncadd [#allocation6], %s199
          %s201 = sshll.u32 [#allocation5], 4
          %s202 = int_to_ptr.vmem [resolvable:$true] %s201
          %207 = dma.hbm_to_vmem [thread:$0]  %s1, 262144, %s202, [#allocation6], 2048, 2048, 128
        $region20: #{tpu_custom_call.1} parent=11 // pred_fallthru
          _
        // Predicated region
        $region21: #{tpu_custom_call.1} parent=11 // pred_check
          %p208 = pneg %p95
        $region22: #{tpu_custom_call.1} parent=11 // pred_check_branch
          %210 = sbr.rel (%p208) target = $region24
        $region23: #{tpu_custom_call.1} parent=11 // pred_region
          %s212 = ssub.s32 512, 512
          %213 = vsyncadd [#allocation6], %s212
          %s215 = sshll.u32 [#allocation7], 4
          %s216 = int_to_ptr.vmem [resolvable:$true] %s215
          %218 = dma.hbm_to_vmem [thread:$0]  %s2, 512, %s216, [#allocation6]
        $region24: #{tpu_custom_call.1} parent=11 // pred_fallthru
          _
        // Predicated region
        $region25: #{tpu_custom_call.1} parent=11 // pred_check
          %p219 = pneg %p116
        $region26: #{tpu_custom_call.1} parent=11 // pred_check_branch
          %221 = sbr.rel (%p219) target = $region28
        $region27: #{tpu_custom_call.1} parent=11 // pred_region
          %s223 = ssub.s32 262144, 262144
          %224 = vsyncadd [#allocation9], %s223
          %s225 = sshll.u32 [#allocation8], 4
          %s226 = int_to_ptr.vmem [resolvable:$true] %s225
          %231 = dma.hbm_to_vmem [thread:$0]  %s3, 262144, %s226, [#allocation9], 512, 512, 32
        $region28: #{tpu_custom_call.1} parent=11 // pred_fallthru
          _
        // Predicated region
        $region29: #{tpu_custom_call.1} parent=11 // pred_check
          %p232 = pneg %p137
        $region30: #{tpu_custom_call.1} parent=11 // pred_check_branch
          %234 = sbr.rel (%p232) target = $region32
        $region31: #{tpu_custom_call.1} parent=11 // pred_region
          %s236 = ssub.s32 128, 128
          %237 = vsyncadd [#allocation9], %s236
          %s239 = sshll.u32 [#allocation10], 4
          %s240 = int_to_ptr.vmem [resolvable:$true] %s239
          %242 = dma.hbm_to_vmem [thread:$0]  %s4, 128, %s240, [#allocation9]
        $region32: #{tpu_custom_call.1} parent=11 // pred_fallthru
          _
      $region12: #{tpu_custom_call.1} parent=5 // pred_fallthru
        _
      %p243 = scmp.lt.s32.totalorder %s15, 4
      // Predicated region
      $region33: #{tpu_custom_call.1} parent=5 // pred_check
        %p244 = pneg %p243
      $region34: #{tpu_custom_call.1} parent=5 // pred_check_branch
        %246 = sbr.rel (%p244) target = $region36
      $region35: #{tpu_custom_call.1} parent=5 // pred_region
        _
      $region36: #{tpu_custom_call.1} parent=5 // pred_fallthru
        _
      %p247 = scmp.le.s32.totalorder 1, %s15
      %p248 = scmp.lt.s32.totalorder %s15, 5
      %p249 = pnand %p247, %p248
      %p250 = pneg %p249
      // Predicated region
      $region37: #{tpu_custom_call.1} parent=5 // pred_check
        _
      $region38: #{tpu_custom_call.1} parent=5 // pred_check_branch
        %252 = sbr.rel (%p249) target = $region40
      $region39: #{tpu_custom_call.1} parent=5 // pred_region
        %s253 = ssub.s32 %s15, 1
        // Predicated region
        $region41: #{tpu_custom_call.1} parent=39 // pred_check
          %p254 = pneg %p53
        $region42: #{tpu_custom_call.1} parent=39 // pred_check_branch
          %256 = sbr.rel (%p254) target = $region44
        $region43: #{tpu_custom_call.1} parent=39 // pred_region
          %257 = dma.done [#allocation3], 1024
        $region44: #{tpu_custom_call.1} parent=39 // pred_fallthru
          _
        // Predicated region
        $region45: #{tpu_custom_call.1} parent=39 // pred_check
          %p258 = pneg %p74
        $region46: #{tpu_custom_call.1} parent=39 // pred_check_branch
          %260 = sbr.rel (%p258) target = $region48
        $region47: #{tpu_custom_call.1} parent=39 // pred_region
          %261 = dma.done [#allocation6], 262144
        $region48: #{tpu_custom_call.1} parent=39 // pred_fallthru
          _
        // Predicated region
        $region49: #{tpu_custom_call.1} parent=39 // pred_check
          %p262 = pneg %p95
        $region50: #{tpu_custom_call.1} parent=39 // pred_check_branch
          %264 = sbr.rel (%p262) target = $region52
        $region51: #{tpu_custom_call.1} parent=39 // pred_region
          %265 = dma.done [#allocation6], 512
        $region52: #{tpu_custom_call.1} parent=39 // pred_fallthru
          _
        // Predicated region
        $region53: #{tpu_custom_call.1} parent=39 // pred_check
          %p266 = pneg %p116
        $region54: #{tpu_custom_call.1} parent=39 // pred_check_branch
          %268 = sbr.rel (%p266) target = $region56
        $region55: #{tpu_custom_call.1} parent=39 // pred_region
          %269 = dma.done [#allocation9], 262144
        $region56: #{tpu_custom_call.1} parent=39 // pred_fallthru
          _
        // Predicated region
        $region57: #{tpu_custom_call.1} parent=39 // pred_check
          %p270 = pneg %p137
        $region58: #{tpu_custom_call.1} parent=39 // pred_check_branch
          %272 = sbr.rel (%p270) target = $region60
        $region59: #{tpu_custom_call.1} parent=39 // pred_region
          %273 = dma.done [#allocation9], 128
        $region60: #{tpu_custom_call.1} parent=39 // pred_fallthru
          _
        %p274 = pneg %p53
        %p275 = pneg %p50
        %p276 = pneg %p74
        %p277 = pneg %p71
        %p278 = pneg %p95
        %p279 = pneg %p92
        %p280 = pneg %p116
        %p281 = pneg %p113
        %p282 = pneg %p137
        %p283 = pneg %p134
        %p284 = pneg %p163
        %p285 = pneg %p160
        %s286 = smul.u32 2, %s24
        %s287 = smul.u32 2, %s24
        %p288 = scmp.eq.s32.totalorder %s25, 0
        // Predicated region
        $region61: #{tpu_custom_call.1} parent=39 // pred_check
          %p289 = pneg %p288
        $region62: #{tpu_custom_call.1} parent=39 // pred_check_branch
          %291 = sbr.rel (%p289) target = $region64
        $region63: #{tpu_custom_call.1} parent=39 // pred_region
          %292 = vst [vmem:[#allocation11] sm:$0xff] 0.0
          %293 = vst [vmem:[#allocation11 + $0x8] sm:$0xff] 0.0
          %294 = vst [vmem:[#allocation11 + $0x10] sm:$0xff] 0.0
          %295 = vst [vmem:[#allocation11 + $0x18] sm:$0xff] 0.0
          %296 = vst [vmem:[#allocation11 + $0x20] sm:$0xff] 0.0
          %297 = vst [vmem:[#allocation11 + $0x28] sm:$0xff] 0.0
          %298 = vst [vmem:[#allocation11 + $0x30] sm:$0xff] 0.0
          %299 = vst [vmem:[#allocation11 + $0x38] sm:$0xff] 0.0
          %300 = vst [vmem:[#allocation11 + $0x40] sm:$0xff] 0.0
          %301 = vst [vmem:[#allocation11 + $0x48] sm:$0xff] 0.0
          %302 = vst [vmem:[#allocation11 + $0x50] sm:$0xff] 0.0
          %303 = vst [vmem:[#allocation11 + $0x58] sm:$0xff] 0.0
          %304 = vst [vmem:[#allocation11 + $0x60] sm:$0xff] 0.0
          %305 = vst [vmem:[#allocation11 + $0x68] sm:$0xff] 0.0
          %306 = vst [vmem:[#allocation11 + $0x70] sm:$0xff] 0.0
          %307 = vst [vmem:[#allocation11 + $0x78] sm:$0xff] 0.0
        $region64: #{tpu_custom_call.1} parent=39 // pred_fallthru
          _
        %s308 = smul.u32 %s25, 1024
        %s309 = sshra.s32 %s308, 7
        %s310 = sand.u32 %s308, 127
        %s311 = smul.addr %s309, 4
        %s312 = scalar_lea.vmem [#allocation5], %s311
        %v313 = vld [vmem:[%s312] sm:$0xff]
        %v314 = vld [vmem:[%s312 + $0x8] sm:$0xff]
        %v315 = vld [vmem:[%s312 + $0x10] sm:$0xff]
        %v316 = vld [vmem:[%s312 + $0x18] sm:$0xff]
        %v317 = vld [vmem:[%s312 + $0x80] sm:$0xff]
        %v318 = vld [vmem:[%s312 + $0x88] sm:$0xff]
        %v319 = vld [vmem:[%s312 + $0x90] sm:$0xff]
        %v320 = vld [vmem:[%s312 + $0x98] sm:$0xff]
        %v321 = vld [vmem:[%s312 + $0x100] sm:$0xff]
        %v322 = vld [vmem:[%s312 + $0x108] sm:$0xff]
        %v323 = vld [vmem:[%s312 + $0x110] sm:$0xff]
        %v324 = vld [vmem:[%s312 + $0x118] sm:$0xff]
        %v325 = vld [vmem:[%s312 + $0x180] sm:$0xff]
        %v326 = vld [vmem:[%s312 + $0x188] sm:$0xff]
        %v327 = vld [vmem:[%s312 + $0x190] sm:$0xff]
        %v328 = vld [vmem:[%s312 + $0x198] sm:$0xff]
        %v329 = vld [vmem:[%s312 + $0x200] sm:$0xff]
        %v330 = vld [vmem:[%s312 + $0x208] sm:$0xff]
        %v331 = vld [vmem:[%s312 + $0x210] sm:$0xff]
        %v332 = vld [vmem:[%s312 + $0x218] sm:$0xff]
        %v333 = vld [vmem:[%s312 + $0x280] sm:$0xff]
        %v334 = vld [vmem:[%s312 + $0x288] sm:$0xff]
        %v335 = vld [vmem:[%s312 + $0x290] sm:$0xff]
        %v336 = vld [vmem:[%s312 + $0x298] sm:$0xff]
        %v337 = vld [vmem:[%s312 + $0x300] sm:$0xff]
        %v338 = vld [vmem:[%s312 + $0x308] sm:$0xff]
        %v339 = vld [vmem:[%s312 + $0x310] sm:$0xff]
        %v340 = vld [vmem:[%s312 + $0x318] sm:$0xff]
        %v341 = vld [vmem:[%s312 + $0x380] sm:$0xff]
        %v342 = vld [vmem:[%s312 + $0x388] sm:$0xff]
        %v343 = vld [vmem:[%s312 + $0x390] sm:$0xff]
        %v344 = vld [vmem:[%s312 + $0x398] sm:$0xff]
        %v345 = vld [vmem:[%s312 + $0x400] sm:$0xff]
        %v346 = vld [vmem:[%s312 + $0x408] sm:$0xff]
        %v347 = vld [vmem:[%s312 + $0x410] sm:$0xff]
        %v348 = vld [vmem:[%s312 + $0x418] sm:$0xff]
        %v349 = vld [vmem:[%s312 + $0x480] sm:$0xff]
        %v350 = vld [vmem:[%s312 + $0x488] sm:$0xff]
        %v351 = vld [vmem:[%s312 + $0x490] sm:$0xff]
        %v352 = vld [vmem:[%s312 + $0x498] sm:$0xff]
        %v353 = vld [vmem:[%s312 + $0x500] sm:$0xff]
        %v354 = vld [vmem:[%s312 + $0x508] sm:$0xff]
        %v355 = vld [vmem:[%s312 + $0x510] sm:$0xff]
        %v356 = vld [vmem:[%s312 + $0x518] sm:$0xff]
        %v357 = vld [vmem:[%s312 + $0x580] sm:$0xff]
        %v358 = vld [vmem:[%s312 + $0x588] sm:$0xff]
        %v359 = vld [vmem:[%s312 + $0x590] sm:$0xff]
        %v360 = vld [vmem:[%s312 + $0x598] sm:$0xff]
        %v361 = vld [vmem:[%s312 + $0x600] sm:$0xff]
        %v362 = vld [vmem:[%s312 + $0x608] sm:$0xff]
        %v363 = vld [vmem:[%s312 + $0x610] sm:$0xff]
        %v364 = vld [vmem:[%s312 + $0x618] sm:$0xff]
        %v365 = vld [vmem:[%s312 + $0x680] sm:$0xff]
        %v366 = vld [vmem:[%s312 + $0x688] sm:$0xff]
        %v367 = vld [vmem:[%s312 + $0x690] sm:$0xff]
        %v368 = vld [vmem:[%s312 + $0x698] sm:$0xff]
        %v369 = vld [vmem:[%s312 + $0x700] sm:$0xff]
        %v370 = vld [vmem:[%s312 + $0x708] sm:$0xff]
        %v371 = vld [vmem:[%s312 + $0x710] sm:$0xff]
        %v372 = vld [vmem:[%s312 + $0x718] sm:$0xff]
        %v373 = vld [vmem:[%s312 + $0x780] sm:$0xff]
        %v374 = vld [vmem:[%s312 + $0x788] sm:$0xff]
        %v375 = vld [vmem:[%s312 + $0x790] sm:$0xff]
        %v376 = vld [vmem:[%s312 + $0x798] sm:$0xff]
        %v377 = vld [vmem:[%s312 + $0x800] sm:$0xff]
        %v378 = vld [vmem:[%s312 + $0x808] sm:$0xff]
        %v379 = vld [vmem:[%s312 + $0x810] sm:$0xff]
        %v380 = vld [vmem:[%s312 + $0x818] sm:$0xff]
        %v381 = vld [vmem:[%s312 + $0x880] sm:$0xff]
        %v382 = vld [vmem:[%s312 + $0x888] sm:$0xff]
        %v383 = vld [vmem:[%s312 + $0x890] sm:$0xff]
        %v384 = vld [vmem:[%s312 + $0x898] sm:$0xff]
        %v385 = vld [vmem:[%s312 + $0x900] sm:$0xff]
        %v386 = vld [vmem:[%s312 + $0x908] sm:$0xff]
        %v387 = vld [vmem:[%s312 + $0x910] sm:$0xff]
        %v388 = vld [vmem:[%s312 + $0x918] sm:$0xff]
        %v389 = vld [vmem:[%s312 + $0x980] sm:$0xff]
        %v390 = vld [vmem:[%s312 + $0x988] sm:$0xff]
        %v391 = vld [vmem:[%s312 + $0x990] sm:$0xff]
        %v392 = vld [vmem:[%s312 + $0x998] sm:$0xff]
        %v393 = vld [vmem:[%s312 + $0xa00] sm:$0xff]
        %v394 = vld [vmem:[%s312 + $0xa08] sm:$0xff]
        %v395 = vld [vmem:[%s312 + $0xa10] sm:$0xff]
        %v396 = vld [vmem:[%s312 + $0xa18] sm:$0xff]
        %v397 = vld [vmem:[%s312 + $0xa80] sm:$0xff]
        %v398 = vld [vmem:[%s312 + $0xa88] sm:$0xff]
        %v399 = vld [vmem:[%s312 + $0xa90] sm:$0xff]
        %v400 = vld [vmem:[%s312 + $0xa98] sm:$0xff]
        %v401 = vld [vmem:[%s312 + $0xb00] sm:$0xff]
        %v402 = vld [vmem:[%s312 + $0xb08] sm:$0xff]
        %v403 = vld [vmem:[%s312 + $0xb10] sm:$0xff]
        %v404 = vld [vmem:[%s312 + $0xb18] sm:$0xff]
        %v405 = vld [vmem:[%s312 + $0xb80] sm:$0xff]
        %v406 = vld [vmem:[%s312 + $0xb88] sm:$0xff]
        %v407 = vld [vmem:[%s312 + $0xb90] sm:$0xff]
        %v408 = vld [vmem:[%s312 + $0xb98] sm:$0xff]
        %v409 = vld [vmem:[%s312 + $0xc00] sm:$0xff]
        %v410 = vld [vmem:[%s312 + $0xc08] sm:$0xff]
        %v411 = vld [vmem:[%s312 + $0xc10] sm:$0xff]
        %v412 = vld [vmem:[%s312 + $0xc18] sm:$0xff]
        %v413 = vld [vmem:[%s312 + $0xc80] sm:$0xff]
        %v414 = vld [vmem:[%s312 + $0xc88] sm:$0xff]
        %v415 = vld [vmem:[%s312 + $0xc90] sm:$0xff]
        %v416 = vld [vmem:[%s312 + $0xc98] sm:$0xff]
        %v417 = vld [vmem:[%s312 + $0xd00] sm:$0xff]
        %v418 = vld [vmem:[%s312 + $0xd08] sm:$0xff]
        %v419 = vld [vmem:[%s312 + $0xd10] sm:$0xff]
        %v420 = vld [vmem:[%s312 + $0xd18] sm:$0xff]
        %v421 = vld [vmem:[%s312 + $0xd80] sm:$0xff]
        %v422 = vld [vmem:[%s312 + $0xd88] sm:$0xff]
        %v423 = vld [vmem:[%s312 + $0xd90] sm:$0xff]
        %v424 = vld [vmem:[%s312 + $0xd98] sm:$0xff]
        %v425 = vld [vmem:[%s312 + $0xe00] sm:$0xff]
        %v426 = vld [vmem:[%s312 + $0xe08] sm:$0xff]
        %v427 = vld [vmem:[%s312 + $0xe10] sm:$0xff]
        %v428 = vld [vmem:[%s312 + $0xe18] sm:$0xff]
        %v429 = vld [vmem:[%s312 + $0xe80] sm:$0xff]
        %v430 = vld [vmem:[%s312 + $0xe88] sm:$0xff]
        %v431 = vld [vmem:[%s312 + $0xe90] sm:$0xff]
        %v432 = vld [vmem:[%s312 + $0xe98] sm:$0xff]
        %v433 = vld [vmem:[%s312 + $0xf00] sm:$0xff]
        %v434 = vld [vmem:[%s312 + $0xf08] sm:$0xff]
        %v435 = vld [vmem:[%s312 + $0xf10] sm:$0xff]
        %v436 = vld [vmem:[%s312 + $0xf18] sm:$0xff]
        %v437 = vld [vmem:[%s312 + $0xf80] sm:$0xff]
        %v438 = vld [vmem:[%s312 + $0xf88] sm:$0xff]
        %v439 = vld [vmem:[%s312 + $0xf90] sm:$0xff]
        %v440 = vld [vmem:[%s312 + $0xf98] sm:$0xff]
        %v441 = vld [vmem:[%s312 + $0x1000] sm:$0xff]
        %v442 = vld [vmem:[%s312 + $0x1008] sm:$0xff]
        %v443 = vld [vmem:[%s312 + $0x1010] sm:$0xff]
        %v444 = vld [vmem:[%s312 + $0x1018] sm:$0xff]
        %v445 = vld [vmem:[%s312 + $0x1080] sm:$0xff]
        %v446 = vld [vmem:[%s312 + $0x1088] sm:$0xff]
        %v447 = vld [vmem:[%s312 + $0x1090] sm:$0xff]
        %v448 = vld [vmem:[%s312 + $0x1098] sm:$0xff]
        %v449 = vld [vmem:[%s312 + $0x1100] sm:$0xff]
        %v450 = vld [vmem:[%s312 + $0x1108] sm:$0xff]
        %v451 = vld [vmem:[%s312 + $0x1110] sm:$0xff]
        %v452 = vld [vmem:[%s312 + $0x1118] sm:$0xff]
        %v453 = vld [vmem:[%s312 + $0x1180] sm:$0xff]
        %v454 = vld [vmem:[%s312 + $0x1188] sm:$0xff]
        %v455 = vld [vmem:[%s312 + $0x1190] sm:$0xff]
        %v456 = vld [vmem:[%s312 + $0x1198] sm:$0xff]
        %v457 = vld [vmem:[%s312 + $0x1200] sm:$0xff]
        %v458 = vld [vmem:[%s312 + $0x1208] sm:$0xff]
        %v459 = vld [vmem:[%s312 + $0x1210] sm:$0xff]
        %v460 = vld [vmem:[%s312 + $0x1218] sm:$0xff]
        %v461 = vld [vmem:[%s312 + $0x1280] sm:$0xff]
        %v462 = vld [vmem:[%s312 + $0x1288] sm:$0xff]
        %v463 = vld [vmem:[%s312 + $0x1290] sm:$0xff]
        %v464 = vld [vmem:[%s312 + $0x1298] sm:$0xff]
        %v465 = vld [vmem:[%s312 + $0x1300] sm:$0xff]
        %v466 = vld [vmem:[%s312 + $0x1308] sm:$0xff]
        %v467 = vld [vmem:[%s312 + $0x1310] sm:$0xff]
        %v468 = vld [vmem:[%s312 + $0x1318] sm:$0xff]
        %v469 = vld [vmem:[%s312 + $0x1380] sm:$0xff]
        %v470 = vld [vmem:[%s312 + $0x1388] sm:$0xff]
        %v471 = vld [vmem:[%s312 + $0x1390] sm:$0xff]
        %v472 = vld [vmem:[%s312 + $0x1398] sm:$0xff]
        %v473 = vld [vmem:[%s312 + $0x1400] sm:$0xff]
        %v474 = vld [vmem:[%s312 + $0x1408] sm:$0xff]
        %v475 = vld [vmem:[%s312 + $0x1410] sm:$0xff]
        %v476 = vld [vmem:[%s312 + $0x1418] sm:$0xff]
        %v477 = vld [vmem:[%s312 + $0x1480] sm:$0xff]
        %v478 = vld [vmem:[%s312 + $0x1488] sm:$0xff]
        %v479 = vld [vmem:[%s312 + $0x1490] sm:$0xff]
        %v480 = vld [vmem:[%s312 + $0x1498] sm:$0xff]
        %v481 = vld [vmem:[%s312 + $0x1500] sm:$0xff]
        %v482 = vld [vmem:[%s312 + $0x1508] sm:$0xff]
        %v483 = vld [vmem:[%s312 + $0x1510] sm:$0xff]
        %v484 = vld [vmem:[%s312 + $0x1518] sm:$0xff]
        %v485 = vld [vmem:[%s312 + $0x1580] sm:$0xff]
        %v486 = vld [vmem:[%s312 + $0x1588] sm:$0xff]
        %v487 = vld [vmem:[%s312 + $0x1590] sm:$0xff]
        %v488 = vld [vmem:[%s312 + $0x1598] sm:$0xff]
        %v489 = vld [vmem:[%s312 + $0x1600] sm:$0xff]
        %v490 = vld [vmem:[%s312 + $0x1608] sm:$0xff]
        %v491 = vld [vmem:[%s312 + $0x1610] sm:$0xff]
        %v492 = vld [vmem:[%s312 + $0x1618] sm:$0xff]
        %v493 = vld [vmem:[%s312 + $0x1680] sm:$0xff]
        %v494 = vld [vmem:[%s312 + $0x1688] sm:$0xff]
        %v495 = vld [vmem:[%s312 + $0x1690] sm:$0xff]
        %v496 = vld [vmem:[%s312 + $0x1698] sm:$0xff]
        %v497 = vld [vmem:[%s312 + $0x1700] sm:$0xff]
        %v498 = vld [vmem:[%s312 + $0x1708] sm:$0xff]
        %v499 = vld [vmem:[%s312 + $0x1710] sm:$0xff]
        %v500 = vld [vmem:[%s312 + $0x1718] sm:$0xff]
        %v501 = vld [vmem:[%s312 + $0x1780] sm:$0xff]
        %v502 = vld [vmem:[%s312 + $0x1788] sm:$0xff]
        %v503 = vld [vmem:[%s312 + $0x1790] sm:$0xff]
        %v504 = vld [vmem:[%s312 + $0x1798] sm:$0xff]
        %v505 = vld [vmem:[%s312 + $0x1800] sm:$0xff]
        %v506 = vld [vmem:[%s312 + $0x1808] sm:$0xff]
        %v507 = vld [vmem:[%s312 + $0x1810] sm:$0xff]
        %v508 = vld [vmem:[%s312 + $0x1818] sm:$0xff]
        %v509 = vld [vmem:[%s312 + $0x1880] sm:$0xff]
        %v510 = vld [vmem:[%s312 + $0x1888] sm:$0xff]
        %v511 = vld [vmem:[%s312 + $0x1890] sm:$0xff]
        %v512 = vld [vmem:[%s312 + $0x1898] sm:$0xff]
        %v513 = vld [vmem:[%s312 + $0x1900] sm:$0xff]
        %v514 = vld [vmem:[%s312 + $0x1908] sm:$0xff]
        %v515 = vld [vmem:[%s312 + $0x1910] sm:$0xff]
        %v516 = vld [vmem:[%s312 + $0x1918] sm:$0xff]
        %v517 = vld [vmem:[%s312 + $0x1980] sm:$0xff]
        %v518 = vld [vmem:[%s312 + $0x1988] sm:$0xff]
        %v519 = vld [vmem:[%s312 + $0x1990] sm:$0xff]
        %v520 = vld [vmem:[%s312 + $0x1998] sm:$0xff]
        %v521 = vld [vmem:[%s312 + $0x1a00] sm:$0xff]
        %v522 = vld [vmem:[%s312 + $0x1a08] sm:$0xff]
        %v523 = vld [vmem:[%s312 + $0x1a10] sm:$0xff]
        %v524 = vld [vmem:[%s312 + $0x1a18] sm:$0xff]
        %v525 = vld [vmem:[%s312 + $0x1a80] sm:$0xff]
        %v526 = vld [vmem:[%s312 + $0x1a88] sm:$0xff]
        %v527 = vld [vmem:[%s312 + $0x1a90] sm:$0xff]
        %v528 = vld [vmem:[%s312 + $0x1a98] sm:$0xff]
        %v529 = vld [vmem:[%s312 + $0x1b00] sm:$0xff]
        %v530 = vld [vmem:[%s312 + $0x1b08] sm:$0xff]
        %v531 = vld [vmem:[%s312 + $0x1b10] sm:$0xff]
        %v532 = vld [vmem:[%s312 + $0x1b18] sm:$0xff]
        %v533 = vld [vmem:[%s312 + $0x1b80] sm:$0xff]
        %v534 = vld [vmem:[%s312 + $0x1b88] sm:$0xff]
        %v535 = vld [vmem:[%s312 + $0x1b90] sm:$0xff]
        %v536 = vld [vmem:[%s312 + $0x1b98] sm:$0xff]
        %v537 = vld [vmem:[%s312 + $0x1c00] sm:$0xff]
        %v538 = vld [vmem:[%s312 + $0x1c08] sm:$0xff]
        %v539 = vld [vmem:[%s312 + $0x1c10] sm:$0xff]
        %v540 = vld [vmem:[%s312 + $0x1c18] sm:$0xff]
        %v541 = vld [vmem:[%s312 + $0x1c80] sm:$0xff]
        %v542 = vld [vmem:[%s312 + $0x1c88] sm:$0xff]
        %v543 = vld [vmem:[%s312 + $0x1c90] sm:$0xff]
        %v544 = vld [vmem:[%s312 + $0x1c98] sm:$0xff]
        %v545 = vld [vmem:[%s312 + $0x1d00] sm:$0xff]
        %v546 = vld [vmem:[%s312 + $0x1d08] sm:$0xff]
        %v547 = vld [vmem:[%s312 + $0x1d10] sm:$0xff]
        %v548 = vld [vmem:[%s312 + $0x1d18] sm:$0xff]
        %v549 = vld [vmem:[%s312 + $0x1d80] sm:$0xff]
        %v550 = vld [vmem:[%s312 + $0x1d88] sm:$0xff]
        %v551 = vld [vmem:[%s312 + $0x1d90] sm:$0xff]
        %v552 = vld [vmem:[%s312 + $0x1d98] sm:$0xff]
        %v553 = vld [vmem:[%s312 + $0x1e00] sm:$0xff]
        %v554 = vld [vmem:[%s312 + $0x1e08] sm:$0xff]
        %v555 = vld [vmem:[%s312 + $0x1e10] sm:$0xff]
        %v556 = vld [vmem:[%s312 + $0x1e18] sm:$0xff]
        %v557 = vld [vmem:[%s312 + $0x1e80] sm:$0xff]
        %v558 = vld [vmem:[%s312 + $0x1e88] sm:$0xff]
        %v559 = vld [vmem:[%s312 + $0x1e90] sm:$0xff]
        %v560 = vld [vmem:[%s312 + $0x1e98] sm:$0xff]
        %v561 = vld [vmem:[%s312 + $0x1f00] sm:$0xff]
        %v562 = vld [vmem:[%s312 + $0x1f08] sm:$0xff]
        %v563 = vld [vmem:[%s312 + $0x1f10] sm:$0xff]
        %v564 = vld [vmem:[%s312 + $0x1f18] sm:$0xff]
        %v565 = vld [vmem:[%s312 + $0x1f80] sm:$0xff]
        %v566 = vld [vmem:[%s312 + $0x1f88] sm:$0xff]
        %v567 = vld [vmem:[%s312 + $0x1f90] sm:$0xff]
        %v568 = vld [vmem:[%s312 + $0x1f98] sm:$0xff]
        %v569 = vld [vmem:[%s312 + $0x2000] sm:$0xff]
        %v570 = vld [vmem:[%s312 + $0x2008] sm:$0xff]
        %v571 = vld [vmem:[%s312 + $0x2010] sm:$0xff]
        %v572 = vld [vmem:[%s312 + $0x2018] sm:$0xff]
        %v573 = vld [vmem:[%s312 + $0x2080] sm:$0xff]
        %v574 = vld [vmem:[%s312 + $0x2088] sm:$0xff]
        %v575 = vld [vmem:[%s312 + $0x2090] sm:$0xff]
        %v576 = vld [vmem:[%s312 + $0x2098] sm:$0xff]
        %v577 = vld [vmem:[%s312 + $0x2100] sm:$0xff]
        %v578 = vld [vmem:[%s312 + $0x2108] sm:$0xff]
        %v579 = vld [vmem:[%s312 + $0x2110] sm:$0xff]
        %v580 = vld [vmem:[%s312 + $0x2118] sm:$0xff]
        %v581 = vld [vmem:[%s312 + $0x2180] sm:$0xff]
        %v582 = vld [vmem:[%s312 + $0x2188] sm:$0xff]
        %v583 = vld [vmem:[%s312 + $0x2190] sm:$0xff]
        %v584 = vld [vmem:[%s312 + $0x2198] sm:$0xff]
        %v585 = vld [vmem:[%s312 + $0x2200] sm:$0xff]
        %v586 = vld [vmem:[%s312 + $0x2208] sm:$0xff]
        %v587 = vld [vmem:[%s312 + $0x2210] sm:$0xff]
        %v588 = vld [vmem:[%s312 + $0x2218] sm:$0xff]
        %v589 = vld [vmem:[%s312 + $0x2280] sm:$0xff]
        %v590 = vld [vmem:[%s312 + $0x2288] sm:$0xff]
        %v591 = vld [vmem:[%s312 + $0x2290] sm:$0xff]
        %v592 = vld [vmem:[%s312 + $0x2298] sm:$0xff]
        %v593 = vld [vmem:[%s312 + $0x2300] sm:$0xff]
        %v594 = vld [vmem:[%s312 + $0x2308] sm:$0xff]
        %v595 = vld [vmem:[%s312 + $0x2310] sm:$0xff]
        %v596 = vld [vmem:[%s312 + $0x2318] sm:$0xff]
        %v597 = vld [vmem:[%s312 + $0x2380] sm:$0xff]
        %v598 = vld [vmem:[%s312 + $0x2388] sm:$0xff]
        %v599 = vld [vmem:[%s312 + $0x2390] sm:$0xff]
        %v600 = vld [vmem:[%s312 + $0x2398] sm:$0xff]
        %v601 = vld [vmem:[%s312 + $0x2400] sm:$0xff]
        %v602 = vld [vmem:[%s312 + $0x2408] sm:$0xff]
        %v603 = vld [vmem:[%s312 + $0x2410] sm:$0xff]
        %v604 = vld [vmem:[%s312 + $0x2418] sm:$0xff]
        %v605 = vld [vmem:[%s312 + $0x2480] sm:$0xff]
        %v606 = vld [vmem:[%s312 + $0x2488] sm:$0xff]
        %v607 = vld [vmem:[%s312 + $0x2490] sm:$0xff]
        %v608 = vld [vmem:[%s312 + $0x2498] sm:$0xff]
        %v609 = vld [vmem:[%s312 + $0x2500] sm:$0xff]
        %v610 = vld [vmem:[%s312 + $0x2508] sm:$0xff]
        %v611 = vld [vmem:[%s312 + $0x2510] sm:$0xff]
        %v612 = vld [vmem:[%s312 + $0x2518] sm:$0xff]
        %v613 = vld [vmem:[%s312 + $0x2580] sm:$0xff]
        %v614 = vld [vmem:[%s312 + $0x2588] sm:$0xff]
        %v615 = vld [vmem:[%s312 + $0x2590] sm:$0xff]
        %v616 = vld [vmem:[%s312 + $0x2598] sm:$0xff]
        %v617 = vld [vmem:[%s312 + $0x2600] sm:$0xff]
        %v618 = vld [vmem:[%s312 + $0x2608] sm:$0xff]
        %v619 = vld [vmem:[%s312 + $0x2610] sm:$0xff]
        %v620 = vld [vmem:[%s312 + $0x2618] sm:$0xff]
        %v621 = vld [vmem:[%s312 + $0x2680] sm:$0xff]
        %v622 = vld [vmem:[%s312 + $0x2688] sm:$0xff]
        %v623 = vld [vmem:[%s312 + $0x2690] sm:$0xff]
        %v624 = vld [vmem:[%s312 + $0x2698] sm:$0xff]
        %v625 = vld [vmem:[%s312 + $0x2700] sm:$0xff]
        %v626 = vld [vmem:[%s312 + $0x2708] sm:$0xff]
        %v627 = vld [vmem:[%s312 + $0x2710] sm:$0xff]
        %v628 = vld [vmem:[%s312 + $0x2718] sm:$0xff]
        %v629 = vld [vmem:[%s312 + $0x2780] sm:$0xff]
        %v630 = vld [vmem:[%s312 + $0x2788] sm:$0xff]
        %v631 = vld [vmem:[%s312 + $0x2790] sm:$0xff]
        %v632 = vld [vmem:[%s312 + $0x2798] sm:$0xff]
        %v633 = vld [vmem:[%s312 + $0x2800] sm:$0xff]
        %v634 = vld [vmem:[%s312 + $0x2808] sm:$0xff]
        %v635 = vld [vmem:[%s312 + $0x2810] sm:$0xff]
        %v636 = vld [vmem:[%s312 + $0x2818] sm:$0xff]
        %v637 = vld [vmem:[%s312 + $0x2880] sm:$0xff]
        %v638 = vld [vmem:[%s312 + $0x2888] sm:$0xff]
        %v639 = vld [vmem:[%s312 + $0x2890] sm:$0xff]
        %v640 = vld [vmem:[%s312 + $0x2898] sm:$0xff]
        %v641 = vld [vmem:[%s312 + $0x2900] sm:$0xff]
        %v642 = vld [vmem:[%s312 + $0x2908] sm:$0xff]
        %v643 = vld [vmem:[%s312 + $0x2910] sm:$0xff]
        %v644 = vld [vmem:[%s312 + $0x2918] sm:$0xff]
        %v645 = vld [vmem:[%s312 + $0x2980] sm:$0xff]
        %v646 = vld [vmem:[%s312 + $0x2988] sm:$0xff]
        %v647 = vld [vmem:[%s312 + $0x2990] sm:$0xff]
        %v648 = vld [vmem:[%s312 + $0x2998] sm:$0xff]
        %v649 = vld [vmem:[%s312 + $0x2a00] sm:$0xff]
        %v650 = vld [vmem:[%s312 + $0x2a08] sm:$0xff]
        %v651 = vld [vmem:[%s312 + $0x2a10] sm:$0xff]
        %v652 = vld [vmem:[%s312 + $0x2a18] sm:$0xff]
        %v653 = vld [vmem:[%s312 + $0x2a80] sm:$0xff]
        %v654 = vld [vmem:[%s312 + $0x2a88] sm:$0xff]
        %v655 = vld [vmem:[%s312 + $0x2a90] sm:$0xff]
        %v656 = vld [vmem:[%s312 + $0x2a98] sm:$0xff]
        %v657 = vld [vmem:[%s312 + $0x2b00] sm:$0xff]
        %v658 = vld [vmem:[%s312 + $0x2b08] sm:$0xff]
        %v659 = vld [vmem:[%s312 + $0x2b10] sm:$0xff]
        %v660 = vld [vmem:[%s312 + $0x2b18] sm:$0xff]
        %v661 = vld [vmem:[%s312 + $0x2b80] sm:$0xff]
        %v662 = vld [vmem:[%s312 + $0x2b88] sm:$0xff]
        %v663 = vld [vmem:[%s312 + $0x2b90] sm:$0xff]
        %v664 = vld [vmem:[%s312 + $0x2b98] sm:$0xff]
        %v665 = vld [vmem:[%s312 + $0x2c00] sm:$0xff]
        %v666 = vld [vmem:[%s312 + $0x2c08] sm:$0xff]
        %v667 = vld [vmem:[%s312 + $0x2c10] sm:$0xff]
        %v668 = vld [vmem:[%s312 + $0x2c18] sm:$0xff]
        %v669 = vld [vmem:[%s312 + $0x2c80] sm:$0xff]
        %v670 = vld [vmem:[%s312 + $0x2c88] sm:$0xff]
        %v671 = vld [vmem:[%s312 + $0x2c90] sm:$0xff]
        %v672 = vld [vmem:[%s312 + $0x2c98] sm:$0xff]
        %v673 = vld [vmem:[%s312 + $0x2d00] sm:$0xff]
        %v674 = vld [vmem:[%s312 + $0x2d08] sm:$0xff]
        %v675 = vld [vmem:[%s312 + $0x2d10] sm:$0xff]
        %v676 = vld [vmem:[%s312 + $0x2d18] sm:$0xff]
        %v677 = vld [vmem:[%s312 + $0x2d80] sm:$0xff]
        %v678 = vld [vmem:[%s312 + $0x2d88] sm:$0xff]
        %v679 = vld [vmem:[%s312 + $0x2d90] sm:$0xff]
        %v680 = vld [vmem:[%s312 + $0x2d98] sm:$0xff]
        %v681 = vld [vmem:[%s312 + $0x2e00] sm:$0xff]
        %v682 = vld [vmem:[%s312 + $0x2e08] sm:$0xff]
        %v683 = vld [vmem:[%s312 + $0x2e10] sm:$0xff]
        %v684 = vld [vmem:[%s312 + $0x2e18] sm:$0xff]
        %v685 = vld [vmem:[%s312 + $0x2e80] sm:$0xff]
        %v686 = vld [vmem:[%s312 + $0x2e88] sm:$0xff]
        %v687 = vld [vmem:[%s312 + $0x2e90] sm:$0xff]
        %v688 = vld [vmem:[%s312 + $0x2e98] sm:$0xff]
        %v689 = vld [vmem:[%s312 + $0x2f00] sm:$0xff]
        %v690 = vld [vmem:[%s312 + $0x2f08] sm:$0xff]
        %v691 = vld [vmem:[%s312 + $0x2f10] sm:$0xff]
        %v692 = vld [vmem:[%s312 + $0x2f18] sm:$0xff]
        %v693 = vld [vmem:[%s312 + $0x2f80] sm:$0xff]
        %v694 = vld [vmem:[%s312 + $0x2f88] sm:$0xff]
        %v695 = vld [vmem:[%s312 + $0x2f90] sm:$0xff]
        %v696 = vld [vmem:[%s312 + $0x2f98] sm:$0xff]
        %v697 = vld [vmem:[%s312 + $0x3000] sm:$0xff]
        %v698 = vld [vmem:[%s312 + $0x3008] sm:$0xff]
        %v699 = vld [vmem:[%s312 + $0x3010] sm:$0xff]
        %v700 = vld [vmem:[%s312 + $0x3018] sm:$0xff]
        %v701 = vld [vmem:[%s312 + $0x3080] sm:$0xff]
        %v702 = vld [vmem:[%s312 + $0x3088] sm:$0xff]
        %v703 = vld [vmem:[%s312 + $0x3090] sm:$0xff]
        %v704 = vld [vmem:[%s312 + $0x3098] sm:$0xff]
        %v705 = vld [vmem:[%s312 + $0x3100] sm:$0xff]
        %v706 = vld [vmem:[%s312 + $0x3108] sm:$0xff]
        %v707 = vld [vmem:[%s312 + $0x3110] sm:$0xff]
        %v708 = vld [vmem:[%s312 + $0x3118] sm:$0xff]
        %v709 = vld [vmem:[%s312 + $0x3180] sm:$0xff]
        %v710 = vld [vmem:[%s312 + $0x3188] sm:$0xff]
        %v711 = vld [vmem:[%s312 + $0x3190] sm:$0xff]
        %v712 = vld [vmem:[%s312 + $0x3198] sm:$0xff]
        %v713 = vld [vmem:[%s312 + $0x3200] sm:$0xff]
        %v714 = vld [vmem:[%s312 + $0x3208] sm:$0xff]
        %v715 = vld [vmem:[%s312 + $0x3210] sm:$0xff]
        %v716 = vld [vmem:[%s312 + $0x3218] sm:$0xff]
        %v717 = vld [vmem:[%s312 + $0x3280] sm:$0xff]
        %v718 = vld [vmem:[%s312 + $0x3288] sm:$0xff]
        %v719 = vld [vmem:[%s312 + $0x3290] sm:$0xff]
        %v720 = vld [vmem:[%s312 + $0x3298] sm:$0xff]
        %v721 = vld [vmem:[%s312 + $0x3300] sm:$0xff]
        %v722 = vld [vmem:[%s312 + $0x3308] sm:$0xff]
        %v723 = vld [vmem:[%s312 + $0x3310] sm:$0xff]
        %v724 = vld [vmem:[%s312 + $0x3318] sm:$0xff]
        %v725 = vld [vmem:[%s312 + $0x3380] sm:$0xff]
        %v726 = vld [vmem:[%s312 + $0x3388] sm:$0xff]
        %v727 = vld [vmem:[%s312 + $0x3390] sm:$0xff]
        %v728 = vld [vmem:[%s312 + $0x3398] sm:$0xff]
        %v729 = vld [vmem:[%s312 + $0x3400] sm:$0xff]
        %v730 = vld [vmem:[%s312 + $0x3408] sm:$0xff]
        %v731 = vld [vmem:[%s312 + $0x3410] sm:$0xff]
        %v732 = vld [vmem:[%s312 + $0x3418] sm:$0xff]
        %v733 = vld [vmem:[%s312 + $0x3480] sm:$0xff]
        %v734 = vld [vmem:[%s312 + $0x3488] sm:$0xff]
        %v735 = vld [vmem:[%s312 + $0x3490] sm:$0xff]
        %v736 = vld [vmem:[%s312 + $0x3498] sm:$0xff]
        %v737 = vld [vmem:[%s312 + $0x3500] sm:$0xff]
        %v738 = vld [vmem:[%s312 + $0x3508] sm:$0xff]
        %v739 = vld [vmem:[%s312 + $0x3510] sm:$0xff]
        %v740 = vld [vmem:[%s312 + $0x3518] sm:$0xff]
        %v741 = vld [vmem:[%s312 + $0x3580] sm:$0xff]
        %v742 = vld [vmem:[%s312 + $0x3588] sm:$0xff]
        %v743 = vld [vmem:[%s312 + $0x3590] sm:$0xff]
        %v744 = vld [vmem:[%s312 + $0x3598] sm:$0xff]
        %v745 = vld [vmem:[%s312 + $0x3600] sm:$0xff]
        %v746 = vld [vmem:[%s312 + $0x3608] sm:$0xff]
        %v747 = vld [vmem:[%s312 + $0x3610] sm:$0xff]
        %v748 = vld [vmem:[%s312 + $0x3618] sm:$0xff]
        %v749 = vld [vmem:[%s312 + $0x3680] sm:$0xff]
        %v750 = vld [vmem:[%s312 + $0x3688] sm:$0xff]
        %v751 = vld [vmem:[%s312 + $0x3690] sm:$0xff]
        %v752 = vld [vmem:[%s312 + $0x3698] sm:$0xff]
        %v753 = vld [vmem:[%s312 + $0x3700] sm:$0xff]
        %v754 = vld [vmem:[%s312 + $0x3708] sm:$0xff]
        %v755 = vld [vmem:[%s312 + $0x3710] sm:$0xff]
        %v756 = vld [vmem:[%s312 + $0x3718] sm:$0xff]
        %v757 = vld [vmem:[%s312 + $0x3780] sm:$0xff]
        %v758 = vld [vmem:[%s312 + $0x3788] sm:$0xff]
        %v759 = vld [vmem:[%s312 + $0x3790] sm:$0xff]
        %v760 = vld [vmem:[%s312 + $0x3798] sm:$0xff]
        %v761 = vld [vmem:[%s312 + $0x3800] sm:$0xff]
        %v762 = vld [vmem:[%s312 + $0x3808] sm:$0xff]
        %v763 = vld [vmem:[%s312 + $0x3810] sm:$0xff]
        %v764 = vld [vmem:[%s312 + $0x3818] sm:$0xff]
        %v765 = vld [vmem:[%s312 + $0x3880] sm:$0xff]
        %v766 = vld [vmem:[%s312 + $0x3888] sm:$0xff]
        %v767 = vld [vmem:[%s312 + $0x3890] sm:$0xff]
        %v768 = vld [vmem:[%s312 + $0x3898] sm:$0xff]
        %v769 = vld [vmem:[%s312 + $0x3900] sm:$0xff]
        %v770 = vld [vmem:[%s312 + $0x3908] sm:$0xff]
        %v771 = vld [vmem:[%s312 + $0x3910] sm:$0xff]
        %v772 = vld [vmem:[%s312 + $0x3918] sm:$0xff]
        %v773 = vld [vmem:[%s312 + $0x3980] sm:$0xff]
        %v774 = vld [vmem:[%s312 + $0x3988] sm:$0xff]
        %v775 = vld [vmem:[%s312 + $0x3990] sm:$0xff]
        %v776 = vld [vmem:[%s312 + $0x3998] sm:$0xff]
        %v777 = vld [vmem:[%s312 + $0x3a00] sm:$0xff]
        %v778 = vld [vmem:[%s312 + $0x3a08] sm:$0xff]
        %v779 = vld [vmem:[%s312 + $0x3a10] sm:$0xff]
        %v780 = vld [vmem:[%s312 + $0x3a18] sm:$0xff]
        %v781 = vld [vmem:[%s312 + $0x3a80] sm:$0xff]
        %v782 = vld [vmem:[%s312 + $0x3a88] sm:$0xff]
        %v783 = vld [vmem:[%s312 + $0x3a90] sm:$0xff]
        %v784 = vld [vmem:[%s312 + $0x3a98] sm:$0xff]
        %v785 = vld [vmem:[%s312 + $0x3b00] sm:$0xff]
        %v786 = vld [vmem:[%s312 + $0x3b08] sm:$0xff]
        %v787 = vld [vmem:[%s312 + $0x3b10] sm:$0xff]
        %v788 = vld [vmem:[%s312 + $0x3b18] sm:$0xff]
        %v789 = vld [vmem:[%s312 + $0x3b80] sm:$0xff]
        %v790 = vld [vmem:[%s312 + $0x3b88] sm:$0xff]
        %v791 = vld [vmem:[%s312 + $0x3b90] sm:$0xff]
        %v792 = vld [vmem:[%s312 + $0x3b98] sm:$0xff]
        %v793 = vld [vmem:[%s312 + $0x3c00] sm:$0xff]
        %v794 = vld [vmem:[%s312 + $0x3c08] sm:$0xff]
        %v795 = vld [vmem:[%s312 + $0x3c10] sm:$0xff]
        %v796 = vld [vmem:[%s312 + $0x3c18] sm:$0xff]
        %v797 = vld [vmem:[%s312 + $0x3c80] sm:$0xff]
        %v798 = vld [vmem:[%s312 + $0x3c88] sm:$0xff]
        %v799 = vld [vmem:[%s312 + $0x3c90] sm:$0xff]
        %v800 = vld [vmem:[%s312 + $0x3c98] sm:$0xff]
        %v801 = vld [vmem:[%s312 + $0x3d00] sm:$0xff]
        %v802 = vld [vmem:[%s312 + $0x3d08] sm:$0xff]
        %v803 = vld [vmem:[%s312 + $0x3d10] sm:$0xff]
        %v804 = vld [vmem:[%s312 + $0x3d18] sm:$0xff]
        %v805 = vld [vmem:[%s312 + $0x3d80] sm:$0xff]
        %v806 = vld [vmem:[%s312 + $0x3d88] sm:$0xff]
        %v807 = vld [vmem:[%s312 + $0x3d90] sm:$0xff]
        %v808 = vld [vmem:[%s312 + $0x3d98] sm:$0xff]
        %v809 = vld [vmem:[%s312 + $0x3e00] sm:$0xff]
        %v810 = vld [vmem:[%s312 + $0x3e08] sm:$0xff]
        %v811 = vld [vmem:[%s312 + $0x3e10] sm:$0xff]
        %v812 = vld [vmem:[%s312 + $0x3e18] sm:$0xff]
        %v813 = vld [vmem:[%s312 + $0x3e80] sm:$0xff]
        %v814 = vld [vmem:[%s312 + $0x3e88] sm:$0xff]
        %v815 = vld [vmem:[%s312 + $0x3e90] sm:$0xff]
        %v816 = vld [vmem:[%s312 + $0x3e98] sm:$0xff]
        %v817 = vld [vmem:[%s312 + $0x3f00] sm:$0xff]
        %v818 = vld [vmem:[%s312 + $0x3f08] sm:$0xff]
        %v819 = vld [vmem:[%s312 + $0x3f10] sm:$0xff]
        %v820 = vld [vmem:[%s312 + $0x3f18] sm:$0xff]
        %v821 = vld [vmem:[%s312 + $0x3f80] sm:$0xff]
        %v822 = vld [vmem:[%s312 + $0x3f88] sm:$0xff]
        %v823 = vld [vmem:[%s312 + $0x3f90] sm:$0xff]
        %v824 = vld [vmem:[%s312 + $0x3f98] sm:$0xff]
        %s825 = scalar_lea.vmem [#allocation7], %s309
        %v826 = vld [vmem:[%s825] sm:$0xff]
        %s827 = sshra.s32 %s308, 3
        %s828 = sand.u32 %s308, 7
        %s829 = smul.u32 %s827, 8
        %s830 = smul.addr %s829, 4
        %s831 = scalar_lea.vmem [#allocation8], %s830
        %v832 = vld [vmem:[%s831] sm:$0xff]
        %v833 = vld [vmem:[%s831 + $0x8] sm:$0xff]
        %v834 = vld [vmem:[%s831 + $0x10] sm:$0xff]
        %v835 = vld [vmem:[%s831 + $0x18] sm:$0xff]
        %v836 = vld [vmem:[%s831 + $0x20] sm:$0xff]
        %v837 = vld [vmem:[%s831 + $0x28] sm:$0xff]
        %v838 = vld [vmem:[%s831 + $0x30] sm:$0xff]
        %v839 = vld [vmem:[%s831 + $0x38] sm:$0xff]
        %v840 = vld [vmem:[%s831 + $0x40] sm:$0xff]
        %v841 = vld [vmem:[%s831 + $0x48] sm:$0xff]
        %v842 = vld [vmem:[%s831 + $0x50] sm:$0xff]
        %v843 = vld [vmem:[%s831 + $0x58] sm:$0xff]
        %v844 = vld [vmem:[%s831 + $0x60] sm:$0xff]
        %v845 = vld [vmem:[%s831 + $0x68] sm:$0xff]
        %v846 = vld [vmem:[%s831 + $0x70] sm:$0xff]
        %v847 = vld [vmem:[%s831 + $0x78] sm:$0xff]
        %v848 = vld [vmem:[%s831 + $0x80] sm:$0xff]
        %v849 = vld [vmem:[%s831 + $0x88] sm:$0xff]
        %v850 = vld [vmem:[%s831 + $0x90] sm:$0xff]
        %v851 = vld [vmem:[%s831 + $0x98] sm:$0xff]
        %v852 = vld [vmem:[%s831 + $0xa0] sm:$0xff]
        %v853 = vld [vmem:[%s831 + $0xa8] sm:$0xff]
        %v854 = vld [vmem:[%s831 + $0xb0] sm:$0xff]
        %v855 = vld [vmem:[%s831 + $0xb8] sm:$0xff]
        %v856 = vld [vmem:[%s831 + $0xc0] sm:$0xff]
        %v857 = vld [vmem:[%s831 + $0xc8] sm:$0xff]
        %v858 = vld [vmem:[%s831 + $0xd0] sm:$0xff]
        %v859 = vld [vmem:[%s831 + $0xd8] sm:$0xff]
        %v860 = vld [vmem:[%s831 + $0xe0] sm:$0xff]
        %v861 = vld [vmem:[%s831 + $0xe8] sm:$0xff]
        %v862 = vld [vmem:[%s831 + $0xf0] sm:$0xff]
        %v863 = vld [vmem:[%s831 + $0xf8] sm:$0xff]
        %v864 = vld [vmem:[%s831 + $0x100] sm:$0xff]
        %v865 = vld [vmem:[%s831 + $0x108] sm:$0xff]
        %v866 = vld [vmem:[%s831 + $0x110] sm:$0xff]
        %v867 = vld [vmem:[%s831 + $0x118] sm:$0xff]
        %v868 = vld [vmem:[%s831 + $0x120] sm:$0xff]
        %v869 = vld [vmem:[%s831 + $0x128] sm:$0xff]
        %v870 = vld [vmem:[%s831 + $0x130] sm:$0xff]
        %v871 = vld [vmem:[%s831 + $0x138] sm:$0xff]
        %v872 = vld [vmem:[%s831 + $0x140] sm:$0xff]
        %v873 = vld [vmem:[%s831 + $0x148] sm:$0xff]
        %v874 = vld [vmem:[%s831 + $0x150] sm:$0xff]
        %v875 = vld [vmem:[%s831 + $0x158] sm:$0xff]
        %v876 = vld [vmem:[%s831 + $0x160] sm:$0xff]
        %v877 = vld [vmem:[%s831 + $0x168] sm:$0xff]
        %v878 = vld [vmem:[%s831 + $0x170] sm:$0xff]
        %v879 = vld [vmem:[%s831 + $0x178] sm:$0xff]
        %v880 = vld [vmem:[%s831 + $0x180] sm:$0xff]
        %v881 = vld [vmem:[%s831 + $0x188] sm:$0xff]
        %v882 = vld [vmem:[%s831 + $0x190] sm:$0xff]
        %v883 = vld [vmem:[%s831 + $0x198] sm:$0xff]
        %v884 = vld [vmem:[%s831 + $0x1a0] sm:$0xff]
        %v885 = vld [vmem:[%s831 + $0x1a8] sm:$0xff]
        %v886 = vld [vmem:[%s831 + $0x1b0] sm:$0xff]
        %v887 = vld [vmem:[%s831 + $0x1b8] sm:$0xff]
        %v888 = vld [vmem:[%s831 + $0x1c0] sm:$0xff]
        %v889 = vld [vmem:[%s831 + $0x1c8] sm:$0xff]
        %v890 = vld [vmem:[%s831 + $0x1d0] sm:$0xff]
        %v891 = vld [vmem:[%s831 + $0x1d8] sm:$0xff]
        %v892 = vld [vmem:[%s831 + $0x1e0] sm:$0xff]
        %v893 = vld [vmem:[%s831 + $0x1e8] sm:$0xff]
        %v894 = vld [vmem:[%s831 + $0x1f0] sm:$0xff]
        %v895 = vld [vmem:[%s831 + $0x1f8] sm:$0xff]
        %v896 = vld [vmem:[%s831 + $0x200] sm:$0xff]
        %v897 = vld [vmem:[%s831 + $0x208] sm:$0xff]
        %v898 = vld [vmem:[%s831 + $0x210] sm:$0xff]
        %v899 = vld [vmem:[%s831 + $0x218] sm:$0xff]
        %v900 = vld [vmem:[%s831 + $0x220] sm:$0xff]
        %v901 = vld [vmem:[%s831 + $0x228] sm:$0xff]
        %v902 = vld [vmem:[%s831 + $0x230] sm:$0xff]
        %v903 = vld [vmem:[%s831 + $0x238] sm:$0xff]
        %v904 = vld [vmem:[%s831 + $0x240] sm:$0xff]
        %v905 = vld [vmem:[%s831 + $0x248] sm:$0xff]
        %v906 = vld [vmem:[%s831 + $0x250] sm:$0xff]
        %v907 = vld [vmem:[%s831 + $0x258] sm:$0xff]
        %v908 = vld [vmem:[%s831 + $0x260] sm:$0xff]
        %v909 = vld [vmem:[%s831 + $0x268] sm:$0xff]
        %v910 = vld [vmem:[%s831 + $0x270] sm:$0xff]
        %v911 = vld [vmem:[%s831 + $0x278] sm:$0xff]
        %v912 = vld [vmem:[%s831 + $0x280] sm:$0xff]
        %v913 = vld [vmem:[%s831 + $0x288] sm:$0xff]
        %v914 = vld [vmem:[%s831 + $0x290] sm:$0xff]
        %v915 = vld [vmem:[%s831 + $0x298] sm:$0xff]
        %v916 = vld [vmem:[%s831 + $0x2a0] sm:$0xff]
        %v917 = vld [vmem:[%s831 + $0x2a8] sm:$0xff]
        %v918 = vld [vmem:[%s831 + $0x2b0] sm:$0xff]
        %v919 = vld [vmem:[%s831 + $0x2b8] sm:$0xff]
        %v920 = vld [vmem:[%s831 + $0x2c0] sm:$0xff]
        %v921 = vld [vmem:[%s831 + $0x2c8] sm:$0xff]
        %v922 = vld [vmem:[%s831 + $0x2d0] sm:$0xff]
        %v923 = vld [vmem:[%s831 + $0x2d8] sm:$0xff]
        %v924 = vld [vmem:[%s831 + $0x2e0] sm:$0xff]
        %v925 = vld [vmem:[%s831 + $0x2e8] sm:$0xff]
        %v926 = vld [vmem:[%s831 + $0x2f0] sm:$0xff]
        %v927 = vld [vmem:[%s831 + $0x2f8] sm:$0xff]
        %v928 = vld [vmem:[%s831 + $0x300] sm:$0xff]
        %v929 = vld [vmem:[%s831 + $0x308] sm:$0xff]
        %v930 = vld [vmem:[%s831 + $0x310] sm:$0xff]
        %v931 = vld [vmem:[%s831 + $0x318] sm:$0xff]
        %v932 = vld [vmem:[%s831 + $0x320] sm:$0xff]
        %v933 = vld [vmem:[%s831 + $0x328] sm:$0xff]
        %v934 = vld [vmem:[%s831 + $0x330] sm:$0xff]
        %v935 = vld [vmem:[%s831 + $0x338] sm:$0xff]
        %v936 = vld [vmem:[%s831 + $0x340] sm:$0xff]
        %v937 = vld [vmem:[%s831 + $0x348] sm:$0xff]
        %v938 = vld [vmem:[%s831 + $0x350] sm:$0xff]
        %v939 = vld [vmem:[%s831 + $0x358] sm:$0xff]
        %v940 = vld [vmem:[%s831 + $0x360] sm:$0xff]
        %v941 = vld [vmem:[%s831 + $0x368] sm:$0xff]
        %v942 = vld [vmem:[%s831 + $0x370] sm:$0xff]
        %v943 = vld [vmem:[%s831 + $0x378] sm:$0xff]
        %v944 = vld [vmem:[%s831 + $0x380] sm:$0xff]
        %v945 = vld [vmem:[%s831 + $0x388] sm:$0xff]
        %v946 = vld [vmem:[%s831 + $0x390] sm:$0xff]
        %v947 = vld [vmem:[%s831 + $0x398] sm:$0xff]
        %v948 = vld [vmem:[%s831 + $0x3a0] sm:$0xff]
        %v949 = vld [vmem:[%s831 + $0x3a8] sm:$0xff]
        %v950 = vld [vmem:[%s831 + $0x3b0] sm:$0xff]
        %v951 = vld [vmem:[%s831 + $0x3b8] sm:$0xff]
        %v952 = vld [vmem:[%s831 + $0x3c0] sm:$0xff]
        %v953 = vld [vmem:[%s831 + $0x3c8] sm:$0xff]
        %v954 = vld [vmem:[%s831 + $0x3d0] sm:$0xff]
        %v955 = vld [vmem:[%s831 + $0x3d8] sm:$0xff]
        %v956 = vld [vmem:[%s831 + $0x3e0] sm:$0xff]
        %v957 = vld [vmem:[%s831 + $0x3e8] sm:$0xff]
        %v958 = vld [vmem:[%s831 + $0x3f0] sm:$0xff]
        %v959 = vld [vmem:[%s831 + $0x3f8] sm:$0xff]
        %v960 = vld [vmem:[%s831 + $0x400] sm:$0xff]
        %v961 = vld [vmem:[%s831 + $0x408] sm:$0xff]
        %v962 = vld [vmem:[%s831 + $0x410] sm:$0xff]
        %v963 = vld [vmem:[%s831 + $0x418] sm:$0xff]
        %v964 = vld [vmem:[%s831 + $0x420] sm:$0xff]
        %v965 = vld [vmem:[%s831 + $0x428] sm:$0xff]
        %v966 = vld [vmem:[%s831 + $0x430] sm:$0xff]
        %v967 = vld [vmem:[%s831 + $0x438] sm:$0xff]
        %v968 = vld [vmem:[%s831 + $0x440] sm:$0xff]
        %v969 = vld [vmem:[%s831 + $0x448] sm:$0xff]
        %v970 = vld [vmem:[%s831 + $0x450] sm:$0xff]
        %v971 = vld [vmem:[%s831 + $0x458] sm:$0xff]
        %v972 = vld [vmem:[%s831 + $0x460] sm:$0xff]
        %v973 = vld [vmem:[%s831 + $0x468] sm:$0xff]
        %v974 = vld [vmem:[%s831 + $0x470] sm:$0xff]
        %v975 = vld [vmem:[%s831 + $0x478] sm:$0xff]
        %v976 = vld [vmem:[%s831 + $0x480] sm:$0xff]
        %v977 = vld [vmem:[%s831 + $0x488] sm:$0xff]
        %v978 = vld [vmem:[%s831 + $0x490] sm:$0xff]
        %v979 = vld [vmem:[%s831 + $0x498] sm:$0xff]
        %v980 = vld [vmem:[%s831 + $0x4a0] sm:$0xff]
        %v981 = vld [vmem:[%s831 + $0x4a8] sm:$0xff]
        %v982 = vld [vmem:[%s831 + $0x4b0] sm:$0xff]
        %v983 = vld [vmem:[%s831 + $0x4b8] sm:$0xff]
        %v984 = vld [vmem:[%s831 + $0x4c0] sm:$0xff]
        %v985 = vld [vmem:[%s831 + $0x4c8] sm:$0xff]
        %v986 = vld [vmem:[%s831 + $0x4d0] sm:$0xff]
        %v987 = vld [vmem:[%s831 + $0x4d8] sm:$0xff]
        %v988 = vld [vmem:[%s831 + $0x4e0] sm:$0xff]
        %v989 = vld [vmem:[%s831 + $0x4e8] sm:$0xff]
        %v990 = vld [vmem:[%s831 + $0x4f0] sm:$0xff]
        %v991 = vld [vmem:[%s831 + $0x4f8] sm:$0xff]
        %v992 = vld [vmem:[%s831 + $0x500] sm:$0xff]
        %v993 = vld [vmem:[%s831 + $0x508] sm:$0xff]
        %v994 = vld [vmem:[%s831 + $0x510] sm:$0xff]
        %v995 = vld [vmem:[%s831 + $0x518] sm:$0xff]
        %v996 = vld [vmem:[%s831 + $0x520] sm:$0xff]
        %v997 = vld [vmem:[%s831 + $0x528] sm:$0xff]
        %v998 = vld [vmem:[%s831 + $0x530] sm:$0xff]
        %v999 = vld [vmem:[%s831 + $0x538] sm:$0xff]
        %v1000 = vld [vmem:[%s831 + $0x540] sm:$0xff]
        %v1001 = vld [vmem:[%s831 + $0x548] sm:$0xff]
        %v1002 = vld [vmem:[%s831 + $0x550] sm:$0xff]
        %v1003 = vld [vmem:[%s831 + $0x558] sm:$0xff]
        %v1004 = vld [vmem:[%s831 + $0x560] sm:$0xff]
        %v1005 = vld [vmem:[%s831 + $0x568] sm:$0xff]
        %v1006 = vld [vmem:[%s831 + $0x570] sm:$0xff]
        %v1007 = vld [vmem:[%s831 + $0x578] sm:$0xff]
        %v1008 = vld [vmem:[%s831 + $0x580] sm:$0xff]
        %v1009 = vld [vmem:[%s831 + $0x588] sm:$0xff]
        %v1010 = vld [vmem:[%s831 + $0x590] sm:$0xff]
        %v1011 = vld [vmem:[%s831 + $0x598] sm:$0xff]
        %v1012 = vld [vmem:[%s831 + $0x5a0] sm:$0xff]
        %v1013 = vld [vmem:[%s831 + $0x5a8] sm:$0xff]
        %v1014 = vld [vmem:[%s831 + $0x5b0] sm:$0xff]
        %v1015 = vld [vmem:[%s831 + $0x5b8] sm:$0xff]
        %v1016 = vld [vmem:[%s831 + $0x5c0] sm:$0xff]
        %v1017 = vld [vmem:[%s831 + $0x5c8] sm:$0xff]
        %v1018 = vld [vmem:[%s831 + $0x5d0] sm:$0xff]
        %v1019 = vld [vmem:[%s831 + $0x5d8] sm:$0xff]
        %v1020 = vld [vmem:[%s831 + $0x5e0] sm:$0xff]
        %v1021 = vld [vmem:[%s831 + $0x5e8] sm:$0xff]
        %v1022 = vld [vmem:[%s831 + $0x5f0] sm:$0xff]
        %v1023 = vld [vmem:[%s831 + $0x5f8] sm:$0xff]
        %v1024 = vld [vmem:[%s831 + $0x600] sm:$0xff]
        %v1025 = vld [vmem:[%s831 + $0x608] sm:$0xff]
        %v1026 = vld [vmem:[%s831 + $0x610] sm:$0xff]
        %v1027 = vld [vmem:[%s831 + $0x618] sm:$0xff]
        %v1028 = vld [vmem:[%s831 + $0x620] sm:$0xff]
        %v1029 = vld [vmem:[%s831 + $0x628] sm:$0xff]
        %v1030 = vld [vmem:[%s831 + $0x630] sm:$0xff]
        %v1031 = vld [vmem:[%s831 + $0x638] sm:$0xff]
        %v1032 = vld [vmem:[%s831 + $0x640] sm:$0xff]
        %v1033 = vld [vmem:[%s831 + $0x648] sm:$0xff]
        %v1034 = vld [vmem:[%s831 + $0x650] sm:$0xff]
        %v1035 = vld [vmem:[%s831 + $0x658] sm:$0xff]
        %v1036 = vld [vmem:[%s831 + $0x660] sm:$0xff]
        %v1037 = vld [vmem:[%s831 + $0x668] sm:$0xff]
        %v1038 = vld [vmem:[%s831 + $0x670] sm:$0xff]
        %v1039 = vld [vmem:[%s831 + $0x678] sm:$0xff]
        %v1040 = vld [vmem:[%s831 + $0x680] sm:$0xff]
        %v1041 = vld [vmem:[%s831 + $0x688] sm:$0xff]
        %v1042 = vld [vmem:[%s831 + $0x690] sm:$0xff]
        %v1043 = vld [vmem:[%s831 + $0x698] sm:$0xff]
        %v1044 = vld [vmem:[%s831 + $0x6a0] sm:$0xff]
        %v1045 = vld [vmem:[%s831 + $0x6a8] sm:$0xff]
        %v1046 = vld [vmem:[%s831 + $0x6b0] sm:$0xff]
        %v1047 = vld [vmem:[%s831 + $0x6b8] sm:$0xff]
        %v1048 = vld [vmem:[%s831 + $0x6c0] sm:$0xff]
        %v1049 = vld [vmem:[%s831 + $0x6c8] sm:$0xff]
        %v1050 = vld [vmem:[%s831 + $0x6d0] sm:$0xff]
        %v1051 = vld [vmem:[%s831 + $0x6d8] sm:$0xff]
        %v1052 = vld [vmem:[%s831 + $0x6e0] sm:$0xff]
        %v1053 = vld [vmem:[%s831 + $0x6e8] sm:$0xff]
        %v1054 = vld [vmem:[%s831 + $0x6f0] sm:$0xff]
        %v1055 = vld [vmem:[%s831 + $0x6f8] sm:$0xff]
        %v1056 = vld [vmem:[%s831 + $0x700] sm:$0xff]
        %v1057 = vld [vmem:[%s831 + $0x708] sm:$0xff]
        %v1058 = vld [vmem:[%s831 + $0x710] sm:$0xff]
        %v1059 = vld [vmem:[%s831 + $0x718] sm:$0xff]
        %v1060 = vld [vmem:[%s831 + $0x720] sm:$0xff]
        %v1061 = vld [vmem:[%s831 + $0x728] sm:$0xff]
        %v1062 = vld [vmem:[%s831 + $0x730] sm:$0xff]
        %v1063 = vld [vmem:[%s831 + $0x738] sm:$0xff]
        %v1064 = vld [vmem:[%s831 + $0x740] sm:$0xff]
        %v1065 = vld [vmem:[%s831 + $0x748] sm:$0xff]
        %v1066 = vld [vmem:[%s831 + $0x750] sm:$0xff]
        %v1067 = vld [vmem:[%s831 + $0x758] sm:$0xff]
        %v1068 = vld [vmem:[%s831 + $0x760] sm:$0xff]
        %v1069 = vld [vmem:[%s831 + $0x768] sm:$0xff]
        %v1070 = vld [vmem:[%s831 + $0x770] sm:$0xff]
        %v1071 = vld [vmem:[%s831 + $0x778] sm:$0xff]
        %v1072 = vld [vmem:[%s831 + $0x780] sm:$0xff]
        %v1073 = vld [vmem:[%s831 + $0x788] sm:$0xff]
        %v1074 = vld [vmem:[%s831 + $0x790] sm:$0xff]
        %v1075 = vld [vmem:[%s831 + $0x798] sm:$0xff]
        %v1076 = vld [vmem:[%s831 + $0x7a0] sm:$0xff]
        %v1077 = vld [vmem:[%s831 + $0x7a8] sm:$0xff]
        %v1078 = vld [vmem:[%s831 + $0x7b0] sm:$0xff]
        %v1079 = vld [vmem:[%s831 + $0x7b8] sm:$0xff]
        %v1080 = vld [vmem:[%s831 + $0x7c0] sm:$0xff]
        %v1081 = vld [vmem:[%s831 + $0x7c8] sm:$0xff]
        %v1082 = vld [vmem:[%s831 + $0x7d0] sm:$0xff]
        %v1083 = vld [vmem:[%s831 + $0x7d8] sm:$0xff]
        %v1084 = vld [vmem:[%s831 + $0x7e0] sm:$0xff]
        %v1085 = vld [vmem:[%s831 + $0x7e8] sm:$0xff]
        %v1086 = vld [vmem:[%s831 + $0x7f0] sm:$0xff]
        %v1087 = vld [vmem:[%s831 + $0x7f8] sm:$0xff]
        %v1088 = vld [vmem:[%s831 + $0x800] sm:$0xff]
        %v1089 = vld [vmem:[%s831 + $0x808] sm:$0xff]
        %v1090 = vld [vmem:[%s831 + $0x810] sm:$0xff]
        %v1091 = vld [vmem:[%s831 + $0x818] sm:$0xff]
        %v1092 = vld [vmem:[%s831 + $0x820] sm:$0xff]
        %v1093 = vld [vmem:[%s831 + $0x828] sm:$0xff]
        %v1094 = vld [vmem:[%s831 + $0x830] sm:$0xff]
        %v1095 = vld [vmem:[%s831 + $0x838] sm:$0xff]
        %v1096 = vld [vmem:[%s831 + $0x840] sm:$0xff]
        %v1097 = vld [vmem:[%s831 + $0x848] sm:$0xff]
        %v1098 = vld [vmem:[%s831 + $0x850] sm:$0xff]
        %v1099 = vld [vmem:[%s831 + $0x858] sm:$0xff]
        %v1100 = vld [vmem:[%s831 + $0x860] sm:$0xff]
        %v1101 = vld [vmem:[%s831 + $0x868] sm:$0xff]
        %v1102 = vld [vmem:[%s831 + $0x870] sm:$0xff]
        %v1103 = vld [vmem:[%s831 + $0x878] sm:$0xff]
        %v1104 = vld [vmem:[%s831 + $0x880] sm:$0xff]
        %v1105 = vld [vmem:[%s831 + $0x888] sm:$0xff]
        %v1106 = vld [vmem:[%s831 + $0x890] sm:$0xff]
        %v1107 = vld [vmem:[%s831 + $0x898] sm:$0xff]
        %v1108 = vld [vmem:[%s831 + $0x8a0] sm:$0xff]
        %v1109 = vld [vmem:[%s831 + $0x8a8] sm:$0xff]
        %v1110 = vld [vmem:[%s831 + $0x8b0] sm:$0xff]
        %v1111 = vld [vmem:[%s831 + $0x8b8] sm:$0xff]
        %v1112 = vld [vmem:[%s831 + $0x8c0] sm:$0xff]
        %v1113 = vld [vmem:[%s831 + $0x8c8] sm:$0xff]
        %v1114 = vld [vmem:[%s831 + $0x8d0] sm:$0xff]
        %v1115 = vld [vmem:[%s831 + $0x8d8] sm:$0xff]
        %v1116 = vld [vmem:[%s831 + $0x8e0] sm:$0xff]
        %v1117 = vld [vmem:[%s831 + $0x8e8] sm:$0xff]
        %v1118 = vld [vmem:[%s831 + $0x8f0] sm:$0xff]
        %v1119 = vld [vmem:[%s831 + $0x8f8] sm:$0xff]
        %v1120 = vld [vmem:[%s831 + $0x900] sm:$0xff]
        %v1121 = vld [vmem:[%s831 + $0x908] sm:$0xff]
        %v1122 = vld [vmem:[%s831 + $0x910] sm:$0xff]
        %v1123 = vld [vmem:[%s831 + $0x918] sm:$0xff]
        %v1124 = vld [vmem:[%s831 + $0x920] sm:$0xff]
        %v1125 = vld [vmem:[%s831 + $0x928] sm:$0xff]
        %v1126 = vld [vmem:[%s831 + $0x930] sm:$0xff]
        %v1127 = vld [vmem:[%s831 + $0x938] sm:$0xff]
        %v1128 = vld [vmem:[%s831 + $0x940] sm:$0xff]
        %v1129 = vld [vmem:[%s831 + $0x948] sm:$0xff]
        %v1130 = vld [vmem:[%s831 + $0x950] sm:$0xff]
        %v1131 = vld [vmem:[%s831 + $0x958] sm:$0xff]
        %v1132 = vld [vmem:[%s831 + $0x960] sm:$0xff]
        %v1133 = vld [vmem:[%s831 + $0x968] sm:$0xff]
        %v1134 = vld [vmem:[%s831 + $0x970] sm:$0xff]
        %v1135 = vld [vmem:[%s831 + $0x978] sm:$0xff]
        %v1136 = vld [vmem:[%s831 + $0x980] sm:$0xff]
        %v1137 = vld [vmem:[%s831 + $0x988] sm:$0xff]
        %v1138 = vld [vmem:[%s831 + $0x990] sm:$0xff]
        %v1139 = vld [vmem:[%s831 + $0x998] sm:$0xff]
        %v1140 = vld [vmem:[%s831 + $0x9a0] sm:$0xff]
        %v1141 = vld [vmem:[%s831 + $0x9a8] sm:$0xff]
        %v1142 = vld [vmem:[%s831 + $0x9b0] sm:$0xff]
        %v1143 = vld [vmem:[%s831 + $0x9b8] sm:$0xff]
        %v1144 = vld [vmem:[%s831 + $0x9c0] sm:$0xff]
        %v1145 = vld [vmem:[%s831 + $0x9c8] sm:$0xff]
        %v1146 = vld [vmem:[%s831 + $0x9d0] sm:$0xff]
        %v1147 = vld [vmem:[%s831 + $0x9d8] sm:$0xff]
        %v1148 = vld [vmem:[%s831 + $0x9e0] sm:$0xff]
        %v1149 = vld [vmem:[%s831 + $0x9e8] sm:$0xff]
        %v1150 = vld [vmem:[%s831 + $0x9f0] sm:$0xff]
        %v1151 = vld [vmem:[%s831 + $0x9f8] sm:$0xff]
        %v1152 = vld [vmem:[%s831 + $0xa00] sm:$0xff]
        %v1153 = vld [vmem:[%s831 + $0xa08] sm:$0xff]
        %v1154 = vld [vmem:[%s831 + $0xa10] sm:$0xff]
        %v1155 = vld [vmem:[%s831 + $0xa18] sm:$0xff]
        %v1156 = vld [vmem:[%s831 + $0xa20] sm:$0xff]
        %v1157 = vld [vmem:[%s831 + $0xa28] sm:$0xff]
        %v1158 = vld [vmem:[%s831 + $0xa30] sm:$0xff]
        %v1159 = vld [vmem:[%s831 + $0xa38] sm:$0xff]
        %v1160 = vld [vmem:[%s831 + $0xa40] sm:$0xff]
        %v1161 = vld [vmem:[%s831 + $0xa48] sm:$0xff]
        %v1162 = vld [vmem:[%s831 + $0xa50] sm:$0xff]
        %v1163 = vld [vmem:[%s831 + $0xa58] sm:$0xff]
        %v1164 = vld [vmem:[%s831 + $0xa60] sm:$0xff]
        %v1165 = vld [vmem:[%s831 + $0xa68] sm:$0xff]
        %v1166 = vld [vmem:[%s831 + $0xa70] sm:$0xff]
        %v1167 = vld [vmem:[%s831 + $0xa78] sm:$0xff]
        %v1168 = vld [vmem:[%s831 + $0xa80] sm:$0xff]
        %v1169 = vld [vmem:[%s831 + $0xa88] sm:$0xff]
        %v1170 = vld [vmem:[%s831 + $0xa90] sm:$0xff]
        %v1171 = vld [vmem:[%s831 + $0xa98] sm:$0xff]
        %v1172 = vld [vmem:[%s831 + $0xaa0] sm:$0xff]
        %v1173 = vld [vmem:[%s831 + $0xaa8] sm:$0xff]
        %v1174 = vld [vmem:[%s831 + $0xab0] sm:$0xff]
        %v1175 = vld [vmem:[%s831 + $0xab8] sm:$0xff]
        %v1176 = vld [vmem:[%s831 + $0xac0] sm:$0xff]
        %v1177 = vld [vmem:[%s831 + $0xac8] sm:$0xff]
        %v1178 = vld [vmem:[%s831 + $0xad0] sm:$0xff]
        %v1179 = vld [vmem:[%s831 + $0xad8] sm:$0xff]
        %v1180 = vld [vmem:[%s831 + $0xae0] sm:$0xff]
        %v1181 = vld [vmem:[%s831 + $0xae8] sm:$0xff]
        %v1182 = vld [vmem:[%s831 + $0xaf0] sm:$0xff]
        %v1183 = vld [vmem:[%s831 + $0xaf8] sm:$0xff]
        %v1184 = vld [vmem:[%s831 + $0xb00] sm:$0xff]
        %v1185 = vld [vmem:[%s831 + $0xb08] sm:$0xff]
        %v1186 = vld [vmem:[%s831 + $0xb10] sm:$0xff]
        %v1187 = vld [vmem:[%s831 + $0xb18] sm:$0xff]
        %v1188 = vld [vmem:[%s831 + $0xb20] sm:$0xff]
        %v1189 = vld [vmem:[%s831 + $0xb28] sm:$0xff]
        %v1190 = vld [vmem:[%s831 + $0xb30] sm:$0xff]
        %v1191 = vld [vmem:[%s831 + $0xb38] sm:$0xff]
        %v1192 = vld [vmem:[%s831 + $0xb40] sm:$0xff]
        %v1193 = vld [vmem:[%s831 + $0xb48] sm:$0xff]
        %v1194 = vld [vmem:[%s831 + $0xb50] sm:$0xff]
        %v1195 = vld [vmem:[%s831 + $0xb58] sm:$0xff]
        %v1196 = vld [vmem:[%s831 + $0xb60] sm:$0xff]
        %v1197 = vld [vmem:[%s831 + $0xb68] sm:$0xff]
        %v1198 = vld [vmem:[%s831 + $0xb70] sm:$0xff]
        %v1199 = vld [vmem:[%s831 + $0xb78] sm:$0xff]
        %v1200 = vld [vmem:[%s831 + $0xb80] sm:$0xff]
        %v1201 = vld [vmem:[%s831 + $0xb88] sm:$0xff]
        %v1202 = vld [vmem:[%s831 + $0xb90] sm:$0xff]
        %v1203 = vld [vmem:[%s831 + $0xb98] sm:$0xff]
        %v1204 = vld [vmem:[%s831 + $0xba0] sm:$0xff]
        %v1205 = vld [vmem:[%s831 + $0xba8] sm:$0xff]
        %v1206 = vld [vmem:[%s831 + $0xbb0] sm:$0xff]
        %v1207 = vld [vmem:[%s831 + $0xbb8] sm:$0xff]
        %v1208 = vld [vmem:[%s831 + $0xbc0] sm:$0xff]
        %v1209 = vld [vmem:[%s831 + $0xbc8] sm:$0xff]
        %v1210 = vld [vmem:[%s831 + $0xbd0] sm:$0xff]
        %v1211 = vld [vmem:[%s831 + $0xbd8] sm:$0xff]
        %v1212 = vld [vmem:[%s831 + $0xbe0] sm:$0xff]
        %v1213 = vld [vmem:[%s831 + $0xbe8] sm:$0xff]
        %v1214 = vld [vmem:[%s831 + $0xbf0] sm:$0xff]
        %v1215 = vld [vmem:[%s831 + $0xbf8] sm:$0xff]
        %v1216 = vld [vmem:[%s831 + $0xc00] sm:$0xff]
        %v1217 = vld [vmem:[%s831 + $0xc08] sm:$0xff]
        %v1218 = vld [vmem:[%s831 + $0xc10] sm:$0xff]
        %v1219 = vld [vmem:[%s831 + $0xc18] sm:$0xff]
        %v1220 = vld [vmem:[%s831 + $0xc20] sm:$0xff]
        %v1221 = vld [vmem:[%s831 + $0xc28] sm:$0xff]
        %v1222 = vld [vmem:[%s831 + $0xc30] sm:$0xff]
        %v1223 = vld [vmem:[%s831 + $0xc38] sm:$0xff]
        %v1224 = vld [vmem:[%s831 + $0xc40] sm:$0xff]
        %v1225 = vld [vmem:[%s831 + $0xc48] sm:$0xff]
        %v1226 = vld [vmem:[%s831 + $0xc50] sm:$0xff]
        %v1227 = vld [vmem:[%s831 + $0xc58] sm:$0xff]
        %v1228 = vld [vmem:[%s831 + $0xc60] sm:$0xff]
        %v1229 = vld [vmem:[%s831 + $0xc68] sm:$0xff]
        %v1230 = vld [vmem:[%s831 + $0xc70] sm:$0xff]
        %v1231 = vld [vmem:[%s831 + $0xc78] sm:$0xff]
        %v1232 = vld [vmem:[%s831 + $0xc80] sm:$0xff]
        %v1233 = vld [vmem:[%s831 + $0xc88] sm:$0xff]
        %v1234 = vld [vmem:[%s831 + $0xc90] sm:$0xff]
        %v1235 = vld [vmem:[%s831 + $0xc98] sm:$0xff]
        %v1236 = vld [vmem:[%s831 + $0xca0] sm:$0xff]
        %v1237 = vld [vmem:[%s831 + $0xca8] sm:$0xff]
        %v1238 = vld [vmem:[%s831 + $0xcb0] sm:$0xff]
        %v1239 = vld [vmem:[%s831 + $0xcb8] sm:$0xff]
        %v1240 = vld [vmem:[%s831 + $0xcc0] sm:$0xff]
        %v1241 = vld [vmem:[%s831 + $0xcc8] sm:$0xff]
        %v1242 = vld [vmem:[%s831 + $0xcd0] sm:$0xff]
        %v1243 = vld [vmem:[%s831 + $0xcd8] sm:$0xff]
        %v1244 = vld [vmem:[%s831 + $0xce0] sm:$0xff]
        %v1245 = vld [vmem:[%s831 + $0xce8] sm:$0xff]
        %v1246 = vld [vmem:[%s831 + $0xcf0] sm:$0xff]
        %v1247 = vld [vmem:[%s831 + $0xcf8] sm:$0xff]
        %v1248 = vld [vmem:[%s831 + $0xd00] sm:$0xff]
        %v1249 = vld [vmem:[%s831 + $0xd08] sm:$0xff]
        %v1250 = vld [vmem:[%s831 + $0xd10] sm:$0xff]
        %v1251 = vld [vmem:[%s831 + $0xd18] sm:$0xff]
        %v1252 = vld [vmem:[%s831 + $0xd20] sm:$0xff]
        %v1253 = vld [vmem:[%s831 + $0xd28] sm:$0xff]
        %v1254 = vld [vmem:[%s831 + $0xd30] sm:$0xff]
        %v1255 = vld [vmem:[%s831 + $0xd38] sm:$0xff]
        %v1256 = vld [vmem:[%s831 + $0xd40] sm:$0xff]
        %v1257 = vld [vmem:[%s831 + $0xd48] sm:$0xff]
        %v1258 = vld [vmem:[%s831 + $0xd50] sm:$0xff]
        %v1259 = vld [vmem:[%s831 + $0xd58] sm:$0xff]
        %v1260 = vld [vmem:[%s831 + $0xd60] sm:$0xff]
        %v1261 = vld [vmem:[%s831 + $0xd68] sm:$0xff]
        %v1262 = vld [vmem:[%s831 + $0xd70] sm:$0xff]
        %v1263 = vld [vmem:[%s831 + $0xd78] sm:$0xff]
        %v1264 = vld [vmem:[%s831 + $0xd80] sm:$0xff]
        %v1265 = vld [vmem:[%s831 + $0xd88] sm:$0xff]
        %v1266 = vld [vmem:[%s831 + $0xd90] sm:$0xff]
        %v1267 = vld [vmem:[%s831 + $0xd98] sm:$0xff]
        %v1268 = vld [vmem:[%s831 + $0xda0] sm:$0xff]
        %v1269 = vld [vmem:[%s831 + $0xda8] sm:$0xff]
        %v1270 = vld [vmem:[%s831 + $0xdb0] sm:$0xff]
        %v1271 = vld [vmem:[%s831 + $0xdb8] sm:$0xff]
        %v1272 = vld [vmem:[%s831 + $0xdc0] sm:$0xff]
        %v1273 = vld [vmem:[%s831 + $0xdc8] sm:$0xff]
        %v1274 = vld [vmem:[%s831 + $0xdd0] sm:$0xff]
        %v1275 = vld [vmem:[%s831 + $0xdd8] sm:$0xff]
        %v1276 = vld [vmem:[%s831 + $0xde0] sm:$0xff]
        %v1277 = vld [vmem:[%s831 + $0xde8] sm:$0xff]
        %v1278 = vld [vmem:[%s831 + $0xdf0] sm:$0xff]
        %v1279 = vld [vmem:[%s831 + $0xdf8] sm:$0xff]
        %v1280 = vld [vmem:[%s831 + $0xe00] sm:$0xff]
        %v1281 = vld [vmem:[%s831 + $0xe08] sm:$0xff]
        %v1282 = vld [vmem:[%s831 + $0xe10] sm:$0xff]
        %v1283 = vld [vmem:[%s831 + $0xe18] sm:$0xff]
        %v1284 = vld [vmem:[%s831 + $0xe20] sm:$0xff]
        %v1285 = vld [vmem:[%s831 + $0xe28] sm:$0xff]
        %v1286 = vld [vmem:[%s831 + $0xe30] sm:$0xff]
        %v1287 = vld [vmem:[%s831 + $0xe38] sm:$0xff]
        %v1288 = vld [vmem:[%s831 + $0xe40] sm:$0xff]
        %v1289 = vld [vmem:[%s831 + $0xe48] sm:$0xff]
        %v1290 = vld [vmem:[%s831 + $0xe50] sm:$0xff]
        %v1291 = vld [vmem:[%s831 + $0xe58] sm:$0xff]
        %v1292 = vld [vmem:[%s831 + $0xe60] sm:$0xff]
        %v1293 = vld [vmem:[%s831 + $0xe68] sm:$0xff]
        %v1294 = vld [vmem:[%s831 + $0xe70] sm:$0xff]
        %v1295 = vld [vmem:[%s831 + $0xe78] sm:$0xff]
        %v1296 = vld [vmem:[%s831 + $0xe80] sm:$0xff]
        %v1297 = vld [vmem:[%s831 + $0xe88] sm:$0xff]
        %v1298 = vld [vmem:[%s831 + $0xe90] sm:$0xff]
        %v1299 = vld [vmem:[%s831 + $0xe98] sm:$0xff]
        %v1300 = vld [vmem:[%s831 + $0xea0] sm:$0xff]
        %v1301 = vld [vmem:[%s831 + $0xea8] sm:$0xff]
        %v1302 = vld [vmem:[%s831 + $0xeb0] sm:$0xff]
        %v1303 = vld [vmem:[%s831 + $0xeb8] sm:$0xff]
        %v1304 = vld [vmem:[%s831 + $0xec0] sm:$0xff]
        %v1305 = vld [vmem:[%s831 + $0xec8] sm:$0xff]
        %v1306 = vld [vmem:[%s831 + $0xed0] sm:$0xff]
        %v1307 = vld [vmem:[%s831 + $0xed8] sm:$0xff]
        %v1308 = vld [vmem:[%s831 + $0xee0] sm:$0xff]
        %v1309 = vld [vmem:[%s831 + $0xee8] sm:$0xff]
        %v1310 = vld [vmem:[%s831 + $0xef0] sm:$0xff]
        %v1311 = vld [vmem:[%s831 + $0xef8] sm:$0xff]
        %v1312 = vld [vmem:[%s831 + $0xf00] sm:$0xff]
        %v1313 = vld [vmem:[%s831 + $0xf08] sm:$0xff]
        %v1314 = vld [vmem:[%s831 + $0xf10] sm:$0xff]
        %v1315 = vld [vmem:[%s831 + $0xf18] sm:$0xff]
        %v1316 = vld [vmem:[%s831 + $0xf20] sm:$0xff]
        %v1317 = vld [vmem:[%s831 + $0xf28] sm:$0xff]
        %v1318 = vld [vmem:[%s831 + $0xf30] sm:$0xff]
        %v1319 = vld [vmem:[%s831 + $0xf38] sm:$0xff]
        %v1320 = vld [vmem:[%s831 + $0xf40] sm:$0xff]
        %v1321 = vld [vmem:[%s831 + $0xf48] sm:$0xff]
        %v1322 = vld [vmem:[%s831 + $0xf50] sm:$0xff]
        %v1323 = vld [vmem:[%s831 + $0xf58] sm:$0xff]
        %v1324 = vld [vmem:[%s831 + $0xf60] sm:$0xff]
        %v1325 = vld [vmem:[%s831 + $0xf68] sm:$0xff]
        %v1326 = vld [vmem:[%s831 + $0xf70] sm:$0xff]
        %v1327 = vld [vmem:[%s831 + $0xf78] sm:$0xff]
        %v1328 = vld [vmem:[%s831 + $0xf80] sm:$0xff]
        %v1329 = vld [vmem:[%s831 + $0xf88] sm:$0xff]
        %v1330 = vld [vmem:[%s831 + $0xf90] sm:$0xff]
        %v1331 = vld [vmem:[%s831 + $0xf98] sm:$0xff]
        %v1332 = vld [vmem:[%s831 + $0xfa0] sm:$0xff]
        %v1333 = vld [vmem:[%s831 + $0xfa8] sm:$0xff]
        %v1334 = vld [vmem:[%s831 + $0xfb0] sm:$0xff]
        %v1335 = vld [vmem:[%s831 + $0xfb8] sm:$0xff]
        %v1336 = vld [vmem:[%s831 + $0xfc0] sm:$0xff]
        %v1337 = vld [vmem:[%s831 + $0xfc8] sm:$0xff]
        %v1338 = vld [vmem:[%s831 + $0xfd0] sm:$0xff]
        %v1339 = vld [vmem:[%s831 + $0xfd8] sm:$0xff]
        %v1340 = vld [vmem:[%s831 + $0xfe0] sm:$0xff]
        %v1341 = vld [vmem:[%s831 + $0xfe8] sm:$0xff]
        %v1342 = vld [vmem:[%s831 + $0xff0] sm:$0xff]
        %v1343 = vld [vmem:[%s831 + $0xff8] sm:$0xff]
        %v1344 = vld [vmem:[#allocation2] sm:$0xff]
        %v1345 = vld [vmem:[#allocation2 + $0x8] sm:$0xff]
        %v1346 = vld [vmem:[#allocation2 + $0x10] sm:$0xff]
        %v1347 = vld [vmem:[#allocation2 + $0x18] sm:$0xff]
        %v1348 = vld [vmem:[#allocation2 + $0x20] sm:$0xff]
        %v1349 = vld [vmem:[#allocation2 + $0x28] sm:$0xff]
        %v1350 = vld [vmem:[#allocation2 + $0x30] sm:$0xff]
        %v1351 = vld [vmem:[#allocation2 + $0x38] sm:$0xff]
        %v1353 = vlaneseq
        %v1354 = vshrl.u32 %v1353, 7
        %v1355 = vsub.s32 0, %v1354
        %v1356 = vrot.slane %v826, %v1355
        %v1357 = vlaneseq
        %v1358 = vshrl.u32 %v1357, 7
        %v1359 = vsub.s32 1, %v1358
        %v1360 = vrot.slane %v826, %v1359
        %v1361 = vlaneseq
        %v1362 = vshrl.u32 %v1361, 7
        %v1363 = vsub.s32 2, %v1362
        %v1364 = vrot.slane %v826, %v1363
        %v1365 = vlaneseq
        %v1366 = vshrl.u32 %v1365, 7
        %v1367 = vsub.s32 3, %v1366
        %v1368 = vrot.slane %v826, %v1367
        %v1369 = vlaneseq
        %v1370 = vshrl.u32 %v1369, 7
        %v1371 = vsub.s32 4, %v1370
        %v1372 = vrot.slane %v826, %v1371
        %v1373 = vlaneseq
        %v1374 = vshrl.u32 %v1373, 7
        %v1375 = vsub.s32 5, %v1374
        %v1376 = vrot.slane %v826, %v1375
        %v1377 = vlaneseq
        %v1378 = vshrl.u32 %v1377, 7
        %v1379 = vsub.s32 6, %v1378
        %v1380 = vrot.slane %v826, %v1379
        %v1381 = vlaneseq
        %v1382 = vshrl.u32 %v1381, 7
        %v1383 = vsub.s32 7, %v1382
        %v1384 = vrot.slane %v826, %v1383
        %v1401 = vunpack.c.l.b16 %v1344
        %v1402 = vunpack.c.h.b16 %v1344
        %v1403 = vunpack.c.l.b16 %v1345
        %v1404 = vunpack.c.h.b16 %v1345
        %v1405 = vunpack.c.l.b16 %v1346
        %v1406 = vunpack.c.h.b16 %v1346
        %v1407 = vunpack.c.l.b16 %v1347
        %v1408 = vunpack.c.h.b16 %v1347
        %v1409 = vunpack.c.l.b16 %v1348
        %v1410 = vunpack.c.h.b16 %v1348
        %v1411 = vunpack.c.l.b16 %v1349
        %v1412 = vunpack.c.h.b16 %v1349
        %v1413 = vunpack.c.l.b16 %v1350
        %v1414 = vunpack.c.h.b16 %v1350
        %v1415 = vunpack.c.l.b16 %v1351
        %v1416 = vunpack.c.h.b16 %v1351
        %v1417 = vpack.c.b16 %v1409, %v1401
        %v1418 = vpack.c.b16 %v1410, %v1402
        %v1419 = vpack.c.b16 %v1411, %v1403
        %v1420 = vpack.c.b16 %v1412, %v1404
        %v1421 = vpack.c.b16 %v1413, %v1405
        %v1422 = vpack.c.b16 %v1414, %v1406
        %v1423 = vpack.c.b16 %v1415, %v1407
        %v1424 = vpack.c.b16 %v1416, %v1408
        %v1945 = vunpack.c.l.b16 %v313
        %v1946 = vunpack.c.h.b16 %v313
        %v1947 = vunpack.c.l.b16 %v314
        %v1948 = vunpack.c.h.b16 %v314
        %v1949 = vunpack.c.l.b16 %v315
        %v1950 = vunpack.c.h.b16 %v315
        %v1951 = vunpack.c.l.b16 %v316
        %v1952 = vunpack.c.h.b16 %v316
        %v1953 = vunpack.c.l.b16 %v317
        %v1954 = vunpack.c.h.b16 %v317
        %v1955 = vunpack.c.l.b16 %v318
        %v1956 = vunpack.c.h.b16 %v318
        %v1957 = vunpack.c.l.b16 %v319
        %v1958 = vunpack.c.h.b16 %v319
        %v1959 = vunpack.c.l.b16 %v320
        %v1960 = vunpack.c.h.b16 %v320
        %v1961 = vunpack.c.l.b16 %v321
        %v1962 = vunpack.c.h.b16 %v321
        %v1963 = vunpack.c.l.b16 %v322
        %v1964 = vunpack.c.h.b16 %v322
        %v1965 = vunpack.c.l.b16 %v323
        %v1966 = vunpack.c.h.b16 %v323
        %v1967 = vunpack.c.l.b16 %v324
        %v1968 = vunpack.c.h.b16 %v324
        %v1969 = vunpack.c.l.b16 %v325
        %v1970 = vunpack.c.h.b16 %v325
        %v1971 = vunpack.c.l.b16 %v326
        %v1972 = vunpack.c.h.b16 %v326
        %v1973 = vunpack.c.l.b16 %v327
        %v1974 = vunpack.c.h.b16 %v327
        %v1975 = vunpack.c.l.b16 %v328
        %v1976 = vunpack.c.h.b16 %v328
        %v1977 = vunpack.c.l.b16 %v329
        %v1978 = vunpack.c.h.b16 %v329
        %v1979 = vunpack.c.l.b16 %v330
        %v1980 = vunpack.c.h.b16 %v330
        %v1981 = vunpack.c.l.b16 %v331
        %v1982 = vunpack.c.h.b16 %v331
        %v1983 = vunpack.c.l.b16 %v332
        %v1984 = vunpack.c.h.b16 %v332
        %v1985 = vunpack.c.l.b16 %v333
        %v1986 = vunpack.c.h.b16 %v333
        %v1987 = vunpack.c.l.b16 %v334
        %v1988 = vunpack.c.h.b16 %v334
        %v1989 = vunpack.c.l.b16 %v335
        %v1990 = vunpack.c.h.b16 %v335
        %v1991 = vunpack.c.l.b16 %v336
        %v1992 = vunpack.c.h.b16 %v336
        %v1993 = vunpack.c.l.b16 %v337
        %v1994 = vunpack.c.h.b16 %v337
        %v1995 = vunpack.c.l.b16 %v338
        %v1996 = vunpack.c.h.b16 %v338
        %v1997 = vunpack.c.l.b16 %v339
        %v1998 = vunpack.c.h.b16 %v339
        %v1999 = vunpack.c.l.b16 %v340
        %v2000 = vunpack.c.h.b16 %v340
        %v2001 = vunpack.c.l.b16 %v341
        %v2002 = vunpack.c.h.b16 %v341
        %v2003 = vunpack.c.l.b16 %v342
        %v2004 = vunpack.c.h.b16 %v342
        %v2005 = vunpack.c.l.b16 %v343
        %v2006 = vunpack.c.h.b16 %v343
        %v2007 = vunpack.c.l.b16 %v344
        %v2008 = vunpack.c.h.b16 %v344
        %v2009 = vunpack.c.l.b16 %v345
        %v2010 = vunpack.c.h.b16 %v345
        %v2011 = vunpack.c.l.b16 %v346
        %v2012 = vunpack.c.h.b16 %v346
        %v2013 = vunpack.c.l.b16 %v347
        %v2014 = vunpack.c.h.b16 %v347
        %v2015 = vunpack.c.l.b16 %v348
        %v2016 = vunpack.c.h.b16 %v348
        %v2017 = vunpack.c.l.b16 %v349
        %v2018 = vunpack.c.h.b16 %v349
        %v2019 = vunpack.c.l.b16 %v350
        %v2020 = vunpack.c.h.b16 %v350
        %v2021 = vunpack.c.l.b16 %v351
        %v2022 = vunpack.c.h.b16 %v351
        %v2023 = vunpack.c.l.b16 %v352
        %v2024 = vunpack.c.h.b16 %v352
        %v2025 = vunpack.c.l.b16 %v353
        %v2026 = vunpack.c.h.b16 %v353
        %v2027 = vunpack.c.l.b16 %v354
        %v2028 = vunpack.c.h.b16 %v354
        %v2029 = vunpack.c.l.b16 %v355
        %v2030 = vunpack.c.h.b16 %v355
        %v2031 = vunpack.c.l.b16 %v356
        %v2032 = vunpack.c.h.b16 %v356
        %v2033 = vunpack.c.l.b16 %v357
        %v2034 = vunpack.c.h.b16 %v357
        %v2035 = vunpack.c.l.b16 %v358
        %v2036 = vunpack.c.h.b16 %v358
        %v2037 = vunpack.c.l.b16 %v359
        %v2038 = vunpack.c.h.b16 %v359
        %v2039 = vunpack.c.l.b16 %v360
        %v2040 = vunpack.c.h.b16 %v360
        %v2041 = vunpack.c.l.b16 %v361
        %v2042 = vunpack.c.h.b16 %v361
        %v2043 = vunpack.c.l.b16 %v362
        %v2044 = vunpack.c.h.b16 %v362
        %v2045 = vunpack.c.l.b16 %v363
        %v2046 = vunpack.c.h.b16 %v363
        %v2047 = vunpack.c.l.b16 %v364
        %v2048 = vunpack.c.h.b16 %v364
        %v2049 = vunpack.c.l.b16 %v365
        %v2050 = vunpack.c.h.b16 %v365
        %v2051 = vunpack.c.l.b16 %v366
        %v2052 = vunpack.c.h.b16 %v366
        %v2053 = vunpack.c.l.b16 %v367
        %v2054 = vunpack.c.h.b16 %v367
        %v2055 = vunpack.c.l.b16 %v368
        %v2056 = vunpack.c.h.b16 %v368
        %v2057 = vunpack.c.l.b16 %v369
        %v2058 = vunpack.c.h.b16 %v369
        %v2059 = vunpack.c.l.b16 %v370
        %v2060 = vunpack.c.h.b16 %v370
        %v2061 = vunpack.c.l.b16 %v371
        %v2062 = vunpack.c.h.b16 %v371
        %v2063 = vunpack.c.l.b16 %v372
        %v2064 = vunpack.c.h.b16 %v372
        %v2065 = vunpack.c.l.b16 %v373
        %v2066 = vunpack.c.h.b16 %v373
        %v2067 = vunpack.c.l.b16 %v374
        %v2068 = vunpack.c.h.b16 %v374
        %v2069 = vunpack.c.l.b16 %v375
        %v2070 = vunpack.c.h.b16 %v375
        %v2071 = vunpack.c.l.b16 %v376
        %v2072 = vunpack.c.h.b16 %v376
        %v2073 = vunpack.c.l.b16 %v377
        %v2074 = vunpack.c.h.b16 %v377
        %v2075 = vunpack.c.l.b16 %v378
        %v2076 = vunpack.c.h.b16 %v378
        %v2077 = vunpack.c.l.b16 %v379
        %v2078 = vunpack.c.h.b16 %v379
        %v2079 = vunpack.c.l.b16 %v380
        %v2080 = vunpack.c.h.b16 %v380
        %v2081 = vunpack.c.l.b16 %v381
        %v2082 = vunpack.c.h.b16 %v381
        %v2083 = vunpack.c.l.b16 %v382
        %v2084 = vunpack.c.h.b16 %v382
        %v2085 = vunpack.c.l.b16 %v383
        %v2086 = vunpack.c.h.b16 %v383
        %v2087 = vunpack.c.l.b16 %v384
        %v2088 = vunpack.c.h.b16 %v384
        %v2089 = vunpack.c.l.b16 %v385
        %v2090 = vunpack.c.h.b16 %v385
        %v2091 = vunpack.c.l.b16 %v386
        %v2092 = vunpack.c.h.b16 %v386
        %v2093 = vunpack.c.l.b16 %v387
        %v2094 = vunpack.c.h.b16 %v387
        %v2095 = vunpack.c.l.b16 %v388
        %v2096 = vunpack.c.h.b16 %v388
        %v2097 = vunpack.c.l.b16 %v389
        %v2098 = vunpack.c.h.b16 %v389
        %v2099 = vunpack.c.l.b16 %v390
        %v2100 = vunpack.c.h.b16 %v390
        %v2101 = vunpack.c.l.b16 %v391
        %v2102 = vunpack.c.h.b16 %v391
        %v2103 = vunpack.c.l.b16 %v392
        %v2104 = vunpack.c.h.b16 %v392
        %v2105 = vunpack.c.l.b16 %v393
        %v2106 = vunpack.c.h.b16 %v393
        %v2107 = vunpack.c.l.b16 %v394
        %v2108 = vunpack.c.h.b16 %v394
        %v2109 = vunpack.c.l.b16 %v395
        %v2110 = vunpack.c.h.b16 %v395
        %v2111 = vunpack.c.l.b16 %v396
        %v2112 = vunpack.c.h.b16 %v396
        %v2113 = vunpack.c.l.b16 %v397
        %v2114 = vunpack.c.h.b16 %v397
        %v2115 = vunpack.c.l.b16 %v398
        %v2116 = vunpack.c.h.b16 %v398
        %v2117 = vunpack.c.l.b16 %v399
        %v2118 = vunpack.c.h.b16 %v399
        %v2119 = vunpack.c.l.b16 %v400
        %v2120 = vunpack.c.h.b16 %v400
        %v2121 = vunpack.c.l.b16 %v401
        %v2122 = vunpack.c.h.b16 %v401
        %v2123 = vunpack.c.l.b16 %v402
        %v2124 = vunpack.c.h.b16 %v402
        %v2125 = vunpack.c.l.b16 %v403
        %v2126 = vunpack.c.h.b16 %v403
        %v2127 = vunpack.c.l.b16 %v404
        %v2128 = vunpack.c.h.b16 %v404
        %v2129 = vunpack.c.l.b16 %v405
        %v2130 = vunpack.c.h.b16 %v405
        %v2131 = vunpack.c.l.b16 %v406
        %v2132 = vunpack.c.h.b16 %v406
        %v2133 = vunpack.c.l.b16 %v407
        %v2134 = vunpack.c.h.b16 %v407
        %v2135 = vunpack.c.l.b16 %v408
        %v2136 = vunpack.c.h.b16 %v408
        %v2137 = vunpack.c.l.b16 %v409
        %v2138 = vunpack.c.h.b16 %v409
        %v2139 = vunpack.c.l.b16 %v410
        %v2140 = vunpack.c.h.b16 %v410
        %v2141 = vunpack.c.l.b16 %v411
        %v2142 = vunpack.c.h.b16 %v411
        %v2143 = vunpack.c.l.b16 %v412
        %v2144 = vunpack.c.h.b16 %v412
        %v2145 = vunpack.c.l.b16 %v413
        %v2146 = vunpack.c.h.b16 %v413
        %v2147 = vunpack.c.l.b16 %v414
        %v2148 = vunpack.c.h.b16 %v414
        %v2149 = vunpack.c.l.b16 %v415
        %v2150 = vunpack.c.h.b16 %v415
        %v2151 = vunpack.c.l.b16 %v416
        %v2152 = vunpack.c.h.b16 %v416
        %v2153 = vunpack.c.l.b16 %v417
        %v2154 = vunpack.c.h.b16 %v417
        %v2155 = vunpack.c.l.b16 %v418
        %v2156 = vunpack.c.h.b16 %v418
        %v2157 = vunpack.c.l.b16 %v419
        %v2158 = vunpack.c.h.b16 %v419
        %v2159 = vunpack.c.l.b16 %v420
        %v2160 = vunpack.c.h.b16 %v420
        %v2161 = vunpack.c.l.b16 %v421
        %v2162 = vunpack.c.h.b16 %v421
        %v2163 = vunpack.c.l.b16 %v422
        %v2164 = vunpack.c.h.b16 %v422
        %v2165 = vunpack.c.l.b16 %v423
        %v2166 = vunpack.c.h.b16 %v423
        %v2167 = vunpack.c.l.b16 %v424
        %v2168 = vunpack.c.h.b16 %v424
        %v2169 = vunpack.c.l.b16 %v425
        %v2170 = vunpack.c.h.b16 %v425
        %v2171 = vunpack.c.l.b16 %v426
        %v2172 = vunpack.c.h.b16 %v426
        %v2173 = vunpack.c.l.b16 %v427
        %v2174 = vunpack.c.h.b16 %v427
        %v2175 = vunpack.c.l.b16 %v428
        %v2176 = vunpack.c.h.b16 %v428
        %v2177 = vunpack.c.l.b16 %v429
        %v2178 = vunpack.c.h.b16 %v429
        %v2179 = vunpack.c.l.b16 %v430
        %v2180 = vunpack.c.h.b16 %v430
        %v2181 = vunpack.c.l.b16 %v431
        %v2182 = vunpack.c.h.b16 %v431
        %v2183 = vunpack.c.l.b16 %v432
        %v2184 = vunpack.c.h.b16 %v432
        %v2185 = vunpack.c.l.b16 %v433
        %v2186 = vunpack.c.h.b16 %v433
        %v2187 = vunpack.c.l.b16 %v434
        %v2188 = vunpack.c.h.b16 %v434
        %v2189 = vunpack.c.l.b16 %v435
        %v2190 = vunpack.c.h.b16 %v435
        %v2191 = vunpack.c.l.b16 %v436
        %v2192 = vunpack.c.h.b16 %v436
        %v2193 = vunpack.c.l.b16 %v437
        %v2194 = vunpack.c.h.b16 %v437
        %v2195 = vunpack.c.l.b16 %v438
        %v2196 = vunpack.c.h.b16 %v438
        %v2197 = vunpack.c.l.b16 %v439
        %v2198 = vunpack.c.h.b16 %v439
        %v2199 = vunpack.c.l.b16 %v440
        %v2200 = vunpack.c.h.b16 %v440
        %v2201 = vunpack.c.l.b16 %v441
        %v2202 = vunpack.c.h.b16 %v441
        %v2203 = vunpack.c.l.b16 %v442
        %v2204 = vunpack.c.h.b16 %v442
        %v2205 = vunpack.c.l.b16 %v443
        %v2206 = vunpack.c.h.b16 %v443
        %v2207 = vunpack.c.l.b16 %v444
        %v2208 = vunpack.c.h.b16 %v444
        %v2209 = vunpack.c.l.b16 %v445
        %v2210 = vunpack.c.h.b16 %v445
        %v2211 = vunpack.c.l.b16 %v446
        %v2212 = vunpack.c.h.b16 %v446
        %v2213 = vunpack.c.l.b16 %v447
        %v2214 = vunpack.c.h.b16 %v447
        %v2215 = vunpack.c.l.b16 %v448
        %v2216 = vunpack.c.h.b16 %v448
        %v2217 = vunpack.c.l.b16 %v449
        %v2218 = vunpack.c.h.b16 %v449
        %v2219 = vunpack.c.l.b16 %v450
        %v2220 = vunpack.c.h.b16 %v450
        %v2221 = vunpack.c.l.b16 %v451
        %v2222 = vunpack.c.h.b16 %v451
        %v2223 = vunpack.c.l.b16 %v452
        %v2224 = vunpack.c.h.b16 %v452
        %v2225 = vunpack.c.l.b16 %v453
        %v2226 = vunpack.c.h.b16 %v453
        %v2227 = vunpack.c.l.b16 %v454
        %v2228 = vunpack.c.h.b16 %v454
        %v2229 = vunpack.c.l.b16 %v455
        %v2230 = vunpack.c.h.b16 %v455
        %v2231 = vunpack.c.l.b16 %v456
        %v2232 = vunpack.c.h.b16 %v456
        %v2233 = vunpack.c.l.b16 %v457
        %v2234 = vunpack.c.h.b16 %v457
        %v2235 = vunpack.c.l.b16 %v458
        %v2236 = vunpack.c.h.b16 %v458
        %v2237 = vunpack.c.l.b16 %v459
        %v2238 = vunpack.c.h.b16 %v459
        %v2239 = vunpack.c.l.b16 %v460
        %v2240 = vunpack.c.h.b16 %v460
        %v2241 = vunpack.c.l.b16 %v461
        %v2242 = vunpack.c.h.b16 %v461
        %v2243 = vunpack.c.l.b16 %v462
        %v2244 = vunpack.c.h.b16 %v462
        %v2245 = vunpack.c.l.b16 %v463
        %v2246 = vunpack.c.h.b16 %v463
        %v2247 = vunpack.c.l.b16 %v464
        %v2248 = vunpack.c.h.b16 %v464
        %v2249 = vunpack.c.l.b16 %v465
        %v2250 = vunpack.c.h.b16 %v465
        %v2251 = vunpack.c.l.b16 %v466
        %v2252 = vunpack.c.h.b16 %v466
        %v2253 = vunpack.c.l.b16 %v467
        %v2254 = vunpack.c.h.b16 %v467
        %v2255 = vunpack.c.l.b16 %v468
        %v2256 = vunpack.c.h.b16 %v468
        %v2257 = vunpack.c.l.b16 %v469
        %v2258 = vunpack.c.h.b16 %v469
        %v2259 = vunpack.c.l.b16 %v470
        %v2260 = vunpack.c.h.b16 %v470
        %v2261 = vunpack.c.l.b16 %v471
        %v2262 = vunpack.c.h.b16 %v471
        %v2263 = vunpack.c.l.b16 %v472
        %v2264 = vunpack.c.h.b16 %v472
        %v2265 = vunpack.c.l.b16 %v473
        %v2266 = vunpack.c.h.b16 %v473
        %v2267 = vunpack.c.l.b16 %v474
        %v2268 = vunpack.c.h.b16 %v474
        %v2269 = vunpack.c.l.b16 %v475
        %v2270 = vunpack.c.h.b16 %v475
        %v2271 = vunpack.c.l.b16 %v476
        %v2272 = vunpack.c.h.b16 %v476
        %v2273 = vunpack.c.l.b16 %v477
        %v2274 = vunpack.c.h.b16 %v477
        %v2275 = vunpack.c.l.b16 %v478
        %v2276 = vunpack.c.h.b16 %v478
        %v2277 = vunpack.c.l.b16 %v479
        %v2278 = vunpack.c.h.b16 %v479
        %v2279 = vunpack.c.l.b16 %v480
        %v2280 = vunpack.c.h.b16 %v480
        %v2281 = vunpack.c.l.b16 %v481
        %v2282 = vunpack.c.h.b16 %v481
        %v2283 = vunpack.c.l.b16 %v482
        %v2284 = vunpack.c.h.b16 %v482
        %v2285 = vunpack.c.l.b16 %v483
        %v2286 = vunpack.c.h.b16 %v483
        %v2287 = vunpack.c.l.b16 %v484
        %v2288 = vunpack.c.h.b16 %v484
        %v2289 = vunpack.c.l.b16 %v485
        %v2290 = vunpack.c.h.b16 %v485
        %v2291 = vunpack.c.l.b16 %v486
        %v2292 = vunpack.c.h.b16 %v486
        %v2293 = vunpack.c.l.b16 %v487
        %v2294 = vunpack.c.h.b16 %v487
        %v2295 = vunpack.c.l.b16 %v488
        %v2296 = vunpack.c.h.b16 %v488
        %v2297 = vunpack.c.l.b16 %v489
        %v2298 = vunpack.c.h.b16 %v489
        %v2299 = vunpack.c.l.b16 %v490
        %v2300 = vunpack.c.h.b16 %v490
        %v2301 = vunpack.c.l.b16 %v491
        %v2302 = vunpack.c.h.b16 %v491
        %v2303 = vunpack.c.l.b16 %v492
        %v2304 = vunpack.c.h.b16 %v492
        %v2305 = vunpack.c.l.b16 %v493
        %v2306 = vunpack.c.h.b16 %v493
        %v2307 = vunpack.c.l.b16 %v494
        %v2308 = vunpack.c.h.b16 %v494
        %v2309 = vunpack.c.l.b16 %v495
        %v2310 = vunpack.c.h.b16 %v495
        %v2311 = vunpack.c.l.b16 %v496
        %v2312 = vunpack.c.h.b16 %v496
        %v2313 = vunpack.c.l.b16 %v497
        %v2314 = vunpack.c.h.b16 %v497
        %v2315 = vunpack.c.l.b16 %v498
        %v2316 = vunpack.c.h.b16 %v498
        %v2317 = vunpack.c.l.b16 %v499
        %v2318 = vunpack.c.h.b16 %v499
        %v2319 = vunpack.c.l.b16 %v500
        %v2320 = vunpack.c.h.b16 %v500
        %v2321 = vunpack.c.l.b16 %v501
        %v2322 = vunpack.c.h.b16 %v501
        %v2323 = vunpack.c.l.b16 %v502
        %v2324 = vunpack.c.h.b16 %v502
        %v2325 = vunpack.c.l.b16 %v503
        %v2326 = vunpack.c.h.b16 %v503
        %v2327 = vunpack.c.l.b16 %v504
        %v2328 = vunpack.c.h.b16 %v504
        %v2329 = vunpack.c.l.b16 %v505
        %v2330 = vunpack.c.h.b16 %v505
        %v2331 = vunpack.c.l.b16 %v506
        %v2332 = vunpack.c.h.b16 %v506
        %v2333 = vunpack.c.l.b16 %v507
        %v2334 = vunpack.c.h.b16 %v507
        %v2335 = vunpack.c.l.b16 %v508
        %v2336 = vunpack.c.h.b16 %v508
        %v2337 = vunpack.c.l.b16 %v509
        %v2338 = vunpack.c.h.b16 %v509
        %v2339 = vunpack.c.l.b16 %v510
        %v2340 = vunpack.c.h.b16 %v510
        %v2341 = vunpack.c.l.b16 %v511
        %v2342 = vunpack.c.h.b16 %v511
        %v2343 = vunpack.c.l.b16 %v512
        %v2344 = vunpack.c.h.b16 %v512
        %v2345 = vunpack.c.l.b16 %v513
        %v2346 = vunpack.c.h.b16 %v513
        %v2347 = vunpack.c.l.b16 %v514
        %v2348 = vunpack.c.h.b16 %v514
        %v2349 = vunpack.c.l.b16 %v515
        %v2350 = vunpack.c.h.b16 %v515
        %v2351 = vunpack.c.l.b16 %v516
        %v2352 = vunpack.c.h.b16 %v516
        %v2353 = vunpack.c.l.b16 %v517
        %v2354 = vunpack.c.h.b16 %v517
        %v2355 = vunpack.c.l.b16 %v518
        %v2356 = vunpack.c.h.b16 %v518
        %v2357 = vunpack.c.l.b16 %v519
        %v2358 = vunpack.c.h.b16 %v519
        %v2359 = vunpack.c.l.b16 %v520
        %v2360 = vunpack.c.h.b16 %v520
        %v2361 = vunpack.c.l.b16 %v521
        %v2362 = vunpack.c.h.b16 %v521
        %v2363 = vunpack.c.l.b16 %v522
        %v2364 = vunpack.c.h.b16 %v522
        %v2365 = vunpack.c.l.b16 %v523
        %v2366 = vunpack.c.h.b16 %v523
        %v2367 = vunpack.c.l.b16 %v524
        %v2368 = vunpack.c.h.b16 %v524
        %v2369 = vunpack.c.l.b16 %v525
        %v2370 = vunpack.c.h.b16 %v525
        %v2371 = vunpack.c.l.b16 %v526
        %v2372 = vunpack.c.h.b16 %v526
        %v2373 = vunpack.c.l.b16 %v527
        %v2374 = vunpack.c.h.b16 %v527
        %v2375 = vunpack.c.l.b16 %v528
        %v2376 = vunpack.c.h.b16 %v528
        %v2377 = vunpack.c.l.b16 %v529
        %v2378 = vunpack.c.h.b16 %v529
        %v2379 = vunpack.c.l.b16 %v530
        %v2380 = vunpack.c.h.b16 %v530
        %v2381 = vunpack.c.l.b16 %v531
        %v2382 = vunpack.c.h.b16 %v531
        %v2383 = vunpack.c.l.b16 %v532
        %v2384 = vunpack.c.h.b16 %v532
        %v2385 = vunpack.c.l.b16 %v533
        %v2386 = vunpack.c.h.b16 %v533
        %v2387 = vunpack.c.l.b16 %v534
        %v2388 = vunpack.c.h.b16 %v534
        %v2389 = vunpack.c.l.b16 %v535
        %v2390 = vunpack.c.h.b16 %v535
        %v2391 = vunpack.c.l.b16 %v536
        %v2392 = vunpack.c.h.b16 %v536
        %v2393 = vunpack.c.l.b16 %v537
        %v2394 = vunpack.c.h.b16 %v537
        %v2395 = vunpack.c.l.b16 %v538
        %v2396 = vunpack.c.h.b16 %v538
        %v2397 = vunpack.c.l.b16 %v539
        %v2398 = vunpack.c.h.b16 %v539
        %v2399 = vunpack.c.l.b16 %v540
        %v2400 = vunpack.c.h.b16 %v540
        %v2401 = vunpack.c.l.b16 %v541
        %v2402 = vunpack.c.h.b16 %v541
        %v2403 = vunpack.c.l.b16 %v542
        %v2404 = vunpack.c.h.b16 %v542
        %v2405 = vunpack.c.l.b16 %v543
        %v2406 = vunpack.c.h.b16 %v543
        %v2407 = vunpack.c.l.b16 %v544
        %v2408 = vunpack.c.h.b16 %v544
        %v2409 = vunpack.c.l.b16 %v545
        %v2410 = vunpack.c.h.b16 %v545
        %v2411 = vunpack.c.l.b16 %v546
        %v2412 = vunpack.c.h.b16 %v546
        %v2413 = vunpack.c.l.b16 %v547
        %v2414 = vunpack.c.h.b16 %v547
        %v2415 = vunpack.c.l.b16 %v548
        %v2416 = vunpack.c.h.b16 %v548
        %v2417 = vunpack.c.l.b16 %v549
        %v2418 = vunpack.c.h.b16 %v549
        %v2419 = vunpack.c.l.b16 %v550
        %v2420 = vunpack.c.h.b16 %v550
        %v2421 = vunpack.c.l.b16 %v551
        %v2422 = vunpack.c.h.b16 %v551
        %v2423 = vunpack.c.l.b16 %v552
        %v2424 = vunpack.c.h.b16 %v552
        %v2425 = vunpack.c.l.b16 %v553
        %v2426 = vunpack.c.h.b16 %v553
        %v2427 = vunpack.c.l.b16 %v554
        %v2428 = vunpack.c.h.b16 %v554
        %v2429 = vunpack.c.l.b16 %v555
        %v2430 = vunpack.c.h.b16 %v555
        %v2431 = vunpack.c.l.b16 %v556
        %v2432 = vunpack.c.h.b16 %v556
        %v2433 = vunpack.c.l.b16 %v557
        %v2434 = vunpack.c.h.b16 %v557
        %v2435 = vunpack.c.l.b16 %v558
        %v2436 = vunpack.c.h.b16 %v558
        %v2437 = vunpack.c.l.b16 %v559
        %v2438 = vunpack.c.h.b16 %v559
        %v2439 = vunpack.c.l.b16 %v560
        %v2440 = vunpack.c.h.b16 %v560
        %v2441 = vunpack.c.l.b16 %v561
        %v2442 = vunpack.c.h.b16 %v561
        %v2443 = vunpack.c.l.b16 %v562
        %v2444 = vunpack.c.h.b16 %v562
        %v2445 = vunpack.c.l.b16 %v563
        %v2446 = vunpack.c.h.b16 %v563
        %v2447 = vunpack.c.l.b16 %v564
        %v2448 = vunpack.c.h.b16 %v564
        %v2449 = vunpack.c.l.b16 %v565
        %v2450 = vunpack.c.h.b16 %v565
        %v2451 = vunpack.c.l.b16 %v566
        %v2452 = vunpack.c.h.b16 %v566
        %v2453 = vunpack.c.l.b16 %v567
        %v2454 = vunpack.c.h.b16 %v567
        %v2455 = vunpack.c.l.b16 %v568
        %v2456 = vunpack.c.h.b16 %v568
        %v2457 = vunpack.c.l.b16 %v569
        %v2458 = vunpack.c.h.b16 %v569
        %v2459 = vunpack.c.l.b16 %v570
        %v2460 = vunpack.c.h.b16 %v570
        %v2461 = vunpack.c.l.b16 %v571
        %v2462 = vunpack.c.h.b16 %v571
        %v2463 = vunpack.c.l.b16 %v572
        %v2464 = vunpack.c.h.b16 %v572
        %v2465 = vunpack.c.l.b16 %v573
        %v2466 = vunpack.c.h.b16 %v573
        %v2467 = vunpack.c.l.b16 %v574
        %v2468 = vunpack.c.h.b16 %v574
        %v2469 = vunpack.c.l.b16 %v575
        %v2470 = vunpack.c.h.b16 %v575
        %v2471 = vunpack.c.l.b16 %v576
        %v2472 = vunpack.c.h.b16 %v576
        %v2473 = vunpack.c.l.b16 %v577
        %v2474 = vunpack.c.h.b16 %v577
        %v2475 = vunpack.c.l.b16 %v578
        %v2476 = vunpack.c.h.b16 %v578
        %v2477 = vunpack.c.l.b16 %v579
        %v2478 = vunpack.c.h.b16 %v579
        %v2479 = vunpack.c.l.b16 %v580
        %v2480 = vunpack.c.h.b16 %v580
        %v2481 = vunpack.c.l.b16 %v581
        %v2482 = vunpack.c.h.b16 %v581
        %v2483 = vunpack.c.l.b16 %v582
        %v2484 = vunpack.c.h.b16 %v582
        %v2485 = vunpack.c.l.b16 %v583
        %v2486 = vunpack.c.h.b16 %v583
        %v2487 = vunpack.c.l.b16 %v584
        %v2488 = vunpack.c.h.b16 %v584
        %v2489 = vunpack.c.l.b16 %v585
        %v2490 = vunpack.c.h.b16 %v585
        %v2491 = vunpack.c.l.b16 %v586
        %v2492 = vunpack.c.h.b16 %v586
        %v2493 = vunpack.c.l.b16 %v587
        %v2494 = vunpack.c.h.b16 %v587
        %v2495 = vunpack.c.l.b16 %v588
        %v2496 = vunpack.c.h.b16 %v588
        %v2497 = vunpack.c.l.b16 %v589
        %v2498 = vunpack.c.h.b16 %v589
        %v2499 = vunpack.c.l.b16 %v590
        %v2500 = vunpack.c.h.b16 %v590
        %v2501 = vunpack.c.l.b16 %v591
        %v2502 = vunpack.c.h.b16 %v591
        %v2503 = vunpack.c.l.b16 %v592
        %v2504 = vunpack.c.h.b16 %v592
        %v2505 = vunpack.c.l.b16 %v593
        %v2506 = vunpack.c.h.b16 %v593
        %v2507 = vunpack.c.l.b16 %v594
        %v2508 = vunpack.c.h.b16 %v594
        %v2509 = vunpack.c.l.b16 %v595
        %v2510 = vunpack.c.h.b16 %v595
        %v2511 = vunpack.c.l.b16 %v596
        %v2512 = vunpack.c.h.b16 %v596
        %v2513 = vunpack.c.l.b16 %v597
        %v2514 = vunpack.c.h.b16 %v597
        %v2515 = vunpack.c.l.b16 %v598
        %v2516 = vunpack.c.h.b16 %v598
        %v2517 = vunpack.c.l.b16 %v599
        %v2518 = vunpack.c.h.b16 %v599
        %v2519 = vunpack.c.l.b16 %v600
        %v2520 = vunpack.c.h.b16 %v600
        %v2521 = vunpack.c.l.b16 %v601
        %v2522 = vunpack.c.h.b16 %v601
        %v2523 = vunpack.c.l.b16 %v602
        %v2524 = vunpack.c.h.b16 %v602
        %v2525 = vunpack.c.l.b16 %v603
        %v2526 = vunpack.c.h.b16 %v603
        %v2527 = vunpack.c.l.b16 %v604
        %v2528 = vunpack.c.h.b16 %v604
        %v2529 = vunpack.c.l.b16 %v605
        %v2530 = vunpack.c.h.b16 %v605
        %v2531 = vunpack.c.l.b16 %v606
        %v2532 = vunpack.c.h.b16 %v606
        %v2533 = vunpack.c.l.b16 %v607
        %v2534 = vunpack.c.h.b16 %v607
        %v2535 = vunpack.c.l.b16 %v608
        %v2536 = vunpack.c.h.b16 %v608
        %v2537 = vunpack.c.l.b16 %v609
        %v2538 = vunpack.c.h.b16 %v609
        %v2539 = vunpack.c.l.b16 %v610
        %v2540 = vunpack.c.h.b16 %v610
        %v2541 = vunpack.c.l.b16 %v611
        %v2542 = vunpack.c.h.b16 %v611
        %v2543 = vunpack.c.l.b16 %v612
        %v2544 = vunpack.c.h.b16 %v612
        %v2545 = vunpack.c.l.b16 %v613
        %v2546 = vunpack.c.h.b16 %v613
        %v2547 = vunpack.c.l.b16 %v614
        %v2548 = vunpack.c.h.b16 %v614
        %v2549 = vunpack.c.l.b16 %v615
        %v2550 = vunpack.c.h.b16 %v615
        %v2551 = vunpack.c.l.b16 %v616
        %v2552 = vunpack.c.h.b16 %v616
        %v2553 = vunpack.c.l.b16 %v617
        %v2554 = vunpack.c.h.b16 %v617
        %v2555 = vunpack.c.l.b16 %v618
        %v2556 = vunpack.c.h.b16 %v618
        %v2557 = vunpack.c.l.b16 %v619
        %v2558 = vunpack.c.h.b16 %v619
        %v2559 = vunpack.c.l.b16 %v620
        %v2560 = vunpack.c.h.b16 %v620
        %v2561 = vunpack.c.l.b16 %v621
        %v2562 = vunpack.c.h.b16 %v621
        %v2563 = vunpack.c.l.b16 %v622
        %v2564 = vunpack.c.h.b16 %v622
        %v2565 = vunpack.c.l.b16 %v623
        %v2566 = vunpack.c.h.b16 %v623
        %v2567 = vunpack.c.l.b16 %v624
        %v2568 = vunpack.c.h.b16 %v624
        %v2569 = vunpack.c.l.b16 %v625
        %v2570 = vunpack.c.h.b16 %v625
        %v2571 = vunpack.c.l.b16 %v626
        %v2572 = vunpack.c.h.b16 %v626
        %v2573 = vunpack.c.l.b16 %v627
        %v2574 = vunpack.c.h.b16 %v627
        %v2575 = vunpack.c.l.b16 %v628
        %v2576 = vunpack.c.h.b16 %v628
        %v2577 = vunpack.c.l.b16 %v629
        %v2578 = vunpack.c.h.b16 %v629
        %v2579 = vunpack.c.l.b16 %v630
        %v2580 = vunpack.c.h.b16 %v630
        %v2581 = vunpack.c.l.b16 %v631
        %v2582 = vunpack.c.h.b16 %v631
        %v2583 = vunpack.c.l.b16 %v632
        %v2584 = vunpack.c.h.b16 %v632
        %v2585 = vunpack.c.l.b16 %v633
        %v2586 = vunpack.c.h.b16 %v633
        %v2587 = vunpack.c.l.b16 %v634
        %v2588 = vunpack.c.h.b16 %v634
        %v2589 = vunpack.c.l.b16 %v635
        %v2590 = vunpack.c.h.b16 %v635
        %v2591 = vunpack.c.l.b16 %v636
        %v2592 = vunpack.c.h.b16 %v636
        %v2593 = vunpack.c.l.b16 %v637
        %v2594 = vunpack.c.h.b16 %v637
        %v2595 = vunpack.c.l.b16 %v638
        %v2596 = vunpack.c.h.b16 %v638
        %v2597 = vunpack.c.l.b16 %v639
        %v2598 = vunpack.c.h.b16 %v639
        %v2599 = vunpack.c.l.b16 %v640
        %v2600 = vunpack.c.h.b16 %v640
        %v2601 = vunpack.c.l.b16 %v641
        %v2602 = vunpack.c.h.b16 %v641
        %v2603 = vunpack.c.l.b16 %v642
        %v2604 = vunpack.c.h.b16 %v642
        %v2605 = vunpack.c.l.b16 %v643
        %v2606 = vunpack.c.h.b16 %v643
        %v2607 = vunpack.c.l.b16 %v644
        %v2608 = vunpack.c.h.b16 %v644
        %v2609 = vunpack.c.l.b16 %v645
        %v2610 = vunpack.c.h.b16 %v645
        %v2611 = vunpack.c.l.b16 %v646
        %v2612 = vunpack.c.h.b16 %v646
        %v2613 = vunpack.c.l.b16 %v647
        %v2614 = vunpack.c.h.b16 %v647
        %v2615 = vunpack.c.l.b16 %v648
        %v2616 = vunpack.c.h.b16 %v648
        %v2617 = vunpack.c.l.b16 %v649
        %v2618 = vunpack.c.h.b16 %v649
        %v2619 = vunpack.c.l.b16 %v650
        %v2620 = vunpack.c.h.b16 %v650
        %v2621 = vunpack.c.l.b16 %v651
        %v2622 = vunpack.c.h.b16 %v651
        %v2623 = vunpack.c.l.b16 %v652
        %v2624 = vunpack.c.h.b16 %v652
        %v2625 = vunpack.c.l.b16 %v653
        %v2626 = vunpack.c.h.b16 %v653
        %v2627 = vunpack.c.l.b16 %v654
        %v2628 = vunpack.c.h.b16 %v654
        %v2629 = vunpack.c.l.b16 %v655
        %v2630 = vunpack.c.h.b16 %v655
        %v2631 = vunpack.c.l.b16 %v656
        %v2632 = vunpack.c.h.b16 %v656
        %v2633 = vunpack.c.l.b16 %v657
        %v2634 = vunpack.c.h.b16 %v657
        %v2635 = vunpack.c.l.b16 %v658
        %v2636 = vunpack.c.h.b16 %v658
        %v2637 = vunpack.c.l.b16 %v659
        %v2638 = vunpack.c.h.b16 %v659
        %v2639 = vunpack.c.l.b16 %v660
        %v2640 = vunpack.c.h.b16 %v660
        %v2641 = vunpack.c.l.b16 %v661
        %v2642 = vunpack.c.h.b16 %v661
        %v2643 = vunpack.c.l.b16 %v662
        %v2644 = vunpack.c.h.b16 %v662
        %v2645 = vunpack.c.l.b16 %v663
        %v2646 = vunpack.c.h.b16 %v663
        %v2647 = vunpack.c.l.b16 %v664
        %v2648 = vunpack.c.h.b16 %v664
        %v2649 = vunpack.c.l.b16 %v665
        %v2650 = vunpack.c.h.b16 %v665
        %v2651 = vunpack.c.l.b16 %v666
        %v2652 = vunpack.c.h.b16 %v666
        %v2653 = vunpack.c.l.b16 %v667
        %v2654 = vunpack.c.h.b16 %v667
        %v2655 = vunpack.c.l.b16 %v668
        %v2656 = vunpack.c.h.b16 %v668
        %v2657 = vunpack.c.l.b16 %v669
        %v2658 = vunpack.c.h.b16 %v669
        %v2659 = vunpack.c.l.b16 %v670
        %v2660 = vunpack.c.h.b16 %v670
        %v2661 = vunpack.c.l.b16 %v671
        %v2662 = vunpack.c.h.b16 %v671
        %v2663 = vunpack.c.l.b16 %v672
        %v2664 = vunpack.c.h.b16 %v672
        %v2665 = vunpack.c.l.b16 %v673
        %v2666 = vunpack.c.h.b16 %v673
        %v2667 = vunpack.c.l.b16 %v674
        %v2668 = vunpack.c.h.b16 %v674
        %v2669 = vunpack.c.l.b16 %v675
        %v2670 = vunpack.c.h.b16 %v675
        %v2671 = vunpack.c.l.b16 %v676
        %v2672 = vunpack.c.h.b16 %v676
        %v2673 = vunpack.c.l.b16 %v677
        %v2674 = vunpack.c.h.b16 %v677
        %v2675 = vunpack.c.l.b16 %v678
        %v2676 = vunpack.c.h.b16 %v678
        %v2677 = vunpack.c.l.b16 %v679
        %v2678 = vunpack.c.h.b16 %v679
        %v2679 = vunpack.c.l.b16 %v680
        %v2680 = vunpack.c.h.b16 %v680
        %v2681 = vunpack.c.l.b16 %v681
        %v2682 = vunpack.c.h.b16 %v681
        %v2683 = vunpack.c.l.b16 %v682
        %v2684 = vunpack.c.h.b16 %v682
        %v2685 = vunpack.c.l.b16 %v683
        %v2686 = vunpack.c.h.b16 %v683
        %v2687 = vunpack.c.l.b16 %v684
        %v2688 = vunpack.c.h.b16 %v684
        %v2689 = vunpack.c.l.b16 %v685
        %v2690 = vunpack.c.h.b16 %v685
        %v2691 = vunpack.c.l.b16 %v686
        %v2692 = vunpack.c.h.b16 %v686
        %v2693 = vunpack.c.l.b16 %v687
        %v2694 = vunpack.c.h.b16 %v687
        %v2695 = vunpack.c.l.b16 %v688
        %v2696 = vunpack.c.h.b16 %v688
        %v2697 = vunpack.c.l.b16 %v689
        %v2698 = vunpack.c.h.b16 %v689
        %v2699 = vunpack.c.l.b16 %v690
        %v2700 = vunpack.c.h.b16 %v690
        %v2701 = vunpack.c.l.b16 %v691
        %v2702 = vunpack.c.h.b16 %v691
        %v2703 = vunpack.c.l.b16 %v692
        %v2704 = vunpack.c.h.b16 %v692
        %v2705 = vunpack.c.l.b16 %v693
        %v2706 = vunpack.c.h.b16 %v693
        %v2707 = vunpack.c.l.b16 %v694
        %v2708 = vunpack.c.h.b16 %v694
        %v2709 = vunpack.c.l.b16 %v695
        %v2710 = vunpack.c.h.b16 %v695
        %v2711 = vunpack.c.l.b16 %v696
        %v2712 = vunpack.c.h.b16 %v696
        %v2713 = vunpack.c.l.b16 %v697
        %v2714 = vunpack.c.h.b16 %v697
        %v2715 = vunpack.c.l.b16 %v698
        %v2716 = vunpack.c.h.b16 %v698
        %v2717 = vunpack.c.l.b16 %v699
        %v2718 = vunpack.c.h.b16 %v699
        %v2719 = vunpack.c.l.b16 %v700
        %v2720 = vunpack.c.h.b16 %v700
        %v2721 = vunpack.c.l.b16 %v701
        %v2722 = vunpack.c.h.b16 %v701
        %v2723 = vunpack.c.l.b16 %v702
        %v2724 = vunpack.c.h.b16 %v702
        %v2725 = vunpack.c.l.b16 %v703
        %v2726 = vunpack.c.h.b16 %v703
        %v2727 = vunpack.c.l.b16 %v704
        %v2728 = vunpack.c.h.b16 %v704
        %v2729 = vunpack.c.l.b16 %v705
        %v2730 = vunpack.c.h.b16 %v705
        %v2731 = vunpack.c.l.b16 %v706
        %v2732 = vunpack.c.h.b16 %v706
        %v2733 = vunpack.c.l.b16 %v707
        %v2734 = vunpack.c.h.b16 %v707
        %v2735 = vunpack.c.l.b16 %v708
        %v2736 = vunpack.c.h.b16 %v708
        %v2737 = vunpack.c.l.b16 %v709
        %v2738 = vunpack.c.h.b16 %v709
        %v2739 = vunpack.c.l.b16 %v710
        %v2740 = vunpack.c.h.b16 %v710
        %v2741 = vunpack.c.l.b16 %v711
        %v2742 = vunpack.c.h.b16 %v711
        %v2743 = vunpack.c.l.b16 %v712
        %v2744 = vunpack.c.h.b16 %v712
        %v2745 = vunpack.c.l.b16 %v713
        %v2746 = vunpack.c.h.b16 %v713
        %v2747 = vunpack.c.l.b16 %v714
        %v2748 = vunpack.c.h.b16 %v714
        %v2749 = vunpack.c.l.b16 %v715
        %v2750 = vunpack.c.h.b16 %v715
        %v2751 = vunpack.c.l.b16 %v716
        %v2752 = vunpack.c.h.b16 %v716
        %v2753 = vunpack.c.l.b16 %v717
        %v2754 = vunpack.c.h.b16 %v717
        %v2755 = vunpack.c.l.b16 %v718
        %v2756 = vunpack.c.h.b16 %v718
        %v2757 = vunpack.c.l.b16 %v719
        %v2758 = vunpack.c.h.b16 %v719
        %v2759 = vunpack.c.l.b16 %v720
        %v2760 = vunpack.c.h.b16 %v720
        %v2761 = vunpack.c.l.b16 %v721
        %v2762 = vunpack.c.h.b16 %v721
        %v2763 = vunpack.c.l.b16 %v722
        %v2764 = vunpack.c.h.b16 %v722
        %v2765 = vunpack.c.l.b16 %v723
        %v2766 = vunpack.c.h.b16 %v723
        %v2767 = vunpack.c.l.b16 %v724
        %v2768 = vunpack.c.h.b16 %v724
        %v2769 = vunpack.c.l.b16 %v725
        %v2770 = vunpack.c.h.b16 %v725
        %v2771 = vunpack.c.l.b16 %v726
        %v2772 = vunpack.c.h.b16 %v726
        %v2773 = vunpack.c.l.b16 %v727
        %v2774 = vunpack.c.h.b16 %v727
        %v2775 = vunpack.c.l.b16 %v728
        %v2776 = vunpack.c.h.b16 %v728
        %v2777 = vunpack.c.l.b16 %v729
        %v2778 = vunpack.c.h.b16 %v729
        %v2779 = vunpack.c.l.b16 %v730
        %v2780 = vunpack.c.h.b16 %v730
        %v2781 = vunpack.c.l.b16 %v731
        %v2782 = vunpack.c.h.b16 %v731
        %v2783 = vunpack.c.l.b16 %v732
        %v2784 = vunpack.c.h.b16 %v732
        %v2785 = vunpack.c.l.b16 %v733
        %v2786 = vunpack.c.h.b16 %v733
        %v2787 = vunpack.c.l.b16 %v734
        %v2788 = vunpack.c.h.b16 %v734
        %v2789 = vunpack.c.l.b16 %v735
        %v2790 = vunpack.c.h.b16 %v735
        %v2791 = vunpack.c.l.b16 %v736
        %v2792 = vunpack.c.h.b16 %v736
        %v2793 = vunpack.c.l.b16 %v737
        %v2794 = vunpack.c.h.b16 %v737
        %v2795 = vunpack.c.l.b16 %v738
        %v2796 = vunpack.c.h.b16 %v738
        %v2797 = vunpack.c.l.b16 %v739
        %v2798 = vunpack.c.h.b16 %v739
        %v2799 = vunpack.c.l.b16 %v740
        %v2800 = vunpack.c.h.b16 %v740
        %v2801 = vunpack.c.l.b16 %v741
        %v2802 = vunpack.c.h.b16 %v741
        %v2803 = vunpack.c.l.b16 %v742
        %v2804 = vunpack.c.h.b16 %v742
        %v2805 = vunpack.c.l.b16 %v743
        %v2806 = vunpack.c.h.b16 %v743
        %v2807 = vunpack.c.l.b16 %v744
        %v2808 = vunpack.c.h.b16 %v744
        %v2809 = vunpack.c.l.b16 %v745
        %v2810 = vunpack.c.h.b16 %v745
        %v2811 = vunpack.c.l.b16 %v746
        %v2812 = vunpack.c.h.b16 %v746
        %v2813 = vunpack.c.l.b16 %v747
        %v2814 = vunpack.c.h.b16 %v747
        %v2815 = vunpack.c.l.b16 %v748
        %v2816 = vunpack.c.h.b16 %v748
        %v2817 = vunpack.c.l.b16 %v749
        %v2818 = vunpack.c.h.b16 %v749
        %v2819 = vunpack.c.l.b16 %v750
        %v2820 = vunpack.c.h.b16 %v750
        %v2821 = vunpack.c.l.b16 %v751
        %v2822 = vunpack.c.h.b16 %v751
        %v2823 = vunpack.c.l.b16 %v752
        %v2824 = vunpack.c.h.b16 %v752
        %v2825 = vunpack.c.l.b16 %v753
        %v2826 = vunpack.c.h.b16 %v753
        %v2827 = vunpack.c.l.b16 %v754
        %v2828 = vunpack.c.h.b16 %v754
        %v2829 = vunpack.c.l.b16 %v755
        %v2830 = vunpack.c.h.b16 %v755
        %v2831 = vunpack.c.l.b16 %v756
        %v2832 = vunpack.c.h.b16 %v756
        %v2833 = vunpack.c.l.b16 %v757
        %v2834 = vunpack.c.h.b16 %v757
        %v2835 = vunpack.c.l.b16 %v758
        %v2836 = vunpack.c.h.b16 %v758
        %v2837 = vunpack.c.l.b16 %v759
        %v2838 = vunpack.c.h.b16 %v759
        %v2839 = vunpack.c.l.b16 %v760
        %v2840 = vunpack.c.h.b16 %v760
        %v2841 = vunpack.c.l.b16 %v761
        %v2842 = vunpack.c.h.b16 %v761
        %v2843 = vunpack.c.l.b16 %v762
        %v2844 = vunpack.c.h.b16 %v762
        %v2845 = vunpack.c.l.b16 %v763
        %v2846 = vunpack.c.h.b16 %v763
        %v2847 = vunpack.c.l.b16 %v764
        %v2848 = vunpack.c.h.b16 %v764
        %v2849 = vunpack.c.l.b16 %v765
        %v2850 = vunpack.c.h.b16 %v765
        %v2851 = vunpack.c.l.b16 %v766
        %v2852 = vunpack.c.h.b16 %v766
        %v2853 = vunpack.c.l.b16 %v767
        %v2854 = vunpack.c.h.b16 %v767
        %v2855 = vunpack.c.l.b16 %v768
        %v2856 = vunpack.c.h.b16 %v768
        %v2857 = vunpack.c.l.b16 %v769
        %v2858 = vunpack.c.h.b16 %v769
        %v2859 = vunpack.c.l.b16 %v770
        %v2860 = vunpack.c.h.b16 %v770
        %v2861 = vunpack.c.l.b16 %v771
        %v2862 = vunpack.c.h.b16 %v771
        %v2863 = vunpack.c.l.b16 %v772
        %v2864 = vunpack.c.h.b16 %v772
        %v2865 = vunpack.c.l.b16 %v773
        %v2866 = vunpack.c.h.b16 %v773
        %v2867 = vunpack.c.l.b16 %v774
        %v2868 = vunpack.c.h.b16 %v774
        %v2869 = vunpack.c.l.b16 %v775
        %v2870 = vunpack.c.h.b16 %v775
        %v2871 = vunpack.c.l.b16 %v776
        %v2872 = vunpack.c.h.b16 %v776
        %v2873 = vunpack.c.l.b16 %v777
        %v2874 = vunpack.c.h.b16 %v777
        %v2875 = vunpack.c.l.b16 %v778
        %v2876 = vunpack.c.h.b16 %v778
        %v2877 = vunpack.c.l.b16 %v779
        %v2878 = vunpack.c.h.b16 %v779
        %v2879 = vunpack.c.l.b16 %v780
        %v2880 = vunpack.c.h.b16 %v780
        %v2881 = vunpack.c.l.b16 %v781
        %v2882 = vunpack.c.h.b16 %v781
        %v2883 = vunpack.c.l.b16 %v782
        %v2884 = vunpack.c.h.b16 %v782
        %v2885 = vunpack.c.l.b16 %v783
        %v2886 = vunpack.c.h.b16 %v783
        %v2887 = vunpack.c.l.b16 %v784
        %v2888 = vunpack.c.h.b16 %v784
        %v2889 = vunpack.c.l.b16 %v785
        %v2890 = vunpack.c.h.b16 %v785
        %v2891 = vunpack.c.l.b16 %v786
        %v2892 = vunpack.c.h.b16 %v786
        %v2893 = vunpack.c.l.b16 %v787
        %v2894 = vunpack.c.h.b16 %v787
        %v2895 = vunpack.c.l.b16 %v788
        %v2896 = vunpack.c.h.b16 %v788
        %v2897 = vunpack.c.l.b16 %v789
        %v2898 = vunpack.c.h.b16 %v789
        %v2899 = vunpack.c.l.b16 %v790
        %v2900 = vunpack.c.h.b16 %v790
        %v2901 = vunpack.c.l.b16 %v791
        %v2902 = vunpack.c.h.b16 %v791
        %v2903 = vunpack.c.l.b16 %v792
        %v2904 = vunpack.c.h.b16 %v792
        %v2905 = vunpack.c.l.b16 %v793
        %v2906 = vunpack.c.h.b16 %v793
        %v2907 = vunpack.c.l.b16 %v794
        %v2908 = vunpack.c.h.b16 %v794
        %v2909 = vunpack.c.l.b16 %v795
        %v2910 = vunpack.c.h.b16 %v795
        %v2911 = vunpack.c.l.b16 %v796
        %v2912 = vunpack.c.h.b16 %v796
        %v2913 = vunpack.c.l.b16 %v797
        %v2914 = vunpack.c.h.b16 %v797
        %v2915 = vunpack.c.l.b16 %v798
        %v2916 = vunpack.c.h.b16 %v798
        %v2917 = vunpack.c.l.b16 %v799
        %v2918 = vunpack.c.h.b16 %v799
        %v2919 = vunpack.c.l.b16 %v800
        %v2920 = vunpack.c.h.b16 %v800
        %v2921 = vunpack.c.l.b16 %v801
        %v2922 = vunpack.c.h.b16 %v801
        %v2923 = vunpack.c.l.b16 %v802
        %v2924 = vunpack.c.h.b16 %v802
        %v2925 = vunpack.c.l.b16 %v803
        %v2926 = vunpack.c.h.b16 %v803
        %v2927 = vunpack.c.l.b16 %v804
        %v2928 = vunpack.c.h.b16 %v804
        %v2929 = vunpack.c.l.b16 %v805
        %v2930 = vunpack.c.h.b16 %v805
        %v2931 = vunpack.c.l.b16 %v806
        %v2932 = vunpack.c.h.b16 %v806
        %v2933 = vunpack.c.l.b16 %v807
        %v2934 = vunpack.c.h.b16 %v807
        %v2935 = vunpack.c.l.b16 %v808
        %v2936 = vunpack.c.h.b16 %v808
        %v2937 = vunpack.c.l.b16 %v809
        %v2938 = vunpack.c.h.b16 %v809
        %v2939 = vunpack.c.l.b16 %v810
        %v2940 = vunpack.c.h.b16 %v810
        %v2941 = vunpack.c.l.b16 %v811
        %v2942 = vunpack.c.h.b16 %v811
        %v2943 = vunpack.c.l.b16 %v812
        %v2944 = vunpack.c.h.b16 %v812
        %v2945 = vunpack.c.l.b16 %v813
        %v2946 = vunpack.c.h.b16 %v813
        %v2947 = vunpack.c.l.b16 %v814
        %v2948 = vunpack.c.h.b16 %v814
        %v2949 = vunpack.c.l.b16 %v815
        %v2950 = vunpack.c.h.b16 %v815
        %v2951 = vunpack.c.l.b16 %v816
        %v2952 = vunpack.c.h.b16 %v816
        %v2953 = vunpack.c.l.b16 %v817
        %v2954 = vunpack.c.h.b16 %v817
        %v2955 = vunpack.c.l.b16 %v818
        %v2956 = vunpack.c.h.b16 %v818
        %v2957 = vunpack.c.l.b16 %v819
        %v2958 = vunpack.c.h.b16 %v819
        %v2959 = vunpack.c.l.b16 %v820
        %v2960 = vunpack.c.h.b16 %v820
        %v2961 = vunpack.c.l.b16 %v821
        %v2962 = vunpack.c.h.b16 %v821
        %v2963 = vunpack.c.l.b16 %v822
        %v2964 = vunpack.c.h.b16 %v822
        %v2965 = vunpack.c.l.b16 %v823
        %v2966 = vunpack.c.h.b16 %v823
        %v2967 = vunpack.c.l.b16 %v824
        %v2968 = vunpack.c.h.b16 %v824
        %v2969 = vpack.c.b16 %v1953, %v1945
        %v2970 = vpack.c.b16 %v1954, %v1946
        %v2971 = vpack.c.b16 %v1955, %v1947
        %v2972 = vpack.c.b16 %v1956, %v1948
        %v2973 = vpack.c.b16 %v1957, %v1949
        %v2974 = vpack.c.b16 %v1958, %v1950
        %v2975 = vpack.c.b16 %v1959, %v1951
        %v2976 = vpack.c.b16 %v1960, %v1952
        %v2977 = vpack.c.b16 %v1969, %v1961
        %v2978 = vpack.c.b16 %v1970, %v1962
        %v2979 = vpack.c.b16 %v1971, %v1963
        %v2980 = vpack.c.b16 %v1972, %v1964
        %v2981 = vpack.c.b16 %v1973, %v1965
        %v2982 = vpack.c.b16 %v1974, %v1966
        %v2983 = vpack.c.b16 %v1975, %v1967
        %v2984 = vpack.c.b16 %v1976, %v1968
        %v2985 = vpack.c.b16 %v1985, %v1977
        %v2986 = vpack.c.b16 %v1986, %v1978
        %v2987 = vpack.c.b16 %v1987, %v1979
        %v2988 = vpack.c.b16 %v1988, %v1980
        %v2989 = vpack.c.b16 %v1989, %v1981
        %v2990 = vpack.c.b16 %v1990, %v1982
        %v2991 = vpack.c.b16 %v1991, %v1983
        %v2992 = vpack.c.b16 %v1992, %v1984
        %v2993 = vpack.c.b16 %v2001, %v1993
        %v2994 = vpack.c.b16 %v2002, %v1994
        %v2995 = vpack.c.b16 %v2003, %v1995
        %v2996 = vpack.c.b16 %v2004, %v1996
        %v2997 = vpack.c.b16 %v2005, %v1997
        %v2998 = vpack.c.b16 %v2006, %v1998
        %v2999 = vpack.c.b16 %v2007, %v1999
        %v3000 = vpack.c.b16 %v2008, %v2000
        %v3001 = vpack.c.b16 %v2017, %v2009
        %v3002 = vpack.c.b16 %v2018, %v2010
        %v3003 = vpack.c.b16 %v2019, %v2011
        %v3004 = vpack.c.b16 %v2020, %v2012
        %v3005 = vpack.c.b16 %v2021, %v2013
        %v3006 = vpack.c.b16 %v2022, %v2014
        %v3007 = vpack.c.b16 %v2023, %v2015
        %v3008 = vpack.c.b16 %v2024, %v2016
        %v3009 = vpack.c.b16 %v2033, %v2025
        %v3010 = vpack.c.b16 %v2034, %v2026
        %v3011 = vpack.c.b16 %v2035, %v2027
        %v3012 = vpack.c.b16 %v2036, %v2028
        %v3013 = vpack.c.b16 %v2037, %v2029
        %v3014 = vpack.c.b16 %v2038, %v2030
        %v3015 = vpack.c.b16 %v2039, %v2031
        %v3016 = vpack.c.b16 %v2040, %v2032
        %v3017 = vpack.c.b16 %v2049, %v2041
        %v3018 = vpack.c.b16 %v2050, %v2042
        %v3019 = vpack.c.b16 %v2051, %v2043
        %v3020 = vpack.c.b16 %v2052, %v2044
        %v3021 = vpack.c.b16 %v2053, %v2045
        %v3022 = vpack.c.b16 %v2054, %v2046
        %v3023 = vpack.c.b16 %v2055, %v2047
        %v3024 = vpack.c.b16 %v2056, %v2048
        %v3025 = vpack.c.b16 %v2065, %v2057
        %v3026 = vpack.c.b16 %v2066, %v2058
        %v3027 = vpack.c.b16 %v2067, %v2059
        %v3028 = vpack.c.b16 %v2068, %v2060
        %v3029 = vpack.c.b16 %v2069, %v2061
        %v3030 = vpack.c.b16 %v2070, %v2062
        %v3031 = vpack.c.b16 %v2071, %v2063
        %v3032 = vpack.c.b16 %v2072, %v2064
        %v3033 = vpack.c.b16 %v2081, %v2073
        %v3034 = vpack.c.b16 %v2082, %v2074
        %v3035 = vpack.c.b16 %v2083, %v2075
        %v3036 = vpack.c.b16 %v2084, %v2076
        %v3037 = vpack.c.b16 %v2085, %v2077
        %v3038 = vpack.c.b16 %v2086, %v2078
        %v3039 = vpack.c.b16 %v2087, %v2079
        %v3040 = vpack.c.b16 %v2088, %v2080
        %v3041 = vpack.c.b16 %v2097, %v2089
        %v3042 = vpack.c.b16 %v2098, %v2090
        %v3043 = vpack.c.b16 %v2099, %v2091
        %v3044 = vpack.c.b16 %v2100, %v2092
        %v3045 = vpack.c.b16 %v2101, %v2093
        %v3046 = vpack.c.b16 %v2102, %v2094
        %v3047 = vpack.c.b16 %v2103, %v2095
        %v3048 = vpack.c.b16 %v2104, %v2096
        %v3049 = vpack.c.b16 %v2113, %v2105
        %v3050 = vpack.c.b16 %v2114, %v2106
        %v3051 = vpack.c.b16 %v2115, %v2107
        %v3052 = vpack.c.b16 %v2116, %v2108
        %v3053 = vpack.c.b16 %v2117, %v2109
        %v3054 = vpack.c.b16 %v2118, %v2110
        %v3055 = vpack.c.b16 %v2119, %v2111
        %v3056 = vpack.c.b16 %v2120, %v2112
        %v3057 = vpack.c.b16 %v2129, %v2121
        %v3058 = vpack.c.b16 %v2130, %v2122
        %v3059 = vpack.c.b16 %v2131, %v2123
        %v3060 = vpack.c.b16 %v2132, %v2124
        %v3061 = vpack.c.b16 %v2133, %v2125
        %v3062 = vpack.c.b16 %v2134, %v2126
        %v3063 = vpack.c.b16 %v2135, %v2127
        %v3064 = vpack.c.b16 %v2136, %v2128
        %v3065 = vpack.c.b16 %v2145, %v2137
        %v3066 = vpack.c.b16 %v2146, %v2138
        %v3067 = vpack.c.b16 %v2147, %v2139
        %v3068 = vpack.c.b16 %v2148, %v2140
        %v3069 = vpack.c.b16 %v2149, %v2141
        %v3070 = vpack.c.b16 %v2150, %v2142
        %v3071 = vpack.c.b16 %v2151, %v2143
        %v3072 = vpack.c.b16 %v2152, %v2144
        %v3073 = vpack.c.b16 %v2161, %v2153
        %v3074 = vpack.c.b16 %v2162, %v2154
        %v3075 = vpack.c.b16 %v2163, %v2155
        %v3076 = vpack.c.b16 %v2164, %v2156
        %v3077 = vpack.c.b16 %v2165, %v2157
        %v3078 = vpack.c.b16 %v2166, %v2158
        %v3079 = vpack.c.b16 %v2167, %v2159
        %v3080 = vpack.c.b16 %v2168, %v2160
        %v3081 = vpack.c.b16 %v2177, %v2169
        %v3082 = vpack.c.b16 %v2178, %v2170
        %v3083 = vpack.c.b16 %v2179, %v2171
        %v3084 = vpack.c.b16 %v2180, %v2172
        %v3085 = vpack.c.b16 %v2181, %v2173
        %v3086 = vpack.c.b16 %v2182, %v2174
        %v3087 = vpack.c.b16 %v2183, %v2175
        %v3088 = vpack.c.b16 %v2184, %v2176
        %v3089 = vpack.c.b16 %v2193, %v2185
        %v3090 = vpack.c.b16 %v2194, %v2186
        %v3091 = vpack.c.b16 %v2195, %v2187
        %v3092 = vpack.c.b16 %v2196, %v2188
        %v3093 = vpack.c.b16 %v2197, %v2189
        %v3094 = vpack.c.b16 %v2198, %v2190
        %v3095 = vpack.c.b16 %v2199, %v2191
        %v3096 = vpack.c.b16 %v2200, %v2192
        %v3097 = vpack.c.b16 %v2209, %v2201
        %v3098 = vpack.c.b16 %v2210, %v2202
        %v3099 = vpack.c.b16 %v2211, %v2203
        %v3100 = vpack.c.b16 %v2212, %v2204
        %v3101 = vpack.c.b16 %v2213, %v2205
        %v3102 = vpack.c.b16 %v2214, %v2206
        %v3103 = vpack.c.b16 %v2215, %v2207
        %v3104 = vpack.c.b16 %v2216, %v2208
        %v3105 = vpack.c.b16 %v2225, %v2217
        %v3106 = vpack.c.b16 %v2226, %v2218
        %v3107 = vpack.c.b16 %v2227, %v2219
        %v3108 = vpack.c.b16 %v2228, %v2220
        %v3109 = vpack.c.b16 %v2229, %v2221
        %v3110 = vpack.c.b16 %v2230, %v2222
        %v3111 = vpack.c.b16 %v2231, %v2223
        %v3112 = vpack.c.b16 %v2232, %v2224
        %v3113 = vpack.c.b16 %v2241, %v2233
        %v3114 = vpack.c.b16 %v2242, %v2234
        %v3115 = vpack.c.b16 %v2243, %v2235
        %v3116 = vpack.c.b16 %v2244, %v2236
        %v3117 = vpack.c.b16 %v2245, %v2237
        %v3118 = vpack.c.b16 %v2246, %v2238
        %v3119 = vpack.c.b16 %v2247, %v2239
        %v3120 = vpack.c.b16 %v2248, %v2240
        %v3121 = vpack.c.b16 %v2257, %v2249
        %v3122 = vpack.c.b16 %v2258, %v2250
        %v3123 = vpack.c.b16 %v2259, %v2251
        %v3124 = vpack.c.b16 %v2260, %v2252
        %v3125 = vpack.c.b16 %v2261, %v2253
        %v3126 = vpack.c.b16 %v2262, %v2254
        %v3127 = vpack.c.b16 %v2263, %v2255
        %v3128 = vpack.c.b16 %v2264, %v2256
        %v3129 = vpack.c.b16 %v2273, %v2265
        %v3130 = vpack.c.b16 %v2274, %v2266
        %v3131 = vpack.c.b16 %v2275, %v2267
        %v3132 = vpack.c.b16 %v2276, %v2268
        %v3133 = vpack.c.b16 %v2277, %v2269
        %v3134 = vpack.c.b16 %v2278, %v2270
        %v3135 = vpack.c.b16 %v2279, %v2271
        %v3136 = vpack.c.b16 %v2280, %v2272
        %v3137 = vpack.c.b16 %v2289, %v2281
        %v3138 = vpack.c.b16 %v2290, %v2282
        %v3139 = vpack.c.b16 %v2291, %v2283
        %v3140 = vpack.c.b16 %v2292, %v2284
        %v3141 = vpack.c.b16 %v2293, %v2285
        %v3142 = vpack.c.b16 %v2294, %v2286
        %v3143 = vpack.c.b16 %v2295, %v2287
        %v3144 = vpack.c.b16 %v2296, %v2288
        %v3145 = vpack.c.b16 %v2305, %v2297
        %v3146 = vpack.c.b16 %v2306, %v2298
        %v3147 = vpack.c.b16 %v2307, %v2299
        %v3148 = vpack.c.b16 %v2308, %v2300
        %v3149 = vpack.c.b16 %v2309, %v2301
        %v3150 = vpack.c.b16 %v2310, %v2302
        %v3151 = vpack.c.b16 %v2311, %v2303
        %v3152 = vpack.c.b16 %v2312, %v2304
        %v3153 = vpack.c.b16 %v2321, %v2313
        %v3154 = vpack.c.b16 %v2322, %v2314
        %v3155 = vpack.c.b16 %v2323, %v2315
        %v3156 = vpack.c.b16 %v2324, %v2316
        %v3157 = vpack.c.b16 %v2325, %v2317
        %v3158 = vpack.c.b16 %v2326, %v2318
        %v3159 = vpack.c.b16 %v2327, %v2319
        %v3160 = vpack.c.b16 %v2328, %v2320
        %v3161 = vpack.c.b16 %v2337, %v2329
        %v3162 = vpack.c.b16 %v2338, %v2330
        %v3163 = vpack.c.b16 %v2339, %v2331
        %v3164 = vpack.c.b16 %v2340, %v2332
        %v3165 = vpack.c.b16 %v2341, %v2333
        %v3166 = vpack.c.b16 %v2342, %v2334
        %v3167 = vpack.c.b16 %v2343, %v2335
        %v3168 = vpack.c.b16 %v2344, %v2336
        %v3169 = vpack.c.b16 %v2353, %v2345
        %v3170 = vpack.c.b16 %v2354, %v2346
        %v3171 = vpack.c.b16 %v2355, %v2347
        %v3172 = vpack.c.b16 %v2356, %v2348
        %v3173 = vpack.c.b16 %v2357, %v2349
        %v3174 = vpack.c.b16 %v2358, %v2350
        %v3175 = vpack.c.b16 %v2359, %v2351
        %v3176 = vpack.c.b16 %v2360, %v2352
        %v3177 = vpack.c.b16 %v2369, %v2361
        %v3178 = vpack.c.b16 %v2370, %v2362
        %v3179 = vpack.c.b16 %v2371, %v2363
        %v3180 = vpack.c.b16 %v2372, %v2364
        %v3181 = vpack.c.b16 %v2373, %v2365
        %v3182 = vpack.c.b16 %v2374, %v2366
        %v3183 = vpack.c.b16 %v2375, %v2367
        %v3184 = vpack.c.b16 %v2376, %v2368
        %v3185 = vpack.c.b16 %v2385, %v2377
        %v3186 = vpack.c.b16 %v2386, %v2378
        %v3187 = vpack.c.b16 %v2387, %v2379
        %v3188 = vpack.c.b16 %v2388, %v2380
        %v3189 = vpack.c.b16 %v2389, %v2381
        %v3190 = vpack.c.b16 %v2390, %v2382
        %v3191 = vpack.c.b16 %v2391, %v2383
        %v3192 = vpack.c.b16 %v2392, %v2384
        %v3193 = vpack.c.b16 %v2401, %v2393
        %v3194 = vpack.c.b16 %v2402, %v2394
        %v3195 = vpack.c.b16 %v2403, %v2395
        %v3196 = vpack.c.b16 %v2404, %v2396
        %v3197 = vpack.c.b16 %v2405, %v2397
        %v3198 = vpack.c.b16 %v2406, %v2398
        %v3199 = vpack.c.b16 %v2407, %v2399
        %v3200 = vpack.c.b16 %v2408, %v2400
        %v3201 = vpack.c.b16 %v2417, %v2409
        %v3202 = vpack.c.b16 %v2418, %v2410
        %v3203 = vpack.c.b16 %v2419, %v2411
        %v3204 = vpack.c.b16 %v2420, %v2412
        %v3205 = vpack.c.b16 %v2421, %v2413
        %v3206 = vpack.c.b16 %v2422, %v2414
        %v3207 = vpack.c.b16 %v2423, %v2415
        %v3208 = vpack.c.b16 %v2424, %v2416
        %v3209 = vpack.c.b16 %v2433, %v2425
        %v3210 = vpack.c.b16 %v2434, %v2426
        %v3211 = vpack.c.b16 %v2435, %v2427
        %v3212 = vpack.c.b16 %v2436, %v2428
        %v3213 = vpack.c.b16 %v2437, %v2429
        %v3214 = vpack.c.b16 %v2438, %v2430
        %v3215 = vpack.c.b16 %v2439, %v2431
        %v3216 = vpack.c.b16 %v2440, %v2432
        %v3217 = vpack.c.b16 %v2449, %v2441
        %v3218 = vpack.c.b16 %v2450, %v2442
        %v3219 = vpack.c.b16 %v2451, %v2443
        %v3220 = vpack.c.b16 %v2452, %v2444
        %v3221 = vpack.c.b16 %v2453, %v2445
        %v3222 = vpack.c.b16 %v2454, %v2446
        %v3223 = vpack.c.b16 %v2455, %v2447
        %v3224 = vpack.c.b16 %v2456, %v2448
        %v3225 = vpack.c.b16 %v2465, %v2457
        %v3226 = vpack.c.b16 %v2466, %v2458
        %v3227 = vpack.c.b16 %v2467, %v2459
        %v3228 = vpack.c.b16 %v2468, %v2460
        %v3229 = vpack.c.b16 %v2469, %v2461
        %v3230 = vpack.c.b16 %v2470, %v2462
        %v3231 = vpack.c.b16 %v2471, %v2463
        %v3232 = vpack.c.b16 %v2472, %v2464
        %v3233 = vpack.c.b16 %v2481, %v2473
        %v3234 = vpack.c.b16 %v2482, %v2474
        %v3235 = vpack.c.b16 %v2483, %v2475
        %v3236 = vpack.c.b16 %v2484, %v2476
        %v3237 = vpack.c.b16 %v2485, %v2477
        %v3238 = vpack.c.b16 %v2486, %v2478
        %v3239 = vpack.c.b16 %v2487, %v2479
        %v3240 = vpack.c.b16 %v2488, %v2480
        %v3241 = vpack.c.b16 %v2497, %v2489
        %v3242 = vpack.c.b16 %v2498, %v2490
        %v3243 = vpack.c.b16 %v2499, %v2491
        %v3244 = vpack.c.b16 %v2500, %v2492
        %v3245 = vpack.c.b16 %v2501, %v2493
        %v3246 = vpack.c.b16 %v2502, %v2494
        %v3247 = vpack.c.b16 %v2503, %v2495
        %v3248 = vpack.c.b16 %v2504, %v2496
        %v3249 = vpack.c.b16 %v2513, %v2505
        %v3250 = vpack.c.b16 %v2514, %v2506
        %v3251 = vpack.c.b16 %v2515, %v2507
        %v3252 = vpack.c.b16 %v2516, %v2508
        %v3253 = vpack.c.b16 %v2517, %v2509
        %v3254 = vpack.c.b16 %v2518, %v2510
        %v3255 = vpack.c.b16 %v2519, %v2511
        %v3256 = vpack.c.b16 %v2520, %v2512
        %v3257 = vpack.c.b16 %v2529, %v2521
        %v3258 = vpack.c.b16 %v2530, %v2522
        %v3259 = vpack.c.b16 %v2531, %v2523
        %v3260 = vpack.c.b16 %v2532, %v2524
        %v3261 = vpack.c.b16 %v2533, %v2525
        %v3262 = vpack.c.b16 %v2534, %v2526
        %v3263 = vpack.c.b16 %v2535, %v2527
        %v3264 = vpack.c.b16 %v2536, %v2528
        %v3265 = vpack.c.b16 %v2545, %v2537
        %v3266 = vpack.c.b16 %v2546, %v2538
        %v3267 = vpack.c.b16 %v2547, %v2539
        %v3268 = vpack.c.b16 %v2548, %v2540
        %v3269 = vpack.c.b16 %v2549, %v2541
        %v3270 = vpack.c.b16 %v2550, %v2542
        %v3271 = vpack.c.b16 %v2551, %v2543
        %v3272 = vpack.c.b16 %v2552, %v2544
        %v3273 = vpack.c.b16 %v2561, %v2553
        %v3274 = vpack.c.b16 %v2562, %v2554
        %v3275 = vpack.c.b16 %v2563, %v2555
        %v3276 = vpack.c.b16 %v2564, %v2556
        %v3277 = vpack.c.b16 %v2565, %v2557
        %v3278 = vpack.c.b16 %v2566, %v2558
        %v3279 = vpack.c.b16 %v2567, %v2559
        %v3280 = vpack.c.b16 %v2568, %v2560
        %v3281 = vpack.c.b16 %v2577, %v2569
        %v3282 = vpack.c.b16 %v2578, %v2570
        %v3283 = vpack.c.b16 %v2579, %v2571
        %v3284 = vpack.c.b16 %v2580, %v2572
        %v3285 = vpack.c.b16 %v2581, %v2573
        %v3286 = vpack.c.b16 %v2582, %v2574
        %v3287 = vpack.c.b16 %v2583, %v2575
        %v3288 = vpack.c.b16 %v2584, %v2576
        %v3289 = vpack.c.b16 %v2593, %v2585
        %v3290 = vpack.c.b16 %v2594, %v2586
        %v3291 = vpack.c.b16 %v2595, %v2587
        %v3292 = vpack.c.b16 %v2596, %v2588
        %v3293 = vpack.c.b16 %v2597, %v2589
        %v3294 = vpack.c.b16 %v2598, %v2590
        %v3295 = vpack.c.b16 %v2599, %v2591
        %v3296 = vpack.c.b16 %v2600, %v2592
        %v3297 = vpack.c.b16 %v2609, %v2601
        %v3298 = vpack.c.b16 %v2610, %v2602
        %v3299 = vpack.c.b16 %v2611, %v2603
        %v3300 = vpack.c.b16 %v2612, %v2604
        %v3301 = vpack.c.b16 %v2613, %v2605
        %v3302 = vpack.c.b16 %v2614, %v2606
        %v3303 = vpack.c.b16 %v2615, %v2607
        %v3304 = vpack.c.b16 %v2616, %v2608
        %v3305 = vpack.c.b16 %v2625, %v2617
        %v3306 = vpack.c.b16 %v2626, %v2618
        %v3307 = vpack.c.b16 %v2627, %v2619
        %v3308 = vpack.c.b16 %v2628, %v2620
        %v3309 = vpack.c.b16 %v2629, %v2621
        %v3310 = vpack.c.b16 %v2630, %v2622
        %v3311 = vpack.c.b16 %v2631, %v2623
        %v3312 = vpack.c.b16 %v2632, %v2624
        %v3313 = vpack.c.b16 %v2641, %v2633
        %v3314 = vpack.c.b16 %v2642, %v2634
        %v3315 = vpack.c.b16 %v2643, %v2635
        %v3316 = vpack.c.b16 %v2644, %v2636
        %v3317 = vpack.c.b16 %v2645, %v2637
        %v3318 = vpack.c.b16 %v2646, %v2638
        %v3319 = vpack.c.b16 %v2647, %v2639
        %v3320 = vpack.c.b16 %v2648, %v2640
        %v3321 = vpack.c.b16 %v2657, %v2649
        %v3322 = vpack.c.b16 %v2658, %v2650
        %v3323 = vpack.c.b16 %v2659, %v2651
        %v3324 = vpack.c.b16 %v2660, %v2652
        %v3325 = vpack.c.b16 %v2661, %v2653
        %v3326 = vpack.c.b16 %v2662, %v2654
        %v3327 = vpack.c.b16 %v2663, %v2655
        %v3328 = vpack.c.b16 %v2664, %v2656
        %v3329 = vpack.c.b16 %v2673, %v2665
        %v3330 = vpack.c.b16 %v2674, %v2666
        %v3331 = vpack.c.b16 %v2675, %v2667
        %v3332 = vpack.c.b16 %v2676, %v2668
        %v3333 = vpack.c.b16 %v2677, %v2669
        %v3334 = vpack.c.b16 %v2678, %v2670
        %v3335 = vpack.c.b16 %v2679, %v2671
        %v3336 = vpack.c.b16 %v2680, %v2672
        %v3337 = vpack.c.b16 %v2689, %v2681
        %v3338 = vpack.c.b16 %v2690, %v2682
        %v3339 = vpack.c.b16 %v2691, %v2683
        %v3340 = vpack.c.b16 %v2692, %v2684
        %v3341 = vpack.c.b16 %v2693, %v2685
        %v3342 = vpack.c.b16 %v2694, %v2686
        %v3343 = vpack.c.b16 %v2695, %v2687
        %v3344 = vpack.c.b16 %v2696, %v2688
        %v3345 = vpack.c.b16 %v2705, %v2697
        %v3346 = vpack.c.b16 %v2706, %v2698
        %v3347 = vpack.c.b16 %v2707, %v2699
        %v3348 = vpack.c.b16 %v2708, %v2700
        %v3349 = vpack.c.b16 %v2709, %v2701
        %v3350 = vpack.c.b16 %v2710, %v2702
        %v3351 = vpack.c.b16 %v2711, %v2703
        %v3352 = vpack.c.b16 %v2712, %v2704
        %v3353 = vpack.c.b16 %v2721, %v2713
        %v3354 = vpack.c.b16 %v2722, %v2714
        %v3355 = vpack.c.b16 %v2723, %v2715
        %v3356 = vpack.c.b16 %v2724, %v2716
        %v3357 = vpack.c.b16 %v2725, %v2717
        %v3358 = vpack.c.b16 %v2726, %v2718
        %v3359 = vpack.c.b16 %v2727, %v2719
        %v3360 = vpack.c.b16 %v2728, %v2720
        %v3361 = vpack.c.b16 %v2737, %v2729
        %v3362 = vpack.c.b16 %v2738, %v2730
        %v3363 = vpack.c.b16 %v2739, %v2731
        %v3364 = vpack.c.b16 %v2740, %v2732
        %v3365 = vpack.c.b16 %v2741, %v2733
        %v3366 = vpack.c.b16 %v2742, %v2734
        %v3367 = vpack.c.b16 %v2743, %v2735
        %v3368 = vpack.c.b16 %v2744, %v2736
        %v3369 = vpack.c.b16 %v2753, %v2745
        %v3370 = vpack.c.b16 %v2754, %v2746
        %v3371 = vpack.c.b16 %v2755, %v2747
        %v3372 = vpack.c.b16 %v2756, %v2748
        %v3373 = vpack.c.b16 %v2757, %v2749
        %v3374 = vpack.c.b16 %v2758, %v2750
        %v3375 = vpack.c.b16 %v2759, %v2751
        %v3376 = vpack.c.b16 %v2760, %v2752
        %v3377 = vpack.c.b16 %v2769, %v2761
        %v3378 = vpack.c.b16 %v2770, %v2762
        %v3379 = vpack.c.b16 %v2771, %v2763
        %v3380 = vpack.c.b16 %v2772, %v2764
        %v3381 = vpack.c.b16 %v2773, %v2765
        %v3382 = vpack.c.b16 %v2774, %v2766
        %v3383 = vpack.c.b16 %v2775, %v2767
        %v3384 = vpack.c.b16 %v2776, %v2768
        %v3385 = vpack.c.b16 %v2785, %v2777
        %v3386 = vpack.c.b16 %v2786, %v2778
        %v3387 = vpack.c.b16 %v2787, %v2779
        %v3388 = vpack.c.b16 %v2788, %v2780
        %v3389 = vpack.c.b16 %v2789, %v2781
        %v3390 = vpack.c.b16 %v2790, %v2782
        %v3391 = vpack.c.b16 %v2791, %v2783
        %v3392 = vpack.c.b16 %v2792, %v2784
        %v3393 = vpack.c.b16 %v2801, %v2793
        %v3394 = vpack.c.b16 %v2802, %v2794
        %v3395 = vpack.c.b16 %v2803, %v2795
        %v3396 = vpack.c.b16 %v2804, %v2796
        %v3397 = vpack.c.b16 %v2805, %v2797
        %v3398 = vpack.c.b16 %v2806, %v2798
        %v3399 = vpack.c.b16 %v2807, %v2799
        %v3400 = vpack.c.b16 %v2808, %v2800
        %v3401 = vpack.c.b16 %v2817, %v2809
        %v3402 = vpack.c.b16 %v2818, %v2810
        %v3403 = vpack.c.b16 %v2819, %v2811
        %v3404 = vpack.c.b16 %v2820, %v2812
        %v3405 = vpack.c.b16 %v2821, %v2813
        %v3406 = vpack.c.b16 %v2822, %v2814
        %v3407 = vpack.c.b16 %v2823, %v2815
        %v3408 = vpack.c.b16 %v2824, %v2816
        %v3409 = vpack.c.b16 %v2833, %v2825
        %v3410 = vpack.c.b16 %v2834, %v2826
        %v3411 = vpack.c.b16 %v2835, %v2827
        %v3412 = vpack.c.b16 %v2836, %v2828
        %v3413 = vpack.c.b16 %v2837, %v2829
        %v3414 = vpack.c.b16 %v2838, %v2830
        %v3415 = vpack.c.b16 %v2839, %v2831
        %v3416 = vpack.c.b16 %v2840, %v2832
        %v3417 = vpack.c.b16 %v2849, %v2841
        %v3418 = vpack.c.b16 %v2850, %v2842
        %v3419 = vpack.c.b16 %v2851, %v2843
        %v3420 = vpack.c.b16 %v2852, %v2844
        %v3421 = vpack.c.b16 %v2853, %v2845
        %v3422 = vpack.c.b16 %v2854, %v2846
        %v3423 = vpack.c.b16 %v2855, %v2847
        %v3424 = vpack.c.b16 %v2856, %v2848
        %v3425 = vpack.c.b16 %v2865, %v2857
        %v3426 = vpack.c.b16 %v2866, %v2858
        %v3427 = vpack.c.b16 %v2867, %v2859
        %v3428 = vpack.c.b16 %v2868, %v2860
        %v3429 = vpack.c.b16 %v2869, %v2861
        %v3430 = vpack.c.b16 %v2870, %v2862
        %v3431 = vpack.c.b16 %v2871, %v2863
        %v3432 = vpack.c.b16 %v2872, %v2864
        %v3433 = vpack.c.b16 %v2881, %v2873
        %v3434 = vpack.c.b16 %v2882, %v2874
        %v3435 = vpack.c.b16 %v2883, %v2875
        %v3436 = vpack.c.b16 %v2884, %v2876
        %v3437 = vpack.c.b16 %v2885, %v2877
        %v3438 = vpack.c.b16 %v2886, %v2878
        %v3439 = vpack.c.b16 %v2887, %v2879
        %v3440 = vpack.c.b16 %v2888, %v2880
        %v3441 = vpack.c.b16 %v2897, %v2889
        %v3442 = vpack.c.b16 %v2898, %v2890
        %v3443 = vpack.c.b16 %v2899, %v2891
        %v3444 = vpack.c.b16 %v2900, %v2892
        %v3445 = vpack.c.b16 %v2901, %v2893
        %v3446 = vpack.c.b16 %v2902, %v2894
        %v3447 = vpack.c.b16 %v2903, %v2895
        %v3448 = vpack.c.b16 %v2904, %v2896
        %v3449 = vpack.c.b16 %v2913, %v2905
        %v3450 = vpack.c.b16 %v2914, %v2906
        %v3451 = vpack.c.b16 %v2915, %v2907
        %v3452 = vpack.c.b16 %v2916, %v2908
        %v3453 = vpack.c.b16 %v2917, %v2909
        %v3454 = vpack.c.b16 %v2918, %v2910
        %v3455 = vpack.c.b16 %v2919, %v2911
        %v3456 = vpack.c.b16 %v2920, %v2912
        %v3457 = vpack.c.b16 %v2929, %v2921
        %v3458 = vpack.c.b16 %v2930, %v2922
        %v3459 = vpack.c.b16 %v2931, %v2923
        %v3460 = vpack.c.b16 %v2932, %v2924
        %v3461 = vpack.c.b16 %v2933, %v2925
        %v3462 = vpack.c.b16 %v2934, %v2926
        %v3463 = vpack.c.b16 %v2935, %v2927
        %v3464 = vpack.c.b16 %v2936, %v2928
        %v3465 = vpack.c.b16 %v2945, %v2937
        %v3466 = vpack.c.b16 %v2946, %v2938
        %v3467 = vpack.c.b16 %v2947, %v2939
        %v3468 = vpack.c.b16 %v2948, %v2940
        %v3469 = vpack.c.b16 %v2949, %v2941
        %v3470 = vpack.c.b16 %v2950, %v2942
        %v3471 = vpack.c.b16 %v2951, %v2943
        %v3472 = vpack.c.b16 %v2952, %v2944
        %v3473 = vpack.c.b16 %v2961, %v2953
        %v3474 = vpack.c.b16 %v2962, %v2954
        %v3475 = vpack.c.b16 %v2963, %v2955
        %v3476 = vpack.c.b16 %v2964, %v2956
        %v3477 = vpack.c.b16 %v2965, %v2957
        %v3478 = vpack.c.b16 %v2966, %v2958
        %v3479 = vpack.c.b16 %v2967, %v2959
        %v3480 = vpack.c.b16 %v2968, %v2960
        %3993 = vmatprep.subr.bf16.mxu0 %v2970
        %3994 = vmatpush1.bf16.msra.mxu0 %v2969
        %3995 = vmatprep.subr.bf16.mxu0 %v2978
        %3996 = vmatpush1.bf16.msra.mxu0 %v2977
        %3997 = vmatprep.subr.bf16.mxu0 %v2986
        %3998 = vmatpush1.bf16.msra.mxu0 %v2985
        %3999 = vmatprep.subr.bf16.mxu0 %v2994
        %4000 = vmatpush1.bf16.msra.mxu0 %v2993
        %4001 = vmatprep.subr.bf16.mxu0 %v3002
        %4002 = vmatpush1.bf16.msra.mxu0 %v3001
        %4003 = vmatprep.subr.bf16.mxu0 %v3010
        %4004 = vmatpush1.bf16.msra.mxu0 %v3009
        %4005 = vmatprep.subr.bf16.mxu0 %v3018
        %4006 = vmatpush1.bf16.msra.mxu0 %v3017
        %4007 = vmatprep.subr.bf16.mxu0 %v3026
        %4008 = vmatpush1.bf16.msra.mxu0 %v3025
        %4009 = vmatprep.subr.bf16.mxu0 %v3034
        %4010 = vmatpush1.bf16.msra.mxu0 %v3033
        %4011 = vmatprep.subr.bf16.mxu0 %v3042
        %4012 = vmatpush1.bf16.msra.mxu0 %v3041
        %4013 = vmatprep.subr.bf16.mxu0 %v3050
        %4014 = vmatpush1.bf16.msra.mxu0 %v3049
        %4015 = vmatprep.subr.bf16.mxu0 %v3058
        %4016 = vmatpush1.bf16.msra.mxu0 %v3057
        %4017 = vmatprep.subr.bf16.mxu0 %v3066
        %4018 = vmatpush1.bf16.msra.mxu0 %v3065
        %4019 = vmatprep.subr.bf16.mxu0 %v3074
        %4020 = vmatpush1.bf16.msra.mxu0 %v3073
        %4021 = vmatprep.subr.bf16.mxu0 %v3082
        %4022 = vmatpush1.bf16.msra.mxu0 %v3081
        %4023 = vmatprep.subr.bf16.mxu0 %v3090
        %4024 = vmatpush1.bf16.msra.mxu0 %v3089
        %4025 = vmatprep.mubr.bf16.mxu0 %v1418
        %4026 = vmatmul.mubr.bf16.gmra.mrb[0].mxu0 %v1417
        %v4027 = vpop.f32.mrb[0].mxu0
        %v4028 = vadd.f32 %v1356, %v4027
        %v4029 = vpop.f32.mrb[0].mxu0
        %v4030 = vadd.f32 %v1360, %v4029
        %v4031 = vpop.f32.mrb[0].mxu0
        %v4032 = vadd.f32 %v1356, %v4031
        %v4033 = vpop.f32.mrb[0].mxu0
        %v4034 = vadd.f32 %v1360, %v4033
        %4035 = vdwg.mxu0
        %4036 = vmatprep.subr.bf16.mxu0 %v3098
        %4037 = vmatpush1.bf16.msra.mxu0 %v3097
        %4038 = vmatprep.subr.bf16.mxu0 %v3106
        %4039 = vmatpush1.bf16.msra.mxu0 %v3105
        %4040 = vmatprep.subr.bf16.mxu0 %v3114
        %4041 = vmatpush1.bf16.msra.mxu0 %v3113
        %4042 = vmatprep.subr.bf16.mxu0 %v3122
        %4043 = vmatpush1.bf16.msra.mxu0 %v3121
        %4044 = vmatprep.subr.bf16.mxu0 %v3130
        %4045 = vmatpush1.bf16.msra.mxu0 %v3129
        %4046 = vmatprep.subr.bf16.mxu0 %v3138
        %4047 = vmatpush1.bf16.msra.mxu0 %v3137
        %4048 = vmatprep.subr.bf16.mxu0 %v3146
        %4049 = vmatpush1.bf16.msra.mxu0 %v3145
        %4050 = vmatprep.subr.bf16.mxu0 %v3154
        %4051 = vmatpush1.bf16.msra.mxu0 %v3153
        %4052 = vmatprep.subr.bf16.mxu0 %v3162
        %4053 = vmatpush1.bf16.msra.mxu0 %v3161
        %4054 = vmatprep.subr.bf16.mxu0 %v3170
        %4055 = vmatpush1.bf16.msra.mxu0 %v3169
        %4056 = vmatprep.subr.bf16.mxu0 %v3178
        %4057 = vmatpush1.bf16.msra.mxu0 %v3177
        %4058 = vmatprep.subr.bf16.mxu0 %v3186
        %4059 = vmatpush1.bf16.msra.mxu0 %v3185
        %4060 = vmatprep.subr.bf16.mxu0 %v3194
        %4061 = vmatpush1.bf16.msra.mxu0 %v3193
        %4062 = vmatprep.subr.bf16.mxu0 %v3202
        %4063 = vmatpush1.bf16.msra.mxu0 %v3201
        %4064 = vmatprep.subr.bf16.mxu0 %v3210
        %4065 = vmatpush1.bf16.msra.mxu0 %v3209
        %4066 = vmatprep.subr.bf16.mxu0 %v3218
        %4067 = vmatpush1.bf16.msra.mxu0 %v3217
        %4068 = vmatprep.mubr.bf16.mxu0 %v1420
        %4069 = vmatmul.mubr.bf16.gmra.mrb[0].mxu0 %v1419
        %v4070 = vpop.f32.mrb[0].mxu0
        %v4071 = vadd.f32 %v4028, %v4070
        %v4072 = vpop.f32.mrb[0].mxu0
        %v4073 = vadd.f32 %v4030, %v4072
        %v4074 = vpop.f32.mrb[0].mxu0
        %v4075 = vadd.f32 %v4032, %v4074
        %v4076 = vpop.f32.mrb[0].mxu0
        %v4077 = vadd.f32 %v4034, %v4076
        %4078 = vdwg.mxu0
        %4079 = vmatprep.subr.bf16.mxu0 %v3226
        %4080 = vmatpush1.bf16.msra.mxu0 %v3225
        %4081 = vmatprep.subr.bf16.mxu0 %v3234
        %4082 = vmatpush1.bf16.msra.mxu0 %v3233
        %4083 = vmatprep.subr.bf16.mxu0 %v3242
        %4084 = vmatpush1.bf16.msra.mxu0 %v3241
        %4085 = vmatprep.subr.bf16.mxu0 %v3250
        %4086 = vmatpush1.bf16.msra.mxu0 %v3249
        %4087 = vmatprep.subr.bf16.mxu0 %v3258
        %4088 = vmatpush1.bf16.msra.mxu0 %v3257
        %4089 = vmatprep.subr.bf16.mxu0 %v3266
        %4090 = vmatpush1.bf16.msra.mxu0 %v3265
        %4091 = vmatprep.subr.bf16.mxu0 %v3274
        %4092 = vmatpush1.bf16.msra.mxu0 %v3273
        %4093 = vmatprep.subr.bf16.mxu0 %v3282
        %4094 = vmatpush1.bf16.msra.mxu0 %v3281
        %4095 = vmatprep.subr.bf16.mxu0 %v3290
        %4096 = vmatpush1.bf16.msra.mxu0 %v3289
        %4097 = vmatprep.subr.bf16.mxu0 %v3298
        %4098 = vmatpush1.bf16.msra.mxu0 %v3297
        %4099 = vmatprep.subr.bf16.mxu0 %v3306
        %4100 = vmatpush1.bf16.msra.mxu0 %v3305
        %4101 = vmatprep.subr.bf16.mxu0 %v3314
        %4102 = vmatpush1.bf16.msra.mxu0 %v3313
        %4103 = vmatprep.subr.bf16.mxu0 %v3322
        %4104 = vmatpush1.bf16.msra.mxu0 %v3321
        %4105 = vmatprep.subr.bf16.mxu0 %v3330
        %4106 = vmatpush1.bf16.msra.mxu0 %v3329
        %4107 = vmatprep.subr.bf16.mxu0 %v3338
        %4108 = vmatpush1.bf16.msra.mxu0 %v3337
        %4109 = vmatprep.subr.bf16.mxu0 %v3346
        %4110 = vmatpush1.bf16.msra.mxu0 %v3345
        %4111 = vmatprep.mubr.bf16.mxu0 %v1422
        %4112 = vmatmul.mubr.bf16.gmra.mrb[0].mxu0 %v1421
        %v4113 = vpop.f32.mrb[0].mxu0
        %v4114 = vadd.f32 %v4071, %v4113
        %v4115 = vpop.f32.mrb[0].mxu0
        %v4116 = vadd.f32 %v4073, %v4115
        %v4117 = vpop.f32.mrb[0].mxu0
        %v4118 = vadd.f32 %v4075, %v4117
        %v4119 = vpop.f32.mrb[0].mxu0
        %v4120 = vadd.f32 %v4077, %v4119
        %4121 = vdwg.mxu0
        %4122 = vmatprep.subr.bf16.mxu0 %v3354
        %4123 = vmatpush1.bf16.msra.mxu0 %v3353
        %4124 = vmatprep.subr.bf16.mxu0 %v3362
        %4125 = vmatpush1.bf16.msra.mxu0 %v3361
        %4126 = vmatprep.subr.bf16.mxu0 %v3370
        %4127 = vmatpush1.bf16.msra.mxu0 %v3369
        %4128 = vmatprep.subr.bf16.mxu0 %v3378
        %4129 = vmatpush1.bf16.msra.mxu0 %v3377
        %4130 = vmatprep.subr.bf16.mxu0 %v3386
        %4131 = vmatpush1.bf16.msra.mxu0 %v3385
        %4132 = vmatprep.subr.bf16.mxu0 %v3394
        %4133 = vmatpush1.bf16.msra.mxu0 %v3393
        %4134 = vmatprep.subr.bf16.mxu0 %v3402
        %4135 = vmatpush1.bf16.msra.mxu0 %v3401
        %4136 = vmatprep.subr.bf16.mxu0 %v3410
        %4137 = vmatpush1.bf16.msra.mxu0 %v3409
        %4138 = vmatprep.subr.bf16.mxu0 %v3418
        %4139 = vmatpush1.bf16.msra.mxu0 %v3417
        %4140 = vmatprep.subr.bf16.mxu0 %v3426
        %4141 = vmatpush1.bf16.msra.mxu0 %v3425
        %4142 = vmatprep.subr.bf16.mxu0 %v3434
        %4143 = vmatpush1.bf16.msra.mxu0 %v3433
        %4144 = vmatprep.subr.bf16.mxu0 %v3442
        %4145 = vmatpush1.bf16.msra.mxu0 %v3441
        %4146 = vmatprep.subr.bf16.mxu0 %v3450
        %4147 = vmatpush1.bf16.msra.mxu0 %v3449
        %4148 = vmatprep.subr.bf16.mxu0 %v3458
        %4149 = vmatpush1.bf16.msra.mxu0 %v3457
        %4150 = vmatprep.subr.bf16.mxu0 %v3466
        %4151 = vmatpush1.bf16.msra.mxu0 %v3465
        %4152 = vmatprep.subr.bf16.mxu0 %v3474
        %4153 = vmatpush1.bf16.msra.mxu0 %v3473
        %4154 = vmatprep.mubr.bf16.mxu0 %v1424
        %4155 = vmatmul.mubr.bf16.gmra.mrb[0].mxu0 %v1423
        %v4156 = vpop.f32.mrb[0].mxu0
        %v4157 = vadd.f32 %v4114, %v4156
        %v4158 = vpop.f32.mrb[0].mxu0
        %v4159 = vadd.f32 %v4116, %v4158
        %v4160 = vpop.f32.mrb[0].mxu0
        %v4161 = vadd.f32 %v4118, %v4160
        %v4162 = vpop.f32.mrb[0].mxu0
        %v4163 = vadd.f32 %v4120, %v4162
        %4164 = vdwg.mxu0
        %4165 = vmatprep.subr.bf16.mxu0 %v2972
        %4166 = vmatpush1.bf16.msra.mxu0 %v2971
        %4167 = vmatprep.subr.bf16.mxu0 %v2980
        %4168 = vmatpush1.bf16.msra.mxu0 %v2979
        %4169 = vmatprep.subr.bf16.mxu0 %v2988
        %4170 = vmatpush1.bf16.msra.mxu0 %v2987
        %4171 = vmatprep.subr.bf16.mxu0 %v2996
        %4172 = vmatpush1.bf16.msra.mxu0 %v2995
        %4173 = vmatprep.subr.bf16.mxu0 %v3004
        %4174 = vmatpush1.bf16.msra.mxu0 %v3003
        %4175 = vmatprep.subr.bf16.mxu0 %v3012
        %4176 = vmatpush1.bf16.msra.mxu0 %v3011
        %4177 = vmatprep.subr.bf16.mxu0 %v3020
        %4178 = vmatpush1.bf16.msra.mxu0 %v3019
        %4179 = vmatprep.subr.bf16.mxu0 %v3028
        %4180 = vmatpush1.bf16.msra.mxu0 %v3027
        %4181 = vmatprep.subr.bf16.mxu0 %v3036
        %4182 = vmatpush1.bf16.msra.mxu0 %v3035
        %4183 = vmatprep.subr.bf16.mxu0 %v3044
        %4184 = vmatpush1.bf16.msra.mxu0 %v3043
        %4185 = vmatprep.subr.bf16.mxu0 %v3052
        %4186 = vmatpush1.bf16.msra.mxu0 %v3051
        %4187 = vmatprep.subr.bf16.mxu0 %v3060
        %4188 = vmatpush1.bf16.msra.mxu0 %v3059
        %4189 = vmatprep.subr.bf16.mxu0 %v3068
        %4190 = vmatpush1.bf16.msra.mxu0 %v3067
        %4191 = vmatprep.subr.bf16.mxu0 %v3076
        %4192 = vmatpush1.bf16.msra.mxu0 %v3075
        %4193 = vmatprep.subr.bf16.mxu0 %v3084
        %4194 = vmatpush1.bf16.msra.mxu0 %v3083
        %4195 = vmatprep.subr.bf16.mxu0 %v3092
        %4196 = vmatpush1.bf16.msra.mxu0 %v3091
        %4197 = vmatprep.mubr.bf16.mxu0 %v1418
        %4198 = vmatmul.mubr.bf16.gmra.mrb[0].mxu0 %v1417
        %v4199 = vpop.f32.mrb[0].mxu0
        %v4200 = vadd.f32 %v1364, %v4199
        %v4201 = vpop.f32.mrb[0].mxu0
        %v4202 = vadd.f32 %v1368, %v4201
        %v4203 = vpop.f32.mrb[0].mxu0
        %v4204 = vadd.f32 %v1364, %v4203
        %v4205 = vpop.f32.mrb[0].mxu0
        %v4206 = vadd.f32 %v1368, %v4205
        %4207 = vdwg.mxu0
        %4208 = vmatprep.subr.bf16.mxu0 %v3100
        %4209 = vmatpush1.bf16.msra.mxu0 %v3099
        %4210 = vmatprep.subr.bf16.mxu0 %v3108
        %4211 = vmatpush1.bf16.msra.mxu0 %v3107
        %4212 = vmatprep.subr.bf16.mxu0 %v3116
        %4213 = vmatpush1.bf16.msra.mxu0 %v3115
        %4214 = vmatprep.subr.bf16.mxu0 %v3124
        %4215 = vmatpush1.bf16.msra.mxu0 %v3123
        %4216 = vmatprep.subr.bf16.mxu0 %v3132
        %4217 = vmatpush1.bf16.msra.mxu0 %v3131
        %4218 = vmatprep.subr.bf16.mxu0 %v3140
        %4219 = vmatpush1.bf16.msra.mxu0 %v3139
        %4220 = vmatprep.subr.bf16.mxu0 %v3148
        %4221 = vmatpush1.bf16.msra.mxu0 %v3147
        %4222 = vmatprep.subr.bf16.mxu0 %v3156
        %4223 = vmatpush1.bf16.msra.mxu0 %v3155
        %4224 = vmatprep.subr.bf16.mxu0 %v3164
        %4225 = vmatpush1.bf16.msra.mxu0 %v3163
        %4226 = vmatprep.subr.bf16.mxu0 %v3172
        %4227 = vmatpush1.bf16.msra.mxu0 %v3171
        %4228 = vmatprep.subr.bf16.mxu0 %v3180
        %4229 = vmatpush1.bf16.msra.mxu0 %v3179
        %4230 = vmatprep.subr.bf16.mxu0 %v3188
        %4231 = vmatpush1.bf16.msra.mxu0 %v3187
        %4232 = vmatprep.subr.bf16.mxu0 %v3196
        %4233 = vmatpush1.bf16.msra.mxu0 %v3195
        %4234 = vmatprep.subr.bf16.mxu0 %v3204
        %4235 = vmatpush1.bf16.msra.mxu0 %v3203
        %4236 = vmatprep.subr.bf16.mxu0 %v3212
        %4237 = vmatpush1.bf16.msra.mxu0 %v3211
        %4238 = vmatprep.subr.bf16.mxu0 %v3220
        %4239 = vmatpush1.bf16.msra.mxu0 %v3219
        %4240 = vmatprep.mubr.bf16.mxu0 %v1420
        %4241 = vmatmul.mubr.bf16.gmra.mrb[0].mxu0 %v1419
        %v4242 = vpop.f32.mrb[0].mxu0
        %v4243 = vadd.f32 %v4200, %v4242
        %v4244 = vpop.f32.mrb[0].mxu0
        %v4245 = vadd.f32 %v4202, %v4244
        %v4246 = vpop.f32.mrb[0].mxu0
        %v4247 = vadd.f32 %v4204, %v4246
        %v4248 = vpop.f32.mrb[0].mxu0
        %v4249 = vadd.f32 %v4206, %v4248
        %4250 = vdwg.mxu0
        %4251 = vmatprep.subr.bf16.mxu0 %v3228
        %4252 = vmatpush1.bf16.msra.mxu0 %v3227
        %4253 = vmatprep.subr.bf16.mxu0 %v3236
        %4254 = vmatpush1.bf16.msra.mxu0 %v3235
        %4255 = vmatprep.subr.bf16.mxu0 %v3244
        %4256 = vmatpush1.bf16.msra.mxu0 %v3243
        %4257 = vmatprep.subr.bf16.mxu0 %v3252
        %4258 = vmatpush1.bf16.msra.mxu0 %v3251
        %4259 = vmatprep.subr.bf16.mxu0 %v3260
        %4260 = vmatpush1.bf16.msra.mxu0 %v3259
        %4261 = vmatprep.subr.bf16.mxu0 %v3268
        %4262 = vmatpush1.bf16.msra.mxu0 %v3267
        %4263 = vmatprep.subr.bf16.mxu0 %v3276
        %4264 = vmatpush1.bf16.msra.mxu0 %v3275
        %4265 = vmatprep.subr.bf16.mxu0 %v3284
        %4266 = vmatpush1.bf16.msra.mxu0 %v3283
        %4267 = vmatprep.subr.bf16.mxu0 %v3292
        %4268 = vmatpush1.bf16.msra.mxu0 %v3291
        %4269 = vmatprep.subr.bf16.mxu0 %v3300
        %4270 = vmatpush1.bf16.msra.mxu0 %v3299
        %4271 = vmatprep.subr.bf16.mxu0 %v3308
        %4272 = vmatpush1.bf16.msra.mxu0 %v3307
        %4273 = vmatprep.subr.bf16.mxu0 %v3316
        %4274 = vmatpush1.bf16.msra.mxu0 %v3315
        %4275 = vmatprep.subr.bf16.mxu0 %v3324
        %4276 = vmatpush1.bf16.msra.mxu0 %v3323
        %4277 = vmatprep.subr.bf16.mxu0 %v3332
        %4278 = vmatpush1.bf16.msra.mxu0 %v3331
        %4279 = vmatprep.subr.bf16.mxu0 %v3340
        %4280 = vmatpush1.bf16.msra.mxu0 %v3339
        %4281 = vmatprep.subr.bf16.mxu0 %v3348
        %4282 = vmatpush1.bf16.msra.mxu0 %v3347
        %4283 = vmatprep.mubr.bf16.mxu0 %v1422
        %4284 = vmatmul.mubr.bf16.gmra.mrb[0].mxu0 %v1421
        %v4285 = vpop.f32.mrb[0].mxu0
        %v4286 = vadd.f32 %v4243, %v4285
        %v4287 = vpop.f32.mrb[0].mxu0
        %v4288 = vadd.f32 %v4245, %v4287
        %v4289 = vpop.f32.mrb[0].mxu0
        %v4290 = vadd.f32 %v4247, %v4289
        %v4291 = vpop.f32.mrb[0].mxu0
        %v4292 = vadd.f32 %v4249, %v4291
        %4293 = vdwg.mxu0
        %4294 = vmatprep.subr.bf16.mxu0 %v3356
        %4295 = vmatpush1.bf16.msra.mxu0 %v3355
        %4296 = vmatprep.subr.bf16.mxu0 %v3364
        %4297 = vmatpush1.bf16.msra.mxu0 %v3363
        %4298 = vmatprep.subr.bf16.mxu0 %v3372
        %4299 = vmatpush1.bf16.msra.mxu0 %v3371
        %4300 = vmatprep.subr.bf16.mxu0 %v3380
        %4301 = vmatpush1.bf16.msra.mxu0 %v3379
        %4302 = vmatprep.subr.bf16.mxu0 %v3388
        %4303 = vmatpush1.bf16.msra.mxu0 %v3387
        %4304 = vmatprep.subr.bf16.mxu0 %v3396
        %4305 = vmatpush1.bf16.msra.mxu0 %v3395
        %4306 = vmatprep.subr.bf16.mxu0 %v3404
        %4307 = vmatpush1.bf16.msra.mxu0 %v3403
        %4308 = vmatprep.subr.bf16.mxu0 %v3412
        %4309 = vmatpush1.bf16.msra.mxu0 %v3411
        %4310 = vmatprep.subr.bf16.mxu0 %v3420
        %4311 = vmatpush1.bf16.msra.mxu0 %v3419
        %4312 = vmatprep.subr.bf16.mxu0 %v3428
        %4313 = vmatpush1.bf16.msra.mxu0 %v3427
        %4314 = vmatprep.subr.bf16.mxu0 %v3436
        %4315 = vmatpush1.bf16.msra.mxu0 %v3435
        %4316 = vmatprep.subr.bf16.mxu0 %v3444
        %4317 = vmatpush1.bf16.msra.mxu0 %v3443
        %4318 = vmatprep.subr.bf16.mxu0 %v3452
        %4319 = vmatpush1.bf16.msra.mxu0 %v3451
        %4320 = vmatprep.subr.bf16.mxu0 %v3460
        %4321 = vmatpush1.bf16.msra.mxu0 %v3459
        %4322 = vmatprep.subr.bf16.mxu0 %v3468
        %4323 = vmatpush1.bf16.msra.mxu0 %v3467
        %4324 = vmatprep.subr.bf16.mxu0 %v3476
        %4325 = vmatpush1.bf16.msra.mxu0 %v3475
        %4326 = vmatprep.mubr.bf16.mxu0 %v1424
        %4327 = vmatmul.mubr.bf16.gmra.mrb[0].mxu0 %v1423
        %v4328 = vpop.f32.mrb[0].mxu0
        %v4329 = vadd.f32 %v4286, %v4328
        %v4330 = vpop.f32.mrb[0].mxu0
        %v4331 = vadd.f32 %v4288, %v4330
        %v4332 = vpop.f32.mrb[0].mxu0
        %v4333 = vadd.f32 %v4290, %v4332
        %v4334 = vpop.f32.mrb[0].mxu0
        %v4335 = vadd.f32 %v4292, %v4334
        %4336 = vdwg.mxu0
        %4337 = vmatprep.subr.bf16.mxu0 %v2974
        %4338 = vmatpush1.bf16.msra.mxu0 %v2973
        %4339 = vmatprep.subr.bf16.mxu0 %v2982
        %4340 = vmatpush1.bf16.msra.mxu0 %v2981
        %4341 = vmatprep.subr.bf16.mxu0 %v2990
        %4342 = vmatpush1.bf16.msra.mxu0 %v2989
        %4343 = vmatprep.subr.bf16.mxu0 %v2998
        %4344 = vmatpush1.bf16.msra.mxu0 %v2997
        %4345 = vmatprep.subr.bf16.mxu0 %v3006
        %4346 = vmatpush1.bf16.msra.mxu0 %v3005
        %4347 = vmatprep.subr.bf16.mxu0 %v3014
        %4348 = vmatpush1.bf16.msra.mxu0 %v3013
        %4349 = vmatprep.subr.bf16.mxu0 %v3022
        %4350 = vmatpush1.bf16.msra.mxu0 %v3021
        %4351 = vmatprep.subr.bf16.mxu0 %v3030
        %4352 = vmatpush1.bf16.msra.mxu0 %v3029
        %4353 = vmatprep.subr.bf16.mxu0 %v3038
        %4354 = vmatpush1.bf16.msra.mxu0 %v3037
        %4355 = vmatprep.subr.bf16.mxu0 %v3046
        %4356 = vmatpush1.bf16.msra.mxu0 %v3045
        %4357 = vmatprep.subr.bf16.mxu0 %v3054
        %4358 = vmatpush1.bf16.msra.mxu0 %v3053
        %4359 = vmatprep.subr.bf16.mxu0 %v3062
        %4360 = vmatpush1.bf16.msra.mxu0 %v3061
        %4361 = vmatprep.subr.bf16.mxu0 %v3070
        %4362 = vmatpush1.bf16.msra.mxu0 %v3069
        %4363 = vmatprep.subr.bf16.mxu0 %v3078
        %4364 = vmatpush1.bf16.msra.mxu0 %v3077
        %4365 = vmatprep.subr.bf16.mxu0 %v3086
        %4366 = vmatpush1.bf16.msra.mxu0 %v3085
        %4367 = vmatprep.subr.bf16.mxu0 %v3094
        %4368 = vmatpush1.bf16.msra.mxu0 %v3093
        %4369 = vmatprep.mubr.bf16.mxu0 %v1418
        %4370 = vmatmul.mubr.bf16.gmra.mrb[0].mxu0 %v1417
        %v4371 = vpop.f32.mrb[0].mxu0
        %v4372 = vadd.f32 %v1372, %v4371
        %v4373 = vpop.f32.mrb[0].mxu0
        %v4374 = vadd.f32 %v1376, %v4373
        %v4375 = vpop.f32.mrb[0].mxu0
        %v4376 = vadd.f32 %v1372, %v4375
        %v4377 = vpop.f32.mrb[0].mxu0
        %v4378 = vadd.f32 %v1376, %v4377
        %4379 = vdwg.mxu0
        %4380 = vmatprep.subr.bf16.mxu0 %v3102
        %4381 = vmatpush1.bf16.msra.mxu0 %v3101
        %4382 = vmatprep.subr.bf16.mxu0 %v3110
        %4383 = vmatpush1.bf16.msra.mxu0 %v3109
        %4384 = vmatprep.subr.bf16.mxu0 %v3118
        %4385 = vmatpush1.bf16.msra.mxu0 %v3117
        %4386 = vmatprep.subr.bf16.mxu0 %v3126
        %4387 = vmatpush1.bf16.msra.mxu0 %v3125
        %4388 = vmatprep.subr.bf16.mxu0 %v3134
        %4389 = vmatpush1.bf16.msra.mxu0 %v3133
        %4390 = vmatprep.subr.bf16.mxu0 %v3142
        %4391 = vmatpush1.bf16.msra.mxu0 %v3141
        %4392 = vmatprep.subr.bf16.mxu0 %v3150
        %4393 = vmatpush1.bf16.msra.mxu0 %v3149
        %4394 = vmatprep.subr.bf16.mxu0 %v3158
        %4395 = vmatpush1.bf16.msra.mxu0 %v3157
        %4396 = vmatprep.subr.bf16.mxu0 %v3166
        %4397 = vmatpush1.bf16.msra.mxu0 %v3165
        %4398 = vmatprep.subr.bf16.mxu0 %v3174
        %4399 = vmatpush1.bf16.msra.mxu0 %v3173
        %4400 = vmatprep.subr.bf16.mxu0 %v3182
        %4401 = vmatpush1.bf16.msra.mxu0 %v3181
        %4402 = vmatprep.subr.bf16.mxu0 %v3190
        %4403 = vmatpush1.bf16.msra.mxu0 %v3189
        %4404 = vmatprep.subr.bf16.mxu0 %v3198
        %4405 = vmatpush1.bf16.msra.mxu0 %v3197
        %4406 = vmatprep.subr.bf16.mxu0 %v3206
        %4407 = vmatpush1.bf16.msra.mxu0 %v3205
        %4408 = vmatprep.subr.bf16.mxu0 %v3214
        %4409 = vmatpush1.bf16.msra.mxu0 %v3213
        %4410 = vmatprep.subr.bf16.mxu0 %v3222
        %4411 = vmatpush1.bf16.msra.mxu0 %v3221
        %4412 = vmatprep.mubr.bf16.mxu0 %v1420
        %4413 = vmatmul.mubr.bf16.gmra.mrb[0].mxu0 %v1419
        %v4414 = vpop.f32.mrb[0].mxu0
        %v4415 = vadd.f32 %v4372, %v4414
        %v4416 = vpop.f32.mrb[0].mxu0
        %v4417 = vadd.f32 %v4374, %v4416
        %v4418 = vpop.f32.mrb[0].mxu0
        %v4419 = vadd.f32 %v4376, %v4418
        %v4420 = vpop.f32.mrb[0].mxu0
        %v4421 = vadd.f32 %v4378, %v4420
        %4422 = vdwg.mxu0
        %4423 = vmatprep.subr.bf16.mxu0 %v3230
        %4424 = vmatpush1.bf16.msra.mxu0 %v3229
        %4425 = vmatprep.subr.bf16.mxu0 %v3238
        %4426 = vmatpush1.bf16.msra.mxu0 %v3237
        %4427 = vmatprep.subr.bf16.mxu0 %v3246
        %4428 = vmatpush1.bf16.msra.mxu0 %v3245
        %4429 = vmatprep.subr.bf16.mxu0 %v3254
        %4430 = vmatpush1.bf16.msra.mxu0 %v3253
        %4431 = vmatprep.subr.bf16.mxu0 %v3262
        %4432 = vmatpush1.bf16.msra.mxu0 %v3261
        %4433 = vmatprep.subr.bf16.mxu0 %v3270
        %4434 = vmatpush1.bf16.msra.mxu0 %v3269
        %4435 = vmatprep.subr.bf16.mxu0 %v3278
        %4436 = vmatpush1.bf16.msra.mxu0 %v3277
        %4437 = vmatprep.subr.bf16.mxu0 %v3286
        %4438 = vmatpush1.bf16.msra.mxu0 %v3285
        %4439 = vmatprep.subr.bf16.mxu0 %v3294
        %4440 = vmatpush1.bf16.msra.mxu0 %v3293
        %4441 = vmatprep.subr.bf16.mxu0 %v3302
        %4442 = vmatpush1.bf16.msra.mxu0 %v3301
        %4443 = vmatprep.subr.bf16.mxu0 %v3310
        %4444 = vmatpush1.bf16.msra.mxu0 %v3309
        %4445 = vmatprep.subr.bf16.mxu0 %v3318
        %4446 = vmatpush1.bf16.msra.mxu0 %v3317
        %4447 = vmatprep.subr.bf16.mxu0 %v3326
        %4448 = vmatpush1.bf16.msra.mxu0 %v3325
        %4449 = vmatprep.subr.bf16.mxu0 %v3334
        %4450 = vmatpush1.bf16.msra.mxu0 %v3333
        %4451 = vmatprep.subr.bf16.mxu0 %v3342
        %4452 = vmatpush1.bf16.msra.mxu0 %v3341
        %4453 = vmatprep.subr.bf16.mxu0 %v3350
        %4454 = vmatpush1.bf16.msra.mxu0 %v3349
        %4455 = vmatprep.mubr.bf16.mxu0 %v1422
        %4456 = vmatmul.mubr.bf16.gmra.mrb[0].mxu0 %v1421
        %v4457 = vpop.f32.mrb[0].mxu0
        %v4458 = vadd.f32 %v4415, %v4457
        %v4459 = vpop.f32.mrb[0].mxu0
        %v4460 = vadd.f32 %v4417, %v4459
        %v4461 = vpop.f32.mrb[0].mxu0
        %v4462 = vadd.f32 %v4419, %v4461
        %v4463 = vpop.f32.mrb[0].mxu0
        %v4464 = vadd.f32 %v4421, %v4463
        %4465 = vdwg.mxu0
        %4466 = vmatprep.subr.bf16.mxu0 %v3358
        %4467 = vmatpush1.bf16.msra.mxu0 %v3357
        %4468 = vmatprep.subr.bf16.mxu0 %v3366
        %4469 = vmatpush1.bf16.msra.mxu0 %v3365
        %4470 = vmatprep.subr.bf16.mxu0 %v3374
        %4471 = vmatpush1.bf16.msra.mxu0 %v3373
        %4472 = vmatprep.subr.bf16.mxu0 %v3382
        %4473 = vmatpush1.bf16.msra.mxu0 %v3381
        %4474 = vmatprep.subr.bf16.mxu0 %v3390
        %4475 = vmatpush1.bf16.msra.mxu0 %v3389
        %4476 = vmatprep.subr.bf16.mxu0 %v3398
        %4477 = vmatpush1.bf16.msra.mxu0 %v3397
        %4478 = vmatprep.subr.bf16.mxu0 %v3406
        %4479 = vmatpush1.bf16.msra.mxu0 %v3405
        %4480 = vmatprep.subr.bf16.mxu0 %v3414
        %4481 = vmatpush1.bf16.msra.mxu0 %v3413
        %4482 = vmatprep.subr.bf16.mxu0 %v3422
        %4483 = vmatpush1.bf16.msra.mxu0 %v3421
        %4484 = vmatprep.subr.bf16.mxu0 %v3430
        %4485 = vmatpush1.bf16.msra.mxu0 %v3429
        %4486 = vmatprep.subr.bf16.mxu0 %v3438
        %4487 = vmatpush1.bf16.msra.mxu0 %v3437
        %4488 = vmatprep.subr.bf16.mxu0 %v3446
        %4489 = vmatpush1.bf16.msra.mxu0 %v3445
        %4490 = vmatprep.subr.bf16.mxu0 %v3454
        %4491 = vmatpush1.bf16.msra.mxu0 %v3453
        %4492 = vmatprep.subr.bf16.mxu0 %v3462
        %4493 = vmatpush1.bf16.msra.mxu0 %v3461
        %4494 = vmatprep.subr.bf16.mxu0 %v3470
        %4495 = vmatpush1.bf16.msra.mxu0 %v3469
        %4496 = vmatprep.subr.bf16.mxu0 %v3478
        %4497 = vmatpush1.bf16.msra.mxu0 %v3477
        %4498 = vmatprep.mubr.bf16.mxu0 %v1424
        %4499 = vmatmul.mubr.bf16.gmra.mrb[0].mxu0 %v1423
        %v4500 = vpop.f32.mrb[0].mxu0
        %v4501 = vadd.f32 %v4458, %v4500
        %v4502 = vpop.f32.mrb[0].mxu0
        %v4503 = vadd.f32 %v4460, %v4502
        %v4504 = vpop.f32.mrb[0].mxu0
        %v4505 = vadd.f32 %v4462, %v4504
        %v4506 = vpop.f32.mrb[0].mxu0
        %v4507 = vadd.f32 %v4464, %v4506
        %4508 = vdwg.mxu0
        %4509 = vmatprep.subr.bf16.mxu0 %v2976
        %4510 = vmatpush1.bf16.msra.mxu0 %v2975
        %4511 = vmatprep.subr.bf16.mxu0 %v2984
        %4512 = vmatpush1.bf16.msra.mxu0 %v2983
        %4513 = vmatprep.subr.bf16.mxu0 %v2992
        %4514 = vmatpush1.bf16.msra.mxu0 %v2991
        %4515 = vmatprep.subr.bf16.mxu0 %v3000
        %4516 = vmatpush1.bf16.msra.mxu0 %v2999
        %4517 = vmatprep.subr.bf16.mxu0 %v3008
        %4518 = vmatpush1.bf16.msra.mxu0 %v3007
        %4519 = vmatprep.subr.bf16.mxu0 %v3016
        %4520 = vmatpush1.bf16.msra.mxu0 %v3015
        %4521 = vmatprep.subr.bf16.mxu0 %v3024
        %4522 = vmatpush1.bf16.msra.mxu0 %v3023
        %4523 = vmatprep.subr.bf16.mxu0 %v3032
        %4524 = vmatpush1.bf16.msra.mxu0 %v3031
        %4525 = vmatprep.subr.bf16.mxu0 %v3040
        %4526 = vmatpush1.bf16.msra.mxu0 %v3039
        %4527 = vmatprep.subr.bf16.mxu0 %v3048
        %4528 = vmatpush1.bf16.msra.mxu0 %v3047
        %4529 = vmatprep.subr.bf16.mxu0 %v3056
        %4530 = vmatpush1.bf16.msra.mxu0 %v3055
        %4531 = vmatprep.subr.bf16.mxu0 %v3064
        %4532 = vmatpush1.bf16.msra.mxu0 %v3063
        %4533 = vmatprep.subr.bf16.mxu0 %v3072
        %4534 = vmatpush1.bf16.msra.mxu0 %v3071
        %4535 = vmatprep.subr.bf16.mxu0 %v3080
        %4536 = vmatpush1.bf16.msra.mxu0 %v3079
        %4537 = vmatprep.subr.bf16.mxu0 %v3088
        %4538 = vmatpush1.bf16.msra.mxu0 %v3087
        %4539 = vmatprep.subr.bf16.mxu0 %v3096
        %4540 = vmatpush1.bf16.msra.mxu0 %v3095
        %4541 = vmatprep.mubr.bf16.mxu0 %v1418
        %4542 = vmatmul.mubr.bf16.gmra.mrb[0].mxu0 %v1417
        %v4543 = vpop.f32.mrb[0].mxu0
        %v4544 = vadd.f32 %v1380, %v4543
        %v4545 = vpop.f32.mrb[0].mxu0
        %v4546 = vadd.f32 %v1384, %v4545
        %v4547 = vpop.f32.mrb[0].mxu0
        %v4548 = vadd.f32 %v1380, %v4547
        %v4549 = vpop.f32.mrb[0].mxu0
        %v4550 = vadd.f32 %v1384, %v4549
        %4551 = vdwg.mxu0
        %4552 = vmatprep.subr.bf16.mxu0 %v3104
        %4553 = vmatpush1.bf16.msra.mxu0 %v3103
        %4554 = vmatprep.subr.bf16.mxu0 %v3112
        %4555 = vmatpush1.bf16.msra.mxu0 %v3111
        %4556 = vmatprep.subr.bf16.mxu0 %v3120
        %4557 = vmatpush1.bf16.msra.mxu0 %v3119
        %4558 = vmatprep.subr.bf16.mxu0 %v3128
        %4559 = vmatpush1.bf16.msra.mxu0 %v3127
        %4560 = vmatprep.subr.bf16.mxu0 %v3136
        %4561 = vmatpush1.bf16.msra.mxu0 %v3135
        %4562 = vmatprep.subr.bf16.mxu0 %v3144
        %4563 = vmatpush1.bf16.msra.mxu0 %v3143
        %4564 = vmatprep.subr.bf16.mxu0 %v3152
        %4565 = vmatpush1.bf16.msra.mxu0 %v3151
        %4566 = vmatprep.subr.bf16.mxu0 %v3160
        %4567 = vmatpush1.bf16.msra.mxu0 %v3159
        %4568 = vmatprep.subr.bf16.mxu0 %v3168
        %4569 = vmatpush1.bf16.msra.mxu0 %v3167
        %4570 = vmatprep.subr.bf16.mxu0 %v3176
        %4571 = vmatpush1.bf16.msra.mxu0 %v3175
        %4572 = vmatprep.subr.bf16.mxu0 %v3184
        %4573 = vmatpush1.bf16.msra.mxu0 %v3183
        %4574 = vmatprep.subr.bf16.mxu0 %v3192
        %4575 = vmatpush1.bf16.msra.mxu0 %v3191
        %4576 = vmatprep.subr.bf16.mxu0 %v3200
        %4577 = vmatpush1.bf16.msra.mxu0 %v3199
        %4578 = vmatprep.subr.bf16.mxu0 %v3208
        %4579 = vmatpush1.bf16.msra.mxu0 %v3207
        %4580 = vmatprep.subr.bf16.mxu0 %v3216
        %4581 = vmatpush1.bf16.msra.mxu0 %v3215
        %4582 = vmatprep.subr.bf16.mxu0 %v3224
        %4583 = vmatpush1.bf16.msra.mxu0 %v3223
        %4584 = vmatprep.mubr.bf16.mxu0 %v1420
        %4585 = vmatmul.mubr.bf16.gmra.mrb[0].mxu0 %v1419
        %v4586 = vpop.f32.mrb[0].mxu0
        %v4587 = vadd.f32 %v4544, %v4586
        %v4588 = vpop.f32.mrb[0].mxu0
        %v4589 = vadd.f32 %v4546, %v4588
        %v4590 = vpop.f32.mrb[0].mxu0
        %v4591 = vadd.f32 %v4548, %v4590
        %v4592 = vpop.f32.mrb[0].mxu0
        %v4593 = vadd.f32 %v4550, %v4592
        %4594 = vdwg.mxu0
        %4595 = vmatprep.subr.bf16.mxu0 %v3232
        %4596 = vmatpush1.bf16.msra.mxu0 %v3231
        %4597 = vmatprep.subr.bf16.mxu0 %v3240
        %4598 = vmatpush1.bf16.msra.mxu0 %v3239
        %4599 = vmatprep.subr.bf16.mxu0 %v3248
        %4600 = vmatpush1.bf16.msra.mxu0 %v3247
        %4601 = vmatprep.subr.bf16.mxu0 %v3256
        %4602 = vmatpush1.bf16.msra.mxu0 %v3255
        %4603 = vmatprep.subr.bf16.mxu0 %v3264
        %4604 = vmatpush1.bf16.msra.mxu0 %v3263
        %4605 = vmatprep.subr.bf16.mxu0 %v3272
        %4606 = vmatpush1.bf16.msra.mxu0 %v3271
        %4607 = vmatprep.subr.bf16.mxu0 %v3280
        %4608 = vmatpush1.bf16.msra.mxu0 %v3279
        %4609 = vmatprep.subr.bf16.mxu0 %v3288
        %4610 = vmatpush1.bf16.msra.mxu0 %v3287
        %4611 = vmatprep.subr.bf16.mxu0 %v3296
        %4612 = vmatpush1.bf16.msra.mxu0 %v3295
        %4613 = vmatprep.subr.bf16.mxu0 %v3304
        %4614 = vmatpush1.bf16.msra.mxu0 %v3303
        %4615 = vmatprep.subr.bf16.mxu0 %v3312
        %4616 = vmatpush1.bf16.msra.mxu0 %v3311
        %4617 = vmatprep.subr.bf16.mxu0 %v3320
        %4618 = vmatpush1.bf16.msra.mxu0 %v3319
        %4619 = vmatprep.subr.bf16.mxu0 %v3328
        %4620 = vmatpush1.bf16.msra.mxu0 %v3327
        %4621 = vmatprep.subr.bf16.mxu0 %v3336
        %4622 = vmatpush1.bf16.msra.mxu0 %v3335
        %4623 = vmatprep.subr.bf16.mxu0 %v3344
        %4624 = vmatpush1.bf16.msra.mxu0 %v3343
        %4625 = vmatprep.subr.bf16.mxu0 %v3352
        %4626 = vmatpush1.bf16.msra.mxu0 %v3351
        %4627 = vmatprep.mubr.bf16.mxu0 %v1422
        %4628 = vmatmul.mubr.bf16.gmra.mrb[0].mxu0 %v1421
        %v4629 = vpop.f32.mrb[0].mxu0
        %v4630 = vadd.f32 %v4587, %v4629
        %v4631 = vpop.f32.mrb[0].mxu0
        %v4632 = vadd.f32 %v4589, %v4631
        %v4633 = vpop.f32.mrb[0].mxu0
        %v4634 = vadd.f32 %v4591, %v4633
        %v4635 = vpop.f32.mrb[0].mxu0
        %v4636 = vadd.f32 %v4593, %v4635
        %4637 = vdwg.mxu0
        %4638 = vmatprep.subr.bf16.mxu0 %v3360
        %4639 = vmatpush1.bf16.msra.mxu0 %v3359
        %4640 = vmatprep.subr.bf16.mxu0 %v3368
        %4641 = vmatpush1.bf16.msra.mxu0 %v3367
        %4642 = vmatprep.subr.bf16.mxu0 %v3376
        %4643 = vmatpush1.bf16.msra.mxu0 %v3375
        %4644 = vmatprep.subr.bf16.mxu0 %v3384
        %4645 = vmatpush1.bf16.msra.mxu0 %v3383
        %4646 = vmatprep.subr.bf16.mxu0 %v3392
        %4647 = vmatpush1.bf16.msra.mxu0 %v3391
        %4648 = vmatprep.subr.bf16.mxu0 %v3400
        %4649 = vmatpush1.bf16.msra.mxu0 %v3399
        %4650 = vmatprep.subr.bf16.mxu0 %v3408
        %4651 = vmatpush1.bf16.msra.mxu0 %v3407
        %4652 = vmatprep.subr.bf16.mxu0 %v3416
        %4653 = vmatpush1.bf16.msra.mxu0 %v3415
        %4654 = vmatprep.subr.bf16.mxu0 %v3424
        %4655 = vmatpush1.bf16.msra.mxu0 %v3423
        %4656 = vmatprep.subr.bf16.mxu0 %v3432
        %4657 = vmatpush1.bf16.msra.mxu0 %v3431
        %4658 = vmatprep.subr.bf16.mxu0 %v3440
        %4659 = vmatpush1.bf16.msra.mxu0 %v3439
        %4660 = vmatprep.subr.bf16.mxu0 %v3448
        %4661 = vmatpush1.bf16.msra.mxu0 %v3447
        %4662 = vmatprep.subr.bf16.mxu0 %v3456
        %4663 = vmatpush1.bf16.msra.mxu0 %v3455
        %4664 = vmatprep.subr.bf16.mxu0 %v3464
        %4665 = vmatpush1.bf16.msra.mxu0 %v3463
        %4666 = vmatprep.subr.bf16.mxu0 %v3472
        %4667 = vmatpush1.bf16.msra.mxu0 %v3471
        %4668 = vmatprep.subr.bf16.mxu0 %v3480
        %4669 = vmatpush1.bf16.msra.mxu0 %v3479
        %4670 = vmatprep.mubr.bf16.mxu0 %v1424
        %4671 = vmatmul.mubr.bf16.gmra.mrb[0].mxu0 %v1423
        %v4672 = vpop.f32.mrb[0].mxu0
        %v4673 = vadd.f32 %v4630, %v4672
        %v4674 = vpop.f32.mrb[0].mxu0
        %v4675 = vadd.f32 %v4632, %v4674
        %v4676 = vpop.f32.mrb[0].mxu0
        %v4677 = vadd.f32 %v4634, %v4676
        %v4678 = vpop.f32.mrb[0].mxu0
        %v4679 = vadd.f32 %v4636, %v4678
        %4680 = vdwg.mxu0
        %v4681 = vmul.f32 %v4157, 0.5
        %v4682 = vmul.f32 %v4159, 0.5
        %v4683 = vmul.f32 %v4329, 0.5
        %v4684 = vmul.f32 %v4331, 0.5
        %v4685 = vmul.f32 %v4501, 0.5
        %v4686 = vmul.f32 %v4503, 0.5
        %v4687 = vmul.f32 %v4673, 0.5
        %v4688 = vmul.f32 %v4675, 0.5
        %v4689 = vmul.f32 %v4161, 0.5
        %v4690 = vmul.f32 %v4163, 0.5
        %v4691 = vmul.f32 %v4333, 0.5
        %v4692 = vmul.f32 %v4335, 0.5
        %v4693 = vmul.f32 %v4505, 0.5
        %v4694 = vmul.f32 %v4507, 0.5
        %v4695 = vmul.f32 %v4677, 0.5
        %v4696 = vmul.f32 %v4679, 0.5
        %v4697 = vmul.f32 %v4157, 0.70710677
        %v4698 = vmul.f32 %v4159, 0.70710677
        %v4699 = vmul.f32 %v4329, 0.70710677
        %v4700 = vmul.f32 %v4331, 0.70710677
        %v4701 = vmul.f32 %v4501, 0.70710677
        %v4702 = vmul.f32 %v4503, 0.70710677
        %v4703 = vmul.f32 %v4673, 0.70710677
        %v4704 = vmul.f32 %v4675, 0.70710677
        %v4705 = vmul.f32 %v4161, 0.70710677
        %v4706 = vmul.f32 %v4163, 0.70710677
        %v4707 = vmul.f32 %v4333, 0.70710677
        %v4708 = vmul.f32 %v4335, 0.70710677
        %v4709 = vmul.f32 %v4505, 0.70710677
        %v4710 = vmul.f32 %v4507, 0.70710677
        %v4711 = vmul.f32 %v4677, 0.70710677
        %v4712 = vmul.f32 %v4679, 0.70710677
        %v4713 = verf.f32.pop %v4697
        %v4714 = verf.f32.pop %v4698
        %v4715 = verf.f32.pop %v4699
        %v4716 = verf.f32.pop %v4700
        %v4717 = verf.f32.pop %v4701
        %v4718 = verf.f32.pop %v4702
        %v4719 = verf.f32.pop %v4703
        %v4720 = verf.f32.pop %v4704
        %v4721 = verf.f32.pop %v4705
        %v4722 = verf.f32.pop %v4706
        %v4723 = verf.f32.pop %v4707
        %v4724 = verf.f32.pop %v4708
        %v4725 = verf.f32.pop %v4709
        %v4726 = verf.f32.pop %v4710
        %v4727 = verf.f32.pop %v4711
        %v4728 = verf.f32.pop %v4712
        %v4729 = vadd.f32 %v4713, 1.0
        %v4730 = vadd.f32 %v4714, 1.0
        %v4731 = vadd.f32 %v4715, 1.0
        %v4732 = vadd.f32 %v4716, 1.0
        %v4733 = vadd.f32 %v4717, 1.0
        %v4734 = vadd.f32 %v4718, 1.0
        %v4735 = vadd.f32 %v4719, 1.0
        %v4736 = vadd.f32 %v4720, 1.0
        %v4737 = vadd.f32 %v4721, 1.0
        %v4738 = vadd.f32 %v4722, 1.0
        %v4739 = vadd.f32 %v4723, 1.0
        %v4740 = vadd.f32 %v4724, 1.0
        %v4741 = vadd.f32 %v4725, 1.0
        %v4742 = vadd.f32 %v4726, 1.0
        %v4743 = vadd.f32 %v4727, 1.0
        %v4744 = vadd.f32 %v4728, 1.0
        %v4745 = vmul.f32 %v4681, %v4729
        %v4746 = vmul.f32 %v4682, %v4730
        %v4747 = vmul.f32 %v4683, %v4731
        %v4748 = vmul.f32 %v4684, %v4732
        %v4749 = vmul.f32 %v4685, %v4733
        %v4750 = vmul.f32 %v4686, %v4734
        %v4751 = vmul.f32 %v4687, %v4735
        %v4752 = vmul.f32 %v4688, %v4736
        %v4753 = vmul.f32 %v4689, %v4737
        %v4754 = vmul.f32 %v4690, %v4738
        %v4755 = vmul.f32 %v4691, %v4739
        %v4756 = vmul.f32 %v4692, %v4740
        %v4757 = vmul.f32 %v4693, %v4741
        %v4758 = vmul.f32 %v4694, %v4742
        %v4759 = vmul.f32 %v4695, %v4743
        %v4760 = vmul.f32 %v4696, %v4744
        %v4761 = vld [vmem:[#allocation11] sm:$0xff]
        %v4762 = vld [vmem:[#allocation11 + $0x8] sm:$0xff]
        %v4763 = vld [vmem:[#allocation11 + $0x10] sm:$0xff]
        %v4764 = vld [vmem:[#allocation11 + $0x18] sm:$0xff]
        %v4765 = vld [vmem:[#allocation11 + $0x20] sm:$0xff]
        %v4766 = vld [vmem:[#allocation11 + $0x28] sm:$0xff]
        %v4767 = vld [vmem:[#allocation11 + $0x30] sm:$0xff]
        %v4768 = vld [vmem:[#allocation11 + $0x38] sm:$0xff]
        %v4769 = vld [vmem:[#allocation11 + $0x40] sm:$0xff]
        %v4770 = vld [vmem:[#allocation11 + $0x48] sm:$0xff]
        %v4771 = vld [vmem:[#allocation11 + $0x50] sm:$0xff]
        %v4772 = vld [vmem:[#allocation11 + $0x58] sm:$0xff]
        %v4773 = vld [vmem:[#allocation11 + $0x60] sm:$0xff]
        %v4774 = vld [vmem:[#allocation11 + $0x68] sm:$0xff]
        %v4775 = vld [vmem:[#allocation11 + $0x70] sm:$0xff]
        %v4776 = vld [vmem:[#allocation11 + $0x78] sm:$0xff]
        %v4777 = vpack.c.bf16 %v4753, %v4745
        %v4778 = vpack.c.bf16 %v4754, %v4746
        %v4779 = vpack.c.bf16 %v4755, %v4747
        %v4780 = vpack.c.bf16 %v4756, %v4748
        %v4781 = vpack.c.bf16 %v4757, %v4749
        %v4782 = vpack.c.bf16 %v4758, %v4750
        %v4783 = vpack.c.bf16 %v4759, %v4751
        %v4784 = vpack.c.bf16 %v4760, %v4752
        %v5297 = vunpack.c.l.b16 %v832
        %v5298 = vunpack.c.h.b16 %v832
        %v5299 = vunpack.c.l.b16 %v833
        %v5300 = vunpack.c.h.b16 %v833
        %v5301 = vunpack.c.l.b16 %v834
        %v5302 = vunpack.c.h.b16 %v834
        %v5303 = vunpack.c.l.b16 %v835
        %v5304 = vunpack.c.h.b16 %v835
        %v5305 = vunpack.c.l.b16 %v836
        %v5306 = vunpack.c.h.b16 %v836
        %v5307 = vunpack.c.l.b16 %v837
        %v5308 = vunpack.c.h.b16 %v837
        %v5309 = vunpack.c.l.b16 %v838
        %v5310 = vunpack.c.h.b16 %v838
        %v5311 = vunpack.c.l.b16 %v839
        %v5312 = vunpack.c.h.b16 %v839
        %v5313 = vunpack.c.l.b16 %v840
        %v5314 = vunpack.c.h.b16 %v840
        %v5315 = vunpack.c.l.b16 %v841
        %v5316 = vunpack.c.h.b16 %v841
        %v5317 = vunpack.c.l.b16 %v842
        %v5318 = vunpack.c.h.b16 %v842
        %v5319 = vunpack.c.l.b16 %v843
        %v5320 = vunpack.c.h.b16 %v843
        %v5321 = vunpack.c.l.b16 %v844
        %v5322 = vunpack.c.h.b16 %v844
        %v5323 = vunpack.c.l.b16 %v845
        %v5324 = vunpack.c.h.b16 %v845
        %v5325 = vunpack.c.l.b16 %v846
        %v5326 = vunpack.c.h.b16 %v846
        %v5327 = vunpack.c.l.b16 %v847
        %v5328 = vunpack.c.h.b16 %v847
        %v5329 = vunpack.c.l.b16 %v848
        %v5330 = vunpack.c.h.b16 %v848
        %v5331 = vunpack.c.l.b16 %v849
        %v5332 = vunpack.c.h.b16 %v849
        %v5333 = vunpack.c.l.b16 %v850
        %v5334 = vunpack.c.h.b16 %v850
        %v5335 = vunpack.c.l.b16 %v851
        %v5336 = vunpack.c.h.b16 %v851
        %v5337 = vunpack.c.l.b16 %v852
        %v5338 = vunpack.c.h.b16 %v852
        %v5339 = vunpack.c.l.b16 %v853
        %v5340 = vunpack.c.h.b16 %v853
        %v5341 = vunpack.c.l.b16 %v854
        %v5342 = vunpack.c.h.b16 %v854
        %v5343 = vunpack.c.l.b16 %v855
        %v5344 = vunpack.c.h.b16 %v855
        %v5345 = vunpack.c.l.b16 %v856
        %v5346 = vunpack.c.h.b16 %v856
        %v5347 = vunpack.c.l.b16 %v857
        %v5348 = vunpack.c.h.b16 %v857
        %v5349 = vunpack.c.l.b16 %v858
        %v5350 = vunpack.c.h.b16 %v858
        %v5351 = vunpack.c.l.b16 %v859
        %v5352 = vunpack.c.h.b16 %v859
        %v5353 = vunpack.c.l.b16 %v860
        %v5354 = vunpack.c.h.b16 %v860
        %v5355 = vunpack.c.l.b16 %v861
        %v5356 = vunpack.c.h.b16 %v861
        %v5357 = vunpack.c.l.b16 %v862
        %v5358 = vunpack.c.h.b16 %v862
        %v5359 = vunpack.c.l.b16 %v863
        %v5360 = vunpack.c.h.b16 %v863
        %v5361 = vunpack.c.l.b16 %v864
        %v5362 = vunpack.c.h.b16 %v864
        %v5363 = vunpack.c.l.b16 %v865
        %v5364 = vunpack.c.h.b16 %v865
        %v5365 = vunpack.c.l.b16 %v866
        %v5366 = vunpack.c.h.b16 %v866
        %v5367 = vunpack.c.l.b16 %v867
        %v5368 = vunpack.c.h.b16 %v867
        %v5369 = vunpack.c.l.b16 %v868
        %v5370 = vunpack.c.h.b16 %v868
        %v5371 = vunpack.c.l.b16 %v869
        %v5372 = vunpack.c.h.b16 %v869
        %v5373 = vunpack.c.l.b16 %v870
        %v5374 = vunpack.c.h.b16 %v870
        %v5375 = vunpack.c.l.b16 %v871
        %v5376 = vunpack.c.h.b16 %v871
        %v5377 = vunpack.c.l.b16 %v872
        %v5378 = vunpack.c.h.b16 %v872
        %v5379 = vunpack.c.l.b16 %v873
        %v5380 = vunpack.c.h.b16 %v873
        %v5381 = vunpack.c.l.b16 %v874
        %v5382 = vunpack.c.h.b16 %v874
        %v5383 = vunpack.c.l.b16 %v875
        %v5384 = vunpack.c.h.b16 %v875
        %v5385 = vunpack.c.l.b16 %v876
        %v5386 = vunpack.c.h.b16 %v876
        %v5387 = vunpack.c.l.b16 %v877
        %v5388 = vunpack.c.h.b16 %v877
        %v5389 = vunpack.c.l.b16 %v878
        %v5390 = vunpack.c.h.b16 %v878
        %v5391 = vunpack.c.l.b16 %v879
        %v5392 = vunpack.c.h.b16 %v879
        %v5393 = vunpack.c.l.b16 %v880
        %v5394 = vunpack.c.h.b16 %v880
        %v5395 = vunpack.c.l.b16 %v881
        %v5396 = vunpack.c.h.b16 %v881
        %v5397 = vunpack.c.l.b16 %v882
        %v5398 = vunpack.c.h.b16 %v882
        %v5399 = vunpack.c.l.b16 %v883
        %v5400 = vunpack.c.h.b16 %v883
        %v5401 = vunpack.c.l.b16 %v884
        %v5402 = vunpack.c.h.b16 %v884
        %v5403 = vunpack.c.l.b16 %v885
        %v5404 = vunpack.c.h.b16 %v885
        %v5405 = vunpack.c.l.b16 %v886
        %v5406 = vunpack.c.h.b16 %v886
        %v5407 = vunpack.c.l.b16 %v887
        %v5408 = vunpack.c.h.b16 %v887
        %v5409 = vunpack.c.l.b16 %v888
        %v5410 = vunpack.c.h.b16 %v888
        %v5411 = vunpack.c.l.b16 %v889
        %v5412 = vunpack.c.h.b16 %v889
        %v5413 = vunpack.c.l.b16 %v890
        %v5414 = vunpack.c.h.b16 %v890
        %v5415 = vunpack.c.l.b16 %v891
        %v5416 = vunpack.c.h.b16 %v891
        %v5417 = vunpack.c.l.b16 %v892
        %v5418 = vunpack.c.h.b16 %v892
        %v5419 = vunpack.c.l.b16 %v893
        %v5420 = vunpack.c.h.b16 %v893
        %v5421 = vunpack.c.l.b16 %v894
        %v5422 = vunpack.c.h.b16 %v894
        %v5423 = vunpack.c.l.b16 %v895
        %v5424 = vunpack.c.h.b16 %v895
        %v5425 = vunpack.c.l.b16 %v896
        %v5426 = vunpack.c.h.b16 %v896
        %v5427 = vunpack.c.l.b16 %v897
        %v5428 = vunpack.c.h.b16 %v897
        %v5429 = vunpack.c.l.b16 %v898
        %v5430 = vunpack.c.h.b16 %v898
        %v5431 = vunpack.c.l.b16 %v899
        %v5432 = vunpack.c.h.b16 %v899
        %v5433 = vunpack.c.l.b16 %v900
        %v5434 = vunpack.c.h.b16 %v900
        %v5435 = vunpack.c.l.b16 %v901
        %v5436 = vunpack.c.h.b16 %v901
        %v5437 = vunpack.c.l.b16 %v902
        %v5438 = vunpack.c.h.b16 %v902
        %v5439 = vunpack.c.l.b16 %v903
        %v5440 = vunpack.c.h.b16 %v903
        %v5441 = vunpack.c.l.b16 %v904
        %v5442 = vunpack.c.h.b16 %v904
        %v5443 = vunpack.c.l.b16 %v905
        %v5444 = vunpack.c.h.b16 %v905
        %v5445 = vunpack.c.l.b16 %v906
        %v5446 = vunpack.c.h.b16 %v906
        %v5447 = vunpack.c.l.b16 %v907
        %v5448 = vunpack.c.h.b16 %v907
        %v5449 = vunpack.c.l.b16 %v908
        %v5450 = vunpack.c.h.b16 %v908
        %v5451 = vunpack.c.l.b16 %v909
        %v5452 = vunpack.c.h.b16 %v909
        %v5453 = vunpack.c.l.b16 %v910
        %v5454 = vunpack.c.h.b16 %v910
        %v5455 = vunpack.c.l.b16 %v911
        %v5456 = vunpack.c.h.b16 %v911
        %v5457 = vunpack.c.l.b16 %v912
        %v5458 = vunpack.c.h.b16 %v912
        %v5459 = vunpack.c.l.b16 %v913
        %v5460 = vunpack.c.h.b16 %v913
        %v5461 = vunpack.c.l.b16 %v914
        %v5462 = vunpack.c.h.b16 %v914
        %v5463 = vunpack.c.l.b16 %v915
        %v5464 = vunpack.c.h.b16 %v915
        %v5465 = vunpack.c.l.b16 %v916
        %v5466 = vunpack.c.h.b16 %v916
        %v5467 = vunpack.c.l.b16 %v917
        %v5468 = vunpack.c.h.b16 %v917
        %v5469 = vunpack.c.l.b16 %v918
        %v5470 = vunpack.c.h.b16 %v918
        %v5471 = vunpack.c.l.b16 %v919
        %v5472 = vunpack.c.h.b16 %v919
        %v5473 = vunpack.c.l.b16 %v920
        %v5474 = vunpack.c.h.b16 %v920
        %v5475 = vunpack.c.l.b16 %v921
        %v5476 = vunpack.c.h.b16 %v921
        %v5477 = vunpack.c.l.b16 %v922
        %v5478 = vunpack.c.h.b16 %v922
        %v5479 = vunpack.c.l.b16 %v923
        %v5480 = vunpack.c.h.b16 %v923
        %v5481 = vunpack.c.l.b16 %v924
        %v5482 = vunpack.c.h.b16 %v924
        %v5483 = vunpack.c.l.b16 %v925
        %v5484 = vunpack.c.h.b16 %v925
        %v5485 = vunpack.c.l.b16 %v926
        %v5486 = vunpack.c.h.b16 %v926
        %v5487 = vunpack.c.l.b16 %v927
        %v5488 = vunpack.c.h.b16 %v927
        %v5489 = vunpack.c.l.b16 %v928
        %v5490 = vunpack.c.h.b16 %v928
        %v5491 = vunpack.c.l.b16 %v929
        %v5492 = vunpack.c.h.b16 %v929
        %v5493 = vunpack.c.l.b16 %v930
        %v5494 = vunpack.c.h.b16 %v930
        %v5495 = vunpack.c.l.b16 %v931
        %v5496 = vunpack.c.h.b16 %v931
        %v5497 = vunpack.c.l.b16 %v932
        %v5498 = vunpack.c.h.b16 %v932
        %v5499 = vunpack.c.l.b16 %v933
        %v5500 = vunpack.c.h.b16 %v933
        %v5501 = vunpack.c.l.b16 %v934
        %v5502 = vunpack.c.h.b16 %v934
        %v5503 = vunpack.c.l.b16 %v935
        %v5504 = vunpack.c.h.b16 %v935
        %v5505 = vunpack.c.l.b16 %v936
        %v5506 = vunpack.c.h.b16 %v936
        %v5507 = vunpack.c.l.b16 %v937
        %v5508 = vunpack.c.h.b16 %v937
        %v5509 = vunpack.c.l.b16 %v938
        %v5510 = vunpack.c.h.b16 %v938
        %v5511 = vunpack.c.l.b16 %v939
        %v5512 = vunpack.c.h.b16 %v939
        %v5513 = vunpack.c.l.b16 %v940
        %v5514 = vunpack.c.h.b16 %v940
        %v5515 = vunpack.c.l.b16 %v941
        %v5516 = vunpack.c.h.b16 %v941
        %v5517 = vunpack.c.l.b16 %v942
        %v5518 = vunpack.c.h.b16 %v942
        %v5519 = vunpack.c.l.b16 %v943
        %v5520 = vunpack.c.h.b16 %v943
        %v5521 = vunpack.c.l.b16 %v944
        %v5522 = vunpack.c.h.b16 %v944
        %v5523 = vunpack.c.l.b16 %v945
        %v5524 = vunpack.c.h.b16 %v945
        %v5525 = vunpack.c.l.b16 %v946
        %v5526 = vunpack.c.h.b16 %v946
        %v5527 = vunpack.c.l.b16 %v947
        %v5528 = vunpack.c.h.b16 %v947
        %v5529 = vunpack.c.l.b16 %v948
        %v5530 = vunpack.c.h.b16 %v948
        %v5531 = vunpack.c.l.b16 %v949
        %v5532 = vunpack.c.h.b16 %v949
        %v5533 = vunpack.c.l.b16 %v950
        %v5534 = vunpack.c.h.b16 %v950
        %v5535 = vunpack.c.l.b16 %v951
        %v5536 = vunpack.c.h.b16 %v951
        %v5537 = vunpack.c.l.b16 %v952
        %v5538 = vunpack.c.h.b16 %v952
        %v5539 = vunpack.c.l.b16 %v953
        %v5540 = vunpack.c.h.b16 %v953
        %v5541 = vunpack.c.l.b16 %v954
        %v5542 = vunpack.c.h.b16 %v954
        %v5543 = vunpack.c.l.b16 %v955
        %v5544 = vunpack.c.h.b16 %v955
        %v5545 = vunpack.c.l.b16 %v956
        %v5546 = vunpack.c.h.b16 %v956
        %v5547 = vunpack.c.l.b16 %v957
        %v5548 = vunpack.c.h.b16 %v957
        %v5549 = vunpack.c.l.b16 %v958
        %v5550 = vunpack.c.h.b16 %v958
        %v5551 = vunpack.c.l.b16 %v959
        %v5552 = vunpack.c.h.b16 %v959
        %v5553 = vunpack.c.l.b16 %v960
        %v5554 = vunpack.c.h.b16 %v960
        %v5555 = vunpack.c.l.b16 %v961
        %v5556 = vunpack.c.h.b16 %v961
        %v5557 = vunpack.c.l.b16 %v962
        %v5558 = vunpack.c.h.b16 %v962
        %v5559 = vunpack.c.l.b16 %v963
        %v5560 = vunpack.c.h.b16 %v963
        %v5561 = vunpack.c.l.b16 %v964
        %v5562 = vunpack.c.h.b16 %v964
        %v5563 = vunpack.c.l.b16 %v965
        %v5564 = vunpack.c.h.b16 %v965
        %v5565 = vunpack.c.l.b16 %v966
        %v5566 = vunpack.c.h.b16 %v966
        %v5567 = vunpack.c.l.b16 %v967
        %v5568 = vunpack.c.h.b16 %v967
        %v5569 = vunpack.c.l.b16 %v968
        %v5570 = vunpack.c.h.b16 %v968
        %v5571 = vunpack.c.l.b16 %v969
        %v5572 = vunpack.c.h.b16 %v969
        %v5573 = vunpack.c.l.b16 %v970
        %v5574 = vunpack.c.h.b16 %v970
        %v5575 = vunpack.c.l.b16 %v971
        %v5576 = vunpack.c.h.b16 %v971
        %v5577 = vunpack.c.l.b16 %v972
        %v5578 = vunpack.c.h.b16 %v972
        %v5579 = vunpack.c.l.b16 %v973
        %v5580 = vunpack.c.h.b16 %v973
        %v5581 = vunpack.c.l.b16 %v974
        %v5582 = vunpack.c.h.b16 %v974
        %v5583 = vunpack.c.l.b16 %v975
        %v5584 = vunpack.c.h.b16 %v975
        %v5585 = vunpack.c.l.b16 %v976
        %v5586 = vunpack.c.h.b16 %v976
        %v5587 = vunpack.c.l.b16 %v977
        %v5588 = vunpack.c.h.b16 %v977
        %v5589 = vunpack.c.l.b16 %v978
        %v5590 = vunpack.c.h.b16 %v978
        %v5591 = vunpack.c.l.b16 %v979
        %v5592 = vunpack.c.h.b16 %v979
        %v5593 = vunpack.c.l.b16 %v980
        %v5594 = vunpack.c.h.b16 %v980
        %v5595 = vunpack.c.l.b16 %v981
        %v5596 = vunpack.c.h.b16 %v981
        %v5597 = vunpack.c.l.b16 %v982
        %v5598 = vunpack.c.h.b16 %v982
        %v5599 = vunpack.c.l.b16 %v983
        %v5600 = vunpack.c.h.b16 %v983
        %v5601 = vunpack.c.l.b16 %v984
        %v5602 = vunpack.c.h.b16 %v984
        %v5603 = vunpack.c.l.b16 %v985
        %v5604 = vunpack.c.h.b16 %v985
        %v5605 = vunpack.c.l.b16 %v986
        %v5606 = vunpack.c.h.b16 %v986
        %v5607 = vunpack.c.l.b16 %v987
        %v5608 = vunpack.c.h.b16 %v987
        %v5609 = vunpack.c.l.b16 %v988
        %v5610 = vunpack.c.h.b16 %v988
        %v5611 = vunpack.c.l.b16 %v989
        %v5612 = vunpack.c.h.b16 %v989
        %v5613 = vunpack.c.l.b16 %v990
        %v5614 = vunpack.c.h.b16 %v990
        %v5615 = vunpack.c.l.b16 %v991
        %v5616 = vunpack.c.h.b16 %v991
        %v5617 = vunpack.c.l.b16 %v992
        %v5618 = vunpack.c.h.b16 %v992
        %v5619 = vunpack.c.l.b16 %v993
        %v5620 = vunpack.c.h.b16 %v993
        %v5621 = vunpack.c.l.b16 %v994
        %v5622 = vunpack.c.h.b16 %v994
        %v5623 = vunpack.c.l.b16 %v995
        %v5624 = vunpack.c.h.b16 %v995
        %v5625 = vunpack.c.l.b16 %v996
        %v5626 = vunpack.c.h.b16 %v996
        %v5627 = vunpack.c.l.b16 %v997
        %v5628 = vunpack.c.h.b16 %v997
        %v5629 = vunpack.c.l.b16 %v998
        %v5630 = vunpack.c.h.b16 %v998
        %v5631 = vunpack.c.l.b16 %v999
        %v5632 = vunpack.c.h.b16 %v999
        %v5633 = vunpack.c.l.b16 %v1000
        %v5634 = vunpack.c.h.b16 %v1000
        %v5635 = vunpack.c.l.b16 %v1001
        %v5636 = vunpack.c.h.b16 %v1001
        %v5637 = vunpack.c.l.b16 %v1002
        %v5638 = vunpack.c.h.b16 %v1002
        %v5639 = vunpack.c.l.b16 %v1003
        %v5640 = vunpack.c.h.b16 %v1003
        %v5641 = vunpack.c.l.b16 %v1004
        %v5642 = vunpack.c.h.b16 %v1004
        %v5643 = vunpack.c.l.b16 %v1005
        %v5644 = vunpack.c.h.b16 %v1005
        %v5645 = vunpack.c.l.b16 %v1006
        %v5646 = vunpack.c.h.b16 %v1006
        %v5647 = vunpack.c.l.b16 %v1007
        %v5648 = vunpack.c.h.b16 %v1007
        %v5649 = vunpack.c.l.b16 %v1008
        %v5650 = vunpack.c.h.b16 %v1008
        %v5651 = vunpack.c.l.b16 %v1009
        %v5652 = vunpack.c.h.b16 %v1009
        %v5653 = vunpack.c.l.b16 %v1010
        %v5654 = vunpack.c.h.b16 %v1010
        %v5655 = vunpack.c.l.b16 %v1011
        %v5656 = vunpack.c.h.b16 %v1011
        %v5657 = vunpack.c.l.b16 %v1012
        %v5658 = vunpack.c.h.b16 %v1012
        %v5659 = vunpack.c.l.b16 %v1013
        %v5660 = vunpack.c.h.b16 %v1013
        %v5661 = vunpack.c.l.b16 %v1014
        %v5662 = vunpack.c.h.b16 %v1014
        %v5663 = vunpack.c.l.b16 %v1015
        %v5664 = vunpack.c.h.b16 %v1015
        %v5665 = vunpack.c.l.b16 %v1016
        %v5666 = vunpack.c.h.b16 %v1016
        %v5667 = vunpack.c.l.b16 %v1017
        %v5668 = vunpack.c.h.b16 %v1017
        %v5669 = vunpack.c.l.b16 %v1018
        %v5670 = vunpack.c.h.b16 %v1018
        %v5671 = vunpack.c.l.b16 %v1019
        %v5672 = vunpack.c.h.b16 %v1019
        %v5673 = vunpack.c.l.b16 %v1020
        %v5674 = vunpack.c.h.b16 %v1020
        %v5675 = vunpack.c.l.b16 %v1021
        %v5676 = vunpack.c.h.b16 %v1021
        %v5677 = vunpack.c.l.b16 %v1022
        %v5678 = vunpack.c.h.b16 %v1022
        %v5679 = vunpack.c.l.b16 %v1023
        %v5680 = vunpack.c.h.b16 %v1023
        %v5681 = vunpack.c.l.b16 %v1024
        %v5682 = vunpack.c.h.b16 %v1024
        %v5683 = vunpack.c.l.b16 %v1025
        %v5684 = vunpack.c.h.b16 %v1025
        %v5685 = vunpack.c.l.b16 %v1026
        %v5686 = vunpack.c.h.b16 %v1026
        %v5687 = vunpack.c.l.b16 %v1027
        %v5688 = vunpack.c.h.b16 %v1027
        %v5689 = vunpack.c.l.b16 %v1028
        %v5690 = vunpack.c.h.b16 %v1028
        %v5691 = vunpack.c.l.b16 %v1029
        %v5692 = vunpack.c.h.b16 %v1029
        %v5693 = vunpack.c.l.b16 %v1030
        %v5694 = vunpack.c.h.b16 %v1030
        %v5695 = vunpack.c.l.b16 %v1031
        %v5696 = vunpack.c.h.b16 %v1031
        %v5697 = vunpack.c.l.b16 %v1032
        %v5698 = vunpack.c.h.b16 %v1032
        %v5699 = vunpack.c.l.b16 %v1033
        %v5700 = vunpack.c.h.b16 %v1033
        %v5701 = vunpack.c.l.b16 %v1034
        %v5702 = vunpack.c.h.b16 %v1034
        %v5703 = vunpack.c.l.b16 %v1035
        %v5704 = vunpack.c.h.b16 %v1035
        %v5705 = vunpack.c.l.b16 %v1036
        %v5706 = vunpack.c.h.b16 %v1036
        %v5707 = vunpack.c.l.b16 %v1037
        %v5708 = vunpack.c.h.b16 %v1037
        %v5709 = vunpack.c.l.b16 %v1038
        %v5710 = vunpack.c.h.b16 %v1038
        %v5711 = vunpack.c.l.b16 %v1039
        %v5712 = vunpack.c.h.b16 %v1039
        %v5713 = vunpack.c.l.b16 %v1040
        %v5714 = vunpack.c.h.b16 %v1040
        %v5715 = vunpack.c.l.b16 %v1041
        %v5716 = vunpack.c.h.b16 %v1041
        %v5717 = vunpack.c.l.b16 %v1042
        %v5718 = vunpack.c.h.b16 %v1042
        %v5719 = vunpack.c.l.b16 %v1043
        %v5720 = vunpack.c.h.b16 %v1043
        %v5721 = vunpack.c.l.b16 %v1044
        %v5722 = vunpack.c.h.b16 %v1044
        %v5723 = vunpack.c.l.b16 %v1045
        %v5724 = vunpack.c.h.b16 %v1045
        %v5725 = vunpack.c.l.b16 %v1046
        %v5726 = vunpack.c.h.b16 %v1046
        %v5727 = vunpack.c.l.b16 %v1047
        %v5728 = vunpack.c.h.b16 %v1047
        %v5729 = vunpack.c.l.b16 %v1048
        %v5730 = vunpack.c.h.b16 %v1048
        %v5731 = vunpack.c.l.b16 %v1049
        %v5732 = vunpack.c.h.b16 %v1049
        %v5733 = vunpack.c.l.b16 %v1050
        %v5734 = vunpack.c.h.b16 %v1050
        %v5735 = vunpack.c.l.b16 %v1051
        %v5736 = vunpack.c.h.b16 %v1051
        %v5737 = vunpack.c.l.b16 %v1052
        %v5738 = vunpack.c.h.b16 %v1052
        %v5739 = vunpack.c.l.b16 %v1053
        %v5740 = vunpack.c.h.b16 %v1053
        %v5741 = vunpack.c.l.b16 %v1054
        %v5742 = vunpack.c.h.b16 %v1054
        %v5743 = vunpack.c.l.b16 %v1055
        %v5744 = vunpack.c.h.b16 %v1055
        %v5745 = vunpack.c.l.b16 %v1056
        %v5746 = vunpack.c.h.b16 %v1056
        %v5747 = vunpack.c.l.b16 %v1057
        %v5748 = vunpack.c.h.b16 %v1057
        %v5749 = vunpack.c.l.b16 %v1058
        %v5750 = vunpack.c.h.b16 %v1058
        %v5751 = vunpack.c.l.b16 %v1059
        %v5752 = vunpack.c.h.b16 %v1059
        %v5753 = vunpack.c.l.b16 %v1060
        %v5754 = vunpack.c.h.b16 %v1060
        %v5755 = vunpack.c.l.b16 %v1061
        %v5756 = vunpack.c.h.b16 %v1061
        %v5757 = vunpack.c.l.b16 %v1062
        %v5758 = vunpack.c.h.b16 %v1062
        %v5759 = vunpack.c.l.b16 %v1063
        %v5760 = vunpack.c.h.b16 %v1063
        %v5761 = vunpack.c.l.b16 %v1064
        %v5762 = vunpack.c.h.b16 %v1064
        %v5763 = vunpack.c.l.b16 %v1065
        %v5764 = vunpack.c.h.b16 %v1065
        %v5765 = vunpack.c.l.b16 %v1066
        %v5766 = vunpack.c.h.b16 %v1066
        %v5767 = vunpack.c.l.b16 %v1067
        %v5768 = vunpack.c.h.b16 %v1067
        %v5769 = vunpack.c.l.b16 %v1068
        %v5770 = vunpack.c.h.b16 %v1068
        %v5771 = vunpack.c.l.b16 %v1069
        %v5772 = vunpack.c.h.b16 %v1069
        %v5773 = vunpack.c.l.b16 %v1070
        %v5774 = vunpack.c.h.b16 %v1070
        %v5775 = vunpack.c.l.b16 %v1071
        %v5776 = vunpack.c.h.b16 %v1071
        %v5777 = vunpack.c.l.b16 %v1072
        %v5778 = vunpack.c.h.b16 %v1072
        %v5779 = vunpack.c.l.b16 %v1073
        %v5780 = vunpack.c.h.b16 %v1073
        %v5781 = vunpack.c.l.b16 %v1074
        %v5782 = vunpack.c.h.b16 %v1074
        %v5783 = vunpack.c.l.b16 %v1075
        %v5784 = vunpack.c.h.b16 %v1075
        %v5785 = vunpack.c.l.b16 %v1076
        %v5786 = vunpack.c.h.b16 %v1076
        %v5787 = vunpack.c.l.b16 %v1077
        %v5788 = vunpack.c.h.b16 %v1077
        %v5789 = vunpack.c.l.b16 %v1078
        %v5790 = vunpack.c.h.b16 %v1078
        %v5791 = vunpack.c.l.b16 %v1079
        %v5792 = vunpack.c.h.b16 %v1079
        %v5793 = vunpack.c.l.b16 %v1080
        %v5794 = vunpack.c.h.b16 %v1080
        %v5795 = vunpack.c.l.b16 %v1081
        %v5796 = vunpack.c.h.b16 %v1081
        %v5797 = vunpack.c.l.b16 %v1082
        %v5798 = vunpack.c.h.b16 %v1082
        %v5799 = vunpack.c.l.b16 %v1083
        %v5800 = vunpack.c.h.b16 %v1083
        %v5801 = vunpack.c.l.b16 %v1084
        %v5802 = vunpack.c.h.b16 %v1084
        %v5803 = vunpack.c.l.b16 %v1085
        %v5804 = vunpack.c.h.b16 %v1085
        %v5805 = vunpack.c.l.b16 %v1086
        %v5806 = vunpack.c.h.b16 %v1086
        %v5807 = vunpack.c.l.b16 %v1087
        %v5808 = vunpack.c.h.b16 %v1087
        %v5809 = vunpack.c.l.b16 %v1088
        %v5810 = vunpack.c.h.b16 %v1088
        %v5811 = vunpack.c.l.b16 %v1089
        %v5812 = vunpack.c.h.b16 %v1089
        %v5813 = vunpack.c.l.b16 %v1090
        %v5814 = vunpack.c.h.b16 %v1090
        %v5815 = vunpack.c.l.b16 %v1091
        %v5816 = vunpack.c.h.b16 %v1091
        %v5817 = vunpack.c.l.b16 %v1092
        %v5818 = vunpack.c.h.b16 %v1092
        %v5819 = vunpack.c.l.b16 %v1093
        %v5820 = vunpack.c.h.b16 %v1093
        %v5821 = vunpack.c.l.b16 %v1094
        %v5822 = vunpack.c.h.b16 %v1094
        %v5823 = vunpack.c.l.b16 %v1095
        %v5824 = vunpack.c.h.b16 %v1095
        %v5825 = vunpack.c.l.b16 %v1096
        %v5826 = vunpack.c.h.b16 %v1096
        %v5827 = vunpack.c.l.b16 %v1097
        %v5828 = vunpack.c.h.b16 %v1097
        %v5829 = vunpack.c.l.b16 %v1098
        %v5830 = vunpack.c.h.b16 %v1098
        %v5831 = vunpack.c.l.b16 %v1099
        %v5832 = vunpack.c.h.b16 %v1099
        %v5833 = vunpack.c.l.b16 %v1100
        %v5834 = vunpack.c.h.b16 %v1100
        %v5835 = vunpack.c.l.b16 %v1101
        %v5836 = vunpack.c.h.b16 %v1101
        %v5837 = vunpack.c.l.b16 %v1102
        %v5838 = vunpack.c.h.b16 %v1102
        %v5839 = vunpack.c.l.b16 %v1103
        %v5840 = vunpack.c.h.b16 %v1103
        %v5841 = vunpack.c.l.b16 %v1104
        %v5842 = vunpack.c.h.b16 %v1104
        %v5843 = vunpack.c.l.b16 %v1105
        %v5844 = vunpack.c.h.b16 %v1105
        %v5845 = vunpack.c.l.b16 %v1106
        %v5846 = vunpack.c.h.b16 %v1106
        %v5847 = vunpack.c.l.b16 %v1107
        %v5848 = vunpack.c.h.b16 %v1107
        %v5849 = vunpack.c.l.b16 %v1108
        %v5850 = vunpack.c.h.b16 %v1108
        %v5851 = vunpack.c.l.b16 %v1109
        %v5852 = vunpack.c.h.b16 %v1109
        %v5853 = vunpack.c.l.b16 %v1110
        %v5854 = vunpack.c.h.b16 %v1110
        %v5855 = vunpack.c.l.b16 %v1111
        %v5856 = vunpack.c.h.b16 %v1111
        %v5857 = vunpack.c.l.b16 %v1112
        %v5858 = vunpack.c.h.b16 %v1112
        %v5859 = vunpack.c.l.b16 %v1113
        %v5860 = vunpack.c.h.b16 %v1113
        %v5861 = vunpack.c.l.b16 %v1114
        %v5862 = vunpack.c.h.b16 %v1114
        %v5863 = vunpack.c.l.b16 %v1115
        %v5864 = vunpack.c.h.b16 %v1115
        %v5865 = vunpack.c.l.b16 %v1116
        %v5866 = vunpack.c.h.b16 %v1116
        %v5867 = vunpack.c.l.b16 %v1117
        %v5868 = vunpack.c.h.b16 %v1117
        %v5869 = vunpack.c.l.b16 %v1118
        %v5870 = vunpack.c.h.b16 %v1118
        %v5871 = vunpack.c.l.b16 %v1119
        %v5872 = vunpack.c.h.b16 %v1119
        %v5873 = vunpack.c.l.b16 %v1120
        %v5874 = vunpack.c.h.b16 %v1120
        %v5875 = vunpack.c.l.b16 %v1121
        %v5876 = vunpack.c.h.b16 %v1121
        %v5877 = vunpack.c.l.b16 %v1122
        %v5878 = vunpack.c.h.b16 %v1122
        %v5879 = vunpack.c.l.b16 %v1123
        %v5880 = vunpack.c.h.b16 %v1123
        %v5881 = vunpack.c.l.b16 %v1124
        %v5882 = vunpack.c.h.b16 %v1124
        %v5883 = vunpack.c.l.b16 %v1125
        %v5884 = vunpack.c.h.b16 %v1125
        %v5885 = vunpack.c.l.b16 %v1126
        %v5886 = vunpack.c.h.b16 %v1126
        %v5887 = vunpack.c.l.b16 %v1127
        %v5888 = vunpack.c.h.b16 %v1127
        %v5889 = vunpack.c.l.b16 %v1128
        %v5890 = vunpack.c.h.b16 %v1128
        %v5891 = vunpack.c.l.b16 %v1129
        %v5892 = vunpack.c.h.b16 %v1129
        %v5893 = vunpack.c.l.b16 %v1130
        %v5894 = vunpack.c.h.b16 %v1130
        %v5895 = vunpack.c.l.b16 %v1131
        %v5896 = vunpack.c.h.b16 %v1131
        %v5897 = vunpack.c.l.b16 %v1132
        %v5898 = vunpack.c.h.b16 %v1132
        %v5899 = vunpack.c.l.b16 %v1133
        %v5900 = vunpack.c.h.b16 %v1133
        %v5901 = vunpack.c.l.b16 %v1134
        %v5902 = vunpack.c.h.b16 %v1134
        %v5903 = vunpack.c.l.b16 %v1135
        %v5904 = vunpack.c.h.b16 %v1135
        %v5905 = vunpack.c.l.b16 %v1136
        %v5906 = vunpack.c.h.b16 %v1136
        %v5907 = vunpack.c.l.b16 %v1137
        %v5908 = vunpack.c.h.b16 %v1137
        %v5909 = vunpack.c.l.b16 %v1138
        %v5910 = vunpack.c.h.b16 %v1138
        %v5911 = vunpack.c.l.b16 %v1139
        %v5912 = vunpack.c.h.b16 %v1139
        %v5913 = vunpack.c.l.b16 %v1140
        %v5914 = vunpack.c.h.b16 %v1140
        %v5915 = vunpack.c.l.b16 %v1141
        %v5916 = vunpack.c.h.b16 %v1141
        %v5917 = vunpack.c.l.b16 %v1142
        %v5918 = vunpack.c.h.b16 %v1142
        %v5919 = vunpack.c.l.b16 %v1143
        %v5920 = vunpack.c.h.b16 %v1143
        %v5921 = vunpack.c.l.b16 %v1144
        %v5922 = vunpack.c.h.b16 %v1144
        %v5923 = vunpack.c.l.b16 %v1145
        %v5924 = vunpack.c.h.b16 %v1145
        %v5925 = vunpack.c.l.b16 %v1146
        %v5926 = vunpack.c.h.b16 %v1146
        %v5927 = vunpack.c.l.b16 %v1147
        %v5928 = vunpack.c.h.b16 %v1147
        %v5929 = vunpack.c.l.b16 %v1148
        %v5930 = vunpack.c.h.b16 %v1148
        %v5931 = vunpack.c.l.b16 %v1149
        %v5932 = vunpack.c.h.b16 %v1149
        %v5933 = vunpack.c.l.b16 %v1150
        %v5934 = vunpack.c.h.b16 %v1150
        %v5935 = vunpack.c.l.b16 %v1151
        %v5936 = vunpack.c.h.b16 %v1151
        %v5937 = vunpack.c.l.b16 %v1152
        %v5938 = vunpack.c.h.b16 %v1152
        %v5939 = vunpack.c.l.b16 %v1153
        %v5940 = vunpack.c.h.b16 %v1153
        %v5941 = vunpack.c.l.b16 %v1154
        %v5942 = vunpack.c.h.b16 %v1154
        %v5943 = vunpack.c.l.b16 %v1155
        %v5944 = vunpack.c.h.b16 %v1155
        %v5945 = vunpack.c.l.b16 %v1156
        %v5946 = vunpack.c.h.b16 %v1156
        %v5947 = vunpack.c.l.b16 %v1157
        %v5948 = vunpack.c.h.b16 %v1157
        %v5949 = vunpack.c.l.b16 %v1158
        %v5950 = vunpack.c.h.b16 %v1158
        %v5951 = vunpack.c.l.b16 %v1159
        %v5952 = vunpack.c.h.b16 %v1159
        %v5953 = vunpack.c.l.b16 %v1160
        %v5954 = vunpack.c.h.b16 %v1160
        %v5955 = vunpack.c.l.b16 %v1161
        %v5956 = vunpack.c.h.b16 %v1161
        %v5957 = vunpack.c.l.b16 %v1162
        %v5958 = vunpack.c.h.b16 %v1162
        %v5959 = vunpack.c.l.b16 %v1163
        %v5960 = vunpack.c.h.b16 %v1163
        %v5961 = vunpack.c.l.b16 %v1164
        %v5962 = vunpack.c.h.b16 %v1164
        %v5963 = vunpack.c.l.b16 %v1165
        %v5964 = vunpack.c.h.b16 %v1165
        %v5965 = vunpack.c.l.b16 %v1166
        %v5966 = vunpack.c.h.b16 %v1166
        %v5967 = vunpack.c.l.b16 %v1167
        %v5968 = vunpack.c.h.b16 %v1167
        %v5969 = vunpack.c.l.b16 %v1168
        %v5970 = vunpack.c.h.b16 %v1168
        %v5971 = vunpack.c.l.b16 %v1169
        %v5972 = vunpack.c.h.b16 %v1169
        %v5973 = vunpack.c.l.b16 %v1170
        %v5974 = vunpack.c.h.b16 %v1170
        %v5975 = vunpack.c.l.b16 %v1171
        %v5976 = vunpack.c.h.b16 %v1171
        %v5977 = vunpack.c.l.b16 %v1172
        %v5978 = vunpack.c.h.b16 %v1172
        %v5979 = vunpack.c.l.b16 %v1173
        %v5980 = vunpack.c.h.b16 %v1173
        %v5981 = vunpack.c.l.b16 %v1174
        %v5982 = vunpack.c.h.b16 %v1174
        %v5983 = vunpack.c.l.b16 %v1175
        %v5984 = vunpack.c.h.b16 %v1175
        %v5985 = vunpack.c.l.b16 %v1176
        %v5986 = vunpack.c.h.b16 %v1176
        %v5987 = vunpack.c.l.b16 %v1177
        %v5988 = vunpack.c.h.b16 %v1177
        %v5989 = vunpack.c.l.b16 %v1178
        %v5990 = vunpack.c.h.b16 %v1178
        %v5991 = vunpack.c.l.b16 %v1179
        %v5992 = vunpack.c.h.b16 %v1179
        %v5993 = vunpack.c.l.b16 %v1180
        %v5994 = vunpack.c.h.b16 %v1180
        %v5995 = vunpack.c.l.b16 %v1181
        %v5996 = vunpack.c.h.b16 %v1181
        %v5997 = vunpack.c.l.b16 %v1182
        %v5998 = vunpack.c.h.b16 %v1182
        %v5999 = vunpack.c.l.b16 %v1183
        %v6000 = vunpack.c.h.b16 %v1183
        %v6001 = vunpack.c.l.b16 %v1184
        %v6002 = vunpack.c.h.b16 %v1184
        %v6003 = vunpack.c.l.b16 %v1185
        %v6004 = vunpack.c.h.b16 %v1185
        %v6005 = vunpack.c.l.b16 %v1186
        %v6006 = vunpack.c.h.b16 %v1186
        %v6007 = vunpack.c.l.b16 %v1187
        %v6008 = vunpack.c.h.b16 %v1187
        %v6009 = vunpack.c.l.b16 %v1188
        %v6010 = vunpack.c.h.b16 %v1188
        %v6011 = vunpack.c.l.b16 %v1189
        %v6012 = vunpack.c.h.b16 %v1189
        %v6013 = vunpack.c.l.b16 %v1190
        %v6014 = vunpack.c.h.b16 %v1190
        %v6015 = vunpack.c.l.b16 %v1191
        %v6016 = vunpack.c.h.b16 %v1191
        %v6017 = vunpack.c.l.b16 %v1192
        %v6018 = vunpack.c.h.b16 %v1192
        %v6019 = vunpack.c.l.b16 %v1193
        %v6020 = vunpack.c.h.b16 %v1193
        %v6021 = vunpack.c.l.b16 %v1194
        %v6022 = vunpack.c.h.b16 %v1194
        %v6023 = vunpack.c.l.b16 %v1195
        %v6024 = vunpack.c.h.b16 %v1195
        %v6025 = vunpack.c.l.b16 %v1196
        %v6026 = vunpack.c.h.b16 %v1196
        %v6027 = vunpack.c.l.b16 %v1197
        %v6028 = vunpack.c.h.b16 %v1197
        %v6029 = vunpack.c.l.b16 %v1198
        %v6030 = vunpack.c.h.b16 %v1198
        %v6031 = vunpack.c.l.b16 %v1199
        %v6032 = vunpack.c.h.b16 %v1199
        %v6033 = vunpack.c.l.b16 %v1200
        %v6034 = vunpack.c.h.b16 %v1200
        %v6035 = vunpack.c.l.b16 %v1201
        %v6036 = vunpack.c.h.b16 %v1201
        %v6037 = vunpack.c.l.b16 %v1202
        %v6038 = vunpack.c.h.b16 %v1202
        %v6039 = vunpack.c.l.b16 %v1203
        %v6040 = vunpack.c.h.b16 %v1203
        %v6041 = vunpack.c.l.b16 %v1204
        %v6042 = vunpack.c.h.b16 %v1204
        %v6043 = vunpack.c.l.b16 %v1205
        %v6044 = vunpack.c.h.b16 %v1205
        %v6045 = vunpack.c.l.b16 %v1206
        %v6046 = vunpack.c.h.b16 %v1206
        %v6047 = vunpack.c.l.b16 %v1207
        %v6048 = vunpack.c.h.b16 %v1207
        %v6049 = vunpack.c.l.b16 %v1208
        %v6050 = vunpack.c.h.b16 %v1208
        %v6051 = vunpack.c.l.b16 %v1209
        %v6052 = vunpack.c.h.b16 %v1209
        %v6053 = vunpack.c.l.b16 %v1210
        %v6054 = vunpack.c.h.b16 %v1210
        %v6055 = vunpack.c.l.b16 %v1211
        %v6056 = vunpack.c.h.b16 %v1211
        %v6057 = vunpack.c.l.b16 %v1212
        %v6058 = vunpack.c.h.b16 %v1212
        %v6059 = vunpack.c.l.b16 %v1213
        %v6060 = vunpack.c.h.b16 %v1213
        %v6061 = vunpack.c.l.b16 %v1214
        %v6062 = vunpack.c.h.b16 %v1214
        %v6063 = vunpack.c.l.b16 %v1215
        %v6064 = vunpack.c.h.b16 %v1215
        %v6065 = vunpack.c.l.b16 %v1216
        %v6066 = vunpack.c.h.b16 %v1216
        %v6067 = vunpack.c.l.b16 %v1217
        %v6068 = vunpack.c.h.b16 %v1217
        %v6069 = vunpack.c.l.b16 %v1218
        %v6070 = vunpack.c.h.b16 %v1218
        %v6071 = vunpack.c.l.b16 %v1219
        %v6072 = vunpack.c.h.b16 %v1219
        %v6073 = vunpack.c.l.b16 %v1220
        %v6074 = vunpack.c.h.b16 %v1220
        %v6075 = vunpack.c.l.b16 %v1221
        %v6076 = vunpack.c.h.b16 %v1221
        %v6077 = vunpack.c.l.b16 %v1222
        %v6078 = vunpack.c.h.b16 %v1222
        %v6079 = vunpack.c.l.b16 %v1223
        %v6080 = vunpack.c.h.b16 %v1223
        %v6081 = vunpack.c.l.b16 %v1224
        %v6082 = vunpack.c.h.b16 %v1224
        %v6083 = vunpack.c.l.b16 %v1225
        %v6084 = vunpack.c.h.b16 %v1225
        %v6085 = vunpack.c.l.b16 %v1226
        %v6086 = vunpack.c.h.b16 %v1226
        %v6087 = vunpack.c.l.b16 %v1227
        %v6088 = vunpack.c.h.b16 %v1227
        %v6089 = vunpack.c.l.b16 %v1228
        %v6090 = vunpack.c.h.b16 %v1228
        %v6091 = vunpack.c.l.b16 %v1229
        %v6092 = vunpack.c.h.b16 %v1229
        %v6093 = vunpack.c.l.b16 %v1230
        %v6094 = vunpack.c.h.b16 %v1230
        %v6095 = vunpack.c.l.b16 %v1231
        %v6096 = vunpack.c.h.b16 %v1231
        %v6097 = vunpack.c.l.b16 %v1232
        %v6098 = vunpack.c.h.b16 %v1232
        %v6099 = vunpack.c.l.b16 %v1233
        %v6100 = vunpack.c.h.b16 %v1233
        %v6101 = vunpack.c.l.b16 %v1234
        %v6102 = vunpack.c.h.b16 %v1234
        %v6103 = vunpack.c.l.b16 %v1235
        %v6104 = vunpack.c.h.b16 %v1235
        %v6105 = vunpack.c.l.b16 %v1236
        %v6106 = vunpack.c.h.b16 %v1236
        %v6107 = vunpack.c.l.b16 %v1237
        %v6108 = vunpack.c.h.b16 %v1237
        %v6109 = vunpack.c.l.b16 %v1238
        %v6110 = vunpack.c.h.b16 %v1238
        %v6111 = vunpack.c.l.b16 %v1239
        %v6112 = vunpack.c.h.b16 %v1239
        %v6113 = vunpack.c.l.b16 %v1240
        %v6114 = vunpack.c.h.b16 %v1240
        %v6115 = vunpack.c.l.b16 %v1241
        %v6116 = vunpack.c.h.b16 %v1241
        %v6117 = vunpack.c.l.b16 %v1242
        %v6118 = vunpack.c.h.b16 %v1242
        %v6119 = vunpack.c.l.b16 %v1243
        %v6120 = vunpack.c.h.b16 %v1243
        %v6121 = vunpack.c.l.b16 %v1244
        %v6122 = vunpack.c.h.b16 %v1244
        %v6123 = vunpack.c.l.b16 %v1245
        %v6124 = vunpack.c.h.b16 %v1245
        %v6125 = vunpack.c.l.b16 %v1246
        %v6126 = vunpack.c.h.b16 %v1246
        %v6127 = vunpack.c.l.b16 %v1247
        %v6128 = vunpack.c.h.b16 %v1247
        %v6129 = vunpack.c.l.b16 %v1248
        %v6130 = vunpack.c.h.b16 %v1248
        %v6131 = vunpack.c.l.b16 %v1249
        %v6132 = vunpack.c.h.b16 %v1249
        %v6133 = vunpack.c.l.b16 %v1250
        %v6134 = vunpack.c.h.b16 %v1250
        %v6135 = vunpack.c.l.b16 %v1251
        %v6136 = vunpack.c.h.b16 %v1251
        %v6137 = vunpack.c.l.b16 %v1252
        %v6138 = vunpack.c.h.b16 %v1252
        %v6139 = vunpack.c.l.b16 %v1253
        %v6140 = vunpack.c.h.b16 %v1253
        %v6141 = vunpack.c.l.b16 %v1254
        %v6142 = vunpack.c.h.b16 %v1254
        %v6143 = vunpack.c.l.b16 %v1255
        %v6144 = vunpack.c.h.b16 %v1255
        %v6145 = vunpack.c.l.b16 %v1256
        %v6146 = vunpack.c.h.b16 %v1256
        %v6147 = vunpack.c.l.b16 %v1257
        %v6148 = vunpack.c.h.b16 %v1257
        %v6149 = vunpack.c.l.b16 %v1258
        %v6150 = vunpack.c.h.b16 %v1258
        %v6151 = vunpack.c.l.b16 %v1259
        %v6152 = vunpack.c.h.b16 %v1259
        %v6153 = vunpack.c.l.b16 %v1260
        %v6154 = vunpack.c.h.b16 %v1260
        %v6155 = vunpack.c.l.b16 %v1261
        %v6156 = vunpack.c.h.b16 %v1261
        %v6157 = vunpack.c.l.b16 %v1262
        %v6158 = vunpack.c.h.b16 %v1262
        %v6159 = vunpack.c.l.b16 %v1263
        %v6160 = vunpack.c.h.b16 %v1263
        %v6161 = vunpack.c.l.b16 %v1264
        %v6162 = vunpack.c.h.b16 %v1264
        %v6163 = vunpack.c.l.b16 %v1265
        %v6164 = vunpack.c.h.b16 %v1265
        %v6165 = vunpack.c.l.b16 %v1266
        %v6166 = vunpack.c.h.b16 %v1266
        %v6167 = vunpack.c.l.b16 %v1267
        %v6168 = vunpack.c.h.b16 %v1267
        %v6169 = vunpack.c.l.b16 %v1268
        %v6170 = vunpack.c.h.b16 %v1268
        %v6171 = vunpack.c.l.b16 %v1269
        %v6172 = vunpack.c.h.b16 %v1269
        %v6173 = vunpack.c.l.b16 %v1270
        %v6174 = vunpack.c.h.b16 %v1270
        %v6175 = vunpack.c.l.b16 %v1271
        %v6176 = vunpack.c.h.b16 %v1271
        %v6177 = vunpack.c.l.b16 %v1272
        %v6178 = vunpack.c.h.b16 %v1272
        %v6179 = vunpack.c.l.b16 %v1273
        %v6180 = vunpack.c.h.b16 %v1273
        %v6181 = vunpack.c.l.b16 %v1274
        %v6182 = vunpack.c.h.b16 %v1274
        %v6183 = vunpack.c.l.b16 %v1275
        %v6184 = vunpack.c.h.b16 %v1275
        %v6185 = vunpack.c.l.b16 %v1276
        %v6186 = vunpack.c.h.b16 %v1276
        %v6187 = vunpack.c.l.b16 %v1277
        %v6188 = vunpack.c.h.b16 %v1277
        %v6189 = vunpack.c.l.b16 %v1278
        %v6190 = vunpack.c.h.b16 %v1278
        %v6191 = vunpack.c.l.b16 %v1279
        %v6192 = vunpack.c.h.b16 %v1279
        %v6193 = vunpack.c.l.b16 %v1280
        %v6194 = vunpack.c.h.b16 %v1280
        %v6195 = vunpack.c.l.b16 %v1281
        %v6196 = vunpack.c.h.b16 %v1281
        %v6197 = vunpack.c.l.b16 %v1282
        %v6198 = vunpack.c.h.b16 %v1282
        %v6199 = vunpack.c.l.b16 %v1283
        %v6200 = vunpack.c.h.b16 %v1283
        %v6201 = vunpack.c.l.b16 %v1284
        %v6202 = vunpack.c.h.b16 %v1284
        %v6203 = vunpack.c.l.b16 %v1285
        %v6204 = vunpack.c.h.b16 %v1285
        %v6205 = vunpack.c.l.b16 %v1286
        %v6206 = vunpack.c.h.b16 %v1286
        %v6207 = vunpack.c.l.b16 %v1287
        %v6208 = vunpack.c.h.b16 %v1287
        %v6209 = vunpack.c.l.b16 %v1288
        %v6210 = vunpack.c.h.b16 %v1288
        %v6211 = vunpack.c.l.b16 %v1289
        %v6212 = vunpack.c.h.b16 %v1289
        %v6213 = vunpack.c.l.b16 %v1290
        %v6214 = vunpack.c.h.b16 %v1290
        %v6215 = vunpack.c.l.b16 %v1291
        %v6216 = vunpack.c.h.b16 %v1291
        %v6217 = vunpack.c.l.b16 %v1292
        %v6218 = vunpack.c.h.b16 %v1292
        %v6219 = vunpack.c.l.b16 %v1293
        %v6220 = vunpack.c.h.b16 %v1293
        %v6221 = vunpack.c.l.b16 %v1294
        %v6222 = vunpack.c.h.b16 %v1294
        %v6223 = vunpack.c.l.b16 %v1295
        %v6224 = vunpack.c.h.b16 %v1295
        %v6225 = vunpack.c.l.b16 %v1296
        %v6226 = vunpack.c.h.b16 %v1296
        %v6227 = vunpack.c.l.b16 %v1297
        %v6228 = vunpack.c.h.b16 %v1297
        %v6229 = vunpack.c.l.b16 %v1298
        %v6230 = vunpack.c.h.b16 %v1298
        %v6231 = vunpack.c.l.b16 %v1299
        %v6232 = vunpack.c.h.b16 %v1299
        %v6233 = vunpack.c.l.b16 %v1300
        %v6234 = vunpack.c.h.b16 %v1300
        %v6235 = vunpack.c.l.b16 %v1301
        %v6236 = vunpack.c.h.b16 %v1301
        %v6237 = vunpack.c.l.b16 %v1302
        %v6238 = vunpack.c.h.b16 %v1302
        %v6239 = vunpack.c.l.b16 %v1303
        %v6240 = vunpack.c.h.b16 %v1303
        %v6241 = vunpack.c.l.b16 %v1304
        %v6242 = vunpack.c.h.b16 %v1304
        %v6243 = vunpack.c.l.b16 %v1305
        %v6244 = vunpack.c.h.b16 %v1305
        %v6245 = vunpack.c.l.b16 %v1306
        %v6246 = vunpack.c.h.b16 %v1306
        %v6247 = vunpack.c.l.b16 %v1307
        %v6248 = vunpack.c.h.b16 %v1307
        %v6249 = vunpack.c.l.b16 %v1308
        %v6250 = vunpack.c.h.b16 %v1308
        %v6251 = vunpack.c.l.b16 %v1309
        %v6252 = vunpack.c.h.b16 %v1309
        %v6253 = vunpack.c.l.b16 %v1310
        %v6254 = vunpack.c.h.b16 %v1310
        %v6255 = vunpack.c.l.b16 %v1311
        %v6256 = vunpack.c.h.b16 %v1311
        %v6257 = vunpack.c.l.b16 %v1312
        %v6258 = vunpack.c.h.b16 %v1312
        %v6259 = vunpack.c.l.b16 %v1313
        %v6260 = vunpack.c.h.b16 %v1313
        %v6261 = vunpack.c.l.b16 %v1314
        %v6262 = vunpack.c.h.b16 %v1314
        %v6263 = vunpack.c.l.b16 %v1315
        %v6264 = vunpack.c.h.b16 %v1315
        %v6265 = vunpack.c.l.b16 %v1316
        %v6266 = vunpack.c.h.b16 %v1316
        %v6267 = vunpack.c.l.b16 %v1317
        %v6268 = vunpack.c.h.b16 %v1317
        %v6269 = vunpack.c.l.b16 %v1318
        %v6270 = vunpack.c.h.b16 %v1318
        %v6271 = vunpack.c.l.b16 %v1319
        %v6272 = vunpack.c.h.b16 %v1319
        %v6273 = vunpack.c.l.b16 %v1320
        %v6274 = vunpack.c.h.b16 %v1320
        %v6275 = vunpack.c.l.b16 %v1321
        %v6276 = vunpack.c.h.b16 %v1321
        %v6277 = vunpack.c.l.b16 %v1322
        %v6278 = vunpack.c.h.b16 %v1322
        %v6279 = vunpack.c.l.b16 %v1323
        %v6280 = vunpack.c.h.b16 %v1323
        %v6281 = vunpack.c.l.b16 %v1324
        %v6282 = vunpack.c.h.b16 %v1324
        %v6283 = vunpack.c.l.b16 %v1325
        %v6284 = vunpack.c.h.b16 %v1325
        %v6285 = vunpack.c.l.b16 %v1326
        %v6286 = vunpack.c.h.b16 %v1326
        %v6287 = vunpack.c.l.b16 %v1327
        %v6288 = vunpack.c.h.b16 %v1327
        %v6289 = vunpack.c.l.b16 %v1328
        %v6290 = vunpack.c.h.b16 %v1328
        %v6291 = vunpack.c.l.b16 %v1329
        %v6292 = vunpack.c.h.b16 %v1329
        %v6293 = vunpack.c.l.b16 %v1330
        %v6294 = vunpack.c.h.b16 %v1330
        %v6295 = vunpack.c.l.b16 %v1331
        %v6296 = vunpack.c.h.b16 %v1331
        %v6297 = vunpack.c.l.b16 %v1332
        %v6298 = vunpack.c.h.b16 %v1332
        %v6299 = vunpack.c.l.b16 %v1333
        %v6300 = vunpack.c.h.b16 %v1333
        %v6301 = vunpack.c.l.b16 %v1334
        %v6302 = vunpack.c.h.b16 %v1334
        %v6303 = vunpack.c.l.b16 %v1335
        %v6304 = vunpack.c.h.b16 %v1335
        %v6305 = vunpack.c.l.b16 %v1336
        %v6306 = vunpack.c.h.b16 %v1336
        %v6307 = vunpack.c.l.b16 %v1337
        %v6308 = vunpack.c.h.b16 %v1337
        %v6309 = vunpack.c.l.b16 %v1338
        %v6310 = vunpack.c.h.b16 %v1338
        %v6311 = vunpack.c.l.b16 %v1339
        %v6312 = vunpack.c.h.b16 %v1339
        %v6313 = vunpack.c.l.b16 %v1340
        %v6314 = vunpack.c.h.b16 %v1340
        %v6315 = vunpack.c.l.b16 %v1341
        %v6316 = vunpack.c.h.b16 %v1341
        %v6317 = vunpack.c.l.b16 %v1342
        %v6318 = vunpack.c.h.b16 %v1342
        %v6319 = vunpack.c.l.b16 %v1343
        %v6320 = vunpack.c.h.b16 %v1343
        %v6321 = vpack.c.b16 %v5305, %v5297
        %v6322 = vpack.c.b16 %v5306, %v5298
        %v6323 = vpack.c.b16 %v5307, %v5299
        %v6324 = vpack.c.b16 %v5308, %v5300
        %v6325 = vpack.c.b16 %v5309, %v5301
        %v6326 = vpack.c.b16 %v5310, %v5302
        %v6327 = vpack.c.b16 %v5311, %v5303
        %v6328 = vpack.c.b16 %v5312, %v5304
        %v6329 = vpack.c.b16 %v5321, %v5313
        %v6330 = vpack.c.b16 %v5322, %v5314
        %v6331 = vpack.c.b16 %v5323, %v5315
        %v6332 = vpack.c.b16 %v5324, %v5316
        %v6333 = vpack.c.b16 %v5325, %v5317
        %v6334 = vpack.c.b16 %v5326, %v5318
        %v6335 = vpack.c.b16 %v5327, %v5319
        %v6336 = vpack.c.b16 %v5328, %v5320
        %v6337 = vpack.c.b16 %v5337, %v5329
        %v6338 = vpack.c.b16 %v5338, %v5330
        %v6339 = vpack.c.b16 %v5339, %v5331
        %v6340 = vpack.c.b16 %v5340, %v5332
        %v6341 = vpack.c.b16 %v5341, %v5333
        %v6342 = vpack.c.b16 %v5342, %v5334
        %v6343 = vpack.c.b16 %v5343, %v5335
        %v6344 = vpack.c.b16 %v5344, %v5336
        %v6345 = vpack.c.b16 %v5353, %v5345
        %v6346 = vpack.c.b16 %v5354, %v5346
        %v6347 = vpack.c.b16 %v5355, %v5347
        %v6348 = vpack.c.b16 %v5356, %v5348
        %v6349 = vpack.c.b16 %v5357, %v5349
        %v6350 = vpack.c.b16 %v5358, %v5350
        %v6351 = vpack.c.b16 %v5359, %v5351
        %v6352 = vpack.c.b16 %v5360, %v5352
        %v6353 = vpack.c.b16 %v5369, %v5361
        %v6354 = vpack.c.b16 %v5370, %v5362
        %v6355 = vpack.c.b16 %v5371, %v5363
        %v6356 = vpack.c.b16 %v5372, %v5364
        %v6357 = vpack.c.b16 %v5373, %v5365
        %v6358 = vpack.c.b16 %v5374, %v5366
        %v6359 = vpack.c.b16 %v5375, %v5367
        %v6360 = vpack.c.b16 %v5376, %v5368
        %v6361 = vpack.c.b16 %v5385, %v5377
        %v6362 = vpack.c.b16 %v5386, %v5378
        %v6363 = vpack.c.b16 %v5387, %v5379
        %v6364 = vpack.c.b16 %v5388, %v5380
        %v6365 = vpack.c.b16 %v5389, %v5381
        %v6366 = vpack.c.b16 %v5390, %v5382
        %v6367 = vpack.c.b16 %v5391, %v5383
        %v6368 = vpack.c.b16 %v5392, %v5384
        %v6369 = vpack.c.b16 %v5401, %v5393
        %v6370 = vpack.c.b16 %v5402, %v5394
        %v6371 = vpack.c.b16 %v5403, %v5395
        %v6372 = vpack.c.b16 %v5404, %v5396
        %v6373 = vpack.c.b16 %v5405, %v5397
        %v6374 = vpack.c.b16 %v5406, %v5398
        %v6375 = vpack.c.b16 %v5407, %v5399
        %v6376 = vpack.c.b16 %v5408, %v5400
        %v6377 = vpack.c.b16 %v5417, %v5409
        %v6378 = vpack.c.b16 %v5418, %v5410
        %v6379 = vpack.c.b16 %v5419, %v5411
        %v6380 = vpack.c.b16 %v5420, %v5412
        %v6381 = vpack.c.b16 %v5421, %v5413
        %v6382 = vpack.c.b16 %v5422, %v5414
        %v6383 = vpack.c.b16 %v5423, %v5415
        %v6384 = vpack.c.b16 %v5424, %v5416
        %v6385 = vpack.c.b16 %v5433, %v5425
        %v6386 = vpack.c.b16 %v5434, %v5426
        %v6387 = vpack.c.b16 %v5435, %v5427
        %v6388 = vpack.c.b16 %v5436, %v5428
        %v6389 = vpack.c.b16 %v5437, %v5429
        %v6390 = vpack.c.b16 %v5438, %v5430
        %v6391 = vpack.c.b16 %v5439, %v5431
        %v6392 = vpack.c.b16 %v5440, %v5432
        %v6393 = vpack.c.b16 %v5449, %v5441
        %v6394 = vpack.c.b16 %v5450, %v5442
        %v6395 = vpack.c.b16 %v5451, %v5443
        %v6396 = vpack.c.b16 %v5452, %v5444
        %v6397 = vpack.c.b16 %v5453, %v5445
        %v6398 = vpack.c.b16 %v5454, %v5446
        %v6399 = vpack.c.b16 %v5455, %v5447
        %v6400 = vpack.c.b16 %v5456, %v5448
        %v6401 = vpack.c.b16 %v5465, %v5457
        %v6402 = vpack.c.b16 %v5466, %v5458
        %v6403 = vpack.c.b16 %v5467, %v5459
        %v6404 = vpack.c.b16 %v5468, %v5460
        %v6405 = vpack.c.b16 %v5469, %v5461
        %v6406 = vpack.c.b16 %v5470, %v5462
        %v6407 = vpack.c.b16 %v5471, %v5463
        %v6408 = vpack.c.b16 %v5472, %v5464
        %v6409 = vpack.c.b16 %v5481, %v5473
        %v6410 = vpack.c.b16 %v5482, %v5474
        %v6411 = vpack.c.b16 %v5483, %v5475
        %v6412 = vpack.c.b16 %v5484, %v5476
        %v6413 = vpack.c.b16 %v5485, %v5477
        %v6414 = vpack.c.b16 %v5486, %v5478
        %v6415 = vpack.c.b16 %v5487, %v5479
        %v6416 = vpack.c.b16 %v5488, %v5480
        %v6417 = vpack.c.b16 %v5497, %v5489
        %v6418 = vpack.c.b16 %v5498, %v5490
        %v6419 = vpack.c.b16 %v5499, %v5491
        %v6420 = vpack.c.b16 %v5500, %v5492
        %v6421 = vpack.c.b16 %v5501, %v5493
        %v6422 = vpack.c.b16 %v5502, %v5494
        %v6423 = vpack.c.b16 %v5503, %v5495
        %v6424 = vpack.c.b16 %v5504, %v5496
        %v6425 = vpack.c.b16 %v5513, %v5505
        %v6426 = vpack.c.b16 %v5514, %v5506
        %v6427 = vpack.c.b16 %v5515, %v5507
        %v6428 = vpack.c.b16 %v5516, %v5508
        %v6429 = vpack.c.b16 %v5517, %v5509
        %v6430 = vpack.c.b16 %v5518, %v5510
        %v6431 = vpack.c.b16 %v5519, %v5511
        %v6432 = vpack.c.b16 %v5520, %v5512
        %v6433 = vpack.c.b16 %v5529, %v5521
        %v6434 = vpack.c.b16 %v5530, %v5522
        %v6435 = vpack.c.b16 %v5531, %v5523
        %v6436 = vpack.c.b16 %v5532, %v5524
        %v6437 = vpack.c.b16 %v5533, %v5525
        %v6438 = vpack.c.b16 %v5534, %v5526
        %v6439 = vpack.c.b16 %v5535, %v5527
        %v6440 = vpack.c.b16 %v5536, %v5528
        %v6441 = vpack.c.b16 %v5545, %v5537
        %v6442 = vpack.c.b16 %v5546, %v5538
        %v6443 = vpack.c.b16 %v5547, %v5539
        %v6444 = vpack.c.b16 %v5548, %v5540
        %v6445 = vpack.c.b16 %v5549, %v5541
        %v6446 = vpack.c.b16 %v5550, %v5542
        %v6447 = vpack.c.b16 %v5551, %v5543
        %v6448 = vpack.c.b16 %v5552, %v5544
        %v6449 = vpack.c.b16 %v5561, %v5553
        %v6450 = vpack.c.b16 %v5562, %v5554
        %v6451 = vpack.c.b16 %v5563, %v5555
        %v6452 = vpack.c.b16 %v5564, %v5556
        %v6453 = vpack.c.b16 %v5565, %v5557
        %v6454 = vpack.c.b16 %v5566, %v5558
        %v6455 = vpack.c.b16 %v5567, %v5559
        %v6456 = vpack.c.b16 %v5568, %v5560
        %v6457 = vpack.c.b16 %v5577, %v5569
        %v6458 = vpack.c.b16 %v5578, %v5570
        %v6459 = vpack.c.b16 %v5579, %v5571
        %v6460 = vpack.c.b16 %v5580, %v5572
        %v6461 = vpack.c.b16 %v5581, %v5573
        %v6462 = vpack.c.b16 %v5582, %v5574
        %v6463 = vpack.c.b16 %v5583, %v5575
        %v6464 = vpack.c.b16 %v5584, %v5576
        %v6465 = vpack.c.b16 %v5593, %v5585
        %v6466 = vpack.c.b16 %v5594, %v5586
        %v6467 = vpack.c.b16 %v5595, %v5587
        %v6468 = vpack.c.b16 %v5596, %v5588
        %v6469 = vpack.c.b16 %v5597, %v5589
        %v6470 = vpack.c.b16 %v5598, %v5590
        %v6471 = vpack.c.b16 %v5599, %v5591
        %v6472 = vpack.c.b16 %v5600, %v5592
        %v6473 = vpack.c.b16 %v5609, %v5601
        %v6474 = vpack.c.b16 %v5610, %v5602
        %v6475 = vpack.c.b16 %v5611, %v5603
        %v6476 = vpack.c.b16 %v5612, %v5604
        %v6477 = vpack.c.b16 %v5613, %v5605
        %v6478 = vpack.c.b16 %v5614, %v5606
        %v6479 = vpack.c.b16 %v5615, %v5607
        %v6480 = vpack.c.b16 %v5616, %v5608
        %v6481 = vpack.c.b16 %v5625, %v5617
        %v6482 = vpack.c.b16 %v5626, %v5618
        %v6483 = vpack.c.b16 %v5627, %v5619
        %v6484 = vpack.c.b16 %v5628, %v5620
        %v6485 = vpack.c.b16 %v5629, %v5621
        %v6486 = vpack.c.b16 %v5630, %v5622
        %v6487 = vpack.c.b16 %v5631, %v5623
        %v6488 = vpack.c.b16 %v5632, %v5624
        %v6489 = vpack.c.b16 %v5641, %v5633
        %v6490 = vpack.c.b16 %v5642, %v5634
        %v6491 = vpack.c.b16 %v5643, %v5635
        %v6492 = vpack.c.b16 %v5644, %v5636
        %v6493 = vpack.c.b16 %v5645, %v5637
        %v6494 = vpack.c.b16 %v5646, %v5638
        %v6495 = vpack.c.b16 %v5647, %v5639
        %v6496 = vpack.c.b16 %v5648, %v5640
        %v6497 = vpack.c.b16 %v5657, %v5649
        %v6498 = vpack.c.b16 %v5658, %v5650
        %v6499 = vpack.c.b16 %v5659, %v5651
        %v6500 = vpack.c.b16 %v5660, %v5652
        %v6501 = vpack.c.b16 %v5661, %v5653
        %v6502 = vpack.c.b16 %v5662, %v5654
        %v6503 = vpack.c.b16 %v5663, %v5655
        %v6504 = vpack.c.b16 %v5664, %v5656
        %v6505 = vpack.c.b16 %v5673, %v5665
        %v6506 = vpack.c.b16 %v5674, %v5666
        %v6507 = vpack.c.b16 %v5675, %v5667
        %v6508 = vpack.c.b16 %v5676, %v5668
        %v6509 = vpack.c.b16 %v5677, %v5669
        %v6510 = vpack.c.b16 %v5678, %v5670
        %v6511 = vpack.c.b16 %v5679, %v5671
        %v6512 = vpack.c.b16 %v5680, %v5672
        %v6513 = vpack.c.b16 %v5689, %v5681
        %v6514 = vpack.c.b16 %v5690, %v5682
        %v6515 = vpack.c.b16 %v5691, %v5683
        %v6516 = vpack.c.b16 %v5692, %v5684
        %v6517 = vpack.c.b16 %v5693, %v5685
        %v6518 = vpack.c.b16 %v5694, %v5686
        %v6519 = vpack.c.b16 %v5695, %v5687
        %v6520 = vpack.c.b16 %v5696, %v5688
        %v6521 = vpack.c.b16 %v5705, %v5697
        %v6522 = vpack.c.b16 %v5706, %v5698
        %v6523 = vpack.c.b16 %v5707, %v5699
        %v6524 = vpack.c.b16 %v5708, %v5700
        %v6525 = vpack.c.b16 %v5709, %v5701
        %v6526 = vpack.c.b16 %v5710, %v5702
        %v6527 = vpack.c.b16 %v5711, %v5703
        %v6528 = vpack.c.b16 %v5712, %v5704
        %v6529 = vpack.c.b16 %v5721, %v5713
        %v6530 = vpack.c.b16 %v5722, %v5714
        %v6531 = vpack.c.b16 %v5723, %v5715
        %v6532 = vpack.c.b16 %v5724, %v5716
        %v6533 = vpack.c.b16 %v5725, %v5717
        %v6534 = vpack.c.b16 %v5726, %v5718
        %v6535 = vpack.c.b16 %v5727, %v5719
        %v6536 = vpack.c.b16 %v5728, %v5720
        %v6537 = vpack.c.b16 %v5737, %v5729
        %v6538 = vpack.c.b16 %v5738, %v5730
        %v6539 = vpack.c.b16 %v5739, %v5731
        %v6540 = vpack.c.b16 %v5740, %v5732
        %v6541 = vpack.c.b16 %v5741, %v5733
        %v6542 = vpack.c.b16 %v5742, %v5734
        %v6543 = vpack.c.b16 %v5743, %v5735
        %v6544 = vpack.c.b16 %v5744, %v5736
        %v6545 = vpack.c.b16 %v5753, %v5745
        %v6546 = vpack.c.b16 %v5754, %v5746
        %v6547 = vpack.c.b16 %v5755, %v5747
        %v6548 = vpack.c.b16 %v5756, %v5748
        %v6549 = vpack.c.b16 %v5757, %v5749
        %v6550 = vpack.c.b16 %v5758, %v5750
        %v6551 = vpack.c.b16 %v5759, %v5751
        %v6552 = vpack.c.b16 %v5760, %v5752
        %v6553 = vpack.c.b16 %v5769, %v5761
        %v6554 = vpack.c.b16 %v5770, %v5762
        %v6555 = vpack.c.b16 %v5771, %v5763
        %v6556 = vpack.c.b16 %v5772, %v5764
        %v6557 = vpack.c.b16 %v5773, %v5765
        %v6558 = vpack.c.b16 %v5774, %v5766
        %v6559 = vpack.c.b16 %v5775, %v5767
        %v6560 = vpack.c.b16 %v5776, %v5768
        %v6561 = vpack.c.b16 %v5785, %v5777
        %v6562 = vpack.c.b16 %v5786, %v5778
        %v6563 = vpack.c.b16 %v5787, %v5779
        %v6564 = vpack.c.b16 %v5788, %v5780
        %v6565 = vpack.c.b16 %v5789, %v5781
        %v6566 = vpack.c.b16 %v5790, %v5782
        %v6567 = vpack.c.b16 %v5791, %v5783
        %v6568 = vpack.c.b16 %v5792, %v5784
        %v6569 = vpack.c.b16 %v5801, %v5793
        %v6570 = vpack.c.b16 %v5802, %v5794
        %v6571 = vpack.c.b16 %v5803, %v5795
        %v6572 = vpack.c.b16 %v5804, %v5796
        %v6573 = vpack.c.b16 %v5805, %v5797
        %v6574 = vpack.c.b16 %v5806, %v5798
        %v6575 = vpack.c.b16 %v5807, %v5799
        %v6576 = vpack.c.b16 %v5808, %v5800
        %v6577 = vpack.c.b16 %v5817, %v5809
        %v6578 = vpack.c.b16 %v5818, %v5810
        %v6579 = vpack.c.b16 %v5819, %v5811
        %v6580 = vpack.c.b16 %v5820, %v5812
        %v6581 = vpack.c.b16 %v5821, %v5813
        %v6582 = vpack.c.b16 %v5822, %v5814
        %v6583 = vpack.c.b16 %v5823, %v5815
        %v6584 = vpack.c.b16 %v5824, %v5816
        %v6585 = vpack.c.b16 %v5833, %v5825
        %v6586 = vpack.c.b16 %v5834, %v5826
        %v6587 = vpack.c.b16 %v5835, %v5827
        %v6588 = vpack.c.b16 %v5836, %v5828
        %v6589 = vpack.c.b16 %v5837, %v5829
        %v6590 = vpack.c.b16 %v5838, %v5830
        %v6591 = vpack.c.b16 %v5839, %v5831
        %v6592 = vpack.c.b16 %v5840, %v5832
        %v6593 = vpack.c.b16 %v5849, %v5841
        %v6594 = vpack.c.b16 %v5850, %v5842
        %v6595 = vpack.c.b16 %v5851, %v5843
        %v6596 = vpack.c.b16 %v5852, %v5844
        %v6597 = vpack.c.b16 %v5853, %v5845
        %v6598 = vpack.c.b16 %v5854, %v5846
        %v6599 = vpack.c.b16 %v5855, %v5847
        %v6600 = vpack.c.b16 %v5856, %v5848
        %v6601 = vpack.c.b16 %v5865, %v5857
        %v6602 = vpack.c.b16 %v5866, %v5858
        %v6603 = vpack.c.b16 %v5867, %v5859
        %v6604 = vpack.c.b16 %v5868, %v5860
        %v6605 = vpack.c.b16 %v5869, %v5861
        %v6606 = vpack.c.b16 %v5870, %v5862
        %v6607 = vpack.c.b16 %v5871, %v5863
        %v6608 = vpack.c.b16 %v5872, %v5864
        %v6609 = vpack.c.b16 %v5881, %v5873
        %v6610 = vpack.c.b16 %v5882, %v5874
        %v6611 = vpack.c.b16 %v5883, %v5875
        %v6612 = vpack.c.b16 %v5884, %v5876
        %v6613 = vpack.c.b16 %v5885, %v5877
        %v6614 = vpack.c.b16 %v5886, %v5878
        %v6615 = vpack.c.b16 %v5887, %v5879
        %v6616 = vpack.c.b16 %v5888, %v5880
        %v6617 = vpack.c.b16 %v5897, %v5889
        %v6618 = vpack.c.b16 %v5898, %v5890
        %v6619 = vpack.c.b16 %v5899, %v5891
        %v6620 = vpack.c.b16 %v5900, %v5892
        %v6621 = vpack.c.b16 %v5901, %v5893
        %v6622 = vpack.c.b16 %v5902, %v5894
        %v6623 = vpack.c.b16 %v5903, %v5895
        %v6624 = vpack.c.b16 %v5904, %v5896
        %v6625 = vpack.c.b16 %v5913, %v5905
        %v6626 = vpack.c.b16 %v5914, %v5906
        %v6627 = vpack.c.b16 %v5915, %v5907
        %v6628 = vpack.c.b16 %v5916, %v5908
        %v6629 = vpack.c.b16 %v5917, %v5909
        %v6630 = vpack.c.b16 %v5918, %v5910
        %v6631 = vpack.c.b16 %v5919, %v5911
        %v6632 = vpack.c.b16 %v5920, %v5912
        %v6633 = vpack.c.b16 %v5929, %v5921
        %v6634 = vpack.c.b16 %v5930, %v5922
        %v6635 = vpack.c.b16 %v5931, %v5923
        %v6636 = vpack.c.b16 %v5932, %v5924
        %v6637 = vpack.c.b16 %v5933, %v5925
        %v6638 = vpack.c.b16 %v5934, %v5926
        %v6639 = vpack.c.b16 %v5935, %v5927
        %v6640 = vpack.c.b16 %v5936, %v5928
        %v6641 = vpack.c.b16 %v5945, %v5937
        %v6642 = vpack.c.b16 %v5946, %v5938
        %v6643 = vpack.c.b16 %v5947, %v5939
        %v6644 = vpack.c.b16 %v5948, %v5940
        %v6645 = vpack.c.b16 %v5949, %v5941
        %v6646 = vpack.c.b16 %v5950, %v5942
        %v6647 = vpack.c.b16 %v5951, %v5943
        %v6648 = vpack.c.b16 %v5952, %v5944
        %v6649 = vpack.c.b16 %v5961, %v5953
        %v6650 = vpack.c.b16 %v5962, %v5954
        %v6651 = vpack.c.b16 %v5963, %v5955
        %v6652 = vpack.c.b16 %v5964, %v5956
        %v6653 = vpack.c.b16 %v5965, %v5957
        %v6654 = vpack.c.b16 %v5966, %v5958
        %v6655 = vpack.c.b16 %v5967, %v5959
        %v6656 = vpack.c.b16 %v5968, %v5960
        %v6657 = vpack.c.b16 %v5977, %v5969
        %v6658 = vpack.c.b16 %v5978, %v5970
        %v6659 = vpack.c.b16 %v5979, %v5971
        %v6660 = vpack.c.b16 %v5980, %v5972
        %v6661 = vpack.c.b16 %v5981, %v5973
        %v6662 = vpack.c.b16 %v5982, %v5974
        %v6663 = vpack.c.b16 %v5983, %v5975
        %v6664 = vpack.c.b16 %v5984, %v5976
        %v6665 = vpack.c.b16 %v5993, %v5985
        %v6666 = vpack.c.b16 %v5994, %v5986
        %v6667 = vpack.c.b16 %v5995, %v5987
        %v6668 = vpack.c.b16 %v5996, %v5988
        %v6669 = vpack.c.b16 %v5997, %v5989
        %v6670 = vpack.c.b16 %v5998, %v5990
        %v6671 = vpack.c.b16 %v5999, %v5991
        %v6672 = vpack.c.b16 %v6000, %v5992
        %v6673 = vpack.c.b16 %v6009, %v6001
        %v6674 = vpack.c.b16 %v6010, %v6002
        %v6675 = vpack.c.b16 %v6011, %v6003
        %v6676 = vpack.c.b16 %v6012, %v6004
        %v6677 = vpack.c.b16 %v6013, %v6005
        %v6678 = vpack.c.b16 %v6014, %v6006
        %v6679 = vpack.c.b16 %v6015, %v6007
        %v6680 = vpack.c.b16 %v6016, %v6008
        %v6681 = vpack.c.b16 %v6025, %v6017
        %v6682 = vpack.c.b16 %v6026, %v6018
        %v6683 = vpack.c.b16 %v6027, %v6019
        %v6684 = vpack.c.b16 %v6028, %v6020
        %v6685 = vpack.c.b16 %v6029, %v6021
        %v6686 = vpack.c.b16 %v6030, %v6022
        %v6687 = vpack.c.b16 %v6031, %v6023
        %v6688 = vpack.c.b16 %v6032, %v6024
        %v6689 = vpack.c.b16 %v6041, %v6033
        %v6690 = vpack.c.b16 %v6042, %v6034
        %v6691 = vpack.c.b16 %v6043, %v6035
        %v6692 = vpack.c.b16 %v6044, %v6036
        %v6693 = vpack.c.b16 %v6045, %v6037
        %v6694 = vpack.c.b16 %v6046, %v6038
        %v6695 = vpack.c.b16 %v6047, %v6039
        %v6696 = vpack.c.b16 %v6048, %v6040
        %v6697 = vpack.c.b16 %v6057, %v6049
        %v6698 = vpack.c.b16 %v6058, %v6050
        %v6699 = vpack.c.b16 %v6059, %v6051
        %v6700 = vpack.c.b16 %v6060, %v6052
        %v6701 = vpack.c.b16 %v6061, %v6053
        %v6702 = vpack.c.b16 %v6062, %v6054
        %v6703 = vpack.c.b16 %v6063, %v6055
        %v6704 = vpack.c.b16 %v6064, %v6056
        %v6705 = vpack.c.b16 %v6073, %v6065
        %v6706 = vpack.c.b16 %v6074, %v6066
        %v6707 = vpack.c.b16 %v6075, %v6067
        %v6708 = vpack.c.b16 %v6076, %v6068
        %v6709 = vpack.c.b16 %v6077, %v6069
        %v6710 = vpack.c.b16 %v6078, %v6070
        %v6711 = vpack.c.b16 %v6079, %v6071
        %v6712 = vpack.c.b16 %v6080, %v6072
        %v6713 = vpack.c.b16 %v6089, %v6081
        %v6714 = vpack.c.b16 %v6090, %v6082
        %v6715 = vpack.c.b16 %v6091, %v6083
        %v6716 = vpack.c.b16 %v6092, %v6084
        %v6717 = vpack.c.b16 %v6093, %v6085
        %v6718 = vpack.c.b16 %v6094, %v6086
        %v6719 = vpack.c.b16 %v6095, %v6087
        %v6720 = vpack.c.b16 %v6096, %v6088
        %v6721 = vpack.c.b16 %v6105, %v6097
        %v6722 = vpack.c.b16 %v6106, %v6098
        %v6723 = vpack.c.b16 %v6107, %v6099
        %v6724 = vpack.c.b16 %v6108, %v6100
        %v6725 = vpack.c.b16 %v6109, %v6101
        %v6726 = vpack.c.b16 %v6110, %v6102
        %v6727 = vpack.c.b16 %v6111, %v6103
        %v6728 = vpack.c.b16 %v6112, %v6104
        %v6729 = vpack.c.b16 %v6121, %v6113
        %v6730 = vpack.c.b16 %v6122, %v6114
        %v6731 = vpack.c.b16 %v6123, %v6115
        %v6732 = vpack.c.b16 %v6124, %v6116
        %v6733 = vpack.c.b16 %v6125, %v6117
        %v6734 = vpack.c.b16 %v6126, %v6118
        %v6735 = vpack.c.b16 %v6127, %v6119
        %v6736 = vpack.c.b16 %v6128, %v6120
        %v6737 = vpack.c.b16 %v6137, %v6129
        %v6738 = vpack.c.b16 %v6138, %v6130
        %v6739 = vpack.c.b16 %v6139, %v6131
        %v6740 = vpack.c.b16 %v6140, %v6132
        %v6741 = vpack.c.b16 %v6141, %v6133
        %v6742 = vpack.c.b16 %v6142, %v6134
        %v6743 = vpack.c.b16 %v6143, %v6135
        %v6744 = vpack.c.b16 %v6144, %v6136
        %v6745 = vpack.c.b16 %v6153, %v6145
        %v6746 = vpack.c.b16 %v6154, %v6146
        %v6747 = vpack.c.b16 %v6155, %v6147
        %v6748 = vpack.c.b16 %v6156, %v6148
        %v6749 = vpack.c.b16 %v6157, %v6149
        %v6750 = vpack.c.b16 %v6158, %v6150
        %v6751 = vpack.c.b16 %v6159, %v6151
        %v6752 = vpack.c.b16 %v6160, %v6152
        %v6753 = vpack.c.b16 %v6169, %v6161
        %v6754 = vpack.c.b16 %v6170, %v6162
        %v6755 = vpack.c.b16 %v6171, %v6163
        %v6756 = vpack.c.b16 %v6172, %v6164
        %v6757 = vpack.c.b16 %v6173, %v6165
        %v6758 = vpack.c.b16 %v6174, %v6166
        %v6759 = vpack.c.b16 %v6175, %v6167
        %v6760 = vpack.c.b16 %v6176, %v6168
        %v6761 = vpack.c.b16 %v6185, %v6177
        %v6762 = vpack.c.b16 %v6186, %v6178
        %v6763 = vpack.c.b16 %v6187, %v6179
        %v6764 = vpack.c.b16 %v6188, %v6180
        %v6765 = vpack.c.b16 %v6189, %v6181
        %v6766 = vpack.c.b16 %v6190, %v6182
        %v6767 = vpack.c.b16 %v6191, %v6183
        %v6768 = vpack.c.b16 %v6192, %v6184
        %v6769 = vpack.c.b16 %v6201, %v6193
        %v6770 = vpack.c.b16 %v6202, %v6194
        %v6771 = vpack.c.b16 %v6203, %v6195
        %v6772 = vpack.c.b16 %v6204, %v6196
        %v6773 = vpack.c.b16 %v6205, %v6197
        %v6774 = vpack.c.b16 %v6206, %v6198
        %v6775 = vpack.c.b16 %v6207, %v6199
        %v6776 = vpack.c.b16 %v6208, %v6200
        %v6777 = vpack.c.b16 %v6217, %v6209
        %v6778 = vpack.c.b16 %v6218, %v6210
        %v6779 = vpack.c.b16 %v6219, %v6211
        %v6780 = vpack.c.b16 %v6220, %v6212
        %v6781 = vpack.c.b16 %v6221, %v6213
        %v6782 = vpack.c.b16 %v6222, %v6214
        %v6783 = vpack.c.b16 %v6223, %v6215
        %v6784 = vpack.c.b16 %v6224, %v6216
        %v6785 = vpack.c.b16 %v6233, %v6225
        %v6786 = vpack.c.b16 %v6234, %v6226
        %v6787 = vpack.c.b16 %v6235, %v6227
        %v6788 = vpack.c.b16 %v6236, %v6228
        %v6789 = vpack.c.b16 %v6237, %v6229
        %v6790 = vpack.c.b16 %v6238, %v6230
        %v6791 = vpack.c.b16 %v6239, %v6231
        %v6792 = vpack.c.b16 %v6240, %v6232
        %v6793 = vpack.c.b16 %v6249, %v6241
        %v6794 = vpack.c.b16 %v6250, %v6242
        %v6795 = vpack.c.b16 %v6251, %v6243
        %v6796 = vpack.c.b16 %v6252, %v6244
        %v6797 = vpack.c.b16 %v6253, %v6245
        %v6798 = vpack.c.b16 %v6254, %v6246
        %v6799 = vpack.c.b16 %v6255, %v6247
        %v6800 = vpack.c.b16 %v6256, %v6248
        %v6801 = vpack.c.b16 %v6265, %v6257
        %v6802 = vpack.c.b16 %v6266, %v6258
        %v6803 = vpack.c.b16 %v6267, %v6259
        %v6804 = vpack.c.b16 %v6268, %v6260
        %v6805 = vpack.c.b16 %v6269, %v6261
        %v6806 = vpack.c.b16 %v6270, %v6262
        %v6807 = vpack.c.b16 %v6271, %v6263
        %v6808 = vpack.c.b16 %v6272, %v6264
        %v6809 = vpack.c.b16 %v6281, %v6273
        %v6810 = vpack.c.b16 %v6282, %v6274
        %v6811 = vpack.c.b16 %v6283, %v6275
        %v6812 = vpack.c.b16 %v6284, %v6276
        %v6813 = vpack.c.b16 %v6285, %v6277
        %v6814 = vpack.c.b16 %v6286, %v6278
        %v6815 = vpack.c.b16 %v6287, %v6279
        %v6816 = vpack.c.b16 %v6288, %v6280
        %v6817 = vpack.c.b16 %v6297, %v6289
        %v6818 = vpack.c.b16 %v6298, %v6290
        %v6819 = vpack.c.b16 %v6299, %v6291
        %v6820 = vpack.c.b16 %v6300, %v6292
        %v6821 = vpack.c.b16 %v6301, %v6293
        %v6822 = vpack.c.b16 %v6302, %v6294
        %v6823 = vpack.c.b16 %v6303, %v6295
        %v6824 = vpack.c.b16 %v6304, %v6296
        %v6825 = vpack.c.b16 %v6313, %v6305
        %v6826 = vpack.c.b16 %v6314, %v6306
        %v6827 = vpack.c.b16 %v6315, %v6307
        %v6828 = vpack.c.b16 %v6316, %v6308
        %v6829 = vpack.c.b16 %v6317, %v6309
        %v6830 = vpack.c.b16 %v6318, %v6310
        %v6831 = vpack.c.b16 %v6319, %v6311
        %v6832 = vpack.c.b16 %v6320, %v6312
        %7345 = vmatprep.subr.bf16.mxu0 %v6322
        %7346 = vmatpush1.bf16.msra.mxu0 %v6321
        %7347 = vmatprep.subr.bf16.mxu0 %v6330
        %7348 = vmatpush1.bf16.msra.mxu0 %v6329
        %7349 = vmatprep.subr.bf16.mxu0 %v6338
        %7350 = vmatpush1.bf16.msra.mxu0 %v6337
        %7351 = vmatprep.subr.bf16.mxu0 %v6346
        %7352 = vmatpush1.bf16.msra.mxu0 %v6345
        %7353 = vmatprep.subr.bf16.mxu0 %v6354
        %7354 = vmatpush1.bf16.msra.mxu0 %v6353
        %7355 = vmatprep.subr.bf16.mxu0 %v6362
        %7356 = vmatpush1.bf16.msra.mxu0 %v6361
        %7357 = vmatprep.subr.bf16.mxu0 %v6370
        %7358 = vmatpush1.bf16.msra.mxu0 %v6369
        %7359 = vmatprep.subr.bf16.mxu0 %v6378
        %7360 = vmatpush1.bf16.msra.mxu0 %v6377
        %7361 = vmatprep.subr.bf16.mxu0 %v6386
        %7362 = vmatpush1.bf16.msra.mxu0 %v6385
        %7363 = vmatprep.subr.bf16.mxu0 %v6394
        %7364 = vmatpush1.bf16.msra.mxu0 %v6393
        %7365 = vmatprep.subr.bf16.mxu0 %v6402
        %7366 = vmatpush1.bf16.msra.mxu0 %v6401
        %7367 = vmatprep.subr.bf16.mxu0 %v6410
        %7368 = vmatpush1.bf16.msra.mxu0 %v6409
        %7369 = vmatprep.subr.bf16.mxu0 %v6418
        %7370 = vmatpush1.bf16.msra.mxu0 %v6417
        %7371 = vmatprep.subr.bf16.mxu0 %v6426
        %7372 = vmatpush1.bf16.msra.mxu0 %v6425
        %7373 = vmatprep.subr.bf16.mxu0 %v6434
        %7374 = vmatpush1.bf16.msra.mxu0 %v6433
        %7375 = vmatprep.subr.bf16.mxu0 %v6442
        %7376 = vmatpush1.bf16.msra.mxu0 %v6441
        %7377 = vmatprep.mubr.bf16.mxu0 %v4778
        %7378 = vmatmul.mubr.bf16.gmra.mrb[0].mxu0 %v4777
        %v7379 = vpop.f32.mrb[0].mxu0
        %v7380 = vadd.f32 0.0, %v7379
        %v7381 = vpop.f32.mrb[0].mxu0
        %v7382 = vadd.f32 0.0, %v7381
        %v7383 = vpop.f32.mrb[0].mxu0
        %v7384 = vadd.f32 0.0, %v7383
        %v7385 = vpop.f32.mrb[0].mxu0
        %v7386 = vadd.f32 0.0, %v7385
        %7387 = vdwg.mxu0
        %7388 = vmatprep.subr.bf16.mxu0 %v6450
        %7389 = vmatpush1.bf16.msra.mxu0 %v6449
        %7390 = vmatprep.subr.bf16.mxu0 %v6458
        %7391 = vmatpush1.bf16.msra.mxu0 %v6457
        %7392 = vmatprep.subr.bf16.mxu0 %v6466
        %7393 = vmatpush1.bf16.msra.mxu0 %v6465
        %7394 = vmatprep.subr.bf16.mxu0 %v6474
        %7395 = vmatpush1.bf16.msra.mxu0 %v6473
        %7396 = vmatprep.subr.bf16.mxu0 %v6482
        %7397 = vmatpush1.bf16.msra.mxu0 %v6481
        %7398 = vmatprep.subr.bf16.mxu0 %v6490
        %7399 = vmatpush1.bf16.msra.mxu0 %v6489
        %7400 = vmatprep.subr.bf16.mxu0 %v6498
        %7401 = vmatpush1.bf16.msra.mxu0 %v6497
        %7402 = vmatprep.subr.bf16.mxu0 %v6506
        %7403 = vmatpush1.bf16.msra.mxu0 %v6505
        %7404 = vmatprep.subr.bf16.mxu0 %v6514
        %7405 = vmatpush1.bf16.msra.mxu0 %v6513
        %7406 = vmatprep.subr.bf16.mxu0 %v6522
        %7407 = vmatpush1.bf16.msra.mxu0 %v6521
        %7408 = vmatprep.subr.bf16.mxu0 %v6530
        %7409 = vmatpush1.bf16.msra.mxu0 %v6529
        %7410 = vmatprep.subr.bf16.mxu0 %v6538
        %7411 = vmatpush1.bf16.msra.mxu0 %v6537
        %7412 = vmatprep.subr.bf16.mxu0 %v6546
        %7413 = vmatpush1.bf16.msra.mxu0 %v6545
        %7414 = vmatprep.subr.bf16.mxu0 %v6554
        %7415 = vmatpush1.bf16.msra.mxu0 %v6553
        %7416 = vmatprep.subr.bf16.mxu0 %v6562
        %7417 = vmatpush1.bf16.msra.mxu0 %v6561
        %7418 = vmatprep.subr.bf16.mxu0 %v6570
        %7419 = vmatpush1.bf16.msra.mxu0 %v6569
        %7420 = vmatprep.mubr.bf16.mxu0 %v4780
        %7421 = vmatmul.mubr.bf16.gmra.mrb[0].mxu0 %v4779
        %v7422 = vpop.f32.mrb[0].mxu0
        %v7423 = vadd.f32 %v7380, %v7422
        %v7424 = vpop.f32.mrb[0].mxu0
        %v7425 = vadd.f32 %v7382, %v7424
        %v7426 = vpop.f32.mrb[0].mxu0
        %v7427 = vadd.f32 %v7384, %v7426
        %v7428 = vpop.f32.mrb[0].mxu0
        %v7429 = vadd.f32 %v7386, %v7428
        %7430 = vdwg.mxu0
        %7431 = vmatprep.subr.bf16.mxu0 %v6578
        %7432 = vmatpush1.bf16.msra.mxu0 %v6577
        %7433 = vmatprep.subr.bf16.mxu0 %v6586
        %7434 = vmatpush1.bf16.msra.mxu0 %v6585
        %7435 = vmatprep.subr.bf16.mxu0 %v6594
        %7436 = vmatpush1.bf16.msra.mxu0 %v6593
        %7437 = vmatprep.subr.bf16.mxu0 %v6602
        %7438 = vmatpush1.bf16.msra.mxu0 %v6601
        %7439 = vmatprep.subr.bf16.mxu0 %v6610
        %7440 = vmatpush1.bf16.msra.mxu0 %v6609
        %7441 = vmatprep.subr.bf16.mxu0 %v6618
        %7442 = vmatpush1.bf16.msra.mxu0 %v6617
        %7443 = vmatprep.subr.bf16.mxu0 %v6626
        %7444 = vmatpush1.bf16.msra.mxu0 %v6625
        %7445 = vmatprep.subr.bf16.mxu0 %v6634
        %7446 = vmatpush1.bf16.msra.mxu0 %v6633
        %7447 = vmatprep.subr.bf16.mxu0 %v6642
        %7448 = vmatpush1.bf16.msra.mxu0 %v6641
        %7449 = vmatprep.subr.bf16.mxu0 %v6650
        %7450 = vmatpush1.bf16.msra.mxu0 %v6649
        %7451 = vmatprep.subr.bf16.mxu0 %v6658
        %7452 = vmatpush1.bf16.msra.mxu0 %v6657
        %7453 = vmatprep.subr.bf16.mxu0 %v6666
        %7454 = vmatpush1.bf16.msra.mxu0 %v6665
        %7455 = vmatprep.subr.bf16.mxu0 %v6674
        %7456 = vmatpush1.bf16.msra.mxu0 %v6673
        %7457 = vmatprep.subr.bf16.mxu0 %v6682
        %7458 = vmatpush1.bf16.msra.mxu0 %v6681
        %7459 = vmatprep.subr.bf16.mxu0 %v6690
        %7460 = vmatpush1.bf16.msra.mxu0 %v6689
        %7461 = vmatprep.subr.bf16.mxu0 %v6698
        %7462 = vmatpush1.bf16.msra.mxu0 %v6697
        %7463 = vmatprep.mubr.bf16.mxu0 %v4782
        %7464 = vmatmul.mubr.bf16.gmra.mrb[0].mxu0 %v4781
        %v7465 = vpop.f32.mrb[0].mxu0
        %v7466 = vadd.f32 %v7423, %v7465
        %v7467 = vpop.f32.mrb[0].mxu0
        %v7468 = vadd.f32 %v7425, %v7467
        %v7469 = vpop.f32.mrb[0].mxu0
        %v7470 = vadd.f32 %v7427, %v7469
        %v7471 = vpop.f32.mrb[0].mxu0
        %v7472 = vadd.f32 %v7429, %v7471
        %7473 = vdwg.mxu0
        %7474 = vmatprep.subr.bf16.mxu0 %v6706
        %7475 = vmatpush1.bf16.msra.mxu0 %v6705
        %7476 = vmatprep.subr.bf16.mxu0 %v6714
        %7477 = vmatpush1.bf16.msra.mxu0 %v6713
        %7478 = vmatprep.subr.bf16.mxu0 %v6722
        %7479 = vmatpush1.bf16.msra.mxu0 %v6721
        %7480 = vmatprep.subr.bf16.mxu0 %v6730
        %7481 = vmatpush1.bf16.msra.mxu0 %v6729
        %7482 = vmatprep.subr.bf16.mxu0 %v6738
        %7483 = vmatpush1.bf16.msra.mxu0 %v6737
        %7484 = vmatprep.subr.bf16.mxu0 %v6746
        %7485 = vmatpush1.bf16.msra.mxu0 %v6745
        %7486 = vmatprep.subr.bf16.mxu0 %v6754
        %7487 = vmatpush1.bf16.msra.mxu0 %v6753
        %7488 = vmatprep.subr.bf16.mxu0 %v6762
        %7489 = vmatpush1.bf16.msra.mxu0 %v6761
        %7490 = vmatprep.subr.bf16.mxu0 %v6770
        %7491 = vmatpush1.bf16.msra.mxu0 %v6769
        %7492 = vmatprep.subr.bf16.mxu0 %v6778
        %7493 = vmatpush1.bf16.msra.mxu0 %v6777
        %7494 = vmatprep.subr.bf16.mxu0 %v6786
        %7495 = vmatpush1.bf16.msra.mxu0 %v6785
        %7496 = vmatprep.subr.bf16.mxu0 %v6794
        %7497 = vmatpush1.bf16.msra.mxu0 %v6793
        %7498 = vmatprep.subr.bf16.mxu0 %v6802
        %7499 = vmatpush1.bf16.msra.mxu0 %v6801
        %7500 = vmatprep.subr.bf16.mxu0 %v6810
        %7501 = vmatpush1.bf16.msra.mxu0 %v6809
        %7502 = vmatprep.subr.bf16.mxu0 %v6818
        %7503 = vmatpush1.bf16.msra.mxu0 %v6817
        %7504 = vmatprep.subr.bf16.mxu0 %v6826
        %7505 = vmatpush1.bf16.msra.mxu0 %v6825
        %7506 = vmatprep.mubr.bf16.mxu0 %v4784
        %7507 = vmatmul.mubr.bf16.gmra.mrb[0].mxu0 %v4783
        %v7508 = vpop.f32.mrb[0].mxu0
        %v7509 = vadd.f32 %v7466, %v7508
        %v7510 = vpop.f32.mrb[0].mxu0
        %v7511 = vadd.f32 %v7468, %v7510
        %v7512 = vpop.f32.mrb[0].mxu0
        %v7513 = vadd.f32 %v7470, %v7512
        %v7514 = vpop.f32.mrb[0].mxu0
        %v7515 = vadd.f32 %v7472, %v7514
        %7516 = vdwg.mxu0
        %7517 = vmatprep.subr.bf16.mxu0 %v6324
        %7518 = vmatpush1.bf16.msra.mxu0 %v6323
        %7519 = vmatprep.subr.bf16.mxu0 %v6332
        %7520 = vmatpush1.bf16.msra.mxu0 %v6331
        %7521 = vmatprep.subr.bf16.mxu0 %v6340
        %7522 = vmatpush1.bf16.msra.mxu0 %v6339
        %7523 = vmatprep.subr.bf16.mxu0 %v6348
        %7524 = vmatpush1.bf16.msra.mxu0 %v6347
        %7525 = vmatprep.subr.bf16.mxu0 %v6356
        %7526 = vmatpush1.bf16.msra.mxu0 %v6355
        %7527 = vmatprep.subr.bf16.mxu0 %v6364
        %7528 = vmatpush1.bf16.msra.mxu0 %v6363
        %7529 = vmatprep.subr.bf16.mxu0 %v6372
        %7530 = vmatpush1.bf16.msra.mxu0 %v6371
        %7531 = vmatprep.subr.bf16.mxu0 %v6380
        %7532 = vmatpush1.bf16.msra.mxu0 %v6379
        %7533 = vmatprep.subr.bf16.mxu0 %v6388
        %7534 = vmatpush1.bf16.msra.mxu0 %v6387
        %7535 = vmatprep.subr.bf16.mxu0 %v6396
        %7536 = vmatpush1.bf16.msra.mxu0 %v6395
        %7537 = vmatprep.subr.bf16.mxu0 %v6404
        %7538 = vmatpush1.bf16.msra.mxu0 %v6403
        %7539 = vmatprep.subr.bf16.mxu0 %v6412
        %7540 = vmatpush1.bf16.msra.mxu0 %v6411
        %7541 = vmatprep.subr.bf16.mxu0 %v6420
        %7542 = vmatpush1.bf16.msra.mxu0 %v6419
        %7543 = vmatprep.subr.bf16.mxu0 %v6428
        %7544 = vmatpush1.bf16.msra.mxu0 %v6427
        %7545 = vmatprep.subr.bf16.mxu0 %v6436
        %7546 = vmatpush1.bf16.msra.mxu0 %v6435
        %7547 = vmatprep.subr.bf16.mxu0 %v6444
        %7548 = vmatpush1.bf16.msra.mxu0 %v6443
        %7549 = vmatprep.mubr.bf16.mxu0 %v4778
        %7550 = vmatmul.mubr.bf16.gmra.mrb[0].mxu0 %v4777
        %v7551 = vpop.f32.mrb[0].mxu0
        %v7552 = vadd.f32 0.0, %v7551
        %v7553 = vpop.f32.mrb[0].mxu0
        %v7554 = vadd.f32 0.0, %v7553
        %v7555 = vpop.f32.mrb[0].mxu0
        %v7556 = vadd.f32 0.0, %v7555
        %v7557 = vpop.f32.mrb[0].mxu0
        %v7558 = vadd.f32 0.0, %v7557
        %7559 = vdwg.mxu0
        %7560 = vmatprep.subr.bf16.mxu0 %v6452
        %7561 = vmatpush1.bf16.msra.mxu0 %v6451
        %7562 = vmatprep.subr.bf16.mxu0 %v6460
        %7563 = vmatpush1.bf16.msra.mxu0 %v6459
        %7564 = vmatprep.subr.bf16.mxu0 %v6468
        %7565 = vmatpush1.bf16.msra.mxu0 %v6467
        %7566 = vmatprep.subr.bf16.mxu0 %v6476
        %7567 = vmatpush1.bf16.msra.mxu0 %v6475
        %7568 = vmatprep.subr.bf16.mxu0 %v6484
        %7569 = vmatpush1.bf16.msra.mxu0 %v6483
        %7570 = vmatprep.subr.bf16.mxu0 %v6492
        %7571 = vmatpush1.bf16.msra.mxu0 %v6491
        %7572 = vmatprep.subr.bf16.mxu0 %v6500
        %7573 = vmatpush1.bf16.msra.mxu0 %v6499
        %7574 = vmatprep.subr.bf16.mxu0 %v6508
        %7575 = vmatpush1.bf16.msra.mxu0 %v6507
        %7576 = vmatprep.subr.bf16.mxu0 %v6516
        %7577 = vmatpush1.bf16.msra.mxu0 %v6515
        %7578 = vmatprep.subr.bf16.mxu0 %v6524
        %7579 = vmatpush1.bf16.msra.mxu0 %v6523
        %7580 = vmatprep.subr.bf16.mxu0 %v6532
        %7581 = vmatpush1.bf16.msra.mxu0 %v6531
        %7582 = vmatprep.subr.bf16.mxu0 %v6540
        %7583 = vmatpush1.bf16.msra.mxu0 %v6539
        %7584 = vmatprep.subr.bf16.mxu0 %v6548
        %7585 = vmatpush1.bf16.msra.mxu0 %v6547
        %7586 = vmatprep.subr.bf16.mxu0 %v6556
        %7587 = vmatpush1.bf16.msra.mxu0 %v6555
        %7588 = vmatprep.subr.bf16.mxu0 %v6564
        %7589 = vmatpush1.bf16.msra.mxu0 %v6563
        %7590 = vmatprep.subr.bf16.mxu0 %v6572
        %7591 = vmatpush1.bf16.msra.mxu0 %v6571
        %7592 = vmatprep.mubr.bf16.mxu0 %v4780
        %7593 = vmatmul.mubr.bf16.gmra.mrb[0].mxu0 %v4779
        %v7594 = vpop.f32.mrb[0].mxu0
        %v7595 = vadd.f32 %v7552, %v7594
        %v7596 = vpop.f32.mrb[0].mxu0
        %v7597 = vadd.f32 %v7554, %v7596
        %v7598 = vpop.f32.mrb[0].mxu0
        %v7599 = vadd.f32 %v7556, %v7598
        %v7600 = vpop.f32.mrb[0].mxu0
        %v7601 = vadd.f32 %v7558, %v7600
        %7602 = vdwg.mxu0
        %7603 = vmatprep.subr.bf16.mxu0 %v6580
        %7604 = vmatpush1.bf16.msra.mxu0 %v6579
        %7605 = vmatprep.subr.bf16.mxu0 %v6588
        %7606 = vmatpush1.bf16.msra.mxu0 %v6587
        %7607 = vmatprep.subr.bf16.mxu0 %v6596
        %7608 = vmatpush1.bf16.msra.mxu0 %v6595
        %7609 = vmatprep.subr.bf16.mxu0 %v6604
        %7610 = vmatpush1.bf16.msra.mxu0 %v6603
        %7611 = vmatprep.subr.bf16.mxu0 %v6612
        %7612 = vmatpush1.bf16.msra.mxu0 %v6611
        %7613 = vmatprep.subr.bf16.mxu0 %v6620
        %7614 = vmatpush1.bf16.msra.mxu0 %v6619
        %7615 = vmatprep.subr.bf16.mxu0 %v6628
        %7616 = vmatpush1.bf16.msra.mxu0 %v6627
        %7617 = vmatprep.subr.bf16.mxu0 %v6636
        %7618 = vmatpush1.bf16.msra.mxu0 %v6635
        %7619 = vmatprep.subr.bf16.mxu0 %v6644
        %7620 = vmatpush1.bf16.msra.mxu0 %v6643
        %7621 = vmatprep.subr.bf16.mxu0 %v6652
        %7622 = vmatpush1.bf16.msra.mxu0 %v6651
        %7623 = vmatprep.subr.bf16.mxu0 %v6660
        %7624 = vmatpush1.bf16.msra.mxu0 %v6659
        %7625 = vmatprep.subr.bf16.mxu0 %v6668
        %7626 = vmatpush1.bf16.msra.mxu0 %v6667
        %7627 = vmatprep.subr.bf16.mxu0 %v6676
        %7628 = vmatpush1.bf16.msra.mxu0 %v6675
        %7629 = vmatprep.subr.bf16.mxu0 %v6684
        %7630 = vmatpush1.bf16.msra.mxu0 %v6683
        %7631 = vmatprep.subr.bf16.mxu0 %v6692
        %7632 = vmatpush1.bf16.msra.mxu0 %v6691
        %7633 = vmatprep.subr.bf16.mxu0 %v6700
        %7634 = vmatpush1.bf16.msra.mxu0 %v6699
        %7635 = vmatprep.mubr.bf16.mxu0 %v4782
        %7636 = vmatmul.mubr.bf16.gmra.mrb[0].mxu0 %v4781
        %v7637 = vpop.f32.mrb[0].mxu0
        %v7638 = vadd.f32 %v7595, %v7637
        %v7639 = vpop.f32.mrb[0].mxu0
        %v7640 = vadd.f32 %v7597, %v7639
        %v7641 = vpop.f32.mrb[0].mxu0
        %v7642 = vadd.f32 %v7599, %v7641
        %v7643 = vpop.f32.mrb[0].mxu0
        %v7644 = vadd.f32 %v7601, %v7643
        %7645 = vdwg.mxu0
        %7646 = vmatprep.subr.bf16.mxu0 %v6708
        %7647 = vmatpush1.bf16.msra.mxu0 %v6707
        %7648 = vmatprep.subr.bf16.mxu0 %v6716
        %7649 = vmatpush1.bf16.msra.mxu0 %v6715
        %7650 = vmatprep.subr.bf16.mxu0 %v6724
        %7651 = vmatpush1.bf16.msra.mxu0 %v6723
        %7652 = vmatprep.subr.bf16.mxu0 %v6732
        %7653 = vmatpush1.bf16.msra.mxu0 %v6731
        %7654 = vmatprep.subr.bf16.mxu0 %v6740
        %7655 = vmatpush1.bf16.msra.mxu0 %v6739
        %7656 = vmatprep.subr.bf16.mxu0 %v6748
        %7657 = vmatpush1.bf16.msra.mxu0 %v6747
        %7658 = vmatprep.subr.bf16.mxu0 %v6756
        %7659 = vmatpush1.bf16.msra.mxu0 %v6755
        %7660 = vmatprep.subr.bf16.mxu0 %v6764
        %7661 = vmatpush1.bf16.msra.mxu0 %v6763
        %7662 = vmatprep.subr.bf16.mxu0 %v6772
        %7663 = vmatpush1.bf16.msra.mxu0 %v6771
        %7664 = vmatprep.subr.bf16.mxu0 %v6780
        %7665 = vmatpush1.bf16.msra.mxu0 %v6779
        %7666 = vmatprep.subr.bf16.mxu0 %v6788
        %7667 = vmatpush1.bf16.msra.mxu0 %v6787
        %7668 = vmatprep.subr.bf16.mxu0 %v6796
        %7669 = vmatpush1.bf16.msra.mxu0 %v6795
        %7670 = vmatprep.subr.bf16.mxu0 %v6804
        %7671 = vmatpush1.bf16.msra.mxu0 %v6803
        %7672 = vmatprep.subr.bf16.mxu0 %v6812
        %7673 = vmatpush1.bf16.msra.mxu0 %v6811
        %7674 = vmatprep.subr.bf16.mxu0 %v6820
        %7675 = vmatpush1.bf16.msra.mxu0 %v6819
        %7676 = vmatprep.subr.bf16.mxu0 %v6828
        %7677 = vmatpush1.bf16.msra.mxu0 %v6827
        %7678 = vmatprep.mubr.bf16.mxu0 %v4784
        %7679 = vmatmul.mubr.bf16.gmra.mrb[0].mxu0 %v4783
        %v7680 = vpop.f32.mrb[0].mxu0
        %v7681 = vadd.f32 %v7638, %v7680
        %v7682 = vpop.f32.mrb[0].mxu0
        %v7683 = vadd.f32 %v7640, %v7682
        %v7684 = vpop.f32.mrb[0].mxu0
        %v7685 = vadd.f32 %v7642, %v7684
        %v7686 = vpop.f32.mrb[0].mxu0
        %v7687 = vadd.f32 %v7644, %v7686
        %7688 = vdwg.mxu0
        %7689 = vmatprep.subr.bf16.mxu0 %v6326
        %7690 = vmatpush1.bf16.msra.mxu0 %v6325
        %7691 = vmatprep.subr.bf16.mxu0 %v6334
        %7692 = vmatpush1.bf16.msra.mxu0 %v6333
        %7693 = vmatprep.subr.bf16.mxu0 %v6342
        %7694 = vmatpush1.bf16.msra.mxu0 %v6341
        %7695 = vmatprep.subr.bf16.mxu0 %v6350
        %7696 = vmatpush1.bf16.msra.mxu0 %v6349
        %7697 = vmatprep.subr.bf16.mxu0 %v6358
        %7698 = vmatpush1.bf16.msra.mxu0 %v6357
        %7699 = vmatprep.subr.bf16.mxu0 %v6366
        %7700 = vmatpush1.bf16.msra.mxu0 %v6365
        %7701 = vmatprep.subr.bf16.mxu0 %v6374
        %7702 = vmatpush1.bf16.msra.mxu0 %v6373
        %7703 = vmatprep.subr.bf16.mxu0 %v6382
        %7704 = vmatpush1.bf16.msra.mxu0 %v6381
        %7705 = vmatprep.subr.bf16.mxu0 %v6390
        %7706 = vmatpush1.bf16.msra.mxu0 %v6389
        %7707 = vmatprep.subr.bf16.mxu0 %v6398
        %7708 = vmatpush1.bf16.msra.mxu0 %v6397
        %7709 = vmatprep.subr.bf16.mxu0 %v6406
        %7710 = vmatpush1.bf16.msra.mxu0 %v6405
        %7711 = vmatprep.subr.bf16.mxu0 %v6414
        %7712 = vmatpush1.bf16.msra.mxu0 %v6413
        %7713 = vmatprep.subr.bf16.mxu0 %v6422
        %7714 = vmatpush1.bf16.msra.mxu0 %v6421
        %7715 = vmatprep.subr.bf16.mxu0 %v6430
        %7716 = vmatpush1.bf16.msra.mxu0 %v6429
        %7717 = vmatprep.subr.bf16.mxu0 %v6438
        %7718 = vmatpush1.bf16.msra.mxu0 %v6437
        %7719 = vmatprep.subr.bf16.mxu0 %v6446
        %7720 = vmatpush1.bf16.msra.mxu0 %v6445
        %7721 = vmatprep.mubr.bf16.mxu0 %v4778
        %7722 = vmatmul.mubr.bf16.gmra.mrb[0].mxu0 %v4777
        %v7723 = vpop.f32.mrb[0].mxu0
        %v7724 = vadd.f32 0.0, %v7723
        %v7725 = vpop.f32.mrb[0].mxu0
        %v7726 = vadd.f32 0.0, %v7725
        %v7727 = vpop.f32.mrb[0].mxu0
        %v7728 = vadd.f32 0.0, %v7727
        %v7729 = vpop.f32.mrb[0].mxu0
        %v7730 = vadd.f32 0.0, %v7729
        %7731 = vdwg.mxu0
        %7732 = vmatprep.subr.bf16.mxu0 %v6454
        %7733 = vmatpush1.bf16.msra.mxu0 %v6453
        %7734 = vmatprep.subr.bf16.mxu0 %v6462
        %7735 = vmatpush1.bf16.msra.mxu0 %v6461
        %7736 = vmatprep.subr.bf16.mxu0 %v6470
        %7737 = vmatpush1.bf16.msra.mxu0 %v6469
        %7738 = vmatprep.subr.bf16.mxu0 %v6478
        %7739 = vmatpush1.bf16.msra.mxu0 %v6477
        %7740 = vmatprep.subr.bf16.mxu0 %v6486
        %7741 = vmatpush1.bf16.msra.mxu0 %v6485
        %7742 = vmatprep.subr.bf16.mxu0 %v6494
        %7743 = vmatpush1.bf16.msra.mxu0 %v6493
        %7744 = vmatprep.subr.bf16.mxu0 %v6502
        %7745 = vmatpush1.bf16.msra.mxu0 %v6501
        %7746 = vmatprep.subr.bf16.mxu0 %v6510
        %7747 = vmatpush1.bf16.msra.mxu0 %v6509
        %7748 = vmatprep.subr.bf16.mxu0 %v6518
        %7749 = vmatpush1.bf16.msra.mxu0 %v6517
        %7750 = vmatprep.subr.bf16.mxu0 %v6526
        %7751 = vmatpush1.bf16.msra.mxu0 %v6525
        %7752 = vmatprep.subr.bf16.mxu0 %v6534
        %7753 = vmatpush1.bf16.msra.mxu0 %v6533
        %7754 = vmatprep.subr.bf16.mxu0 %v6542
        %7755 = vmatpush1.bf16.msra.mxu0 %v6541
        %7756 = vmatprep.subr.bf16.mxu0 %v6550
        %7757 = vmatpush1.bf16.msra.mxu0 %v6549
        %7758 = vmatprep.subr.bf16.mxu0 %v6558
        %7759 = vmatpush1.bf16.msra.mxu0 %v6557
        %7760 = vmatprep.subr.bf16.mxu0 %v6566
        %7761 = vmatpush1.bf16.msra.mxu0 %v6565
        %7762 = vmatprep.subr.bf16.mxu0 %v6574
        %7763 = vmatpush1.bf16.msra.mxu0 %v6573
        %7764 = vmatprep.mubr.bf16.mxu0 %v4780
        %7765 = vmatmul.mubr.bf16.gmra.mrb[0].mxu0 %v4779
        %v7766 = vpop.f32.mrb[0].mxu0
        %v7767 = vadd.f32 %v7724, %v7766
        %v7768 = vpop.f32.mrb[0].mxu0
        %v7769 = vadd.f32 %v7726, %v7768
        %v7770 = vpop.f32.mrb[0].mxu0
        %v7771 = vadd.f32 %v7728, %v7770
        %v7772 = vpop.f32.mrb[0].mxu0
        %v7773 = vadd.f32 %v7730, %v7772
        %7774 = vdwg.mxu0
        %7775 = vmatprep.subr.bf16.mxu0 %v6582
        %7776 = vmatpush1.bf16.msra.mxu0 %v6581
        %7777 = vmatprep.subr.bf16.mxu0 %v6590
        %7778 = vmatpush1.bf16.msra.mxu0 %v6589
        %7779 = vmatprep.subr.bf16.mxu0 %v6598
        %7780 = vmatpush1.bf16.msra.mxu0 %v6597
        %7781 = vmatprep.subr.bf16.mxu0 %v6606
        %7782 = vmatpush1.bf16.msra.mxu0 %v6605
        %7783 = vmatprep.subr.bf16.mxu0 %v6614
        %7784 = vmatpush1.bf16.msra.mxu0 %v6613
        %7785 = vmatprep.subr.bf16.mxu0 %v6622
        %7786 = vmatpush1.bf16.msra.mxu0 %v6621
        %7787 = vmatprep.subr.bf16.mxu0 %v6630
        %7788 = vmatpush1.bf16.msra.mxu0 %v6629
        %7789 = vmatprep.subr.bf16.mxu0 %v6638
        %7790 = vmatpush1.bf16.msra.mxu0 %v6637
        %7791 = vmatprep.subr.bf16.mxu0 %v6646
        %7792 = vmatpush1.bf16.msra.mxu0 %v6645
        %7793 = vmatprep.subr.bf16.mxu0 %v6654
        %7794 = vmatpush1.bf16.msra.mxu0 %v6653
        %7795 = vmatprep.subr.bf16.mxu0 %v6662
        %7796 = vmatpush1.bf16.msra.mxu0 %v6661
        %7797 = vmatprep.subr.bf16.mxu0 %v6670
        %7798 = vmatpush1.bf16.msra.mxu0 %v6669
        %7799 = vmatprep.subr.bf16.mxu0 %v6678
        %7800 = vmatpush1.bf16.msra.mxu0 %v6677
        %7801 = vmatprep.subr.bf16.mxu0 %v6686
        %7802 = vmatpush1.bf16.msra.mxu0 %v6685
        %7803 = vmatprep.subr.bf16.mxu0 %v6694
        %7804 = vmatpush1.bf16.msra.mxu0 %v6693
        %7805 = vmatprep.subr.bf16.mxu0 %v6702
        %7806 = vmatpush1.bf16.msra.mxu0 %v6701
        %7807 = vmatprep.mubr.bf16.mxu0 %v4782
        %7808 = vmatmul.mubr.bf16.gmra.mrb[0].mxu0 %v4781
        %v7809 = vpop.f32.mrb[0].mxu0
        %v7810 = vadd.f32 %v7767, %v7809
        %v7811 = vpop.f32.mrb[0].mxu0
        %v7812 = vadd.f32 %v7769, %v7811
        %v7813 = vpop.f32.mrb[0].mxu0
        %v7814 = vadd.f32 %v7771, %v7813
        %v7815 = vpop.f32.mrb[0].mxu0
        %v7816 = vadd.f32 %v7773, %v7815
        %7817 = vdwg.mxu0
        %7818 = vmatprep.subr.bf16.mxu0 %v6710
        %7819 = vmatpush1.bf16.msra.mxu0 %v6709
        %7820 = vmatprep.subr.bf16.mxu0 %v6718
        %7821 = vmatpush1.bf16.msra.mxu0 %v6717
        %7822 = vmatprep.subr.bf16.mxu0 %v6726
        %7823 = vmatpush1.bf16.msra.mxu0 %v6725
        %7824 = vmatprep.subr.bf16.mxu0 %v6734
        %7825 = vmatpush1.bf16.msra.mxu0 %v6733
        %7826 = vmatprep.subr.bf16.mxu0 %v6742
        %7827 = vmatpush1.bf16.msra.mxu0 %v6741
        %7828 = vmatprep.subr.bf16.mxu0 %v6750
        %7829 = vmatpush1.bf16.msra.mxu0 %v6749
        %7830 = vmatprep.subr.bf16.mxu0 %v6758
        %7831 = vmatpush1.bf16.msra.mxu0 %v6757
        %7832 = vmatprep.subr.bf16.mxu0 %v6766
        %7833 = vmatpush1.bf16.msra.mxu0 %v6765
        %7834 = vmatprep.subr.bf16.mxu0 %v6774
        %7835 = vmatpush1.bf16.msra.mxu0 %v6773
        %7836 = vmatprep.subr.bf16.mxu0 %v6782
        %7837 = vmatpush1.bf16.msra.mxu0 %v6781
        %7838 = vmatprep.subr.bf16.mxu0 %v6790
        %7839 = vmatpush1.bf16.msra.mxu0 %v6789
        %7840 = vmatprep.subr.bf16.mxu0 %v6798
        %7841 = vmatpush1.bf16.msra.mxu0 %v6797
        %7842 = vmatprep.subr.bf16.mxu0 %v6806
        %7843 = vmatpush1.bf16.msra.mxu0 %v6805
        %7844 = vmatprep.subr.bf16.mxu0 %v6814
        %7845 = vmatpush1.bf16.msra.mxu0 %v6813
        %7846 = vmatprep.subr.bf16.mxu0 %v6822
        %7847 = vmatpush1.bf16.msra.mxu0 %v6821
        %7848 = vmatprep.subr.bf16.mxu0 %v6830
        %7849 = vmatpush1.bf16.msra.mxu0 %v6829
        %7850 = vmatprep.mubr.bf16.mxu0 %v4784
        %7851 = vmatmul.mubr.bf16.gmra.mrb[0].mxu0 %v4783
        %v7852 = vpop.f32.mrb[0].mxu0
        %v7853 = vadd.f32 %v7810, %v7852
        %v7854 = vpop.f32.mrb[0].mxu0
        %v7855 = vadd.f32 %v7812, %v7854
        %v7856 = vpop.f32.mrb[0].mxu0
        %v7857 = vadd.f32 %v7814, %v7856
        %v7858 = vpop.f32.mrb[0].mxu0
        %v7859 = vadd.f32 %v7816, %v7858
        %7860 = vdwg.mxu0
        %7861 = vmatprep.subr.bf16.mxu0 %v6328
        %7862 = vmatpush1.bf16.msra.mxu0 %v6327
        %7863 = vmatprep.subr.bf16.mxu0 %v6336
        %7864 = vmatpush1.bf16.msra.mxu0 %v6335
        %7865 = vmatprep.subr.bf16.mxu0 %v6344
        %7866 = vmatpush1.bf16.msra.mxu0 %v6343
        %7867 = vmatprep.subr.bf16.mxu0 %v6352
        %7868 = vmatpush1.bf16.msra.mxu0 %v6351
        %7869 = vmatprep.subr.bf16.mxu0 %v6360
        %7870 = vmatpush1.bf16.msra.mxu0 %v6359
        %7871 = vmatprep.subr.bf16.mxu0 %v6368
        %7872 = vmatpush1.bf16.msra.mxu0 %v6367
        %7873 = vmatprep.subr.bf16.mxu0 %v6376
        %7874 = vmatpush1.bf16.msra.mxu0 %v6375
        %7875 = vmatprep.subr.bf16.mxu0 %v6384
        %7876 = vmatpush1.bf16.msra.mxu0 %v6383
        %7877 = vmatprep.subr.bf16.mxu0 %v6392
        %7878 = vmatpush1.bf16.msra.mxu0 %v6391
        %7879 = vmatprep.subr.bf16.mxu0 %v6400
        %7880 = vmatpush1.bf16.msra.mxu0 %v6399
        %7881 = vmatprep.subr.bf16.mxu0 %v6408
        %7882 = vmatpush1.bf16.msra.mxu0 %v6407
        %7883 = vmatprep.subr.bf16.mxu0 %v6416
        %7884 = vmatpush1.bf16.msra.mxu0 %v6415
        %7885 = vmatprep.subr.bf16.mxu0 %v6424
        %7886 = vmatpush1.bf16.msra.mxu0 %v6423
        %7887 = vmatprep.subr.bf16.mxu0 %v6432
        %7888 = vmatpush1.bf16.msra.mxu0 %v6431
        %7889 = vmatprep.subr.bf16.mxu0 %v6440
        %7890 = vmatpush1.bf16.msra.mxu0 %v6439
        %7891 = vmatprep.subr.bf16.mxu0 %v6448
        %7892 = vmatpush1.bf16.msra.mxu0 %v6447
        %7893 = vmatprep.mubr.bf16.mxu0 %v4778
        %7894 = vmatmul.mubr.bf16.gmra.mrb[0].mxu0 %v4777
        %v7895 = vpop.f32.mrb[0].mxu0
        %v7896 = vadd.f32 0.0, %v7895
        %v7897 = vpop.f32.mrb[0].mxu0
        %v7898 = vadd.f32 0.0, %v7897
        %v7899 = vpop.f32.mrb[0].mxu0
        %v7900 = vadd.f32 0.0, %v7899
        %v7901 = vpop.f32.mrb[0].mxu0
        %v7902 = vadd.f32 0.0, %v7901
        %7903 = vdwg.mxu0
        %7904 = vmatprep.subr.bf16.mxu0 %v6456
        %7905 = vmatpush1.bf16.msra.mxu0 %v6455
        %7906 = vmatprep.subr.bf16.mxu0 %v6464
        %7907 = vmatpush1.bf16.msra.mxu0 %v6463
        %7908 = vmatprep.subr.bf16.mxu0 %v6472
        %7909 = vmatpush1.bf16.msra.mxu0 %v6471
        %7910 = vmatprep.subr.bf16.mxu0 %v6480
        %7911 = vmatpush1.bf16.msra.mxu0 %v6479
        %7912 = vmatprep.subr.bf16.mxu0 %v6488
        %7913 = vmatpush1.bf16.msra.mxu0 %v6487
        %7914 = vmatprep.subr.bf16.mxu0 %v6496
        %7915 = vmatpush1.bf16.msra.mxu0 %v6495
        %7916 = vmatprep.subr.bf16.mxu0 %v6504
        %7917 = vmatpush1.bf16.msra.mxu0 %v6503
        %7918 = vmatprep.subr.bf16.mxu0 %v6512
        %7919 = vmatpush1.bf16.msra.mxu0 %v6511
        %7920 = vmatprep.subr.bf16.mxu0 %v6520
        %7921 = vmatpush1.bf16.msra.mxu0 %v6519
        %7922 = vmatprep.subr.bf16.mxu0 %v6528
        %7923 = vmatpush1.bf16.msra.mxu0 %v6527
        %7924 = vmatprep.subr.bf16.mxu0 %v6536
        %7925 = vmatpush1.bf16.msra.mxu0 %v6535
        %7926 = vmatprep.subr.bf16.mxu0 %v6544
        %7927 = vmatpush1.bf16.msra.mxu0 %v6543
        %7928 = vmatprep.subr.bf16.mxu0 %v6552
        %7929 = vmatpush1.bf16.msra.mxu0 %v6551
        %7930 = vmatprep.subr.bf16.mxu0 %v6560
        %7931 = vmatpush1.bf16.msra.mxu0 %v6559
        %7932 = vmatprep.subr.bf16.mxu0 %v6568
        %7933 = vmatpush1.bf16.msra.mxu0 %v6567
        %7934 = vmatprep.subr.bf16.mxu0 %v6576
        %7935 = vmatpush1.bf16.msra.mxu0 %v6575
        %7936 = vmatprep.mubr.bf16.mxu0 %v4780
        %7937 = vmatmul.mubr.bf16.gmra.mrb[0].mxu0 %v4779
        %v7938 = vpop.f32.mrb[0].mxu0
        %v7939 = vadd.f32 %v7896, %v7938
        %v7940 = vpop.f32.mrb[0].mxu0
        %v7941 = vadd.f32 %v7898, %v7940
        %v7942 = vpop.f32.mrb[0].mxu0
        %v7943 = vadd.f32 %v7900, %v7942
        %v7944 = vpop.f32.mrb[0].mxu0
        %v7945 = vadd.f32 %v7902, %v7944
        %7946 = vdwg.mxu0
        %7947 = vmatprep.subr.bf16.mxu0 %v6584
        %7948 = vmatpush1.bf16.msra.mxu0 %v6583
        %7949 = vmatprep.subr.bf16.mxu0 %v6592
        %7950 = vmatpush1.bf16.msra.mxu0 %v6591
        %7951 = vmatprep.subr.bf16.mxu0 %v6600
        %7952 = vmatpush1.bf16.msra.mxu0 %v6599
        %7953 = vmatprep.subr.bf16.mxu0 %v6608
        %7954 = vmatpush1.bf16.msra.mxu0 %v6607
        %7955 = vmatprep.subr.bf16.mxu0 %v6616
        %7956 = vmatpush1.bf16.msra.mxu0 %v6615
        %7957 = vmatprep.subr.bf16.mxu0 %v6624
        %7958 = vmatpush1.bf16.msra.mxu0 %v6623
        %7959 = vmatprep.subr.bf16.mxu0 %v6632
        %7960 = vmatpush1.bf16.msra.mxu0 %v6631
        %7961 = vmatprep.subr.bf16.mxu0 %v6640
        %7962 = vmatpush1.bf16.msra.mxu0 %v6639
        %7963 = vmatprep.subr.bf16.mxu0 %v6648
        %7964 = vmatpush1.bf16.msra.mxu0 %v6647
        %7965 = vmatprep.subr.bf16.mxu0 %v6656
        %7966 = vmatpush1.bf16.msra.mxu0 %v6655
        %7967 = vmatprep.subr.bf16.mxu0 %v6664
        %7968 = vmatpush1.bf16.msra.mxu0 %v6663
        %7969 = vmatprep.subr.bf16.mxu0 %v6672
        %7970 = vmatpush1.bf16.msra.mxu0 %v6671
        %7971 = vmatprep.subr.bf16.mxu0 %v6680
        %7972 = vmatpush1.bf16.msra.mxu0 %v6679
        %7973 = vmatprep.subr.bf16.mxu0 %v6688
        %7974 = vmatpush1.bf16.msra.mxu0 %v6687
        %7975 = vmatprep.subr.bf16.mxu0 %v6696
        %7976 = vmatpush1.bf16.msra.mxu0 %v6695
        %7977 = vmatprep.subr.bf16.mxu0 %v6704
        %7978 = vmatpush1.bf16.msra.mxu0 %v6703
        %7979 = vmatprep.mubr.bf16.mxu0 %v4782
        %7980 = vmatmul.mubr.bf16.gmra.mrb[0].mxu0 %v4781
        %v7981 = vpop.f32.mrb[0].mxu0
        %v7982 = vadd.f32 %v7939, %v7981
        %v7983 = vpop.f32.mrb[0].mxu0
        %v7984 = vadd.f32 %v7941, %v7983
        %v7985 = vpop.f32.mrb[0].mxu0
        %v7986 = vadd.f32 %v7943, %v7985
        %v7987 = vpop.f32.mrb[0].mxu0
        %v7988 = vadd.f32 %v7945, %v7987
        %7989 = vdwg.mxu0
        %7990 = vmatprep.subr.bf16.mxu0 %v6712
        %7991 = vmatpush1.bf16.msra.mxu0 %v6711
        %7992 = vmatprep.subr.bf16.mxu0 %v6720
        %7993 = vmatpush1.bf16.msra.mxu0 %v6719
        %7994 = vmatprep.subr.bf16.mxu0 %v6728
        %7995 = vmatpush1.bf16.msra.mxu0 %v6727
        %7996 = vmatprep.subr.bf16.mxu0 %v6736
        %7997 = vmatpush1.bf16.msra.mxu0 %v6735
        %7998 = vmatprep.subr.bf16.mxu0 %v6744
        %7999 = vmatpush1.bf16.msra.mxu0 %v6743
        %8000 = vmatprep.subr.bf16.mxu0 %v6752
        %8001 = vmatpush1.bf16.msra.mxu0 %v6751
        %8002 = vmatprep.subr.bf16.mxu0 %v6760
        %8003 = vmatpush1.bf16.msra.mxu0 %v6759
        %8004 = vmatprep.subr.bf16.mxu0 %v6768
        %8005 = vmatpush1.bf16.msra.mxu0 %v6767
        %8006 = vmatprep.subr.bf16.mxu0 %v6776
        %8007 = vmatpush1.bf16.msra.mxu0 %v6775
        %8008 = vmatprep.subr.bf16.mxu0 %v6784
        %8009 = vmatpush1.bf16.msra.mxu0 %v6783
        %8010 = vmatprep.subr.bf16.mxu0 %v6792
        %8011 = vmatpush1.bf16.msra.mxu0 %v6791
        %8012 = vmatprep.subr.bf16.mxu0 %v6800
        %8013 = vmatpush1.bf16.msra.mxu0 %v6799
        %8014 = vmatprep.subr.bf16.mxu0 %v6808
        %8015 = vmatpush1.bf16.msra.mxu0 %v6807
        %8016 = vmatprep.subr.bf16.mxu0 %v6816
        %8017 = vmatpush1.bf16.msra.mxu0 %v6815
        %8018 = vmatprep.subr.bf16.mxu0 %v6824
        %8019 = vmatpush1.bf16.msra.mxu0 %v6823
        %8020 = vmatprep.subr.bf16.mxu0 %v6832
        %8021 = vmatpush1.bf16.msra.mxu0 %v6831
        %8022 = vmatprep.mubr.bf16.mxu0 %v4784
        %8023 = vmatmul.mubr.bf16.gmra.mrb[0].mxu0 %v4783
        %v8024 = vpop.f32.mrb[0].mxu0
        %v8025 = vadd.f32 %v7982, %v8024
        %v8026 = vpop.f32.mrb[0].mxu0
        %v8027 = vadd.f32 %v7984, %v8026
        %v8028 = vpop.f32.mrb[0].mxu0
        %v8029 = vadd.f32 %v7986, %v8028
        %v8030 = vpop.f32.mrb[0].mxu0
        %v8031 = vadd.f32 %v7988, %v8030
        %8032 = vdwg.mxu0
        %v8033 = vadd.f32 %v4761, %v7509
        %v8034 = vadd.f32 %v4762, %v7511
        %v8035 = vadd.f32 %v4763, %v7681
        %v8036 = vadd.f32 %v4764, %v7683
        %v8037 = vadd.f32 %v4765, %v7853
        %v8038 = vadd.f32 %v4766, %v7855
        %v8039 = vadd.f32 %v4767, %v8025
        %v8040 = vadd.f32 %v4768, %v8027
        %v8041 = vadd.f32 %v4769, %v7513
        %v8042 = vadd.f32 %v4770, %v7515
        %v8043 = vadd.f32 %v4771, %v7685
        %v8044 = vadd.f32 %v4772, %v7687
        %v8045 = vadd.f32 %v4773, %v7857
        %v8046 = vadd.f32 %v4774, %v7859
        %v8047 = vadd.f32 %v4775, %v8029
        %v8048 = vadd.f32 %v4776, %v8031
        %8049 = vst [vmem:[#allocation11] sm:$0xff] %v8033
        %8050 = vst [vmem:[#allocation11 + $0x8] sm:$0xff] %v8034
        %8051 = vst [vmem:[#allocation11 + $0x10] sm:$0xff] %v8035
        %8052 = vst [vmem:[#allocation11 + $0x18] sm:$0xff] %v8036
        %8053 = vst [vmem:[#allocation11 + $0x20] sm:$0xff] %v8037
        %8054 = vst [vmem:[#allocation11 + $0x28] sm:$0xff] %v8038
        %8055 = vst [vmem:[#allocation11 + $0x30] sm:$0xff] %v8039
        %8056 = vst [vmem:[#allocation11 + $0x38] sm:$0xff] %v8040
        %8057 = vst [vmem:[#allocation11 + $0x40] sm:$0xff] %v8041
        %8058 = vst [vmem:[#allocation11 + $0x48] sm:$0xff] %v8042
        %8059 = vst [vmem:[#allocation11 + $0x50] sm:$0xff] %v8043
        %8060 = vst [vmem:[#allocation11 + $0x58] sm:$0xff] %v8044
        %8061 = vst [vmem:[#allocation11 + $0x60] sm:$0xff] %v8045
        %8062 = vst [vmem:[#allocation11 + $0x68] sm:$0xff] %v8046
        %8063 = vst [vmem:[#allocation11 + $0x70] sm:$0xff] %v8047
        %8064 = vst [vmem:[#allocation11 + $0x78] sm:$0xff] %v8048
        %p8065 = scmp.eq.s32.totalorder %s25, 3
        // Predicated region
        $region65: #{tpu_custom_call.1} parent=39 // pred_check
          %p8066 = pneg %p8065
        $region66: #{tpu_custom_call.1} parent=39 // pred_check_branch
          %8068 = sbr.rel (%p8066) target = $region68
        $region67: #{tpu_custom_call.1} parent=39 // pred_region
          %v8069 = vld [vmem:[#allocation11] sm:$0xff]
          %v8070 = vld [vmem:[#allocation11 + $0x8] sm:$0xff]
          %v8071 = vld [vmem:[#allocation11 + $0x10] sm:$0xff]
          %v8072 = vld [vmem:[#allocation11 + $0x18] sm:$0xff]
          %v8073 = vld [vmem:[#allocation11 + $0x20] sm:$0xff]
          %v8074 = vld [vmem:[#allocation11 + $0x28] sm:$0xff]
          %v8075 = vld [vmem:[#allocation11 + $0x30] sm:$0xff]
          %v8076 = vld [vmem:[#allocation11 + $0x38] sm:$0xff]
          %v8077 = vld [vmem:[#allocation11 + $0x40] sm:$0xff]
          %v8078 = vld [vmem:[#allocation11 + $0x48] sm:$0xff]
          %v8079 = vld [vmem:[#allocation11 + $0x50] sm:$0xff]
          %v8080 = vld [vmem:[#allocation11 + $0x58] sm:$0xff]
          %v8081 = vld [vmem:[#allocation11 + $0x60] sm:$0xff]
          %v8082 = vld [vmem:[#allocation11 + $0x68] sm:$0xff]
          %v8083 = vld [vmem:[#allocation11 + $0x70] sm:$0xff]
          %v8084 = vld [vmem:[#allocation11 + $0x78] sm:$0xff]
          %v8085 = vld [vmem:[#allocation10] sm:$0xff]
          %v8087 = vlaneseq
          %v8088 = vshrl.u32 %v8087, 7
          %v8089 = vsub.s32 0, %v8088
          %v8090 = vrot.slane %v8085, %v8089
          %v8091 = vlaneseq
          %v8092 = vshrl.u32 %v8091, 7
          %v8093 = vsub.s32 1, %v8092
          %v8094 = vrot.slane %v8085, %v8093
          %v8095 = vlaneseq
          %v8096 = vshrl.u32 %v8095, 7
          %v8097 = vsub.s32 2, %v8096
          %v8098 = vrot.slane %v8085, %v8097
          %v8099 = vlaneseq
          %v8100 = vshrl.u32 %v8099, 7
          %v8101 = vsub.s32 3, %v8100
          %v8102 = vrot.slane %v8085, %v8101
          %v8103 = vlaneseq
          %v8104 = vshrl.u32 %v8103, 7
          %v8105 = vsub.s32 4, %v8104
          %v8106 = vrot.slane %v8085, %v8105
          %v8107 = vlaneseq
          %v8108 = vshrl.u32 %v8107, 7
          %v8109 = vsub.s32 5, %v8108
          %v8110 = vrot.slane %v8085, %v8109
          %v8111 = vlaneseq
          %v8112 = vshrl.u32 %v8111, 7
          %v8113 = vsub.s32 6, %v8112
          %v8114 = vrot.slane %v8085, %v8113
          %v8115 = vlaneseq
          %v8116 = vshrl.u32 %v8115, 7
          %v8117 = vsub.s32 7, %v8116
          %v8118 = vrot.slane %v8085, %v8117
          %v8127 = vadd.f32 %v8069, %v8090
          %v8128 = vadd.f32 %v8070, %v8094
          %v8129 = vadd.f32 %v8071, %v8098
          %v8130 = vadd.f32 %v8072, %v8102
          %v8131 = vadd.f32 %v8073, %v8106
          %v8132 = vadd.f32 %v8074, %v8110
          %v8133 = vadd.f32 %v8075, %v8114
          %v8134 = vadd.f32 %v8076, %v8118
          %v8135 = vadd.f32 %v8077, %v8090
          %v8136 = vadd.f32 %v8078, %v8094
          %v8137 = vadd.f32 %v8079, %v8098
          %v8138 = vadd.f32 %v8080, %v8102
          %v8139 = vadd.f32 %v8081, %v8106
          %v8140 = vadd.f32 %v8082, %v8110
          %v8141 = vadd.f32 %v8083, %v8114
          %v8142 = vadd.f32 %v8084, %v8118
          %8143 = vst [vmem:[#allocation11] sm:$0xff] %v8127
          %8144 = vst [vmem:[#allocation11 + $0x8] sm:$0xff] %v8128
          %8145 = vst [vmem:[#allocation11 + $0x10] sm:$0xff] %v8129
          %8146 = vst [vmem:[#allocation11 + $0x18] sm:$0xff] %v8130
          %8147 = vst [vmem:[#allocation11 + $0x20] sm:$0xff] %v8131
          %8148 = vst [vmem:[#allocation11 + $0x28] sm:$0xff] %v8132
          %8149 = vst [vmem:[#allocation11 + $0x30] sm:$0xff] %v8133
          %8150 = vst [vmem:[#allocation11 + $0x38] sm:$0xff] %v8134
          %8151 = vst [vmem:[#allocation11 + $0x40] sm:$0xff] %v8135
          %8152 = vst [vmem:[#allocation11 + $0x48] sm:$0xff] %v8136
          %8153 = vst [vmem:[#allocation11 + $0x50] sm:$0xff] %v8137
          %8154 = vst [vmem:[#allocation11 + $0x58] sm:$0xff] %v8138
          %8155 = vst [vmem:[#allocation11 + $0x60] sm:$0xff] %v8139
          %8156 = vst [vmem:[#allocation11 + $0x68] sm:$0xff] %v8140
          %8157 = vst [vmem:[#allocation11 + $0x70] sm:$0xff] %v8141
          %8158 = vst [vmem:[#allocation11 + $0x78] sm:$0xff] %v8142
        $region68: #{tpu_custom_call.1} parent=39 // pred_fallthru
          _
        // Predicated region
        $region69: #{tpu_custom_call.1} parent=39 // pred_check
          %p8159 = pneg %p160
        $region70: #{tpu_custom_call.1} parent=39 // pred_check_branch
          %8161 = sbr.rel (%p8159) target = $region72
        $region71: #{tpu_custom_call.1} parent=39 // pred_region
          %s8162 = smul.u32 2, %s24
          %s8164 = ssub.s32 2048, 2048
          %8165 = vsyncadd [#allocation4], %s8164
          %s8166 = smul.addr %s8162, 8
          %s8167 = smul.addr %s8166, 128
          %s8168 = scalar_lea.hbm %s5, %s8167
          %s8169 = sshll.u32 [#allocation11], 4
          %s8170 = int_to_ptr.vmem [resolvable:$true] %s8169
          %8175 = dma.vmem_to_hbm [thread:$0]  %s8170, 2048, %s8168, [#allocation4], 1024, 1024, 64
        $region72: #{tpu_custom_call.1} parent=39 // pred_fallthru
          _
        // Predicated region
        $region73: #{tpu_custom_call.1} parent=39 // pred_check
          %p8176 = pneg %p160
        $region74: #{tpu_custom_call.1} parent=39 // pred_check_branch
          %8178 = sbr.rel (%p8176) target = $region76
        $region75: #{tpu_custom_call.1} parent=39 // pred_region
          %8179 = dma.done [#allocation4], 2048
        $region76: #{tpu_custom_call.1} parent=39 // pred_fallthru
          _
      $region40: #{tpu_custom_call.1} parent=5 // pred_fallthru
        _
      %p8180 = scmp.le.s32.totalorder 2, %s15
      // Predicated region
      $region77: #{tpu_custom_call.1} parent=5 // pred_check
        %p8181 = pneg %p8180
      $region78: #{tpu_custom_call.1} parent=5 // pred_check_branch
        %8183 = sbr.rel (%p8181) target = $region80
      $region79: #{tpu_custom_call.1} parent=5 // pred_region
        %s8184 = ssub.s32 %s15, 2
      $region80: #{tpu_custom_call.1} parent=5 // pred_fallthru
        _
    $region6: #{tpu_custom_call.1} parent=1 // loop_footer
      %s19 = sadd.s32 1, %s15
    $region7: #{tpu_custom_call.1} parent=1 // loop_footer_branch
      %14 = sbr.rel target = $region3
    $region8: #{tpu_custom_call.1} parent=1 // loop_exit
      _
    %8185 = vsyncpa [#allocation3], 1
    %s8186 = scalar_lea.sflag [#allocation3], 1
    %8187 = vsyncpa %s8186, 1
    %8188 = vsyncpa [#allocation6], 1
    %8189 = vsyncpa [#allocation9], 1
    %8190 = vsyncpa [#allocation4], 1
    %s8191 = scalar_lea.sflag [#allocation4], 1
    %8192 = vsyncpa %s8191, 1

</llo_original>
